<compile_context>
chip_gen: v6e
topology: v6e:2x2x1
jax: 0.10.0
libtpu: 0.0.40
codegen_flags: <defaults>
</compile_context>

<pallas_src>
import jax
import jax.numpy as jnp
from jax.experimental import pallas as pl
from jax.experimental.pallas import tpu as pltpu

EPS = 1e-5


def _round_up(x, m):
    return ((x + m - 1) // m) * m


# --------------------------------------------------------------------------
# Fused Pallas kernel: 3 x Inception + residual + final ReLU.
# Row layout: B segments of Lp rows each; rows [pad, pad+L) of a segment are
# real data, the rest are physical zero padding.
# --------------------------------------------------------------------------
def _make_block_kernel(R, n_real, pad, bc, G, NG):
    inv_n = 1.0 / float(n_real)

    def kernel(x_ref, m_ref,
               wb1_ref, wg1_ref, wmp1_ref, g1_ref, b1_ref,
               wb2_ref, wg2_ref, wmp2_ref, g2_ref, b2_ref,
               wb3_ref, wg3_ref, wmp3_ref, g3_ref, b3_ref,
               wr_ref, br_ref, gr_ref, ber_ref,
               o_ref, grp_ref):
        m = m_ref[...]                        # [R, 1] f32, 1.0 = real row
        x = x_ref[...]                        # [R, Cin] f32 (pad rows are 0)

        # Grouped-tap scratch: lane block g holds the bottleneck output
        # shifted by g rows, so taps k0..k0+G-1 are one contiguous slice
        # grp_ref[k0:k0+R, :].  Rows never written below stay zero forever.
        grp_ref[...] = jnp.zeros(grp_ref.shape, jnp.bfloat16)

        def bn(z, gamma, beta):
            # BatchNorm1d, training-mode stats over the B*L real rows only.
            # Two-pass: mean, then centered variance (masked to real rows).
            mean = jnp.sum(z * m, axis=0, keepdims=True) * inv_n
            zc = z - mean
            var = jnp.sum(zc * zc * m, axis=0, keepdims=True) * inv_n
            return zc * (jax.lax.rsqrt(var + EPS) * gamma) + beta

        def maxpool3(z, neg_inf_edges):
            # MaxPool1d(kernel=3, stride=1, padding=1).  Out-of-sequence
            # neighbours must act as -inf; for post-ReLU inputs (layers 2/3)
            # the physical zero pad rows are equivalent, so no masking needed.
            zz = jnp.where(m > 0.0, z, -jnp.inf) if neg_inf_edges else z
            zero_row = jnp.zeros((1, z.shape[1]), jnp.float32)
            up = jnp.concatenate([zero_row, zz[:-1]], axis=0)   # z[r-1]
            dn = jnp.concatenate([zz[1:], zero_row], axis=0)    # z[r+1]
            return jnp.maximum(jnp.maximum(up, z), dn)

        def inception(z, wb_ref, wg_ref, wmp_ref, gamma_ref, beta_ref,
                      first, last):
            z16 = z.astype(jnp.bfloat16)
            # Bottleneck 1x1 conv (no bias); pad rows stay exactly zero.
            zb16 = jnp.dot(z16, wb_ref[...],
                           preferred_element_type=jnp.float32
                           ).astype(jnp.bfloat16)                  # [R, bc]
            # One bf16 cast, G row-shifted stores into the grouped scratch.
            for g in range(G):
                grp_ref[pad - g:pad - g + R, g * bc:(g + 1) * bc] = zb16
            # MaxPool branch; its 1x1 conv weight is pre-placed in lanes
            # 3*nf:4*nf of a [Cin, 128] weight so it directly initializes the
            # full 128-lane accumulator (no lane concatenate later).
            mp16 = maxpool3(z, first).astype(jnp.bfloat16)
            acc = jnp.dot(mp16, wmp_ref[...],
                          preferred_element_type=jnp.float32)      # [R, 128]
            # Grouped tap matmuls: NG passes with K = G*bc (=256), N = 128.
            for gi in range(NG):
                k0 = gi * G
                acc = acc + jnp.dot(grp_ref[k0:k0 + R, :], wg_ref[gi],
                                    preferred_element_type=jnp.float32)
            zout = jnp.maximum(bn(acc, gamma_ref[...], beta_ref[...]), 0.0)
            # Zero the pad rows so the next layer's convs/maxpool read zeros.
            return zout if last else zout * m

        z = inception(x, wb1_ref, wg1_ref, wmp1_ref, g1_ref, b1_ref,
                      first=True, last=False)
        z = inception(z, wb2_ref, wg2_ref, wmp2_ref, g2_ref, b2_ref,
                      first=False, last=False)
        z = inception(z, wb3_ref, wg3_ref, wmp3_ref, g3_ref, b3_ref,
                      first=False, last=True)

        # Residual branch: Conv1d(1x1, bias) -> BatchNorm1d, then add + ReLU.
        r = jnp.dot(x.astype(jnp.bfloat16), wr_ref[...],
                    preferred_element_type=jnp.float32) + br_ref[...]
        rn = bn(r, gr_ref[...], ber_ref[...])
        o_ref[...] = jnp.maximum(z + rn, 0.0).astype(o_ref.dtype)

    return kernel


# --------------------------------------------------------------------------
# JAX-side wrapper (layout plumbing only)
# --------------------------------------------------------------------------
def _prep_inception(p, kmax, G, NG, nf, bc):
    """Torch-layout weights -> kernel layout.

    Returns [wb, wg, wmp, gamma, beta] where
      wb  : [Cin, bc]         bf16  bottleneck 1x1
      wg  : [NG, G*bc, 4*nf]  bf16  grouped tap weights (w1|w2|w3|zeros lanes)
      wmp : [Cin, 4*nf]       bf16  maxpool 1x1, real cols in lanes 3*nf:4*nf
    """
    C = 4 * nf
    wb = jnp.transpose(p["wb"][:, :, 0]).astype(jnp.bfloat16)
    wm = jnp.zeros((NG * G, bc, C), jnp.float32)      # taps padded to NG*G
    for bi, name in enumerate(("w1", "w2", "w3")):
        w = jnp.transpose(p[name], (2, 1, 0))         # [K, bc, nf]
        off = (kmax - w.shape[0]) // 2                # center odd kernels
        wm = wm.at[off:off + w.shape[0], :, bi * nf:(bi + 1) * nf].set(w)
    wg = wm.reshape(NG, G * bc, C).astype(jnp.bfloat16)
    cin = p["wmp"].shape[1]
    wmp = jnp.zeros((cin, C), jnp.float32)
    wmp = wmp.at[:, 3 * nf:].set(jnp.transpose(p["wmp"][:, :, 0]))
    return [wb, wg, wmp.astype(jnp.bfloat16),
            p["gamma"][None, :], p["beta"][None, :]]


def inception_block_forward(x_ncl, params, kmax):
    B, Cin, L = x_ncl.shape
    nf = params["inc1"]["w1"].shape[0]
    bc = params["inc1"]["wb"].shape[0]
    C = 4 * nf
    pad = kmax // 2
    G = min(max(1, 256 // bc), pad + 1)       # taps per group (K = G*bc)
    NG = -(-kmax // G)                        # number of tap groups
    Lp = _round_up(L + 2 * pad, 8)            # per-batch padded segment rows
    R = B * Lp                                # rows of the stacked slab
    R_slab = R + (NG - 1) * G                 # rows of the grouped scratch

    # NCL -> zero-padded, channels-last stacked slab [R, Cin].
    x_blc = jnp.transpose(x_ncl, (0, 2, 1))
    x_rows = jnp.pad(x_blc, ((0, 0), (pad, Lp - L - pad), (0, 0))
                     ).reshape(R, Cin)
    # Real-row mask: 1.0 on the B*L real rows, 0.0 on pad rows.
    pos = jnp.arange(Lp, dtype=jnp.int32)
    seg_mask = ((pos >= pad) & (pos < pad + L)).astype(jnp.float32)
    m = jnp.tile(seg_mask, B)[:, None]                              # [R, 1]

    args = [x_rows, m]
    for name in ("inc1", "inc2", "inc3"):
        args.extend(_prep_inception(params[name], kmax, G, NG, nf, bc))
    res = params["res"]
    args.extend([
        jnp.transpose(res["w"][:, :, 0]).astype(jnp.bfloat16),      # [Cin, C]
        res["b"][None, :],
        res["gamma"][None, :],
        res["beta"][None, :],
    ])

    flops = 2 * R * (Cin * bc + 2 * C * bc          # bottlenecks
                     + 3 * NG * G * bc * C          # grouped tap matmuls
                     + Cin * C + 2 * C * C          # maxpool 1x1 convs
                     + Cin * C)                     # residual 1x1 conv
    bytes_accessed = (4 * R * (Cin + C)
                      + sum(a.size * a.dtype.itemsize for a in args[2:]))

    out = pl.pallas_call(
        _make_block_kernel(R, B * L, pad, bc, G, NG),
        out_shape=jax.ShapeDtypeStruct((R, C), jnp.float32),
        in_specs=[pl.BlockSpec(memory_space=pltpu.MemorySpace.VMEM)
                  for _ in args],
        out_specs=pl.BlockSpec(memory_space=pltpu.MemorySpace.VMEM),
        scratch_shapes=[pltpu.VMEM((R_slab, G * bc), jnp.bfloat16)],
        compiler_params=pltpu.CompilerParams(
            vmem_limit_bytes=32 * 1024 * 1024),
        cost_estimate=pl.CostEstimate(flops=flops, transcendentals=0,
                                      bytes_accessed=bytes_accessed),
    )(*args)

    # Drop the pad rows and return to NCL.
    return jnp.transpose(out.reshape(B, Lp, C)[:, pad:pad + L, :], (0, 2, 1))


# --------------------------------------------------------------------------
# Deterministic parameter init (shapes follow the PyTorch __init__)
# --------------------------------------------------------------------------
def init_inception_params(key, in_ch, nf, bc, ks):
    keys = jax.random.split(key, 7)
    w = lambda k, shape: 0.1 * jax.random.normal(k, shape, jnp.float32)
    return {
        "wb": w(keys[0], (bc, in_ch, 1)),          # bottleneck Conv1d (no bias)
        "w1": w(keys[1], (nf, bc, ks[0])),
        "w2": w(keys[2], (nf, bc, ks[1])),
        "w3": w(keys[3], (nf, bc, ks[2])),
        "wmp": w(keys[4], (nf, in_ch, 1)),         # conv_from_maxpool (no bias)
        "gamma": 1.0 + 0.1 * jax.random.normal(keys[5], (4 * nf,), jnp.float32),
        "beta": 0.1 * jax.random.normal(keys[6], (4 * nf,), jnp.float32),
    }


def init_block_params(key, in_ch, nf, bc, ks):
    k1, k2, k3, k4 = jax.random.split(key, 4)
    kr = jax.random.split(k4, 4)
    return {
        "inc1": init_inception_params(k1, in_ch, nf, bc, ks),
        "inc2": init_inception_params(k2, 4 * nf, nf, bc, ks),
        "inc3": init_inception_params(k3, 4 * nf, nf, bc, ks),
        "res": {
            "w": 0.1 * jax.random.normal(kr[0], (4 * nf, in_ch, 1), jnp.float32),
            "b": 0.1 * jax.random.normal(kr[1], (4 * nf,), jnp.float32),
            "gamma": 1.0 + 0.1 * jax.random.normal(kr[2], (4 * nf,), jnp.float32),
            "beta": 0.1 * jax.random.normal(kr[3], (4 * nf,), jnp.float32),
        },
    }


# --------------------------------------------------------------------------
# Pure-JAX reference (NCL, mirrors the PyTorch forward).  Convs use bf16
# operands with f32 accumulation, matching the kernel's MXU numerics.
# --------------------------------------------------------------------------
def _ref_conv1d(x, w, pad=0, bias=None):
    out = jax.lax.conv_general_dilated(
        x.astype(jnp.bfloat16), w.astype(jnp.bfloat16),
        window_strides=(1,), padding=[(pad, pad)],
        dimension_numbers=("NCH", "OIH", "NCH"),
        preferred_element_type=jnp.float32)
    if bias is not None:
        out = out + bias[None, :, None]
    return out


def _ref_bn_train(x, gamma, beta, eps=EPS):
    mean = jnp.mean(x, axis=(0, 2), keepdims=True)
    var = jnp.mean((x - mean) ** 2, axis=(0, 2), keepdims=True)
    return (x - mean) * jax.lax.rsqrt(var + eps) * gamma[None, :, None] \
        + beta[None, :, None]


def _ref_inception(x, p):
    zb = _ref_conv1d(x, p["wb"])
    xp = jnp.pad(x, ((0, 0), (0, 0), (1, 1)), constant_values=-jnp.inf)
    zmp = jnp.maximum(jnp.maximum(xp[..., :-2], xp[..., 1:-1]), xp[..., 2:])
    z1 = _ref_conv1d(zb, p["w1"], pad=p["w1"].shape[2] // 2)
    z2 = _ref_conv1d(zb, p["w2"], pad=p["w2"].shape[2] // 2)
    z3 = _ref_conv1d(zb, p["w3"], pad=p["w3"].shape[2] // 2)
    z4 = _ref_conv1d(zmp, p["wmp"])
    z = jnp.concatenate([z1, z2, z3, z4], axis=1)
    return jax.nn.relu(_ref_bn_train(z, p["gamma"], p["beta"]))


def ref_block(x, params):
    z = _ref_inception(x, params["inc1"])
    z = _ref_inception(z, params["inc2"])
    z = _ref_inception(z, params["inc3"])
    r = _ref_conv1d(x, params["res"]["w"], bias=params["res"]["b"])
    r = _ref_bn_train(r, params["res"]["gamma"], params["res"]["beta"])
    return jax.nn.relu(z + r)


# --------------------------------------------------------------------------
if __name__ == "__main__":
    key = jax.random.PRNGKey(0)
    kx, kp = jax.random.split(key)

    B, Cin, L = 2, 4, 16                   # NCL input, matching nn.Conv1d
    nf, bc, ks = 32, 32, [9, 19, 39]       # module defaults -> 4*nf = 128 out
    kmax = max(ks)

    x = jax.random.normal(kx, (B, Cin, L), jnp.float32)
    params = init_block_params(kp, Cin, nf, bc, ks)

    fwd = jax.jit(inception_block_forward, static_argnums=2)
    out = jax.block_until_ready(fwd(x, params, kmax))
    assert out.shape == (B, 4 * nf, L), out.shape

    ref = ref_block(x, params)
    err = float(jnp.max(jnp.abs(out - ref)))
    # Both paths use bf16 MXU operands with f32 accumulation; residual
    # differences come only from summation order / rare bf16 rounding ties.
    if not bool(jnp.allclose(out, ref, atol=5e-3, rtol=5e-3)):
        raise AssertionError(f"Pallas output mismatch vs JAX reference, max abs err={err}")

    print("KERNEL_OK")
</pallas_src>

<mosaic_0001>
module attributes {stable_mosaic.version = 11 : i64} {
  func.func @kernel(%arg0: memref<112x4xf32, #tpu.memory_space<vmem>>, %arg1: memref<112x1xf32, #tpu.memory_space<vmem>>, %arg2: memref<4x32xbf16, #tpu.memory_space<vmem>>, %arg3: memref<5x256x128xbf16, #tpu.memory_space<vmem>>, %arg4: memref<4x128xbf16, #tpu.memory_space<vmem>>, %arg5: memref<1x128xf32, #tpu.memory_space<vmem>>, %arg6: memref<1x128xf32, #tpu.memory_space<vmem>>, %arg7: memref<128x32xbf16, #tpu.memory_space<vmem>>, %arg8: memref<5x256x128xbf16, #tpu.memory_space<vmem>>, %arg9: memref<128x128xbf16, #tpu.memory_space<vmem>>, %arg10: memref<1x128xf32, #tpu.memory_space<vmem>>, %arg11: memref<1x128xf32, #tpu.memory_space<vmem>>, %arg12: memref<128x32xbf16, #tpu.memory_space<vmem>>, %arg13: memref<5x256x128xbf16, #tpu.memory_space<vmem>>, %arg14: memref<128x128xbf16, #tpu.memory_space<vmem>>, %arg15: memref<1x128xf32, #tpu.memory_space<vmem>>, %arg16: memref<1x128xf32, #tpu.memory_space<vmem>>, %arg17: memref<4x128xbf16, #tpu.memory_space<vmem>>, %arg18: memref<1x128xf32, #tpu.memory_space<vmem>>, %arg19: memref<1x128xf32, #tpu.memory_space<vmem>>, %arg20: memref<1x128xf32, #tpu.memory_space<vmem>>, %arg21: memref<112x128xf32, #tpu.memory_space<vmem>>, %arg22: memref<144x256xbf16, #tpu.memory_space<vmem>>) attributes {dimension_semantics = [], scalar_prefetch = 0 : i64, scratch_operands = 1 : i64, tpu.core_type = #tpu.core_type<tc>} {
    %c0 = arith.constant 0 : index
    %c0_0 = arith.constant 0 : index
    %0 = vector.load %arg1[%c0, %c0_0] : memref<112x1xf32, #tpu.memory_space<vmem>>, vector<112x1xf32>
    %c0_1 = arith.constant 0 : index
    %c0_2 = arith.constant 0 : index
    %1 = vector.load %arg0[%c0_1, %c0_2] : memref<112x4xf32, #tpu.memory_space<vmem>>, vector<112x4xf32>
    %cst = arith.constant 0.000000e+00 : bf16
    %2 = vector.broadcast %cst : bf16 to vector<144x256xbf16>
    %c0_3 = arith.constant 0 : index
    %c0_4 = arith.constant 0 : index
    %3 = vector.load %arg22[%c0_3, %c0_4] : memref<144x256xbf16, #tpu.memory_space<vmem>>, vector<144x256xbf16>
    tpu.vector_store %arg22[%c0_3, %c0_4], %2 {strides = array<i32>} : memref<144x256xbf16, #tpu.memory_space<vmem>>, vector<144x256xbf16>,
    %4 = arith.truncf %1 : vector<112x4xf32> to vector<112x4xbf16>
    %c0_5 = arith.constant 0 : index
    %c0_6 = arith.constant 0 : index
    %5 = vector.load %arg2[%c0_5, %c0_6] : memref<4x32xbf16, #tpu.memory_space<vmem>>, vector<4x32xbf16>
    %cst_7 = arith.constant dense<0.000000e+00> : vector<112x32xf32>
    %6 = tpu.matmul %4, %5, %cst_7 {dimension_numbers = #tpu.dot_dimension_numbers<[1], [0], [0], [1], [0, 0, 1, 1], [], []>} : vector<112x4xbf16>, vector<4x32xbf16>, vector<112x32xf32> -> vector<112x32xf32>
    %7 = arith.truncf %6 : vector<112x32xf32> to vector<112x32xbf16>
    %c19 = arith.constant 19 : index
    %c0_8 = arith.constant 0 : index
    %8 = vector.load %arg22[%c19, %c0_8] : memref<144x256xbf16, #tpu.memory_space<vmem>>, vector<112x32xbf16>
    tpu.vector_store %arg22[%c19, %c0_8], %7 {strides = array<i32>} : memref<144x256xbf16, #tpu.memory_space<vmem>>, vector<112x32xbf16>,
    %c18 = arith.constant 18 : index
    %c32 = arith.constant 32 : index
    %9 = vector.load %arg22[%c18, %c32] : memref<144x256xbf16, #tpu.memory_space<vmem>>, vector<112x32xbf16>
    tpu.vector_store %arg22[%c18, %c32], %7 {strides = array<i32>} : memref<144x256xbf16, #tpu.memory_space<vmem>>, vector<112x32xbf16>,
    %c17 = arith.constant 17 : index
    %c64 = arith.constant 64 : index
    %10 = vector.load %arg22[%c17, %c64] : memref<144x256xbf16, #tpu.memory_space<vmem>>, vector<112x32xbf16>
    tpu.vector_store %arg22[%c17, %c64], %7 {strides = array<i32>} : memref<144x256xbf16, #tpu.memory_space<vmem>>, vector<112x32xbf16>,
    %c16 = arith.constant 16 : index
    %c96 = arith.constant 96 : index
    %11 = vector.load %arg22[%c16, %c96] : memref<144x256xbf16, #tpu.memory_space<vmem>>, vector<112x32xbf16>
    tpu.vector_store %arg22[%c16, %c96], %7 {strides = array<i32>} : memref<144x256xbf16, #tpu.memory_space<vmem>>, vector<112x32xbf16>,
    %c15 = arith.constant 15 : index
    %c128 = arith.constant 128 : index
    %12 = vector.load %arg22[%c15, %c128] : memref<144x256xbf16, #tpu.memory_space<vmem>>, vector<112x32xbf16>
    tpu.vector_store %arg22[%c15, %c128], %7 {strides = array<i32>} : memref<144x256xbf16, #tpu.memory_space<vmem>>, vector<112x32xbf16>,
    %c14 = arith.constant 14 : index
    %c160 = arith.constant 160 : index
    %13 = vector.load %arg22[%c14, %c160] : memref<144x256xbf16, #tpu.memory_space<vmem>>, vector<112x32xbf16>
    tpu.vector_store %arg22[%c14, %c160], %7 {strides = array<i32>} : memref<144x256xbf16, #tpu.memory_space<vmem>>, vector<112x32xbf16>,
    %c13 = arith.constant 13 : index
    %c192 = arith.constant 192 : index
    %14 = vector.load %arg22[%c13, %c192] : memref<144x256xbf16, #tpu.memory_space<vmem>>, vector<112x32xbf16>
    tpu.vector_store %arg22[%c13, %c192], %7 {strides = array<i32>} : memref<144x256xbf16, #tpu.memory_space<vmem>>, vector<112x32xbf16>,
    %c12 = arith.constant 12 : index
    %c224 = arith.constant 224 : index
    %15 = vector.load %arg22[%c12, %c224] : memref<144x256xbf16, #tpu.memory_space<vmem>>, vector<112x32xbf16>
    tpu.vector_store %arg22[%c12, %c224], %7 {strides = array<i32>} : memref<144x256xbf16, #tpu.memory_space<vmem>>, vector<112x32xbf16>,
    %cst_9 = arith.constant 0.000000e+00 : f32
    %16 = vector.broadcast %cst_9 : f32 to vector<112x1xf32>
    %17 = arith.cmpf ogt, %0, %16 : vector<112x1xf32>
    %cst_10 = arith.constant 0xFF800000 : f32
    %18 = vector.shape_cast %17 : vector<112x1xi1> to vector<112x1xi1>
    %19 = vector.broadcast %18 : vector<112x1xi1> to vector<112x4xi1>
    %20 = vector.broadcast %cst_10 : f32 to vector<112x4xf32>
    %21 = arith.select %19, %1, %20 : vector<112x4xi1>, vector<112x4xf32>
    %cst_11 = arith.constant 0.000000e+00 : f32
    %22 = vector.broadcast %cst_11 : f32 to vector<1x4xf32>
    %23 = vector.extract_strided_slice %21 {offsets = [0, 0], sizes = [111, 4], strides = [1, 1]} : vector<112x4xf32> to vector<111x4xf32>
    %24 = tpu.concatenate %22, %23 in 0 : vector<1x4xf32>, vector<111x4xf32> -> vector<112x4xf32>
    %25 = vector.extract_strided_slice %21 {offsets = [1, 0], sizes = [111, 4], strides = [1, 1]} : vector<112x4xf32> to vector<111x4xf32>
    %26 = tpu.concatenate %25, %22 in 0 : vector<111x4xf32>, vector<1x4xf32> -> vector<112x4xf32>
    %27 = arith.maximumf %24, %1 : vector<112x4xf32>
    %28 = arith.maximumf %27, %26 : vector<112x4xf32>
    %29 = arith.truncf %28 : vector<112x4xf32> to vector<112x4xbf16>
    %c0_12 = arith.constant 0 : index
    %c0_13 = arith.constant 0 : index
    %30 = vector.load %arg4[%c0_12, %c0_13] : memref<4x128xbf16, #tpu.memory_space<vmem>>, vector<4x128xbf16>
    %cst_14 = arith.constant dense<0.000000e+00> : vector<112x128xf32>
    %31 = tpu.matmul %29, %30, %cst_14 {dimension_numbers = #tpu.dot_dimension_numbers<[1], [0], [0], [1], [0, 0, 1, 1], [], []>} : vector<112x4xbf16>, vector<4x128xbf16>, vector<112x128xf32> -> vector<112x128xf32>
    %c0_15 = arith.constant 0 : index
    %c0_16 = arith.constant 0 : index
    %32 = vector.load %arg22[%c0_15, %c0_16] : memref<144x256xbf16, #tpu.memory_space<vmem>>, vector<112x256xbf16>
    %c0_17 = arith.constant 0 : index
    %c0_18 = arith.constant 0 : index
    %c0_19 = arith.constant 0 : index
    %33 = vector.load %arg3[%c0_17, %c0_18, %c0_19] : memref<5x256x128xbf16, #tpu.memory_space<vmem>>, vector<1x256x128xbf16>
    %34 = vector.shape_cast %33 : vector<1x256x128xbf16> to vector<256x128xbf16>
    %cst_20 = arith.constant dense<0.000000e+00> : vector<112x128xf32>
    %35 = tpu.matmul %32, %34, %cst_20 {dimension_numbers = #tpu.dot_dimension_numbers<[1], [0], [0], [1], [0, 0, 1, 1], [], []>} : vector<112x256xbf16>, vector<256x128xbf16>, vector<112x128xf32> -> vector<112x128xf32>
    %36 = arith.addf %31, %35 : vector<112x128xf32>
    %c8 = arith.constant 8 : index
    %c0_21 = arith.constant 0 : index
    %37 = vector.load %arg22[%c8, %c0_21] : memref<144x256xbf16, #tpu.memory_space<vmem>>, vector<112x256xbf16>
    %c1 = arith.constant 1 : index
    %c0_22 = arith.constant 0 : index
    %c0_23 = arith.constant 0 : index
    %38 = vector.load %arg3[%c1, %c0_22, %c0_23] : memref<5x256x128xbf16, #tpu.memory_space<vmem>>, vector<1x256x128xbf16>
    %39 = vector.shape_cast %38 : vector<1x256x128xbf16> to vector<256x128xbf16>
    %cst_24 = arith.constant dense<0.000000e+00> : vector<112x128xf32>
    %40 = tpu.matmul %37, %39, %cst_24 {dimension_numbers = #tpu.dot_dimension_numbers<[1], [0], [0], [1], [0, 0, 1, 1], [], []>} : vector<112x256xbf16>, vector<256x128xbf16>, vector<112x128xf32> -> vector<112x128xf32>
    %41 = arith.addf %36, %40 : vector<112x128xf32>
    %c16_25 = arith.constant 16 : index
    %c0_26 = arith.constant 0 : index
    %42 = vector.load %arg22[%c16_25, %c0_26] : memref<144x256xbf16, #tpu.memory_space<vmem>>, vector<112x256xbf16>
    %c2 = arith.constant 2 : index
    %c0_27 = arith.constant 0 : index
    %c0_28 = arith.constant 0 : index
    %43 = vector.load %arg3[%c2, %c0_27, %c0_28] : memref<5x256x128xbf16, #tpu.memory_space<vmem>>, vector<1x256x128xbf16>
    %44 = vector.shape_cast %43 : vector<1x256x128xbf16> to vector<256x128xbf16>
    %cst_29 = arith.constant dense<0.000000e+00> : vector<112x128xf32>
    %45 = tpu.matmul %42, %44, %cst_29 {dimension_numbers = #tpu.dot_dimension_numbers<[1], [0], [0], [1], [0, 0, 1, 1], [], []>} : vector<112x256xbf16>, vector<256x128xbf16>, vector<112x128xf32> -> vector<112x128xf32>
    %46 = arith.addf %41, %45 : vector<112x128xf32>
    %c24 = arith.constant 24 : index
    %c0_30 = arith.constant 0 : index
    %47 = vector.load %arg22[%c24, %c0_30] : memref<144x256xbf16, #tpu.memory_space<vmem>>, vector<112x256xbf16>
    %c3 = arith.constant 3 : index
    %c0_31 = arith.constant 0 : index
    %c0_32 = arith.constant 0 : index
    %48 = vector.load %arg3[%c3, %c0_31, %c0_32] : memref<5x256x128xbf16, #tpu.memory_space<vmem>>, vector<1x256x128xbf16>
    %49 = vector.shape_cast %48 : vector<1x256x128xbf16> to vector<256x128xbf16>
    %cst_33 = arith.constant dense<0.000000e+00> : vector<112x128xf32>
    %50 = tpu.matmul %47, %49, %cst_33 {dimension_numbers = #tpu.dot_dimension_numbers<[1], [0], [0], [1], [0, 0, 1, 1], [], []>} : vector<112x256xbf16>, vector<256x128xbf16>, vector<112x128xf32> -> vector<112x128xf32>
    %51 = arith.addf %46, %50 : vector<112x128xf32>
    %c32_34 = arith.constant 32 : index
    %c0_35 = arith.constant 0 : index
    %52 = vector.load %arg22[%c32_34, %c0_35] : memref<144x256xbf16, #tpu.memory_space<vmem>>, vector<112x256xbf16>
    %c4 = arith.constant 4 : index
    %c0_36 = arith.constant 0 : index
    %c0_37 = arith.constant 0 : index
    %53 = vector.load %arg3[%c4, %c0_36, %c0_37] : memref<5x256x128xbf16, #tpu.memory_space<vmem>>, vector<1x256x128xbf16>
    %54 = vector.shape_cast %53 : vector<1x256x128xbf16> to vector<256x128xbf16>
    %cst_38 = arith.constant dense<0.000000e+00> : vector<112x128xf32>
    %55 = tpu.matmul %52, %54, %cst_38 {dimension_numbers = #tpu.dot_dimension_numbers<[1], [0], [0], [1], [0, 0, 1, 1], [], []>} : vector<112x256xbf16>, vector<256x128xbf16>, vector<112x128xf32> -> vector<112x128xf32>
    %56 = arith.addf %51, %55 : vector<112x128xf32>
    %c0_39 = arith.constant 0 : index
    %c0_40 = arith.constant 0 : index
    %57 = vector.load %arg5[%c0_39, %c0_40] : memref<1x128xf32, #tpu.memory_space<vmem>>, vector<1x128xf32>
    %c0_41 = arith.constant 0 : index
    %c0_42 = arith.constant 0 : index
    %58 = vector.load %arg6[%c0_41, %c0_42] : memref<1x128xf32, #tpu.memory_space<vmem>>, vector<1x128xf32>
    %59 = vector.broadcast %0 : vector<112x1xf32> to vector<112x128xf32>
    %60 = arith.mulf %56, %59 : vector<112x128xf32>
    %cst_43 = arith.constant dense<0.000000e+00> : vector<128xf32>
    %61 = vector.multi_reduction <add>, %60, %cst_43 [0] : vector<112x128xf32> to vector<128xf32>
    %62 = vector.shape_cast %61 : vector<128xf32> to vector<1x128xf32>
    %cst_44 = arith.constant 3.125000e-02 : f32
    %63 = vector.broadcast %cst_44 : f32 to vector<1x128xf32>
    %64 = arith.mulf %62, %63 : vector<1x128xf32>
    %65 = vector.broadcast %64 : vector<1x128xf32> to vector<112x128xf32>
    %66 = arith.subf %56, %65 : vector<112x128xf32>
    %67 = arith.mulf %66, %66 : vector<112x128xf32>
    %68 = vector.broadcast %0 : vector<112x1xf32> to vector<112x128xf32>
    %69 = arith.mulf %67, %68 : vector<112x128xf32>
    %cst_45 = arith.constant dense<0.000000e+00> : vector<128xf32>
    %70 = vector.multi_reduction <add>, %69, %cst_45 [0] : vector<112x128xf32> to vector<128xf32>
    %71 = vector.shape_cast %70 : vector<128xf32> to vector<1x128xf32>
    %cst_46 = arith.constant 3.125000e-02 : f32
    %72 = vector.broadcast %cst_46 : f32 to vector<1x128xf32>
    %73 = arith.mulf %71, %72 : vector<1x128xf32>
    %cst_47 = arith.constant 9.99999974E-6 : f32
    %74 = vector.broadcast %cst_47 : f32 to vector<1x128xf32>
    %75 = arith.addf %73, %74 : vector<1x128xf32>
    %76 = math.rsqrt %75 : vector<1x128xf32>
    %77 = arith.mulf %76, %57 : vector<1x128xf32>
    %78 = vector.broadcast %77 : vector<1x128xf32> to vector<112x128xf32>
    %79 = arith.mulf %66, %78 : vector<112x128xf32>
    %80 = vector.broadcast %58 : vector<1x128xf32> to vector<112x128xf32>
    %81 = arith.addf %79, %80 : vector<112x128xf32>
    %cst_48 = arith.constant 0.000000e+00 : f32
    %82 = vector.broadcast %cst_48 : f32 to vector<112x128xf32>
    %83 = arith.maximumf %81, %82 : vector<112x128xf32>
    %84 = vector.broadcast %0 : vector<112x1xf32> to vector<112x128xf32>
    %85 = arith.mulf %83, %84 : vector<112x128xf32>
    %86 = arith.truncf %85 : vector<112x128xf32> to vector<112x128xbf16>
    %c0_49 = arith.constant 0 : index
    %c0_50 = arith.constant 0 : index
    %87 = vector.load %arg7[%c0_49, %c0_50] : memref<128x32xbf16, #tpu.memory_space<vmem>>, vector<128x32xbf16>
    %cst_51 = arith.constant dense<0.000000e+00> : vector<112x32xf32>
    %88 = tpu.matmul %86, %87, %cst_51 {dimension_numbers = #tpu.dot_dimension_numbers<[1], [0], [0], [1], [0, 0, 1, 1], [], []>} : vector<112x128xbf16>, vector<128x32xbf16>, vector<112x32xf32> -> vector<112x32xf32>
    %89 = arith.truncf %88 : vector<112x32xf32> to vector<112x32xbf16>
    %c19_52 = arith.constant 19 : index
    %c0_53 = arith.constant 0 : index
    %90 = vector.load %arg22[%c19_52, %c0_53] : memref<144x256xbf16, #tpu.memory_space<vmem>>, vector<112x32xbf16>
    tpu.vector_store %arg22[%c19_52, %c0_53], %89 {strides = array<i32>} : memref<144x256xbf16, #tpu.memory_space<vmem>>, vector<112x32xbf16>,
    %c18_54 = arith.constant 18 : index
    %c32_55 = arith.constant 32 : index
    %91 = vector.load %arg22[%c18_54, %c32_55] : memref<144x256xbf16, #tpu.memory_space<vmem>>, vector<112x32xbf16>
    tpu.vector_store %arg22[%c18_54, %c32_55], %89 {strides = array<i32>} : memref<144x256xbf16, #tpu.memory_space<vmem>>, vector<112x32xbf16>,
    %c17_56 = arith.constant 17 : index
    %c64_57 = arith.constant 64 : index
    %92 = vector.load %arg22[%c17_56, %c64_57] : memref<144x256xbf16, #tpu.memory_space<vmem>>, vector<112x32xbf16>
    tpu.vector_store %arg22[%c17_56, %c64_57], %89 {strides = array<i32>} : memref<144x256xbf16, #tpu.memory_space<vmem>>, vector<112x32xbf16>,
    %c16_58 = arith.constant 16 : index
    %c96_59 = arith.constant 96 : index
    %93 = vector.load %arg22[%c16_58, %c96_59] : memref<144x256xbf16, #tpu.memory_space<vmem>>, vector<112x32xbf16>
    tpu.vector_store %arg22[%c16_58, %c96_59], %89 {strides = array<i32>} : memref<144x256xbf16, #tpu.memory_space<vmem>>, vector<112x32xbf16>,
    %c15_60 = arith.constant 15 : index
    %c128_61 = arith.constant 128 : index
    %94 = vector.load %arg22[%c15_60, %c128_61] : memref<144x256xbf16, #tpu.memory_space<vmem>>, vector<112x32xbf16>
    tpu.vector_store %arg22[%c15_60, %c128_61], %89 {strides = array<i32>} : memref<144x256xbf16, #tpu.memory_space<vmem>>, vector<112x32xbf16>,
    %c14_62 = arith.constant 14 : index
    %c160_63 = arith.constant 160 : index
    %95 = vector.load %arg22[%c14_62, %c160_63] : memref<144x256xbf16, #tpu.memory_space<vmem>>, vector<112x32xbf16>
    tpu.vector_store %arg22[%c14_62, %c160_63], %89 {strides = array<i32>} : memref<144x256xbf16, #tpu.memory_space<vmem>>, vector<112x32xbf16>,
    %c13_64 = arith.constant 13 : index
    %c192_65 = arith.constant 192 : index
    %96 = vector.load %arg22[%c13_64, %c192_65] : memref<144x256xbf16, #tpu.memory_space<vmem>>, vector<112x32xbf16>
    tpu.vector_store %arg22[%c13_64, %c192_65], %89 {strides = array<i32>} : memref<144x256xbf16, #tpu.memory_space<vmem>>, vector<112x32xbf16>,
    %c12_66 = arith.constant 12 : index
    %c224_67 = arith.constant 224 : index
    %97 = vector.load %arg22[%c12_66, %c224_67] : memref<144x256xbf16, #tpu.memory_space<vmem>>, vector<112x32xbf16>
    tpu.vector_store %arg22[%c12_66, %c224_67], %89 {strides = array<i32>} : memref<144x256xbf16, #tpu.memory_space<vmem>>, vector<112x32xbf16>,
    %cst_68 = arith.constant 0.000000e+00 : f32
    %98 = vector.broadcast %cst_68 : f32 to vector<1x128xf32>
    %99 = vector.extract_strided_slice %85 {offsets = [0, 0], sizes = [111, 128], strides = [1, 1]} : vector<112x128xf32> to vector<111x128xf32>
    %100 = tpu.concatenate %98, %99 in 0 : vector<1x128xf32>, vector<111x128xf32> -> vector<112x128xf32>
    %101 = vector.extract_strided_slice %85 {offsets = [1, 0], sizes = [111, 128], strides = [1, 1]} : vector<112x128xf32> to vector<111x128xf32>
    %102 = tpu.concatenate %101, %98 in 0 : vector<111x128xf32>, vector<1x128xf32> -> vector<112x128xf32>
    %103 = arith.maximumf %100, %85 : vector<112x128xf32>
    %104 = arith.maximumf %103, %102 : vector<112x128xf32>
    %105 = arith.truncf %104 : vector<112x128xf32> to vector<112x128xbf16>
    %c0_69 = arith.constant 0 : index
    %c0_70 = arith.constant 0 : index
    %106 = vector.load %arg9[%c0_69, %c0_70] : memref<128x128xbf16, #tpu.memory_space<vmem>>, vector<128x128xbf16>
    %cst_71 = arith.constant dense<0.000000e+00> : vector<112x128xf32>
    %107 = tpu.matmul %105, %106, %cst_71 {dimension_numbers = #tpu.dot_dimension_numbers<[1], [0], [0], [1], [0, 0, 1, 1], [], []>} : vector<112x128xbf16>, vector<128x128xbf16>, vector<112x128xf32> -> vector<112x128xf32>
    %c0_72 = arith.constant 0 : index
    %c0_73 = arith.constant 0 : index
    %108 = vector.load %arg22[%c0_72, %c0_73] : memref<144x256xbf16, #tpu.memory_space<vmem>>, vector<112x256xbf16>
    %c0_74 = arith.constant 0 : index
    %c0_75 = arith.constant 0 : index
    %c0_76 = arith.constant 0 : index
    %109 = vector.load %arg8[%c0_74, %c0_75, %c0_76] : memref<5x256x128xbf16, #tpu.memory_space<vmem>>, vector<1x256x128xbf16>
    %110 = vector.shape_cast %109 : vector<1x256x128xbf16> to vector<256x128xbf16>
    %cst_77 = arith.constant dense<0.000000e+00> : vector<112x128xf32>
    %111 = tpu.matmul %108, %110, %cst_77 {dimension_numbers = #tpu.dot_dimension_numbers<[1], [0], [0], [1], [0, 0, 1, 1], [], []>} : vector<112x256xbf16>, vector<256x128xbf16>, vector<112x128xf32> -> vector<112x128xf32>
    %112 = arith.addf %107, %111 : vector<112x128xf32>
    %c8_78 = arith.constant 8 : index
    %c0_79 = arith.constant 0 : index
    %113 = vector.load %arg22[%c8_78, %c0_79] : memref<144x256xbf16, #tpu.memory_space<vmem>>, vector<112x256xbf16>
    %c1_80 = arith.constant 1 : index
    %c0_81 = arith.constant 0 : index
    %c0_82 = arith.constant 0 : index
    %114 = vector.load %arg8[%c1_80, %c0_81, %c0_82] : memref<5x256x128xbf16, #tpu.memory_space<vmem>>, vector<1x256x128xbf16>
    %115 = vector.shape_cast %114 : vector<1x256x128xbf16> to vector<256x128xbf16>
    %cst_83 = arith.constant dense<0.000000e+00> : vector<112x128xf32>
    %116 = tpu.matmul %113, %115, %cst_83 {dimension_numbers = #tpu.dot_dimension_numbers<[1], [0], [0], [1], [0, 0, 1, 1], [], []>} : vector<112x256xbf16>, vector<256x128xbf16>, vector<112x128xf32> -> vector<112x128xf32>
    %117 = arith.addf %112, %116 : vector<112x128xf32>
    %c16_84 = arith.constant 16 : index
    %c0_85 = arith.constant 0 : index
    %118 = vector.load %arg22[%c16_84, %c0_85] : memref<144x256xbf16, #tpu.memory_space<vmem>>, vector<112x256xbf16>
    %c2_86 = arith.constant 2 : index
    %c0_87 = arith.constant 0 : index
    %c0_88 = arith.constant 0 : index
    %119 = vector.load %arg8[%c2_86, %c0_87, %c0_88] : memref<5x256x128xbf16, #tpu.memory_space<vmem>>, vector<1x256x128xbf16>
    %120 = vector.shape_cast %119 : vector<1x256x128xbf16> to vector<256x128xbf16>
    %cst_89 = arith.constant dense<0.000000e+00> : vector<112x128xf32>
    %121 = tpu.matmul %118, %120, %cst_89 {dimension_numbers = #tpu.dot_dimension_numbers<[1], [0], [0], [1], [0, 0, 1, 1], [], []>} : vector<112x256xbf16>, vector<256x128xbf16>, vector<112x128xf32> -> vector<112x128xf32>
    %122 = arith.addf %117, %121 : vector<112x128xf32>
    %c24_90 = arith.constant 24 : index
    %c0_91 = arith.constant 0 : index
    %123 = vector.load %arg22[%c24_90, %c0_91] : memref<144x256xbf16, #tpu.memory_space<vmem>>, vector<112x256xbf16>
    %c3_92 = arith.constant 3 : index
    %c0_93 = arith.constant 0 : index
    %c0_94 = arith.constant 0 : index
    %124 = vector.load %arg8[%c3_92, %c0_93, %c0_94] : memref<5x256x128xbf16, #tpu.memory_space<vmem>>, vector<1x256x128xbf16>
    %125 = vector.shape_cast %124 : vector<1x256x128xbf16> to vector<256x128xbf16>
    %cst_95 = arith.constant dense<0.000000e+00> : vector<112x128xf32>
    %126 = tpu.matmul %123, %125, %cst_95 {dimension_numbers = #tpu.dot_dimension_numbers<[1], [0], [0], [1], [0, 0, 1, 1], [], []>} : vector<112x256xbf16>, vector<256x128xbf16>, vector<112x128xf32> -> vector<112x128xf32>
    %127 = arith.addf %122, %126 : vector<112x128xf32>
    %c32_96 = arith.constant 32 : index
    %c0_97 = arith.constant 0 : index
    %128 = vector.load %arg22[%c32_96, %c0_97] : memref<144x256xbf16, #tpu.memory_space<vmem>>, vector<112x256xbf16>
    %c4_98 = arith.constant 4 : index
    %c0_99 = arith.constant 0 : index
    %c0_100 = arith.constant 0 : index
    %129 = vector.load %arg8[%c4_98, %c0_99, %c0_100] : memref<5x256x128xbf16, #tpu.memory_space<vmem>>, vector<1x256x128xbf16>
    %130 = vector.shape_cast %129 : vector<1x256x128xbf16> to vector<256x128xbf16>
    %cst_101 = arith.constant dense<0.000000e+00> : vector<112x128xf32>
    %131 = tpu.matmul %128, %130, %cst_101 {dimension_numbers = #tpu.dot_dimension_numbers<[1], [0], [0], [1], [0, 0, 1, 1], [], []>} : vector<112x256xbf16>, vector<256x128xbf16>, vector<112x128xf32> -> vector<112x128xf32>
    %132 = arith.addf %127, %131 : vector<112x128xf32>
    %c0_102 = arith.constant 0 : index
    %c0_103 = arith.constant 0 : index
    %133 = vector.load %arg10[%c0_102, %c0_103] : memref<1x128xf32, #tpu.memory_space<vmem>>, vector<1x128xf32>
    %c0_104 = arith.constant 0 : index
    %c0_105 = arith.constant 0 : index
    %134 = vector.load %arg11[%c0_104, %c0_105] : memref<1x128xf32, #tpu.memory_space<vmem>>, vector<1x128xf32>
    %135 = vector.broadcast %0 : vector<112x1xf32> to vector<112x128xf32>
    %136 = arith.mulf %132, %135 : vector<112x128xf32>
    %cst_106 = arith.constant dense<0.000000e+00> : vector<128xf32>
    %137 = vector.multi_reduction <add>, %136, %cst_106 [0] : vector<112x128xf32> to vector<128xf32>
    %138 = vector.shape_cast %137 : vector<128xf32> to vector<1x128xf32>
    %cst_107 = arith.constant 3.125000e-02 : f32
    %139 = vector.broadcast %cst_107 : f32 to vector<1x128xf32>
    %140 = arith.mulf %138, %139 : vector<1x128xf32>
    %141 = vector.broadcast %140 : vector<1x128xf32> to vector<112x128xf32>
    %142 = arith.subf %132, %141 : vector<112x128xf32>
    %143 = arith.mulf %142, %142 : vector<112x128xf32>
    %144 = vector.broadcast %0 : vector<112x1xf32> to vector<112x128xf32>
    %145 = arith.mulf %143, %144 : vector<112x128xf32>
    %cst_108 = arith.constant dense<0.000000e+00> : vector<128xf32>
    %146 = vector.multi_reduction <add>, %145, %cst_108 [0] : vector<112x128xf32> to vector<128xf32>
    %147 = vector.shape_cast %146 : vector<128xf32> to vector<1x128xf32>
    %cst_109 = arith.constant 3.125000e-02 : f32
    %148 = vector.broadcast %cst_109 : f32 to vector<1x128xf32>
    %149 = arith.mulf %147, %148 : vector<1x128xf32>
    %cst_110 = arith.constant 9.99999974E-6 : f32
    %150 = vector.broadcast %cst_110 : f32 to vector<1x128xf32>
    %151 = arith.addf %149, %150 : vector<1x128xf32>
    %152 = math.rsqrt %151 : vector<1x128xf32>
    %153 = arith.mulf %152, %133 : vector<1x128xf32>
    %154 = vector.broadcast %153 : vector<1x128xf32> to vector<112x128xf32>
    %155 = arith.mulf %142, %154 : vector<112x128xf32>
    %156 = vector.broadcast %134 : vector<1x128xf32> to vector<112x128xf32>
    %157 = arith.addf %155, %156 : vector<112x128xf32>
    %cst_111 = arith.constant 0.000000e+00 : f32
    %158 = vector.broadcast %cst_111 : f32 to vector<112x128xf32>
    %159 = arith.maximumf %157, %158 : vector<112x128xf32>
    %160 = vector.broadcast %0 : vector<112x1xf32> to vector<112x128xf32>
    %161 = arith.mulf %159, %160 : vector<112x128xf32>
    %162 = arith.truncf %161 : vector<112x128xf32> to vector<112x128xbf16>
    %c0_112 = arith.constant 0 : index
    %c0_113 = arith.constant 0 : index
    %163 = vector.load %arg12[%c0_112, %c0_113] : memref<128x32xbf16, #tpu.memory_space<vmem>>, vector<128x32xbf16>
    %cst_114 = arith.constant dense<0.000000e+00> : vector<112x32xf32>
    %164 = tpu.matmul %162, %163, %cst_114 {dimension_numbers = #tpu.dot_dimension_numbers<[1], [0], [0], [1], [0, 0, 1, 1], [], []>} : vector<112x128xbf16>, vector<128x32xbf16>, vector<112x32xf32> -> vector<112x32xf32>
    %165 = arith.truncf %164 : vector<112x32xf32> to vector<112x32xbf16>
    %c19_115 = arith.constant 19 : index
    %c0_116 = arith.constant 0 : index
    %166 = vector.load %arg22[%c19_115, %c0_116] : memref<144x256xbf16, #tpu.memory_space<vmem>>, vector<112x32xbf16>
    tpu.vector_store %arg22[%c19_115, %c0_116], %165 {strides = array<i32>} : memref<144x256xbf16, #tpu.memory_space<vmem>>, vector<112x32xbf16>,
    %c18_117 = arith.constant 18 : index
    %c32_118 = arith.constant 32 : index
    %167 = vector.load %arg22[%c18_117, %c32_118] : memref<144x256xbf16, #tpu.memory_space<vmem>>, vector<112x32xbf16>
    tpu.vector_store %arg22[%c18_117, %c32_118], %165 {strides = array<i32>} : memref<144x256xbf16, #tpu.memory_space<vmem>>, vector<112x32xbf16>,
    %c17_119 = arith.constant 17 : index
    %c64_120 = arith.constant 64 : index
    %168 = vector.load %arg22[%c17_119, %c64_120] : memref<144x256xbf16, #tpu.memory_space<vmem>>, vector<112x32xbf16>
    tpu.vector_store %arg22[%c17_119, %c64_120], %165 {strides = array<i32>} : memref<144x256xbf16, #tpu.memory_space<vmem>>, vector<112x32xbf16>,
    %c16_121 = arith.constant 16 : index
    %c96_122 = arith.constant 96 : index
    %169 = vector.load %arg22[%c16_121, %c96_122] : memref<144x256xbf16, #tpu.memory_space<vmem>>, vector<112x32xbf16>
    tpu.vector_store %arg22[%c16_121, %c96_122], %165 {strides = array<i32>} : memref<144x256xbf16, #tpu.memory_space<vmem>>, vector<112x32xbf16>,
    %c15_123 = arith.constant 15 : index
    %c128_124 = arith.constant 128 : index
    %170 = vector.load %arg22[%c15_123, %c128_124] : memref<144x256xbf16, #tpu.memory_space<vmem>>, vector<112x32xbf16>
    tpu.vector_store %arg22[%c15_123, %c128_124], %165 {strides = array<i32>} : memref<144x256xbf16, #tpu.memory_space<vmem>>, vector<112x32xbf16>,
    %c14_125 = arith.constant 14 : index
    %c160_126 = arith.constant 160 : index
    %171 = vector.load %arg22[%c14_125, %c160_126] : memref<144x256xbf16, #tpu.memory_space<vmem>>, vector<112x32xbf16>
    tpu.vector_store %arg22[%c14_125, %c160_126], %165 {strides = array<i32>} : memref<144x256xbf16, #tpu.memory_space<vmem>>, vector<112x32xbf16>,
    %c13_127 = arith.constant 13 : index
    %c192_128 = arith.constant 192 : index
    %172 = vector.load %arg22[%c13_127, %c192_128] : memref<144x256xbf16, #tpu.memory_space<vmem>>, vector<112x32xbf16>
    tpu.vector_store %arg22[%c13_127, %c192_128], %165 {strides = array<i32>} : memref<144x256xbf16, #tpu.memory_space<vmem>>, vector<112x32xbf16>,
    %c12_129 = arith.constant 12 : index
    %c224_130 = arith.constant 224 : index
    %173 = vector.load %arg22[%c12_129, %c224_130] : memref<144x256xbf16, #tpu.memory_space<vmem>>, vector<112x32xbf16>
    tpu.vector_store %arg22[%c12_129, %c224_130], %165 {strides = array<i32>} : memref<144x256xbf16, #tpu.memory_space<vmem>>, vector<112x32xbf16>,
    %cst_131 = arith.constant 0.000000e+00 : f32
    %174 = vector.broadcast %cst_131 : f32 to vector<1x128xf32>
    %175 = vector.extract_strided_slice %161 {offsets = [0, 0], sizes = [111, 128], strides = [1, 1]} : vector<112x128xf32> to vector<111x128xf32>
    %176 = tpu.concatenate %174, %175 in 0 : vector<1x128xf32>, vector<111x128xf32> -> vector<112x128xf32>
    %177 = vector.extract_strided_slice %161 {offsets = [1, 0], sizes = [111, 128], strides = [1, 1]} : vector<112x128xf32> to vector<111x128xf32>
    %178 = tpu.concatenate %177, %174 in 0 : vector<111x128xf32>, vector<1x128xf32> -> vector<112x128xf32>
    %179 = arith.maximumf %176, %161 : vector<112x128xf32>
    %180 = arith.maximumf %179, %178 : vector<112x128xf32>
    %181 = arith.truncf %180 : vector<112x128xf32> to vector<112x128xbf16>
    %c0_132 = arith.constant 0 : index
    %c0_133 = arith.constant 0 : index
    %182 = vector.load %arg14[%c0_132, %c0_133] : memref<128x128xbf16, #tpu.memory_space<vmem>>, vector<128x128xbf16>
    %cst_134 = arith.constant dense<0.000000e+00> : vector<112x128xf32>
    %183 = tpu.matmul %181, %182, %cst_134 {dimension_numbers = #tpu.dot_dimension_numbers<[1], [0], [0], [1], [0, 0, 1, 1], [], []>} : vector<112x128xbf16>, vector<128x128xbf16>, vector<112x128xf32> -> vector<112x128xf32>
    %c0_135 = arith.constant 0 : index
    %c0_136 = arith.constant 0 : index
    %184 = vector.load %arg22[%c0_135, %c0_136] : memref<144x256xbf16, #tpu.memory_space<vmem>>, vector<112x256xbf16>
    %c0_137 = arith.constant 0 : index
    %c0_138 = arith.constant 0 : index
    %c0_139 = arith.constant 0 : index
    %185 = vector.load %arg13[%c0_137, %c0_138, %c0_139] : memref<5x256x128xbf16, #tpu.memory_space<vmem>>, vector<1x256x128xbf16>
    %186 = vector.shape_cast %185 : vector<1x256x128xbf16> to vector<256x128xbf16>
    %cst_140 = arith.constant dense<0.000000e+00> : vector<112x128xf32>
    %187 = tpu.matmul %184, %186, %cst_140 {dimension_numbers = #tpu.dot_dimension_numbers<[1], [0], [0], [1], [0, 0, 1, 1], [], []>} : vector<112x256xbf16>, vector<256x128xbf16>, vector<112x128xf32> -> vector<112x128xf32>
    %188 = arith.addf %183, %187 : vector<112x128xf32>
    %c8_141 = arith.constant 8 : index
    %c0_142 = arith.constant 0 : index
    %189 = vector.load %arg22[%c8_141, %c0_142] : memref<144x256xbf16, #tpu.memory_space<vmem>>, vector<112x256xbf16>
    %c1_143 = arith.constant 1 : index
    %c0_144 = arith.constant 0 : index
    %c0_145 = arith.constant 0 : index
    %190 = vector.load %arg13[%c1_143, %c0_144, %c0_145] : memref<5x256x128xbf16, #tpu.memory_space<vmem>>, vector<1x256x128xbf16>
    %191 = vector.shape_cast %190 : vector<1x256x128xbf16> to vector<256x128xbf16>
    %cst_146 = arith.constant dense<0.000000e+00> : vector<112x128xf32>
    %192 = tpu.matmul %189, %191, %cst_146 {dimension_numbers = #tpu.dot_dimension_numbers<[1], [0], [0], [1], [0, 0, 1, 1], [], []>} : vector<112x256xbf16>, vector<256x128xbf16>, vector<112x128xf32> -> vector<112x128xf32>
    %193 = arith.addf %188, %192 : vector<112x128xf32>
    %c16_147 = arith.constant 16 : index
    %c0_148 = arith.constant 0 : index
    %194 = vector.load %arg22[%c16_147, %c0_148] : memref<144x256xbf16, #tpu.memory_space<vmem>>, vector<112x256xbf16>
    %c2_149 = arith.constant 2 : index
    %c0_150 = arith.constant 0 : index
    %c0_151 = arith.constant 0 : index
    %195 = vector.load %arg13[%c2_149, %c0_150, %c0_151] : memref<5x256x128xbf16, #tpu.memory_space<vmem>>, vector<1x256x128xbf16>
    %196 = vector.shape_cast %195 : vector<1x256x128xbf16> to vector<256x128xbf16>
    %cst_152 = arith.constant dense<0.000000e+00> : vector<112x128xf32>
    %197 = tpu.matmul %194, %196, %cst_152 {dimension_numbers = #tpu.dot_dimension_numbers<[1], [0], [0], [1], [0, 0, 1, 1], [], []>} : vector<112x256xbf16>, vector<256x128xbf16>, vector<112x128xf32> -> vector<112x128xf32>
    %198 = arith.addf %193, %197 : vector<112x128xf32>
    %c24_153 = arith.constant 24 : index
    %c0_154 = arith.constant 0 : index
    %199 = vector.load %arg22[%c24_153, %c0_154] : memref<144x256xbf16, #tpu.memory_space<vmem>>, vector<112x256xbf16>
    %c3_155 = arith.constant 3 : index
    %c0_156 = arith.constant 0 : index
    %c0_157 = arith.constant 0 : index
    %200 = vector.load %arg13[%c3_155, %c0_156, %c0_157] : memref<5x256x128xbf16, #tpu.memory_space<vmem>>, vector<1x256x128xbf16>
    %201 = vector.shape_cast %200 : vector<1x256x128xbf16> to vector<256x128xbf16>
    %cst_158 = arith.constant dense<0.000000e+00> : vector<112x128xf32>
    %202 = tpu.matmul %199, %201, %cst_158 {dimension_numbers = #tpu.dot_dimension_numbers<[1], [0], [0], [1], [0, 0, 1, 1], [], []>} : vector<112x256xbf16>, vector<256x128xbf16>, vector<112x128xf32> -> vector<112x128xf32>
    %203 = arith.addf %198, %202 : vector<112x128xf32>
    %c32_159 = arith.constant 32 : index
    %c0_160 = arith.constant 0 : index
    %204 = vector.load %arg22[%c32_159, %c0_160] : memref<144x256xbf16, #tpu.memory_space<vmem>>, vector<112x256xbf16>
    %c4_161 = arith.constant 4 : index
    %c0_162 = arith.constant 0 : index
    %c0_163 = arith.constant 0 : index
    %205 = vector.load %arg13[%c4_161, %c0_162, %c0_163] : memref<5x256x128xbf16, #tpu.memory_space<vmem>>, vector<1x256x128xbf16>
    %206 = vector.shape_cast %205 : vector<1x256x128xbf16> to vector<256x128xbf16>
    %cst_164 = arith.constant dense<0.000000e+00> : vector<112x128xf32>
    %207 = tpu.matmul %204, %206, %cst_164 {dimension_numbers = #tpu.dot_dimension_numbers<[1], [0], [0], [1], [0, 0, 1, 1], [], []>} : vector<112x256xbf16>, vector<256x128xbf16>, vector<112x128xf32> -> vector<112x128xf32>
    %208 = arith.addf %203, %207 : vector<112x128xf32>
    %c0_165 = arith.constant 0 : index
    %c0_166 = arith.constant 0 : index
    %209 = vector.load %arg15[%c0_165, %c0_166] : memref<1x128xf32, #tpu.memory_space<vmem>>, vector<1x128xf32>
    %c0_167 = arith.constant 0 : index
    %c0_168 = arith.constant 0 : index
    %210 = vector.load %arg16[%c0_167, %c0_168] : memref<1x128xf32, #tpu.memory_space<vmem>>, vector<1x128xf32>
    %211 = vector.broadcast %0 : vector<112x1xf32> to vector<112x128xf32>
    %212 = arith.mulf %208, %211 : vector<112x128xf32>
    %cst_169 = arith.constant dense<0.000000e+00> : vector<128xf32>
    %213 = vector.multi_reduction <add>, %212, %cst_169 [0] : vector<112x128xf32> to vector<128xf32>
    %214 = vector.shape_cast %213 : vector<128xf32> to vector<1x128xf32>
    %cst_170 = arith.constant 3.125000e-02 : f32
    %215 = vector.broadcast %cst_170 : f32 to vector<1x128xf32>
    %216 = arith.mulf %214, %215 : vector<1x128xf32>
    %217 = vector.broadcast %216 : vector<1x128xf32> to vector<112x128xf32>
    %218 = arith.subf %208, %217 : vector<112x128xf32>
    %219 = arith.mulf %218, %218 : vector<112x128xf32>
    %220 = vector.broadcast %0 : vector<112x1xf32> to vector<112x128xf32>
    %221 = arith.mulf %219, %220 : vector<112x128xf32>
    %cst_171 = arith.constant dense<0.000000e+00> : vector<128xf32>
    %222 = vector.multi_reduction <add>, %221, %cst_171 [0] : vector<112x128xf32> to vector<128xf32>
    %223 = vector.shape_cast %222 : vector<128xf32> to vector<1x128xf32>
    %cst_172 = arith.constant 3.125000e-02 : f32
    %224 = vector.broadcast %cst_172 : f32 to vector<1x128xf32>
    %225 = arith.mulf %223, %224 : vector<1x128xf32>
    %cst_173 = arith.constant 9.99999974E-6 : f32
    %226 = vector.broadcast %cst_173 : f32 to vector<1x128xf32>
    %227 = arith.addf %225, %226 : vector<1x128xf32>
    %228 = math.rsqrt %227 : vector<1x128xf32>
    %229 = arith.mulf %228, %209 : vector<1x128xf32>
    %230 = vector.broadcast %229 : vector<1x128xf32> to vector<112x128xf32>
    %231 = arith.mulf %218, %230 : vector<112x128xf32>
    %232 = vector.broadcast %210 : vector<1x128xf32> to vector<112x128xf32>
    %233 = arith.addf %231, %232 : vector<112x128xf32>
    %cst_174 = arith.constant 0.000000e+00 : f32
    %234 = vector.broadcast %cst_174 : f32 to vector<112x128xf32>
    %235 = arith.maximumf %233, %234 : vector<112x128xf32>
    %236 = arith.truncf %1 : vector<112x4xf32> to vector<112x4xbf16>
    %c0_175 = arith.constant 0 : index
    %c0_176 = arith.constant 0 : index
    %237 = vector.load %arg17[%c0_175, %c0_176] : memref<4x128xbf16, #tpu.memory_space<vmem>>, vector<4x128xbf16>
    %cst_177 = arith.constant dense<0.000000e+00> : vector<112x128xf32>
    %238 = tpu.matmul %236, %237, %cst_177 {dimension_numbers = #tpu.dot_dimension_numbers<[1], [0], [0], [1], [0, 0, 1, 1], [], []>} : vector<112x4xbf16>, vector<4x128xbf16>, vector<112x128xf32> -> vector<112x128xf32>
    %c0_178 = arith.constant 0 : index
    %c0_179 = arith.constant 0 : index
    %239 = vector.load %arg18[%c0_178, %c0_179] : memref<1x128xf32, #tpu.memory_space<vmem>>, vector<1x128xf32>
    %240 = vector.broadcast %239 : vector<1x128xf32> to vector<112x128xf32>
    %241 = arith.addf %238, %240 : vector<112x128xf32>
    %c0_180 = arith.constant 0 : index
    %c0_181 = arith.constant 0 : index
    %242 = vector.load %arg19[%c0_180, %c0_181] : memref<1x128xf32, #tpu.memory_space<vmem>>, vector<1x128xf32>
    %c0_182 = arith.constant 0 : index
    %c0_183 = arith.constant 0 : index
    %243 = vector.load %arg20[%c0_182, %c0_183] : memref<1x128xf32, #tpu.memory_space<vmem>>, vector<1x128xf32>
    %244 = vector.broadcast %0 : vector<112x1xf32> to vector<112x128xf32>
    %245 = arith.mulf %241, %244 : vector<112x128xf32>
    %cst_184 = arith.constant dense<0.000000e+00> : vector<128xf32>
    %246 = vector.multi_reduction <add>, %245, %cst_184 [0] : vector<112x128xf32> to vector<128xf32>
    %247 = vector.shape_cast %246 : vector<128xf32> to vector<1x128xf32>
    %cst_185 = arith.constant 3.125000e-02 : f32
    %248 = vector.broadcast %cst_185 : f32 to vector<1x128xf32>
    %249 = arith.mulf %247, %248 : vector<1x128xf32>
    %250 = vector.broadcast %249 : vector<1x128xf32> to vector<112x128xf32>
    %251 = arith.subf %241, %250 : vector<112x128xf32>
    %252 = arith.mulf %251, %251 : vector<112x128xf32>
    %253 = vector.broadcast %0 : vector<112x1xf32> to vector<112x128xf32>
    %254 = arith.mulf %252, %253 : vector<112x128xf32>
    %cst_186 = arith.constant dense<0.000000e+00> : vector<128xf32>
    %255 = vector.multi_reduction <add>, %254, %cst_186 [0] : vector<112x128xf32> to vector<128xf32>
    %256 = vector.shape_cast %255 : vector<128xf32> to vector<1x128xf32>
    %cst_187 = arith.constant 3.125000e-02 : f32
    %257 = vector.broadcast %cst_187 : f32 to vector<1x128xf32>
    %258 = arith.mulf %256, %257 : vector<1x128xf32>
    %cst_188 = arith.constant 9.99999974E-6 : f32
    %259 = vector.broadcast %cst_188 : f32 to vector<1x128xf32>
    %260 = arith.addf %258, %259 : vector<1x128xf32>
    %261 = math.rsqrt %260 : vector<1x128xf32>
    %262 = arith.mulf %261, %242 : vector<1x128xf32>
    %263 = vector.broadcast %262 : vector<1x128xf32> to vector<112x128xf32>
    %264 = arith.mulf %251, %263 : vector<112x128xf32>
    %265 = vector.broadcast %243 : vector<1x128xf32> to vector<112x128xf32>
    %266 = arith.addf %264, %265 : vector<112x128xf32>
    %267 = arith.addf %235, %266 : vector<112x128xf32>
    %cst_189 = arith.constant 0.000000e+00 : f32
    %268 = vector.broadcast %cst_189 : f32 to vector<112x128xf32>
    %269 = arith.maximumf %267, %268 : vector<112x128xf32>
    %c0_190 = arith.constant 0 : index
    %c0_191 = arith.constant 0 : index
    %270 = vector.load %arg21[%c0_190, %c0_191] : memref<112x128xf32, #tpu.memory_space<vmem>>, vector<112x128xf32>
    tpu.vector_store %arg21[%c0_190, %c0_191], %269 {strides = array<i32>} : memref<112x128xf32, #tpu.memory_space<vmem>>, vector<112x128xf32>,
    return
  }
}

</mosaic_0001>

<llo_original>
// kernel: tile.8
$region0: #{tile.8}
  #allocation0 [shape = 's32[1]{0}', space=sflag, size = 0x4, scoped, tag = 'scoped memory for tile.8']
  %s0 = inlined_call_operand.vmem [shape: f32[56], index: 0, kind: input, shape index: {}]
  %s1 = inlined_call_operand.vmem [shape: f32[2,56], index: 1, kind: output, shape index: {}]
  // Predicated region
  $region2: #{tile.8} parent=0 // pred_check
    _
  $region3: #{tile.8} parent=0 // pred_check_branch
    %3 = sbr.rel (0) target = $region5
  $region4: #{tile.8} parent=0 // pred_region
    _
  $region5: #{tile.8} parent=0 // pred_fallthru
    _
  %v4 = vld [vmem:[%s0] ss:$0 sm:$0xff]
  %5 = vst [vmem:[%s1] sm:$0x3] %v4

// kernel: tile.0
$region0: #{tile.0}
  %s0 = inlined_call_operand.vmem [shape: f32[2,56], index: 0, kind: input, shape index: {}]
  %s1 = inlined_call_operand.vmem [shape: f32[112,1], index: 1, kind: output, shape index: {}]
  $region1: #{tile.0} parent=0
    #allocation0 [shape = 'u8[4096]{0}', space=vmem, size = 0x1000, scoped, tag = 'scoped mem for input reshape']
    %s3 = sshll.u32 1, 2
    %s4 = ssub.s32 %s3, 1
    %v5 = vld [vmem:[%s0] sm:%s4]
    %6 = vst [vmem:[#allocation0] sm:%s4] %v5
    %v7 = vld [vmem:[#allocation0] sm:$0x3]
    %vm8 = vcmask 7168
    %9 = vst.msk [vmem:[%s1] ss:$56 sm:$0x3] %vm8, %v7
    %v10 = vld [vmem:[#allocation0] sm:$0x3]
    %11 = vrot.lane.b32.xlu0 %v10, 127
    %v12 = vpop.permute.xlu0 %11
    %vm13 = vcmask 7168
    %s14 = scalar_lea.vmem %s1, 1
    %15 = vst.msk [vmem:[%s14] ss:$56 sm:$0x3] %vm13, %v12
    %v16 = vld [vmem:[#allocation0] sm:$0x3]
    %17 = vrot.lane.b32.xlu0 %v16, 126
    %v18 = vpop.permute.xlu0 %17
    %vm19 = vcmask 7168
    %s20 = scalar_lea.vmem %s1, 2
    %21 = vst.msk [vmem:[%s20] ss:$56 sm:$0x3] %vm19, %v18
    %v22 = vld [vmem:[#allocation0] sm:$0x3]
    %23 = vrot.lane.b32.xlu0 %v22, 125
    %v24 = vpop.permute.xlu0 %23
    %vm25 = vcmask 7168
    %s26 = scalar_lea.vmem %s1, 3
    %27 = vst.msk [vmem:[%s26] ss:$56 sm:$0x3] %vm25, %v24
    %v28 = vld [vmem:[#allocation0] sm:$0x3]
    %29 = vrot.lane.b32.xlu0 %v28, 124
    %v30 = vpop.permute.xlu0 %29
    %vm31 = vcmask 7168
    %s32 = scalar_lea.vmem %s1, 4
    %33 = vst.msk [vmem:[%s32] ss:$56 sm:$0x3] %vm31, %v30
    %v34 = vld [vmem:[#allocation0] sm:$0x3]
    %35 = vrot.lane.b32.xlu0 %v34, 123
    %v36 = vpop.permute.xlu0 %35
    %vm37 = vcmask 7168
    %s38 = scalar_lea.vmem %s1, 5
    %39 = vst.msk [vmem:[%s38] ss:$56 sm:$0x3] %vm37, %v36
    %v40 = vld [vmem:[#allocation0] sm:$0x3]
    %41 = vrot.lane.b32.xlu0 %v40, 122
    %v42 = vpop.permute.xlu0 %41
    %vm43 = vcmask 7168
    %s44 = scalar_lea.vmem %s1, 6
    %45 = vst.msk [vmem:[%s44] ss:$56 sm:$0x3] %vm43, %v42
    %v46 = vld [vmem:[#allocation0] sm:$0x3]
    %47 = vrot.lane.b32.xlu0 %v46, 121
    %v48 = vpop.permute.xlu0 %47
    %vm49 = vcmask 7168
    %s50 = scalar_lea.vmem %s1, 7
    %51 = vst.msk [vmem:[%s50] ss:$56 sm:$0x3] %vm49, %v48
    %s52 = scalar_lea.vmem [#allocation0], 1
    %s53 = smov 3
    %v54 = vld [vmem:[%s52] ss:$-1 sm:%s53]
    %55 = vrot.lane.b32.xlu0 %v54, 120
    %v56 = vpop.permute.xlu0 %55
    %vm57 = vcmask 7168
    %s58 = scalar_lea.vmem %s1, 64
    %59 = vst.msk [vmem:[%s58] ss:$-56 sm:$0x3] %vm57, %v56
    %s60 = scalar_lea.vmem [#allocation0], 1
    %s61 = smov 3
    %v62 = vld [vmem:[%s60] ss:$-1 sm:%s61]
    %63 = vrot.lane.b32.xlu0 %v62, 119
    %v64 = vpop.permute.xlu0 %63
    %vm65 = vcmask 7168
    %s66 = scalar_lea.vmem %s1, 65
    %67 = vst.msk [vmem:[%s66] ss:$-56 sm:$0x3] %vm65, %v64
    %s68 = scalar_lea.vmem [#allocation0], 1
    %s69 = smov 3
    %v70 = vld [vmem:[%s68] ss:$-1 sm:%s69]
    %71 = vrot.lane.b32.xlu0 %v70, 118
    %v72 = vpop.permute.xlu0 %71
    %vm73 = vcmask 7168
    %s74 = scalar_lea.vmem %s1, 66
    %75 = vst.msk [vmem:[%s74] ss:$-56 sm:$0x3] %vm73, %v72
    %s76 = scalar_lea.vmem [#allocation0], 1
    %s77 = smov 3
    %v78 = vld [vmem:[%s76] ss:$-1 sm:%s77]
    %79 = vrot.lane.b32.xlu0 %v78, 117
    %v80 = vpop.permute.xlu0 %79
    %vm81 = vcmask 7168
    %s82 = scalar_lea.vmem %s1, 67
    %83 = vst.msk [vmem:[%s82] ss:$-56 sm:$0x3] %vm81, %v80
    %s84 = scalar_lea.vmem [#allocation0], 1
    %s85 = smov 3
    %v86 = vld [vmem:[%s84] ss:$-1 sm:%s85]
    %87 = vrot.lane.b32.xlu0 %v86, 116
    %v88 = vpop.permute.xlu0 %87
    %vm89 = vcmask 7168
    %s90 = scalar_lea.vmem %s1, 68
    %91 = vst.msk [vmem:[%s90] ss:$-56 sm:$0x3] %vm89, %v88
    %s92 = scalar_lea.vmem [#allocation0], 1
    %s93 = smov 3
    %v94 = vld [vmem:[%s92] ss:$-1 sm:%s93]
    %95 = vrot.lane.b32.xlu0 %v94, 115
    %v96 = vpop.permute.xlu0 %95
    %vm97 = vcmask 7168
    %s98 = scalar_lea.vmem %s1, 69
    %99 = vst.msk [vmem:[%s98] ss:$-56 sm:$0x3] %vm97, %v96
    %s100 = scalar_lea.vmem [#allocation0], 1
    %s101 = smov 3
    %v102 = vld [vmem:[%s100] ss:$-1 sm:%s101]
    %103 = vrot.lane.b32.xlu0 %v102, 114
    %v104 = vpop.permute.xlu0 %103
    %vm105 = vcmask 7168
    %s106 = scalar_lea.vmem %s1, 70
    %107 = vst.msk [vmem:[%s106] ss:$-56 sm:$0x3] %vm105, %v104
    %s108 = scalar_lea.vmem [#allocation0], 1
    %s109 = smov 3
    %v110 = vld [vmem:[%s108] ss:$-1 sm:%s109]
    %111 = vrot.lane.b32.xlu0 %v110, 113
    %v112 = vpop.permute.xlu0 %111
    %vm113 = vcmask 7168
    %s114 = scalar_lea.vmem %s1, 71
    %115 = vst.msk [vmem:[%s114] ss:$-56 sm:$0x3] %vm113, %v112
    %s116 = scalar_lea.vmem [#allocation0], 1
    %s117 = smov 3
    %v118 = vld [vmem:[%s116] ss:$-1 sm:%s117]
    %119 = vrot.lane.b32.xlu0 %v118, 112
    %v120 = vpop.permute.xlu0 %119
    %vm121 = vcmask 7168
    %s122 = scalar_lea.vmem %s1, 72
    %123 = vst.msk [vmem:[%s122] ss:$-56 sm:$0x3] %vm121, %v120
    %s124 = scalar_lea.vmem [#allocation0], 1
    %s125 = smov 3
    %v126 = vld [vmem:[%s124] ss:$-1 sm:%s125]
    %127 = vrot.lane.b32.xlu0 %v126, 111
    %v128 = vpop.permute.xlu0 %127
    %vm129 = vcmask 7168
    %s130 = scalar_lea.vmem %s1, 73
    %131 = vst.msk [vmem:[%s130] ss:$-56 sm:$0x3] %vm129, %v128
    %s132 = scalar_lea.vmem [#allocation0], 1
    %s133 = smov 3
    %v134 = vld [vmem:[%s132] ss:$-1 sm:%s133]
    %135 = vrot.lane.b32.xlu0 %v134, 110
    %v136 = vpop.permute.xlu0 %135
    %vm137 = vcmask 7168
    %s138 = scalar_lea.vmem %s1, 74
    %139 = vst.msk [vmem:[%s138] ss:$-56 sm:$0x3] %vm137, %v136
    %s140 = scalar_lea.vmem [#allocation0], 1
    %s141 = smov 3
    %v142 = vld [vmem:[%s140] ss:$-1 sm:%s141]
    %143 = vrot.lane.b32.xlu0 %v142, 109
    %v144 = vpop.permute.xlu0 %143
    %vm145 = vcmask 7168
    %s146 = scalar_lea.vmem %s1, 75
    %147 = vst.msk [vmem:[%s146] ss:$-56 sm:$0x3] %vm145, %v144
    %s148 = scalar_lea.vmem [#allocation0], 1
    %s149 = smov 3
    %v150 = vld [vmem:[%s148] ss:$-1 sm:%s149]
    %151 = vrot.lane.b32.xlu0 %v150, 108
    %v152 = vpop.permute.xlu0 %151
    %vm153 = vcmask 7168
    %s154 = scalar_lea.vmem %s1, 76
    %155 = vst.msk [vmem:[%s154] ss:$-56 sm:$0x3] %vm153, %v152
    %s156 = scalar_lea.vmem [#allocation0], 1
    %s157 = smov 3
    %v158 = vld [vmem:[%s156] ss:$-1 sm:%s157]
    %159 = vrot.lane.b32.xlu0 %v158, 107
    %v160 = vpop.permute.xlu0 %159
    %vm161 = vcmask 7168
    %s162 = scalar_lea.vmem %s1, 77
    %163 = vst.msk [vmem:[%s162] ss:$-56 sm:$0x3] %vm161, %v160
    %s164 = scalar_lea.vmem [#allocation0], 1
    %s165 = smov 3
    %v166 = vld [vmem:[%s164] ss:$-1 sm:%s165]
    %167 = vrot.lane.b32.xlu0 %v166, 106
    %v168 = vpop.permute.xlu0 %167
    %vm169 = vcmask 7168
    %s170 = scalar_lea.vmem %s1, 78
    %171 = vst.msk [vmem:[%s170] ss:$-56 sm:$0x3] %vm169, %v168
    %s172 = scalar_lea.vmem [#allocation0], 1
    %s173 = smov 3
    %v174 = vld [vmem:[%s172] ss:$-1 sm:%s173]
    %175 = vrot.lane.b32.xlu0 %v174, 105
    %v176 = vpop.permute.xlu0 %175
    %vm177 = vcmask 7168
    %s178 = scalar_lea.vmem %s1, 79
    %179 = vst.msk [vmem:[%s178] ss:$-56 sm:$0x3] %vm177, %v176
    %s180 = scalar_lea.vmem [#allocation0], 1
    %s181 = smov 3
    %v182 = vld [vmem:[%s180] ss:$-1 sm:%s181]
    %183 = vrot.lane.b32.xlu0 %v182, 104
    %v184 = vpop.permute.xlu0 %183
    %vm185 = vcmask 7168
    %s186 = scalar_lea.vmem %s1, 80
    %187 = vst.msk [vmem:[%s186] ss:$-56 sm:$0x3] %vm185, %v184
    %s188 = scalar_lea.vmem [#allocation0], 1
    %s189 = smov 3
    %v190 = vld [vmem:[%s188] ss:$-1 sm:%s189]
    %191 = vrot.lane.b32.xlu0 %v190, 103
    %v192 = vpop.permute.xlu0 %191
    %vm193 = vcmask 7168
    %s194 = scalar_lea.vmem %s1, 81
    %195 = vst.msk [vmem:[%s194] ss:$-56 sm:$0x3] %vm193, %v192
    %s196 = scalar_lea.vmem [#allocation0], 1
    %s197 = smov 3
    %v198 = vld [vmem:[%s196] ss:$-1 sm:%s197]
    %199 = vrot.lane.b32.xlu0 %v198, 102
    %v200 = vpop.permute.xlu0 %199
    %vm201 = vcmask 7168
    %s202 = scalar_lea.vmem %s1, 82
    %203 = vst.msk [vmem:[%s202] ss:$-56 sm:$0x3] %vm201, %v200
    %s204 = scalar_lea.vmem [#allocation0], 1
    %s205 = smov 3
    %v206 = vld [vmem:[%s204] ss:$-1 sm:%s205]
    %207 = vrot.lane.b32.xlu0 %v206, 101
    %v208 = vpop.permute.xlu0 %207
    %vm209 = vcmask 7168
    %s210 = scalar_lea.vmem %s1, 83
    %211 = vst.msk [vmem:[%s210] ss:$-56 sm:$0x3] %vm209, %v208
    %s212 = scalar_lea.vmem [#allocation0], 1
    %s213 = smov 3
    %v214 = vld [vmem:[%s212] ss:$-1 sm:%s213]
    %215 = vrot.lane.b32.xlu0 %v214, 100
    %v216 = vpop.permute.xlu0 %215
    %vm217 = vcmask 7168
    %s218 = scalar_lea.vmem %s1, 84
    %219 = vst.msk [vmem:[%s218] ss:$-56 sm:$0x3] %vm217, %v216
    %s220 = scalar_lea.vmem [#allocation0], 1
    %s221 = smov 3
    %v222 = vld [vmem:[%s220] ss:$-1 sm:%s221]
    %223 = vrot.lane.b32.xlu0 %v222, 99
    %v224 = vpop.permute.xlu0 %223
    %vm225 = vcmask 7168
    %s226 = scalar_lea.vmem %s1, 85
    %227 = vst.msk [vmem:[%s226] ss:$-56 sm:$0x3] %vm225, %v224
    %s228 = scalar_lea.vmem [#allocation0], 1
    %s229 = smov 3
    %v230 = vld [vmem:[%s228] ss:$-1 sm:%s229]
    %231 = vrot.lane.b32.xlu0 %v230, 98
    %v232 = vpop.permute.xlu0 %231
    %vm233 = vcmask 7168
    %s234 = scalar_lea.vmem %s1, 86
    %235 = vst.msk [vmem:[%s234] ss:$-56 sm:$0x3] %vm233, %v232
    %s236 = scalar_lea.vmem [#allocation0], 1
    %s237 = smov 3
    %v238 = vld [vmem:[%s236] ss:$-1 sm:%s237]
    %239 = vrot.lane.b32.xlu0 %v238, 97
    %v240 = vpop.permute.xlu0 %239
    %vm241 = vcmask 7168
    %s242 = scalar_lea.vmem %s1, 87
    %243 = vst.msk [vmem:[%s242] ss:$-56 sm:$0x3] %vm241, %v240
    %v244 = vld [vmem:[#allocation0] sm:$0x3]
    %245 = vrot.lane.b32.xlu0 %v244, 96
    %v246 = vpop.permute.xlu0 %245
    %vm247 = vcmask 7168
    %s248 = scalar_lea.vmem %s1, 32
    %249 = vst.msk [vmem:[%s248] ss:$56 sm:$0x3] %vm247, %v246
    %v250 = vld [vmem:[#allocation0] sm:$0x3]
    %251 = vrot.lane.b32.xlu0 %v250, 95
    %v252 = vpop.permute.xlu0 %251
    %vm253 = vcmask 7168
    %s254 = scalar_lea.vmem %s1, 33
    %255 = vst.msk [vmem:[%s254] ss:$56 sm:$0x3] %vm253, %v252
    %v256 = vld [vmem:[#allocation0] sm:$0x3]
    %257 = vrot.lane.b32.xlu0 %v256, 94
    %v258 = vpop.permute.xlu0 %257
    %vm259 = vcmask 7168
    %s260 = scalar_lea.vmem %s1, 34
    %261 = vst.msk [vmem:[%s260] ss:$56 sm:$0x3] %vm259, %v258
    %v262 = vld [vmem:[#allocation0] sm:$0x3]
    %263 = vrot.lane.b32.xlu0 %v262, 93
    %v264 = vpop.permute.xlu0 %263
    %vm265 = vcmask 7168
    %s266 = scalar_lea.vmem %s1, 35
    %267 = vst.msk [vmem:[%s266] ss:$56 sm:$0x3] %vm265, %v264
    %v268 = vld [vmem:[#allocation0] sm:$0x3]
    %269 = vrot.lane.b32.xlu0 %v268, 92
    %v270 = vpop.permute.xlu0 %269
    %vm271 = vcmask 7168
    %s272 = scalar_lea.vmem %s1, 36
    %273 = vst.msk [vmem:[%s272] ss:$56 sm:$0x3] %vm271, %v270
    %v274 = vld [vmem:[#allocation0] sm:$0x3]
    %275 = vrot.lane.b32.xlu0 %v274, 91
    %v276 = vpop.permute.xlu0 %275
    %vm277 = vcmask 7168
    %s278 = scalar_lea.vmem %s1, 37
    %279 = vst.msk [vmem:[%s278] ss:$56 sm:$0x3] %vm277, %v276
    %v280 = vld [vmem:[#allocation0] sm:$0x3]
    %281 = vrot.lane.b32.xlu0 %v280, 90
    %v282 = vpop.permute.xlu0 %281
    %vm283 = vcmask 7168
    %s284 = scalar_lea.vmem %s1, 38
    %285 = vst.msk [vmem:[%s284] ss:$56 sm:$0x3] %vm283, %v282
    %v286 = vld [vmem:[#allocation0] sm:$0x3]
    %287 = vrot.lane.b32.xlu0 %v286, 89
    %v288 = vpop.permute.xlu0 %287
    %vm289 = vcmask 7168
    %s290 = scalar_lea.vmem %s1, 39
    %291 = vst.msk [vmem:[%s290] ss:$56 sm:$0x3] %vm289, %v288
    %s292 = scalar_lea.vmem [#allocation0], 1
    %s293 = smov 3
    %v294 = vld [vmem:[%s292] ss:$-1 sm:%s293]
    %295 = vrot.lane.b32.xlu0 %v294, 88
    %v296 = vpop.permute.xlu0 %295
    %vm297 = vcmask 7168
    %s298 = scalar_lea.vmem %s1, 96
    %299 = vst.msk [vmem:[%s298] ss:$-56 sm:$0x3] %vm297, %v296
    %s300 = scalar_lea.vmem [#allocation0], 1
    %s301 = smov 3
    %v302 = vld [vmem:[%s300] ss:$-1 sm:%s301]
    %303 = vrot.lane.b32.xlu0 %v302, 87
    %v304 = vpop.permute.xlu0 %303
    %vm305 = vcmask 7168
    %s306 = scalar_lea.vmem %s1, 97
    %307 = vst.msk [vmem:[%s306] ss:$-56 sm:$0x3] %vm305, %v304
    %s308 = scalar_lea.vmem [#allocation0], 1
    %s309 = smov 3
    %v310 = vld [vmem:[%s308] ss:$-1 sm:%s309]
    %311 = vrot.lane.b32.xlu0 %v310, 86
    %v312 = vpop.permute.xlu0 %311
    %vm313 = vcmask 7168
    %s314 = scalar_lea.vmem %s1, 98
    %315 = vst.msk [vmem:[%s314] ss:$-56 sm:$0x3] %vm313, %v312
    %s316 = scalar_lea.vmem [#allocation0], 1
    %s317 = smov 3
    %v318 = vld [vmem:[%s316] ss:$-1 sm:%s317]
    %319 = vrot.lane.b32.xlu0 %v318, 85
    %v320 = vpop.permute.xlu0 %319
    %vm321 = vcmask 7168
    %s322 = scalar_lea.vmem %s1, 99
    %323 = vst.msk [vmem:[%s322] ss:$-56 sm:$0x3] %vm321, %v320
    %s324 = scalar_lea.vmem [#allocation0], 1
    %s325 = smov 3
    %v326 = vld [vmem:[%s324] ss:$-1 sm:%s325]
    %327 = vrot.lane.b32.xlu0 %v326, 84
    %v328 = vpop.permute.xlu0 %327
    %vm329 = vcmask 7168
    %s330 = scalar_lea.vmem %s1, 100
    %331 = vst.msk [vmem:[%s330] ss:$-56 sm:$0x3] %vm329, %v328
    %s332 = scalar_lea.vmem [#allocation0], 1
    %s333 = smov 3
    %v334 = vld [vmem:[%s332] ss:$-1 sm:%s333]
    %335 = vrot.lane.b32.xlu0 %v334, 83
    %v336 = vpop.permute.xlu0 %335
    %vm337 = vcmask 7168
    %s338 = scalar_lea.vmem %s1, 101
    %339 = vst.msk [vmem:[%s338] ss:$-56 sm:$0x3] %vm337, %v336
    %s340 = scalar_lea.vmem [#allocation0], 1
    %s341 = smov 3
    %v342 = vld [vmem:[%s340] ss:$-1 sm:%s341]
    %343 = vrot.lane.b32.xlu0 %v342, 82
    %v344 = vpop.permute.xlu0 %343
    %vm345 = vcmask 7168
    %s346 = scalar_lea.vmem %s1, 102
    %347 = vst.msk [vmem:[%s346] ss:$-56 sm:$0x3] %vm345, %v344
    %s348 = scalar_lea.vmem [#allocation0], 1
    %s349 = smov 3
    %v350 = vld [vmem:[%s348] ss:$-1 sm:%s349]
    %351 = vrot.lane.b32.xlu0 %v350, 81
    %v352 = vpop.permute.xlu0 %351
    %vm353 = vcmask 7168
    %s354 = scalar_lea.vmem %s1, 103
    %355 = vst.msk [vmem:[%s354] ss:$-56 sm:$0x3] %vm353, %v352
    %s356 = scalar_lea.vmem [#allocation0], 1
    %s357 = smov 3
    %v358 = vld [vmem:[%s356] ss:$-1 sm:%s357]
    %359 = vrot.lane.b32.xlu0 %v358, 80
    %v360 = vpop.permute.xlu0 %359
    %vm361 = vcmask 7168
    %s362 = scalar_lea.vmem %s1, 104
    %363 = vst.msk [vmem:[%s362] ss:$-56 sm:$0x3] %vm361, %v360
    %s364 = scalar_lea.vmem [#allocation0], 1
    %s365 = smov 3
    %v366 = vld [vmem:[%s364] ss:$-1 sm:%s365]
    %367 = vrot.lane.b32.xlu0 %v366, 79
    %v368 = vpop.permute.xlu0 %367
    %vm369 = vcmask 7168
    %s370 = scalar_lea.vmem %s1, 105
    %371 = vst.msk [vmem:[%s370] ss:$-56 sm:$0x3] %vm369, %v368
    %s372 = scalar_lea.vmem [#allocation0], 1
    %s373 = smov 3
    %v374 = vld [vmem:[%s372] ss:$-1 sm:%s373]
    %375 = vrot.lane.b32.xlu0 %v374, 78
    %v376 = vpop.permute.xlu0 %375
    %vm377 = vcmask 7168
    %s378 = scalar_lea.vmem %s1, 106
    %379 = vst.msk [vmem:[%s378] ss:$-56 sm:$0x3] %vm377, %v376
    %s380 = scalar_lea.vmem [#allocation0], 1
    %s381 = smov 3
    %v382 = vld [vmem:[%s380] ss:$-1 sm:%s381]
    %383 = vrot.lane.b32.xlu0 %v382, 77
    %v384 = vpop.permute.xlu0 %383
    %vm385 = vcmask 7168
    %s386 = scalar_lea.vmem %s1, 107
    %387 = vst.msk [vmem:[%s386] ss:$-56 sm:$0x3] %vm385, %v384
    %s388 = scalar_lea.vmem [#allocation0], 1
    %s389 = smov 3
    %v390 = vld [vmem:[%s388] ss:$-1 sm:%s389]
    %391 = vrot.lane.b32.xlu0 %v390, 76
    %v392 = vpop.permute.xlu0 %391
    %vm393 = vcmask 7168
    %s394 = scalar_lea.vmem %s1, 108
    %395 = vst.msk [vmem:[%s394] ss:$-56 sm:$0x3] %vm393, %v392
    %s396 = scalar_lea.vmem [#allocation0], 1
    %s397 = smov 3
    %v398 = vld [vmem:[%s396] ss:$-1 sm:%s397]
    %399 = vrot.lane.b32.xlu0 %v398, 75
    %v400 = vpop.permute.xlu0 %399
    %vm401 = vcmask 7168
    %s402 = scalar_lea.vmem %s1, 109
    %403 = vst.msk [vmem:[%s402] ss:$-56 sm:$0x3] %vm401, %v400
    %s404 = scalar_lea.vmem [#allocation0], 1
    %s405 = smov 3
    %v406 = vld [vmem:[%s404] ss:$-1 sm:%s405]
    %407 = vrot.lane.b32.xlu0 %v406, 74
    %v408 = vpop.permute.xlu0 %407
    %vm409 = vcmask 7168
    %s410 = scalar_lea.vmem %s1, 110
    %411 = vst.msk [vmem:[%s410] ss:$-56 sm:$0x3] %vm409, %v408
    %s412 = scalar_lea.vmem [#allocation0], 1
    %s413 = smov 3
    %v414 = vld [vmem:[%s412] ss:$-1 sm:%s413]
    %415 = vrot.lane.b32.xlu0 %v414, 73
    %v416 = vpop.permute.xlu0 %415
    %vm417 = vcmask 7168
    %s418 = scalar_lea.vmem %s1, 111
    %419 = vst.msk [vmem:[%s418] ss:$-56 sm:$0x3] %vm417, %v416

// kernel: inception_block_forward.1
$region0: #{inception_block_forward.1}
  #allocation0 [shape = 'u32[]', space=smem, size = 0x4, offset = 0x4, fixed_abs, tag = 'smem constant byte address 0x4 - core index']
  #allocation1 [shape = 'u32[144,128]{1,0:T(1,128)}', space=vmem, size = 0x12000, scoped, tag = 'internal scratch']
  #allocation2 [shape = 'bf16[144,256]{1,0:T(8,128)(2,1)}', space=vmem, size = 0x12000, scoped, tag = 'scratch operand']
  %s0 = inlined_call_operand.vmem [shape: f32[112,4], index: 0, kind: input, shape index: {}]
  %s1 = inlined_call_operand.vmem [shape: f32[112,1], index: 1, kind: input, shape index: {}]
  %s2 = inlined_call_operand.vmem [shape: bf16[4,32], index: 2, kind: input, shape index: {}]
  %s3 = inlined_call_operand.vmem [shape: bf16[5,256,128], index: 3, kind: input, shape index: {}]
  %s4 = inlined_call_operand.vmem [shape: bf16[4,128], index: 4, kind: input, shape index: {}]
  %s5 = inlined_call_operand.vmem [shape: f32[1,128], index: 5, kind: input, shape index: {}]
  %s6 = inlined_call_operand.vmem [shape: f32[1,128], index: 6, kind: input, shape index: {}]
  %s7 = inlined_call_operand.vmem [shape: bf16[128,32], index: 7, kind: input, shape index: {}]
  %s8 = inlined_call_operand.vmem [shape: bf16[5,256,128], index: 8, kind: input, shape index: {}]
  %s9 = inlined_call_operand.vmem [shape: bf16[128,128], index: 9, kind: input, shape index: {}]
  %s10 = inlined_call_operand.vmem [shape: f32[1,128], index: 10, kind: input, shape index: {}]
  %s11 = inlined_call_operand.vmem [shape: f32[1,128], index: 11, kind: input, shape index: {}]
  %s12 = inlined_call_operand.vmem [shape: bf16[128,32], index: 12, kind: input, shape index: {}]
  %s13 = inlined_call_operand.vmem [shape: bf16[5,256,128], index: 13, kind: input, shape index: {}]
  %s14 = inlined_call_operand.vmem [shape: bf16[128,128], index: 14, kind: input, shape index: {}]
  %s15 = inlined_call_operand.vmem [shape: f32[1,128], index: 15, kind: input, shape index: {}]
  %s16 = inlined_call_operand.vmem [shape: f32[1,128], index: 16, kind: input, shape index: {}]
  %s17 = inlined_call_operand.vmem [shape: bf16[4,128], index: 17, kind: input, shape index: {}]
  %s18 = inlined_call_operand.vmem [shape: f32[1,128], index: 18, kind: input, shape index: {}]
  %s19 = inlined_call_operand.vmem [shape: f32[1,128], index: 19, kind: input, shape index: {}]
  %s20 = inlined_call_operand.vmem [shape: f32[1,128], index: 20, kind: input, shape index: {}]
  %s21 = inlined_call_operand.vmem [shape: f32[112,128], index: 21, kind: output, shape index: {}]
  %s22 = sld [smem:[#allocation0]]
  $region94: #{inception_block_forward.1} parent=0
    _
  %s24 = ssub.s32 1, %s22
  %s25 = scalar_select 0, %s24, %s22
  // Predicated region
  $region2: #{inception_block_forward.1} parent=0 // pred_check
    _
  $region3: #{inception_block_forward.1} parent=0 // pred_check_branch
    %27 = sbr.rel (0) target = $region5
  $region4: #{inception_block_forward.1} parent=0 // pred_region
    _
  $region5: #{inception_block_forward.1} parent=0 // pred_fallthru
    _
  // Predicated region
  $region6: #{inception_block_forward.1} parent=0 // pred_check
    _
  $region7: #{inception_block_forward.1} parent=0 // pred_check_branch
    %29 = sbr.rel (0) target = $region9
  $region8: #{inception_block_forward.1} parent=0 // pred_region
    _
  $region9: #{inception_block_forward.1} parent=0 // pred_fallthru
    _
  // Predicated region
  $region10: #{inception_block_forward.1} parent=0 // pred_check
    _
  $region11: #{inception_block_forward.1} parent=0 // pred_check_branch
    %31 = sbr.rel (0) target = $region13
  $region12: #{inception_block_forward.1} parent=0 // pred_region
    _
  $region13: #{inception_block_forward.1} parent=0 // pred_fallthru
    _
  // Predicated region
  $region14: #{inception_block_forward.1} parent=0 // pred_check
    _
  $region15: #{inception_block_forward.1} parent=0 // pred_check_branch
    %33 = sbr.rel (0) target = $region17
  $region16: #{inception_block_forward.1} parent=0 // pred_region
    _
  $region17: #{inception_block_forward.1} parent=0 // pred_fallthru
    _
  // Predicated region
  $region18: #{inception_block_forward.1} parent=0 // pred_check
    _
  $region19: #{inception_block_forward.1} parent=0 // pred_check_branch
    %35 = sbr.rel (0) target = $region21
  $region20: #{inception_block_forward.1} parent=0 // pred_region
    _
  $region21: #{inception_block_forward.1} parent=0 // pred_fallthru
    _
  // Predicated region
  $region22: #{inception_block_forward.1} parent=0 // pred_check
    _
  $region23: #{inception_block_forward.1} parent=0 // pred_check_branch
    %37 = sbr.rel (0) target = $region25
  $region24: #{inception_block_forward.1} parent=0 // pred_region
    _
  $region25: #{inception_block_forward.1} parent=0 // pred_fallthru
    _
  // Predicated region
  $region26: #{inception_block_forward.1} parent=0 // pred_check
    _
  $region27: #{inception_block_forward.1} parent=0 // pred_check_branch
    %39 = sbr.rel (0) target = $region29
  $region28: #{inception_block_forward.1} parent=0 // pred_region
    _
  $region29: #{inception_block_forward.1} parent=0 // pred_fallthru
    _
  // Predicated region
  $region30: #{inception_block_forward.1} parent=0 // pred_check
    _
  $region31: #{inception_block_forward.1} parent=0 // pred_check_branch
    %41 = sbr.rel (0) target = $region33
  $region32: #{inception_block_forward.1} parent=0 // pred_region
    _
  $region33: #{inception_block_forward.1} parent=0 // pred_fallthru
    _
  // Predicated region
  $region34: #{inception_block_forward.1} parent=0 // pred_check
    _
  $region35: #{inception_block_forward.1} parent=0 // pred_check_branch
    %43 = sbr.rel (0) target = $region37
  $region36: #{inception_block_forward.1} parent=0 // pred_region
    _
  $region37: #{inception_block_forward.1} parent=0 // pred_fallthru
    _
  // Predicated region
  $region38: #{inception_block_forward.1} parent=0 // pred_check
    _
  $region39: #{inception_block_forward.1} parent=0 // pred_check_branch
    %45 = sbr.rel (0) target = $region41
  $region40: #{inception_block_forward.1} parent=0 // pred_region
    _
  $region41: #{inception_block_forward.1} parent=0 // pred_fallthru
    _
  // Predicated region
  $region42: #{inception_block_forward.1} parent=0 // pred_check
    _
  $region43: #{inception_block_forward.1} parent=0 // pred_check_branch
    %47 = sbr.rel (0) target = $region45
  $region44: #{inception_block_forward.1} parent=0 // pred_region
    _
  $region45: #{inception_block_forward.1} parent=0 // pred_fallthru
    _
  // Predicated region
  $region46: #{inception_block_forward.1} parent=0 // pred_check
    _
  $region47: #{inception_block_forward.1} parent=0 // pred_check_branch
    %49 = sbr.rel (0) target = $region49
  $region48: #{inception_block_forward.1} parent=0 // pred_region
    _
  $region49: #{inception_block_forward.1} parent=0 // pred_fallthru
    _
  // Predicated region
  $region50: #{inception_block_forward.1} parent=0 // pred_check
    _
  $region51: #{inception_block_forward.1} parent=0 // pred_check_branch
    %51 = sbr.rel (0) target = $region53
  $region52: #{inception_block_forward.1} parent=0 // pred_region
    _
  $region53: #{inception_block_forward.1} parent=0 // pred_fallthru
    _
  // Predicated region
  $region54: #{inception_block_forward.1} parent=0 // pred_check
    _
  $region55: #{inception_block_forward.1} parent=0 // pred_check_branch
    %53 = sbr.rel (0) target = $region57
  $region56: #{inception_block_forward.1} parent=0 // pred_region
    _
  $region57: #{inception_block_forward.1} parent=0 // pred_fallthru
    _
  // Predicated region
  $region58: #{inception_block_forward.1} parent=0 // pred_check
    _
  $region59: #{inception_block_forward.1} parent=0 // pred_check_branch
    %55 = sbr.rel (0) target = $region61
  $region60: #{inception_block_forward.1} parent=0 // pred_region
    _
  $region61: #{inception_block_forward.1} parent=0 // pred_fallthru
    _
  // Predicated region
  $region62: #{inception_block_forward.1} parent=0 // pred_check
    _
  $region63: #{inception_block_forward.1} parent=0 // pred_check_branch
    %57 = sbr.rel (0) target = $region65
  $region64: #{inception_block_forward.1} parent=0 // pred_region
    _
  $region65: #{inception_block_forward.1} parent=0 // pred_fallthru
    _
  // Predicated region
  $region66: #{inception_block_forward.1} parent=0 // pred_check
    _
  $region67: #{inception_block_forward.1} parent=0 // pred_check_branch
    %59 = sbr.rel (0) target = $region69
  $region68: #{inception_block_forward.1} parent=0 // pred_region
    _
  $region69: #{inception_block_forward.1} parent=0 // pred_fallthru
    _
  // Predicated region
  $region70: #{inception_block_forward.1} parent=0 // pred_check
    _
  $region71: #{inception_block_forward.1} parent=0 // pred_check_branch
    %61 = sbr.rel (0) target = $region73
  $region72: #{inception_block_forward.1} parent=0 // pred_region
    _
  $region73: #{inception_block_forward.1} parent=0 // pred_fallthru
    _
  // Predicated region
  $region74: #{inception_block_forward.1} parent=0 // pred_check
    _
  $region75: #{inception_block_forward.1} parent=0 // pred_check_branch
    %63 = sbr.rel (0) target = $region77
  $region76: #{inception_block_forward.1} parent=0 // pred_region
    _
  $region77: #{inception_block_forward.1} parent=0 // pred_fallthru
    _
  // Predicated region
  $region78: #{inception_block_forward.1} parent=0 // pred_check
    _
  $region79: #{inception_block_forward.1} parent=0 // pred_check_branch
    %65 = sbr.rel (0) target = $region81
  $region80: #{inception_block_forward.1} parent=0 // pred_region
    _
  $region81: #{inception_block_forward.1} parent=0 // pred_fallthru
    _
  // Predicated region
  $region82: #{inception_block_forward.1} parent=0 // pred_check
    _
  $region83: #{inception_block_forward.1} parent=0 // pred_check_branch
    %67 = sbr.rel (0) target = $region85
  $region84: #{inception_block_forward.1} parent=0 // pred_region
    _
  $region85: #{inception_block_forward.1} parent=0 // pred_fallthru
    _
  %v69 = vld [vmem:[%s1] sm:$0xff]
  %v70 = vld [vmem:[%s1 + $0x8] sm:$0xff]
  %v71 = vld [vmem:[%s1 + $0x10] sm:$0xff]
  %v72 = vld [vmem:[%s1 + $0x18] sm:$0xff]
  %v73 = vld [vmem:[%s1 + $0x20] sm:$0xff]
  %v74 = vld [vmem:[%s1 + $0x28] sm:$0xff]
  %v75 = vld [vmem:[%s1 + $0x30] sm:$0xff]
  %v76 = vld [vmem:[%s1 + $0x38] sm:$0xff]
  %v77 = vld [vmem:[%s1 + $0x40] sm:$0xff]
  %v78 = vld [vmem:[%s1 + $0x48] sm:$0xff]
  %v79 = vld [vmem:[%s1 + $0x50] sm:$0xff]
  %v80 = vld [vmem:[%s1 + $0x58] sm:$0xff]
  %v81 = vld [vmem:[%s1 + $0x60] sm:$0xff]
  %v82 = vld [vmem:[%s1 + $0x68] sm:$0xff]
  %v83 = vld [vmem:[%s0] sm:$0xff]
  %v84 = vld [vmem:[%s0 + $0x8] sm:$0xff]
  %v85 = vld [vmem:[%s0 + $0x10] sm:$0xff]
  %v86 = vld [vmem:[%s0 + $0x18] sm:$0xff]
  %v87 = vld [vmem:[%s0 + $0x20] sm:$0xff]
  %v88 = vld [vmem:[%s0 + $0x28] sm:$0xff]
  %v89 = vld [vmem:[%s0 + $0x30] sm:$0xff]
  %v90 = vld [vmem:[%s0 + $0x38] sm:$0xff]
  %v91 = vld [vmem:[%s0 + $0x40] sm:$0xff]
  %v92 = vld [vmem:[%s0 + $0x48] sm:$0xff]
  %v93 = vld [vmem:[%s0 + $0x50] sm:$0xff]
  %v94 = vld [vmem:[%s0 + $0x58] sm:$0xff]
  %v95 = vld [vmem:[%s0 + $0x60] sm:$0xff]
  %v96 = vld [vmem:[%s0 + $0x68] sm:$0xff]
  %97 = vst [vmem:[#allocation2] sm:$0xff] 0
  %98 = vst [vmem:[#allocation2 + $0x8] sm:$0xff] 0
  %99 = vst [vmem:[#allocation2 + $0x10] sm:$0xff] 0
  %100 = vst [vmem:[#allocation2 + $0x18] sm:$0xff] 0
  %101 = vst [vmem:[#allocation2 + $0x20] sm:$0xff] 0
  %102 = vst [vmem:[#allocation2 + $0x28] sm:$0xff] 0
  %103 = vst [vmem:[#allocation2 + $0x30] sm:$0xff] 0
  %104 = vst [vmem:[#allocation2 + $0x38] sm:$0xff] 0
  %105 = vst [vmem:[#allocation2 + $0x40] sm:$0xff] 0
  %106 = vst [vmem:[#allocation2 + $0x48] sm:$0xff] 0
  %107 = vst [vmem:[#allocation2 + $0x50] sm:$0xff] 0
  %108 = vst [vmem:[#allocation2 + $0x58] sm:$0xff] 0
  %109 = vst [vmem:[#allocation2 + $0x60] sm:$0xff] 0
  %110 = vst [vmem:[#allocation2 + $0x68] sm:$0xff] 0
  %111 = vst [vmem:[#allocation2 + $0x70] sm:$0xff] 0
  %112 = vst [vmem:[#allocation2 + $0x78] sm:$0xff] 0
  %113 = vst [vmem:[#allocation2 + $0x80] sm:$0xff] 0
  %114 = vst [vmem:[#allocation2 + $0x88] sm:$0xff] 0
  %v115 = vpack.c.bf16 %v84, %v83
  %v116 = vpack.c.bf16 %v86, %v85
  %v117 = vpack.c.bf16 %v88, %v87
  %v118 = vpack.c.bf16 %v90, %v89
  %v119 = vpack.c.bf16 %v92, %v91
  %v120 = vpack.c.bf16 %v94, %v93
  %v121 = vpack.c.bf16 %v96, %v95
  %v122 = vld [vmem:[%s2] sm:$0x3]
  %vm123 = vcmask 31744
  %v125 = vsel %vm123, %v115, 0
  %v128 = vsel %vm123, %v116, 0
  %v131 = vsel %vm123, %v117, 0
  %v134 = vsel %vm123, %v118, 0
  %v137 = vsel %vm123, %v119, 0
  %v140 = vsel %vm123, %v120, 0
  %v143 = vsel %vm123, %v121, 0
  %vm145 = vcmask 1041408
  %v147 = vsel %vm145, %v122, 0
  %149 = vmatprep.subr.bf16.mxu0 0
  %150 = vmatpush1.bf16.msra.mxu0 0
  %151 = vmatprep.subr.bf16.mxu0 0
  %152 = vmatpush1.bf16.msra.mxu0 0
  %153 = vmatprep.subr.bf16.mxu0 0
  %154 = vmatpush1.bf16.msra.mxu0 0
  %155 = vmatprep.subr.bf16.mxu0 0
  %156 = vmatpush1.bf16.msra.mxu0 0
  %157 = vmatprep.subr.bf16.mxu0 0
  %158 = vmatpush1.bf16.msra.mxu0 0
  %159 = vmatprep.subr.bf16.mxu0 0
  %160 = vmatpush1.bf16.msra.mxu0 0
  %161 = vmatprep.subr.bf16.mxu0 0
  %162 = vmatpush1.bf16.msra.mxu0 0
  %163 = vmatprep.subr.bf16.mxu0 0
  %164 = vmatpush1.bf16.msra.mxu0 %v147
  %165 = vmatprep.subr.bf16.mxu0 0
  %166 = vmatpush2.bf16.msra.mxu0 0
  %167 = vmatprep.subr.bf16.mxu0 0
  %168 = vmatpush2.bf16.msra.mxu0 0
  %169 = vmatprep.subr.bf16.mxu0 0
  %170 = vmatpush2.bf16.msra.mxu0 0
  %171 = vmatprep.subr.bf16.mxu0 0
  %172 = vmatpush2.bf16.msra.mxu0 0
  %173 = vmatprep.subr.bf16.mxu0 0
  %174 = vmatpush2.bf16.msra.mxu0 0
  %175 = vmatprep.subr.bf16.mxu0 0
  %176 = vmatpush2.bf16.msra.mxu0 0
  %177 = vmatprep.subr.bf16.mxu0 0
  %178 = vmatpush2.bf16.msra.mxu0 0
  %179 = vmatprep.subr.bf16.mxu0 0
  %180 = vmatpush2.bf16.msra.mxu0 0
  %181 = vmatprep.mubr.bf16.mxu0 0
  %182 = vmatmul.mubr.bf16.gmra.mxu0 %v125
  %v183 = vpop.f32.mrf.mxu0
  %v184 = vadd.f32 0.0, %v183
  %v185 = vpop.f32.mrf.mxu0
  %v186 = vpop.f32.mrf.mxu0
  %v187 = vadd.f32 0.0, %v186
  %v188 = vpop.f32.mrf.mxu0
  %189 = vmatprep.mubr.bf16.mxu0 0
  %190 = vmatmul.mubr.bf16.gmra.mxu0 %v128
  %v191 = vpop.f32.mrf.mxu0
  %v192 = vadd.f32 0.0, %v191
  %v193 = vpop.f32.mrf.mxu0
  %v194 = vpop.f32.mrf.mxu0
  %v195 = vadd.f32 0.0, %v194
  %v196 = vpop.f32.mrf.mxu0
  %197 = vmatprep.mubr.bf16.mxu0 0
  %198 = vmatmul.mubr.bf16.gmra.mxu0 %v131
  %v199 = vpop.f32.mrf.mxu0
  %v200 = vadd.f32 0.0, %v199
  %v201 = vpop.f32.mrf.mxu0
  %v202 = vpop.f32.mrf.mxu0
  %v203 = vadd.f32 0.0, %v202
  %v204 = vpop.f32.mrf.mxu0
  %205 = vmatprep.mubr.bf16.mxu0 0
  %206 = vmatmul.mubr.bf16.gmra.mxu0 %v134
  %v207 = vpop.f32.mrf.mxu0
  %v208 = vadd.f32 0.0, %v207
  %v209 = vpop.f32.mrf.mxu0
  %v210 = vpop.f32.mrf.mxu0
  %v211 = vadd.f32 0.0, %v210
  %v212 = vpop.f32.mrf.mxu0
  %213 = vmatprep.mubr.bf16.mxu0 0
  %214 = vmatmul.mubr.bf16.gmra.mxu0 %v137
  %v215 = vpop.f32.mrf.mxu0
  %v216 = vadd.f32 0.0, %v215
  %v217 = vpop.f32.mrf.mxu0
  %v218 = vpop.f32.mrf.mxu0
  %v219 = vadd.f32 0.0, %v218
  %v220 = vpop.f32.mrf.mxu0
  %221 = vmatprep.mubr.bf16.mxu0 0
  %222 = vmatmul.mubr.bf16.gmra.mxu0 %v140
  %v223 = vpop.f32.mrf.mxu0
  %v224 = vadd.f32 0.0, %v223
  %v225 = vpop.f32.mrf.mxu0
  %v226 = vpop.f32.mrf.mxu0
  %v227 = vadd.f32 0.0, %v226
  %v228 = vpop.f32.mrf.mxu0
  %229 = vmatprep.mubr.bf16.mxu0 0
  %230 = vmatmul.mubr.bf16.gmra.mxu0 %v143
  %v231 = vpop.f32.mrf.mxu0
  %v232 = vadd.f32 0.0, %v231
  %v233 = vpop.f32.mrf.mxu0
  %v234 = vpop.f32.mrf.mxu0
  %v235 = vadd.f32 0.0, %v234
  %v236 = vpop.f32.mrf.mxu0
  %237 = vdwg.mxu0
  %v238 = vpack.c.bf16 %v187, %v184
  %v239 = vpack.c.bf16 %v195, %v192
  %v240 = vpack.c.bf16 %v203, %v200
  %v241 = vpack.c.bf16 %v211, %v208
  %v242 = vpack.c.bf16 %v219, %v216
  %v243 = vpack.c.bf16 %v227, %v224
  %v244 = vpack.c.bf16 %v235, %v232
  %v252 = vunpack.c.l.b16 %v238
  %v253 = vunpack.c.h.b16 %v238
  %v254 = vunpack.c.l.b16 %v239
  %v255 = vunpack.c.h.b16 %v239
  %v256 = vunpack.c.l.b16 %v240
  %v257 = vunpack.c.h.b16 %v240
  %v258 = vunpack.c.l.b16 %v241
  %v259 = vunpack.c.h.b16 %v241
  %v260 = vunpack.c.l.b16 %v242
  %v261 = vunpack.c.h.b16 %v242
  %v262 = vunpack.c.l.b16 %v243
  %v263 = vunpack.c.h.b16 %v243
  %v264 = vunpack.c.l.b16 %v244
  %v265 = vunpack.c.h.b16 %v244
  %v266 = vpack.c.b16 %v252, %v252
  %v267 = vpack.c.b16 %v253, %v253
  %v268 = vpack.c.b16 %v254, %v254
  %v269 = vpack.c.b16 %v255, %v255
  %v270 = vpack.c.b16 %v256, %v256
  %v271 = vpack.c.b16 %v257, %v257
  %v272 = vpack.c.b16 %v258, %v258
  %v273 = vpack.c.b16 %v259, %v259
  %v274 = vpack.c.b16 %v260, %v260
  %v275 = vpack.c.b16 %v261, %v261
  %v276 = vpack.c.b16 %v262, %v262
  %v277 = vpack.c.b16 %v263, %v263
  %v278 = vpack.c.b16 %v264, %v264
  %v279 = vpack.c.b16 %v265, %v265
  %vm280 = vsmask.f32 1280
  %vm281 = vsmask.f32 5392
  %vm282 = vmor %vm280, %vm281
  %v284 = vshrl.u32 %v266, 16
  %v286 = vrot.slane %v284, 6
  %v287 = vshll.u32 %v266, 16
  %v289 = vrot.slane %v287, 7
  %v290 = vor.u32 %v286, %v289
  %v291 = vrot.slane %v290, 4
  %v293 = vshrl.u32 %v267, 16
  %v295 = vrot.slane %v293, 6
  %v296 = vshll.u32 %v267, 16
  %v298 = vrot.slane %v296, 7
  %v299 = vor.u32 %v295, %v298
  %v300 = vsel %vm282, %v291, %v299
  %v301 = vrot.slane %v299, 4
  %v303 = vshrl.u32 %v268, 16
  %v305 = vrot.slane %v303, 6
  %v306 = vshll.u32 %v268, 16
  %v308 = vrot.slane %v306, 7
  %v309 = vor.u32 %v305, %v308
  %v310 = vsel %vm282, %v301, %v309
  %v311 = vrot.slane %v309, 4
  %v313 = vshrl.u32 %v269, 16
  %v315 = vrot.slane %v313, 6
  %v316 = vshll.u32 %v269, 16
  %v318 = vrot.slane %v316, 7
  %v319 = vor.u32 %v315, %v318
  %v320 = vsel %vm282, %v311, %v319
  %v321 = vrot.slane %v319, 4
  %v323 = vshrl.u32 %v270, 16
  %v325 = vrot.slane %v323, 6
  %v326 = vshll.u32 %v270, 16
  %v328 = vrot.slane %v326, 7
  %v329 = vor.u32 %v325, %v328
  %v330 = vsel %vm282, %v321, %v329
  %v331 = vrot.slane %v329, 4
  %v333 = vshrl.u32 %v271, 16
  %v335 = vrot.slane %v333, 6
  %v336 = vshll.u32 %v271, 16
  %v338 = vrot.slane %v336, 7
  %v339 = vor.u32 %v335, %v338
  %v340 = vsel %vm282, %v331, %v339
  %v341 = vrot.slane %v339, 4
  %v343 = vshrl.u32 %v272, 16
  %v345 = vrot.slane %v343, 6
  %v346 = vshll.u32 %v272, 16
  %v348 = vrot.slane %v346, 7
  %v349 = vor.u32 %v345, %v348
  %v350 = vsel %vm282, %v341, %v349
  %v351 = vrot.slane %v349, 4
  %v353 = vshrl.u32 %v273, 16
  %v355 = vrot.slane %v353, 6
  %v356 = vshll.u32 %v273, 16
  %v358 = vrot.slane %v356, 7
  %v359 = vor.u32 %v355, %v358
  %v360 = vsel %vm282, %v351, %v359
  %v361 = vrot.slane %v359, 4
  %v363 = vshrl.u32 %v274, 16
  %v365 = vrot.slane %v363, 6
  %v366 = vshll.u32 %v274, 16
  %v368 = vrot.slane %v366, 7
  %v369 = vor.u32 %v365, %v368
  %v370 = vsel %vm282, %v361, %v369
  %v371 = vrot.slane %v369, 4
  %v373 = vshrl.u32 %v275, 16
  %v375 = vrot.slane %v373, 6
  %v376 = vshll.u32 %v275, 16
  %v378 = vrot.slane %v376, 7
  %v379 = vor.u32 %v375, %v378
  %v380 = vsel %vm282, %v371, %v379
  %v381 = vrot.slane %v379, 4
  %v383 = vshrl.u32 %v276, 16
  %v385 = vrot.slane %v383, 6
  %v386 = vshll.u32 %v276, 16
  %v388 = vrot.slane %v386, 7
  %v389 = vor.u32 %v385, %v388
  %v390 = vsel %vm282, %v381, %v389
  %v391 = vrot.slane %v389, 4
  %v393 = vshrl.u32 %v277, 16
  %v395 = vrot.slane %v393, 6
  %v396 = vshll.u32 %v277, 16
  %v398 = vrot.slane %v396, 7
  %v399 = vor.u32 %v395, %v398
  %v400 = vsel %vm282, %v391, %v399
  %v401 = vrot.slane %v399, 4
  %v403 = vshrl.u32 %v278, 16
  %v405 = vrot.slane %v403, 6
  %v406 = vshll.u32 %v278, 16
  %v408 = vrot.slane %v406, 7
  %v409 = vor.u32 %v405, %v408
  %v410 = vsel %vm282, %v401, %v409
  %v411 = vrot.slane %v409, 4
  %v413 = vshrl.u32 %v279, 16
  %v415 = vrot.slane %v413, 6
  %v416 = vshll.u32 %v279, 16
  %v418 = vrot.slane %v416, 7
  %v419 = vor.u32 %v415, %v418
  %v420 = vsel %vm282, %v411, %v419
  %v421 = vrot.slane %v419, 4
  %vm437 = vcmask 257025
  %vm438 = vsmask.f32 7942
  %vm439 = vmand %vm437, %vm438
  %v440 = vld [vmem:[#allocation2 + $0x10] sm:$0xe]
  %v441 = vsel %vm439, %v290, %v440
  %442 = vst [vmem:[#allocation2 + $0x10] sm:$0xe] %v441
  %vm443 = vcmask 257024
  %444 = vst.msk [vmem:[#allocation2 + $0x18] sm:$0xf] %vm443, %v300
  %445 = vst.msk [vmem:[#allocation2 + $0x20] sm:$0xf] %vm443, %v310
  %446 = vst.msk [vmem:[#allocation2 + $0x28] sm:$0xf] %vm443, %v320
  %447 = vst.msk [vmem:[#allocation2 + $0x30] sm:$0xf] %vm443, %v330
  %448 = vst.msk [vmem:[#allocation2 + $0x38] sm:$0xf] %vm443, %v340
  %449 = vst.msk [vmem:[#allocation2 + $0x40] sm:$0xf] %vm443, %v350
  %450 = vst.msk [vmem:[#allocation2 + $0x48] sm:$0xf] %vm443, %v360
  %451 = vst.msk [vmem:[#allocation2 + $0x50] sm:$0xf] %vm443, %v370
  %452 = vst.msk [vmem:[#allocation2 + $0x58] sm:$0xf] %vm443, %v380
  %453 = vst.msk [vmem:[#allocation2 + $0x60] sm:$0xf] %vm443, %v390
  %454 = vst.msk [vmem:[#allocation2 + $0x68] sm:$0xf] %vm443, %v400
  %455 = vst.msk [vmem:[#allocation2 + $0x70] sm:$0xf] %vm443, %v410
  %456 = vst.msk [vmem:[#allocation2 + $0x78] sm:$0xf] %vm443, %v420
  %vm457 = vcmask 254976
  %vm458 = vmand %vm457, %vm280
  %v459 = vld [vmem:[#allocation2 + $0x80] sm:$0x3]
  %v460 = vsel %vm458, %v421, %v459
  %461 = vst [vmem:[#allocation2 + $0x80] sm:$0x3] %v460
  %vm462 = vcmask 1040384
  %vm463 = vcmask 1044484
  %vm464 = vmor %vm462, %vm463
  %v465 = vrot.slane %v266, 7
  %v466 = vrot.slane %v465, 4
  %v467 = vrot.slane %v267, 7
  %v468 = vsel %vm464, %v466, %v467
  %v469 = vrot.slane %v467, 4
  %v470 = vrot.slane %v268, 7
  %v471 = vsel %vm464, %v469, %v470
  %v472 = vrot.slane %v470, 4
  %v473 = vrot.slane %v269, 7
  %v474 = vsel %vm464, %v472, %v473
  %v475 = vrot.slane %v473, 4
  %v476 = vrot.slane %v270, 7
  %v477 = vsel %vm464, %v475, %v476
  %v478 = vrot.slane %v476, 4
  %v479 = vrot.slane %v271, 7
  %v480 = vsel %vm464, %v478, %v479
  %v481 = vrot.slane %v479, 4
  %v482 = vrot.slane %v272, 7
  %v483 = vsel %vm464, %v481, %v482
  %v484 = vrot.slane %v482, 4
  %v485 = vrot.slane %v273, 7
  %v486 = vsel %vm464, %v484, %v485
  %v487 = vrot.slane %v485, 4
  %v488 = vrot.slane %v274, 7
  %v489 = vsel %vm464, %v487, %v488
  %v490 = vrot.slane %v488, 4
  %v491 = vrot.slane %v275, 7
  %v492 = vsel %vm464, %v490, %v491
  %v493 = vrot.slane %v491, 4
  %v494 = vrot.slane %v276, 7
  %v495 = vsel %vm464, %v493, %v494
  %v496 = vrot.slane %v494, 4
  %v497 = vrot.slane %v277, 7
  %v498 = vsel %vm464, %v496, %v497
  %v499 = vrot.slane %v497, 4
  %v500 = vrot.slane %v278, 7
  %v501 = vsel %vm464, %v499, %v500
  %v502 = vrot.slane %v500, 4
  %v503 = vrot.slane %v279, 7
  %v504 = vsel %vm464, %v502, %v503
  %v505 = vrot.slane %v503, 4
  %506 = vrot.lane.b32.xlu0 %v465, 32
  %v507 = vpop.permute.xlu0 %506
  %508 = vrot.lane.b32.xlu0 %v468, 32
  %v509 = vpop.permute.xlu0 %508
  %510 = vrot.lane.b32.xlu0 %v471, 32
  %v511 = vpop.permute.xlu0 %510
  %512 = vrot.lane.b32.xlu0 %v474, 32
  %v513 = vpop.permute.xlu0 %512
  %514 = vrot.lane.b32.xlu0 %v477, 32
  %v515 = vpop.permute.xlu0 %514
  %516 = vrot.lane.b32.xlu0 %v480, 32
  %v517 = vpop.permute.xlu0 %516
  %518 = vrot.lane.b32.xlu0 %v483, 32
  %v519 = vpop.permute.xlu0 %518
  %520 = vrot.lane.b32.xlu0 %v486, 32
  %v521 = vpop.permute.xlu0 %520
  %522 = vrot.lane.b32.xlu0 %v489, 32
  %v523 = vpop.permute.xlu0 %522
  %524 = vrot.lane.b32.xlu0 %v492, 32
  %v525 = vpop.permute.xlu0 %524
  %526 = vrot.lane.b32.xlu0 %v495, 32
  %v527 = vpop.permute.xlu0 %526
  %528 = vrot.lane.b32.xlu0 %v498, 32
  %v529 = vpop.permute.xlu0 %528
  %530 = vrot.lane.b32.xlu0 %v501, 32
  %v531 = vpop.permute.xlu0 %530
  %532 = vrot.lane.b32.xlu0 %v504, 32
  %v533 = vpop.permute.xlu0 %532
  %534 = vrot.lane.b32.xlu0 %v505, 32
  %v535 = vpop.permute.xlu0 %534
  %vm551 = vcmask 519425
  %552 = vst.msk [vmem:[#allocation2 + $0x10] sm:$0xe] %vm551, %v507
  %vm553 = vcmask 519424
  %554 = vst.msk [vmem:[#allocation2 + $0x18] sm:$0xf] %vm553, %v509
  %555 = vst.msk [vmem:[#allocation2 + $0x20] sm:$0xf] %vm553, %v511
  %556 = vst.msk [vmem:[#allocation2 + $0x28] sm:$0xf] %vm553, %v513
  %557 = vst.msk [vmem:[#allocation2 + $0x30] sm:$0xf] %vm553, %v515
  %558 = vst.msk [vmem:[#allocation2 + $0x38] sm:$0xf] %vm553, %v517
  %559 = vst.msk [vmem:[#allocation2 + $0x40] sm:$0xf] %vm553, %v519
  %560 = vst.msk [vmem:[#allocation2 + $0x48] sm:$0xf] %vm553, %v521
  %561 = vst.msk [vmem:[#allocation2 + $0x50] sm:$0xf] %vm553, %v523
  %562 = vst.msk [vmem:[#allocation2 + $0x58] sm:$0xf] %vm553, %v525
  %563 = vst.msk [vmem:[#allocation2 + $0x60] sm:$0xf] %vm553, %v527
  %564 = vst.msk [vmem:[#allocation2 + $0x68] sm:$0xf] %vm553, %v529
  %565 = vst.msk [vmem:[#allocation2 + $0x70] sm:$0xf] %vm553, %v531
  %566 = vst.msk [vmem:[#allocation2 + $0x78] sm:$0xf] %vm553, %v533
  %vm567 = vcmask 516352
  %568 = vst.msk [vmem:[#allocation2 + $0x80] sm:$0x1] %vm567, %v535
  %vm569 = vsmask.f32 256
  %vm570 = vsmask.f32 4368
  %vm571 = vmor %vm569, %vm570
  %v572 = vrot.slane %v284, 7
  %v573 = vor.u32 %v572, %v287
  %v574 = vrot.slane %v572, 4
  %v575 = vrot.slane %v293, 7
  %v576 = vor.u32 %v575, %v296
  %v577 = vsel %vm571, %v574, %v576
  %v578 = vrot.slane %v575, 4
  %v579 = vrot.slane %v303, 7
  %v580 = vor.u32 %v579, %v306
  %v581 = vsel %vm571, %v578, %v580
  %v582 = vrot.slane %v579, 4
  %v583 = vrot.slane %v313, 7
  %v584 = vor.u32 %v583, %v316
  %v585 = vsel %vm571, %v582, %v584
  %v586 = vrot.slane %v583, 4
  %v587 = vrot.slane %v323, 7
  %v588 = vor.u32 %v587, %v326
  %v589 = vsel %vm571, %v586, %v588
  %v590 = vrot.slane %v587, 4
  %v591 = vrot.slane %v333, 7
  %v592 = vor.u32 %v591, %v336
  %v593 = vsel %vm571, %v590, %v592
  %v594 = vrot.slane %v591, 4
  %v595 = vrot.slane %v343, 7
  %v596 = vor.u32 %v595, %v346
  %v597 = vsel %vm571, %v594, %v596
  %v598 = vrot.slane %v595, 4
  %v599 = vrot.slane %v353, 7
  %v600 = vor.u32 %v599, %v356
  %v601 = vsel %vm571, %v598, %v600
  %v602 = vrot.slane %v599, 4
  %v603 = vrot.slane %v363, 7
  %v604 = vor.u32 %v603, %v366
  %v605 = vsel %vm571, %v602, %v604
  %v606 = vrot.slane %v603, 4
  %v607 = vrot.slane %v373, 7
  %v608 = vor.u32 %v607, %v376
  %v609 = vsel %vm571, %v606, %v608
  %v610 = vrot.slane %v607, 4
  %v611 = vrot.slane %v383, 7
  %v612 = vor.u32 %v611, %v386
  %v613 = vsel %vm571, %v610, %v612
  %v614 = vrot.slane %v611, 4
  %v615 = vrot.slane %v393, 7
  %v616 = vor.u32 %v615, %v396
  %v617 = vsel %vm571, %v614, %v616
  %v618 = vrot.slane %v615, 4
  %v619 = vrot.slane %v403, 7
  %v620 = vor.u32 %v619, %v406
  %v621 = vsel %vm571, %v618, %v620
  %v622 = vrot.slane %v619, 4
  %v623 = vrot.slane %v413, 7
  %v624 = vor.u32 %v623, %v416
  %v625 = vsel %vm571, %v622, %v624
  %v626 = vrot.slane %v623, 4
  %627 = vrot.lane.b32.xlu0 %v573, 64
  %v628 = vpop.permute.xlu0 %627
  %629 = vrot.lane.b32.xlu0 %v577, 64
  %v630 = vpop.permute.xlu0 %629
  %631 = vrot.lane.b32.xlu0 %v581, 64
  %v632 = vpop.permute.xlu0 %631
  %633 = vrot.lane.b32.xlu0 %v585, 64
  %v634 = vpop.permute.xlu0 %633
  %635 = vrot.lane.b32.xlu0 %v589, 64
  %v636 = vpop.permute.xlu0 %635
  %637 = vrot.lane.b32.xlu0 %v593, 64
  %v638 = vpop.permute.xlu0 %637
  %639 = vrot.lane.b32.xlu0 %v597, 64
  %v640 = vpop.permute.xlu0 %639
  %641 = vrot.lane.b32.xlu0 %v601, 64
  %v642 = vpop.permute.xlu0 %641
  %643 = vrot.lane.b32.xlu0 %v605, 64
  %v644 = vpop.permute.xlu0 %643
  %645 = vrot.lane.b32.xlu0 %v609, 64
  %v646 = vpop.permute.xlu0 %645
  %647 = vrot.lane.b32.xlu0 %v613, 64
  %v648 = vpop.permute.xlu0 %647
  %649 = vrot.lane.b32.xlu0 %v617, 64
  %v650 = vpop.permute.xlu0 %649
  %651 = vrot.lane.b32.xlu0 %v621, 64
  %v652 = vpop.permute.xlu0 %651
  %653 = vrot.lane.b32.xlu0 %v625, 64
  %v654 = vpop.permute.xlu0 %653
  %655 = vrot.lane.b32.xlu0 %v626, 64
  %v656 = vpop.permute.xlu0 %655
  %vm672 = vcmask 781824
  %vm673 = vsmask.f32 7938
  %vm674 = vmand %vm672, %vm673
  %v675 = vld [vmem:[#allocation2 + $0x10] sm:$0xf]
  %v676 = vsel %vm674, %v628, %v675
  %677 = vst [vmem:[#allocation2 + $0x10] sm:$0xf] %v676
  %vm678 = vcmask 781824
  %679 = vst.msk [vmem:[#allocation2 + $0x18] sm:$0xf] %vm678, %v630
  %680 = vst.msk [vmem:[#allocation2 + $0x20] sm:$0xf] %vm678, %v632
  %681 = vst.msk [vmem:[#allocation2 + $0x28] sm:$0xf] %vm678, %v634
  %682 = vst.msk [vmem:[#allocation2 + $0x30] sm:$0xf] %vm678, %v636
  %683 = vst.msk [vmem:[#allocation2 + $0x38] sm:$0xf] %vm678, %v638
  %684 = vst.msk [vmem:[#allocation2 + $0x40] sm:$0xf] %vm678, %v640
  %685 = vst.msk [vmem:[#allocation2 + $0x48] sm:$0xf] %vm678, %v642
  %686 = vst.msk [vmem:[#allocation2 + $0x50] sm:$0xf] %vm678, %v644
  %687 = vst.msk [vmem:[#allocation2 + $0x58] sm:$0xf] %vm678, %v646
  %688 = vst.msk [vmem:[#allocation2 + $0x60] sm:$0xf] %vm678, %v648
  %689 = vst.msk [vmem:[#allocation2 + $0x68] sm:$0xf] %vm678, %v650
  %690 = vst.msk [vmem:[#allocation2 + $0x70] sm:$0xf] %vm678, %v652
  %691 = vst.msk [vmem:[#allocation2 + $0x78] sm:$0xf] %vm678, %v654
  %vm692 = vcmask 778752
  %vm693 = vmand %vm692, %vm569
  %v694 = vld [vmem:[#allocation2 + $0x80] sm:$0x1]
  %v695 = vsel %vm693, %v656, %v694
  %696 = vst [vmem:[#allocation2 + $0x80] sm:$0x1] %v695
  %697 = vrot.lane.b32.xlu0 %v266, 96
  %v698 = vpop.permute.xlu0 %697
  %699 = vrot.lane.b32.xlu0 %v267, 96
  %v700 = vpop.permute.xlu0 %699
  %701 = vrot.lane.b32.xlu0 %v268, 96
  %v702 = vpop.permute.xlu0 %701
  %703 = vrot.lane.b32.xlu0 %v269, 96
  %v704 = vpop.permute.xlu0 %703
  %705 = vrot.lane.b32.xlu0 %v270, 96
  %v706 = vpop.permute.xlu0 %705
  %707 = vrot.lane.b32.xlu0 %v271, 96
  %v708 = vpop.permute.xlu0 %707
  %709 = vrot.lane.b32.xlu0 %v272, 96
  %v710 = vpop.permute.xlu0 %709
  %711 = vrot.lane.b32.xlu0 %v273, 96
  %v712 = vpop.permute.xlu0 %711
  %713 = vrot.lane.b32.xlu0 %v274, 96
  %v714 = vpop.permute.xlu0 %713
  %715 = vrot.lane.b32.xlu0 %v275, 96
  %v716 = vpop.permute.xlu0 %715
  %717 = vrot.lane.b32.xlu0 %v276, 96
  %v718 = vpop.permute.xlu0 %717
  %719 = vrot.lane.b32.xlu0 %v277, 96
  %v720 = vpop.permute.xlu0 %719
  %721 = vrot.lane.b32.xlu0 %v278, 96
  %v722 = vpop.permute.xlu0 %721
  %723 = vrot.lane.b32.xlu0 %v279, 96
  %v724 = vpop.permute.xlu0 %723
  %vm739 = vcmask 1044224
  %740 = vst.msk [vmem:[#allocation2 + $0x10] sm:$0xf] %vm739, %v698
  %741 = vst.msk [vmem:[#allocation2 + $0x18] sm:$0xf] %vm739, %v700
  %742 = vst.msk [vmem:[#allocation2 + $0x20] sm:$0xf] %vm739, %v702
  %743 = vst.msk [vmem:[#allocation2 + $0x28] sm:$0xf] %vm739, %v704
  %744 = vst.msk [vmem:[#allocation2 + $0x30] sm:$0xf] %vm739, %v706
  %745 = vst.msk [vmem:[#allocation2 + $0x38] sm:$0xf] %vm739, %v708
  %746 = vst.msk [vmem:[#allocation2 + $0x40] sm:$0xf] %vm739, %v710
  %747 = vst.msk [vmem:[#allocation2 + $0x48] sm:$0xf] %vm739, %v712
  %748 = vst.msk [vmem:[#allocation2 + $0x50] sm:$0xf] %vm739, %v714
  %749 = vst.msk [vmem:[#allocation2 + $0x58] sm:$0xf] %vm739, %v716
  %750 = vst.msk [vmem:[#allocation2 + $0x60] sm:$0xf] %vm739, %v718
  %751 = vst.msk [vmem:[#allocation2 + $0x68] sm:$0xf] %vm739, %v720
  %752 = vst.msk [vmem:[#allocation2 + $0x70] sm:$0xf] %vm739, %v722
  %753 = vst.msk [vmem:[#allocation2 + $0x78] sm:$0xf] %vm739, %v724
  %vm754 = vsmask.f32 3328
  %vm755 = vsmask.f32 7440
  %vm756 = vmor %vm754, %vm755
  %v757 = vrot.slane %v287, 5
  %v758 = vrot.slane %v284, 4
  %v759 = vor.u32 %v758, %v757
  %v760 = vrot.slane %v759, 4
  %v761 = vrot.slane %v296, 5
  %v762 = vsel %vm756, %v760, %v761
  %v763 = vrot.slane %v293, 4
  %v764 = vor.u32 %v763, %v761
  %v765 = vrot.slane %v764, 4
  %v766 = vrot.slane %v306, 5
  %v767 = vsel %vm756, %v765, %v766
  %v768 = vrot.slane %v303, 4
  %v769 = vor.u32 %v768, %v766
  %v770 = vrot.slane %v769, 4
  %v771 = vrot.slane %v316, 5
  %v772 = vsel %vm756, %v770, %v771
  %v773 = vrot.slane %v313, 4
  %v774 = vor.u32 %v773, %v771
  %v775 = vrot.slane %v774, 4
  %v776 = vrot.slane %v326, 5
  %v777 = vsel %vm756, %v775, %v776
  %v778 = vrot.slane %v323, 4
  %v779 = vor.u32 %v778, %v776
  %v780 = vrot.slane %v779, 4
  %v781 = vrot.slane %v336, 5
  %v782 = vsel %vm756, %v780, %v781
  %v783 = vrot.slane %v333, 4
  %v784 = vor.u32 %v783, %v781
  %v785 = vrot.slane %v784, 4
  %v786 = vrot.slane %v346, 5
  %v787 = vsel %vm756, %v785, %v786
  %v788 = vrot.slane %v343, 4
  %v789 = vor.u32 %v788, %v786
  %v790 = vrot.slane %v789, 4
  %v791 = vrot.slane %v356, 5
  %v792 = vsel %vm756, %v790, %v791
  %v793 = vrot.slane %v353, 4
  %v794 = vor.u32 %v793, %v791
  %v795 = vrot.slane %v794, 4
  %v796 = vrot.slane %v366, 5
  %v797 = vsel %vm756, %v795, %v796
  %v798 = vrot.slane %v363, 4
  %v799 = vor.u32 %v798, %v796
  %v800 = vrot.slane %v799, 4
  %v801 = vrot.slane %v376, 5
  %v802 = vsel %vm756, %v800, %v801
  %v803 = vrot.slane %v373, 4
  %v804 = vor.u32 %v803, %v801
  %v805 = vrot.slane %v804, 4
  %v806 = vrot.slane %v386, 5
  %v807 = vsel %vm756, %v805, %v806
  %v808 = vrot.slane %v383, 4
  %v809 = vor.u32 %v808, %v806
  %v810 = vrot.slane %v809, 4
  %v811 = vrot.slane %v396, 5
  %v812 = vsel %vm756, %v810, %v811
  %v813 = vrot.slane %v393, 4
  %v814 = vor.u32 %v813, %v811
  %v815 = vrot.slane %v814, 4
  %v816 = vrot.slane %v406, 5
  %v817 = vsel %vm756, %v815, %v816
  %v818 = vrot.slane %v403, 4
  %v819 = vor.u32 %v818, %v816
  %v820 = vrot.slane %v819, 4
  %v821 = vrot.slane %v416, 5
  %v822 = vsel %vm756, %v820, %v821
  %v823 = vrot.slane %v413, 4
  %v824 = vor.u32 %v823, %v821
  %v825 = vrot.slane %v824, 4
  %vm841 = vcmask 257027
  %vm842 = vsmask.f32 7950
  %vm843 = vmand %vm841, %vm842
  %v844 = vld [vmem:[#allocation2 + $0xc] sm:$0x8]
  %v845 = vsel %vm843, %v757, %v844
  %846 = vst [vmem:[#allocation2 + $0xc] sm:$0x8] %v845
  %847 = vst.msk [vmem:[#allocation2 + $0x14] sm:$0xf] %vm443, %v762
  %848 = vst.msk [vmem:[#allocation2 + $0x1c] sm:$0xf] %vm443, %v767
  %849 = vst.msk [vmem:[#allocation2 + $0x24] sm:$0xf] %vm443, %v772
  %850 = vst.msk [vmem:[#allocation2 + $0x2c] sm:$0xf] %vm443, %v777
  %851 = vst.msk [vmem:[#allocation2 + $0x34] sm:$0xf] %vm443, %v782
  %852 = vst.msk [vmem:[#allocation2 + $0x3c] sm:$0xf] %vm443, %v787
  %853 = vst.msk [vmem:[#allocation2 + $0x44] sm:$0xf] %vm443, %v792
  %854 = vst.msk [vmem:[#allocation2 + $0x4c] sm:$0xf] %vm443, %v797
  %855 = vst.msk [vmem:[#allocation2 + $0x54] sm:$0xf] %vm443, %v802
  %856 = vst.msk [vmem:[#allocation2 + $0x5c] sm:$0xf] %vm443, %v807
  %857 = vst.msk [vmem:[#allocation2 + $0x64] sm:$0xf] %vm443, %v812
  %858 = vst.msk [vmem:[#allocation2 + $0x6c] sm:$0xf] %vm443, %v817
  %859 = vst.msk [vmem:[#allocation2 + $0x74] sm:$0xf] %vm443, %v822
  %vm860 = vcmask 257024
  %vm861 = vmand %vm860, %vm754
  %v862 = vld [vmem:[#allocation2 + $0x7c] sm:$0xf]
  %v863 = vsel %vm861, %v825, %v862
  %864 = vst [vmem:[#allocation2 + $0x7c] sm:$0xf] %v863
  %vm865 = vcmask 1042432
  %vm866 = vcmask 1046532
  %vm867 = vmor %vm865, %vm866
  %v868 = vrot.slane %v266, 5
  %v869 = vrot.slane %v868, 4
  %v870 = vrot.slane %v267, 5
  %v871 = vsel %vm867, %v869, %v870
  %v872 = vrot.slane %v870, 4
  %v873 = vrot.slane %v268, 5
  %v874 = vsel %vm867, %v872, %v873
  %v875 = vrot.slane %v873, 4
  %v876 = vrot.slane %v269, 5
  %v877 = vsel %vm867, %v875, %v876
  %v878 = vrot.slane %v876, 4
  %v879 = vrot.slane %v270, 5
  %v880 = vsel %vm867, %v878, %v879
  %v881 = vrot.slane %v879, 4
  %v882 = vrot.slane %v271, 5
  %v883 = vsel %vm867, %v881, %v882
  %v884 = vrot.slane %v882, 4
  %v885 = vrot.slane %v272, 5
  %v886 = vsel %vm867, %v884, %v885
  %v887 = vrot.slane %v885, 4
  %v888 = vrot.slane %v273, 5
  %v889 = vsel %vm867, %v887, %v888
  %v890 = vrot.slane %v888, 4
  %v891 = vrot.slane %v274, 5
  %v892 = vsel %vm867, %v890, %v891
  %v893 = vrot.slane %v891, 4
  %v894 = vrot.slane %v275, 5
  %v895 = vsel %vm867, %v893, %v894
  %v896 = vrot.slane %v894, 4
  %v897 = vrot.slane %v276, 5
  %v898 = vsel %vm867, %v896, %v897
  %v899 = vrot.slane %v897, 4
  %v900 = vrot.slane %v277, 5
  %v901 = vsel %vm867, %v899, %v900
  %v902 = vrot.slane %v900, 4
  %v903 = vrot.slane %v278, 5
  %v904 = vsel %vm867, %v902, %v903
  %v905 = vrot.slane %v903, 4
  %v906 = vrot.slane %v279, 5
  %v907 = vsel %vm867, %v905, %v906
  %v908 = vrot.slane %v906, 4
  %909 = vrot.lane.b32.xlu0 %v868, 32
  %v910 = vpop.permute.xlu0 %909
  %911 = vrot.lane.b32.xlu0 %v871, 32
  %v912 = vpop.permute.xlu0 %911
  %913 = vrot.lane.b32.xlu0 %v874, 32
  %v914 = vpop.permute.xlu0 %913
  %915 = vrot.lane.b32.xlu0 %v877, 32
  %v916 = vpop.permute.xlu0 %915
  %917 = vrot.lane.b32.xlu0 %v880, 32
  %v918 = vpop.permute.xlu0 %917
  %919 = vrot.lane.b32.xlu0 %v883, 32
  %v920 = vpop.permute.xlu0 %919
  %921 = vrot.lane.b32.xlu0 %v886, 32
  %v922 = vpop.permute.xlu0 %921
  %923 = vrot.lane.b32.xlu0 %v889, 32
  %v924 = vpop.permute.xlu0 %923
  %925 = vrot.lane.b32.xlu0 %v892, 32
  %v926 = vpop.permute.xlu0 %925
  %927 = vrot.lane.b32.xlu0 %v895, 32
  %v928 = vpop.permute.xlu0 %927
  %929 = vrot.lane.b32.xlu0 %v898, 32
  %v930 = vpop.permute.xlu0 %929
  %931 = vrot.lane.b32.xlu0 %v901, 32
  %v932 = vpop.permute.xlu0 %931
  %933 = vrot.lane.b32.xlu0 %v904, 32
  %v934 = vpop.permute.xlu0 %933
  %935 = vrot.lane.b32.xlu0 %v907, 32
  %v936 = vpop.permute.xlu0 %935
  %937 = vrot.lane.b32.xlu0 %v908, 32
  %v938 = vpop.permute.xlu0 %937
  %vm954 = vcmask 519427
  %955 = vst.msk [vmem:[#allocation2 + $0xc] sm:$0x8] %vm954, %v910
  %956 = vst.msk [vmem:[#allocation2 + $0x14] sm:$0xf] %vm553, %v912
  %957 = vst.msk [vmem:[#allocation2 + $0x1c] sm:$0xf] %vm553, %v914
  %958 = vst.msk [vmem:[#allocation2 + $0x24] sm:$0xf] %vm553, %v916
  %959 = vst.msk [vmem:[#allocation2 + $0x2c] sm:$0xf] %vm553, %v918
  %960 = vst.msk [vmem:[#allocation2 + $0x34] sm:$0xf] %vm553, %v920
  %961 = vst.msk [vmem:[#allocation2 + $0x3c] sm:$0xf] %vm553, %v922
  %962 = vst.msk [vmem:[#allocation2 + $0x44] sm:$0xf] %vm553, %v924
  %963 = vst.msk [vmem:[#allocation2 + $0x4c] sm:$0xf] %vm553, %v926
  %964 = vst.msk [vmem:[#allocation2 + $0x54] sm:$0xf] %vm553, %v928
  %965 = vst.msk [vmem:[#allocation2 + $0x5c] sm:$0xf] %vm553, %v930
  %966 = vst.msk [vmem:[#allocation2 + $0x64] sm:$0xf] %vm553, %v932
  %967 = vst.msk [vmem:[#allocation2 + $0x6c] sm:$0xf] %vm553, %v934
  %968 = vst.msk [vmem:[#allocation2 + $0x74] sm:$0xf] %vm553, %v936
  %vm969 = vcmask 518400
  %970 = vst.msk [vmem:[#allocation2 + $0x7c] sm:$0x7] %vm969, %v938
  %vm971 = vsmask.f32 2304
  %vm972 = vsmask.f32 6416
  %vm973 = vmor %vm971, %vm972
  %v974 = vrot.slane %v284, 5
  %v975 = vrot.slane %v287, 6
  %v976 = vor.u32 %v974, %v975
  %v977 = vrot.slane %v976, 4
  %v978 = vrot.slane %v293, 5
  %v979 = vrot.slane %v296, 6
  %v980 = vor.u32 %v978, %v979
  %v981 = vsel %vm973, %v977, %v980
  %v982 = vrot.slane %v980, 4
  %v983 = vrot.slane %v303, 5
  %v984 = vrot.slane %v306, 6
  %v985 = vor.u32 %v983, %v984
  %v986 = vsel %vm973, %v982, %v985
  %v987 = vrot.slane %v985, 4
  %v988 = vrot.slane %v313, 5
  %v989 = vrot.slane %v316, 6
  %v990 = vor.u32 %v988, %v989
  %v991 = vsel %vm973, %v987, %v990
  %v992 = vrot.slane %v990, 4
  %v993 = vrot.slane %v323, 5
  %v994 = vrot.slane %v326, 6
  %v995 = vor.u32 %v993, %v994
  %v996 = vsel %vm973, %v992, %v995
  %v997 = vrot.slane %v995, 4
  %v998 = vrot.slane %v333, 5
  %v999 = vrot.slane %v336, 6
  %v1000 = vor.u32 %v998, %v999
  %v1001 = vsel %vm973, %v997, %v1000
  %v1002 = vrot.slane %v1000, 4
  %v1003 = vrot.slane %v343, 5
  %v1004 = vrot.slane %v346, 6
  %v1005 = vor.u32 %v1003, %v1004
  %v1006 = vsel %vm973, %v1002, %v1005
  %v1007 = vrot.slane %v1005, 4
  %v1008 = vrot.slane %v353, 5
  %v1009 = vrot.slane %v356, 6
  %v1010 = vor.u32 %v1008, %v1009
  %v1011 = vsel %vm973, %v1007, %v1010
  %v1012 = vrot.slane %v1010, 4
  %v1013 = vrot.slane %v363, 5
  %v1014 = vrot.slane %v366, 6
  %v1015 = vor.u32 %v1013, %v1014
  %v1016 = vsel %vm973, %v1012, %v1015
  %v1017 = vrot.slane %v1015, 4
  %v1018 = vrot.slane %v373, 5
  %v1019 = vrot.slane %v376, 6
  %v1020 = vor.u32 %v1018, %v1019
  %v1021 = vsel %vm973, %v1017, %v1020
  %v1022 = vrot.slane %v1020, 4
  %v1023 = vrot.slane %v383, 5
  %v1024 = vrot.slane %v386, 6
  %v1025 = vor.u32 %v1023, %v1024
  %v1026 = vsel %vm973, %v1022, %v1025
  %v1027 = vrot.slane %v1025, 4
  %v1028 = vrot.slane %v393, 5
  %v1029 = vrot.slane %v396, 6
  %v1030 = vor.u32 %v1028, %v1029
  %v1031 = vsel %vm973, %v1027, %v1030
  %v1032 = vrot.slane %v1030, 4
  %v1033 = vrot.slane %v403, 5
  %v1034 = vrot.slane %v406, 6
  %v1035 = vor.u32 %v1033, %v1034
  %v1036 = vsel %vm973, %v1032, %v1035
  %v1037 = vrot.slane %v1035, 4
  %v1038 = vrot.slane %v413, 5
  %v1039 = vrot.slane %v416, 6
  %v1040 = vor.u32 %v1038, %v1039
  %v1041 = vsel %vm973, %v1037, %v1040
  %v1042 = vrot.slane %v1040, 4
  %1043 = vrot.lane.b32.xlu0 %v976, 64
  %v1044 = vpop.permute.xlu0 %1043
  %1045 = vrot.lane.b32.xlu0 %v981, 64
  %v1046 = vpop.permute.xlu0 %1045
  %1047 = vrot.lane.b32.xlu0 %v986, 64
  %v1048 = vpop.permute.xlu0 %1047
  %1049 = vrot.lane.b32.xlu0 %v991, 64
  %v1050 = vpop.permute.xlu0 %1049
  %1051 = vrot.lane.b32.xlu0 %v996, 64
  %v1052 = vpop.permute.xlu0 %1051
  %1053 = vrot.lane.b32.xlu0 %v1001, 64
  %v1054 = vpop.permute.xlu0 %1053
  %1055 = vrot.lane.b32.xlu0 %v1006, 64
  %v1056 = vpop.permute.xlu0 %1055
  %1057 = vrot.lane.b32.xlu0 %v1011, 64
  %v1058 = vpop.permute.xlu0 %1057
  %1059 = vrot.lane.b32.xlu0 %v1016, 64
  %v1060 = vpop.permute.xlu0 %1059
  %1061 = vrot.lane.b32.xlu0 %v1021, 64
  %v1062 = vpop.permute.xlu0 %1061
  %1063 = vrot.lane.b32.xlu0 %v1026, 64
  %v1064 = vpop.permute.xlu0 %1063
  %1065 = vrot.lane.b32.xlu0 %v1031, 64
  %v1066 = vpop.permute.xlu0 %1065
  %1067 = vrot.lane.b32.xlu0 %v1036, 64
  %v1068 = vpop.permute.xlu0 %1067
  %1069 = vrot.lane.b32.xlu0 %v1041, 64
  %v1070 = vpop.permute.xlu0 %1069
  %1071 = vrot.lane.b32.xlu0 %v1042, 64
  %v1072 = vpop.permute.xlu0 %1071
  %vm1088 = vcmask 781826
  %vm1089 = vsmask.f32 7946
  %vm1090 = vmand %vm1088, %vm1089
  %v1091 = vld [vmem:[#allocation2 + $0xc] sm:$0xc]
  %v1092 = vsel %vm1090, %v1044, %v1091
  %1093 = vst [vmem:[#allocation2 + $0xc] sm:$0xc] %v1092
  %1094 = vst.msk [vmem:[#allocation2 + $0x14] sm:$0xf] %vm678, %v1046
  %1095 = vst.msk [vmem:[#allocation2 + $0x1c] sm:$0xf] %vm678, %v1048
  %1096 = vst.msk [vmem:[#allocation2 + $0x24] sm:$0xf] %vm678, %v1050
  %1097 = vst.msk [vmem:[#allocation2 + $0x2c] sm:$0xf] %vm678, %v1052
  %1098 = vst.msk [vmem:[#allocation2 + $0x34] sm:$0xf] %vm678, %v1054
  %1099 = vst.msk [vmem:[#allocation2 + $0x3c] sm:$0xf] %vm678, %v1056
  %1100 = vst.msk [vmem:[#allocation2 + $0x44] sm:$0xf] %vm678, %v1058
  %1101 = vst.msk [vmem:[#allocation2 + $0x4c] sm:$0xf] %vm678, %v1060
  %1102 = vst.msk [vmem:[#allocation2 + $0x54] sm:$0xf] %vm678, %v1062
  %1103 = vst.msk [vmem:[#allocation2 + $0x5c] sm:$0xf] %vm678, %v1064
  %1104 = vst.msk [vmem:[#allocation2 + $0x64] sm:$0xf] %vm678, %v1066
  %1105 = vst.msk [vmem:[#allocation2 + $0x6c] sm:$0xf] %vm678, %v1068
  %1106 = vst.msk [vmem:[#allocation2 + $0x74] sm:$0xf] %vm678, %v1070
  %vm1107 = vcmask 780800
  %vm1108 = vmand %vm1107, %vm971
  %v1109 = vld [vmem:[#allocation2 + $0x7c] sm:$0x7]
  %v1110 = vsel %vm1108, %v1072, %v1109
  %1111 = vst [vmem:[#allocation2 + $0x7c] sm:$0x7] %v1110
  %vm1112 = vcmask 1041408
  %vm1113 = vcmask 1045508
  %vm1114 = vmor %vm1112, %vm1113
  %v1115 = vrot.slane %v266, 6
  %v1116 = vrot.slane %v1115, 4
  %v1117 = vrot.slane %v267, 6
  %v1118 = vsel %vm1114, %v1116, %v1117
  %v1119 = vrot.slane %v1117, 4
  %v1120 = vrot.slane %v268, 6
  %v1121 = vsel %vm1114, %v1119, %v1120
  %v1122 = vrot.slane %v1120, 4
  %v1123 = vrot.slane %v269, 6
  %v1124 = vsel %vm1114, %v1122, %v1123
  %v1125 = vrot.slane %v1123, 4
  %v1126 = vrot.slane %v270, 6
  %v1127 = vsel %vm1114, %v1125, %v1126
  %v1128 = vrot.slane %v1126, 4
  %v1129 = vrot.slane %v271, 6
  %v1130 = vsel %vm1114, %v1128, %v1129
  %v1131 = vrot.slane %v1129, 4
  %v1132 = vrot.slane %v272, 6
  %v1133 = vsel %vm1114, %v1131, %v1132
  %v1134 = vrot.slane %v1132, 4
  %v1135 = vrot.slane %v273, 6
  %v1136 = vsel %vm1114, %v1134, %v1135
  %v1137 = vrot.slane %v1135, 4
  %v1138 = vrot.slane %v274, 6
  %v1139 = vsel %vm1114, %v1137, %v1138
  %v1140 = vrot.slane %v1138, 4
  %v1141 = vrot.slane %v275, 6
  %v1142 = vsel %vm1114, %v1140, %v1141
  %v1143 = vrot.slane %v1141, 4
  %v1144 = vrot.slane %v276, 6
  %v1145 = vsel %vm1114, %v1143, %v1144
  %v1146 = vrot.slane %v1144, 4
  %v1147 = vrot.slane %v277, 6
  %v1148 = vsel %vm1114, %v1146, %v1147
  %v1149 = vrot.slane %v1147, 4
  %v1150 = vrot.slane %v278, 6
  %v1151 = vsel %vm1114, %v1149, %v1150
  %v1152 = vrot.slane %v1150, 4
  %v1153 = vrot.slane %v279, 6
  %v1154 = vsel %vm1114, %v1152, %v1153
  %v1155 = vrot.slane %v1153, 4
  %1156 = vrot.lane.b32.xlu0 %v1115, 96
  %v1157 = vpop.permute.xlu0 %1156
  %1158 = vrot.lane.b32.xlu0 %v1118, 96
  %v1159 = vpop.permute.xlu0 %1158
  %1160 = vrot.lane.b32.xlu0 %v1121, 96
  %v1161 = vpop.permute.xlu0 %1160
  %1162 = vrot.lane.b32.xlu0 %v1124, 96
  %v1163 = vpop.permute.xlu0 %1162
  %1164 = vrot.lane.b32.xlu0 %v1127, 96
  %v1165 = vpop.permute.xlu0 %1164
  %1166 = vrot.lane.b32.xlu0 %v1130, 96
  %v1167 = vpop.permute.xlu0 %1166
  %1168 = vrot.lane.b32.xlu0 %v1133, 96
  %v1169 = vpop.permute.xlu0 %1168
  %1170 = vrot.lane.b32.xlu0 %v1136, 96
  %v1171 = vpop.permute.xlu0 %1170
  %1172 = vrot.lane.b32.xlu0 %v1139, 96
  %v1173 = vpop.permute.xlu0 %1172
  %1174 = vrot.lane.b32.xlu0 %v1142, 96
  %v1175 = vpop.permute.xlu0 %1174
  %1176 = vrot.lane.b32.xlu0 %v1145, 96
  %v1177 = vpop.permute.xlu0 %1176
  %1178 = vrot.lane.b32.xlu0 %v1148, 96
  %v1179 = vpop.permute.xlu0 %1178
  %1180 = vrot.lane.b32.xlu0 %v1151, 96
  %v1181 = vpop.permute.xlu0 %1180
  %1182 = vrot.lane.b32.xlu0 %v1154, 96
  %v1183 = vpop.permute.xlu0 %1182
  %1184 = vrot.lane.b32.xlu0 %v1155, 96
  %v1185 = vpop.permute.xlu0 %1184
  %vm1201 = vcmask 1044226
  %1202 = vst.msk [vmem:[#allocation2 + $0xc] sm:$0xc] %vm1201, %v1157
  %1203 = vst.msk [vmem:[#allocation2 + $0x14] sm:$0xf] %vm739, %v1159
  %1204 = vst.msk [vmem:[#allocation2 + $0x1c] sm:$0xf] %vm739, %v1161
  %1205 = vst.msk [vmem:[#allocation2 + $0x24] sm:$0xf] %vm739, %v1163
  %1206 = vst.msk [vmem:[#allocation2 + $0x2c] sm:$0xf] %vm739, %v1165
  %1207 = vst.msk [vmem:[#allocation2 + $0x34] sm:$0xf] %vm739, %v1167
  %1208 = vst.msk [vmem:[#allocation2 + $0x3c] sm:$0xf] %vm739, %v1169
  %1209 = vst.msk [vmem:[#allocation2 + $0x44] sm:$0xf] %vm739, %v1171
  %1210 = vst.msk [vmem:[#allocation2 + $0x4c] sm:$0xf] %vm739, %v1173
  %1211 = vst.msk [vmem:[#allocation2 + $0x54] sm:$0xf] %vm739, %v1175
  %1212 = vst.msk [vmem:[#allocation2 + $0x5c] sm:$0xf] %vm739, %v1177
  %1213 = vst.msk [vmem:[#allocation2 + $0x64] sm:$0xf] %vm739, %v1179
  %1214 = vst.msk [vmem:[#allocation2 + $0x6c] sm:$0xf] %vm739, %v1181
  %1215 = vst.msk [vmem:[#allocation2 + $0x74] sm:$0xf] %vm739, %v1183
  %vm1216 = vcmask 1042176
  %1217 = vst.msk [vmem:[#allocation2 + $0x7c] sm:$0x3] %vm1216, %v1185
  %vm1218 = vcmp.gt.f32.partialorder %v69, 0.0
  %vm1219 = vcmp.gt.f32.partialorder %v70, 0.0
  %vm1220 = vcmp.gt.f32.partialorder %v71, 0.0
  %vm1221 = vcmp.gt.f32.partialorder %v72, 0.0
  %vm1222 = vcmp.gt.f32.partialorder %v73, 0.0
  %vm1223 = vcmp.gt.f32.partialorder %v74, 0.0
  %vm1224 = vcmp.gt.f32.partialorder %v75, 0.0
  %vm1225 = vcmp.gt.f32.partialorder %v76, 0.0
  %vm1226 = vcmp.gt.f32.partialorder %v77, 0.0
  %vm1227 = vcmp.gt.f32.partialorder %v78, 0.0
  %vm1228 = vcmp.gt.f32.partialorder %v79, 0.0
  %vm1229 = vcmp.gt.f32.partialorder %v80, 0.0
  %vm1230 = vcmp.gt.f32.partialorder %v81, 0.0
  %vm1231 = vcmp.gt.f32.partialorder %v82, 0.0
  %v1232 = vsel %vm1218, 1, 0
  %v1233 = vsel %vm1219, 1, 0
  %v1234 = vsel %vm1220, 1, 0
  %v1235 = vsel %vm1221, 1, 0
  %v1236 = vsel %vm1222, 1, 0
  %v1237 = vsel %vm1223, 1, 0
  %v1238 = vsel %vm1224, 1, 0
  %v1239 = vsel %vm1225, 1, 0
  %v1240 = vsel %vm1226, 1, 0
  %v1241 = vsel %vm1227, 1, 0
  %v1242 = vsel %vm1228, 1, 0
  %v1243 = vsel %vm1229, 1, 0
  %v1244 = vsel %vm1230, 1, 0
  %v1245 = vsel %vm1231, 1, 0
  %1246 = vset.pattern.permute.xlu0 0
  %1247 = vperm.xlu0 %1246, %v1232
  %v1248 = vpop.permute.xlu0 %1247
  %1249 = vset.pattern.permute.xlu0 0
  %1250 = vperm.xlu0 %1249, %v1233
  %v1251 = vpop.permute.xlu0 %1250
  %1252 = vset.pattern.permute.xlu0 0
  %1253 = vperm.xlu0 %1252, %v1234
  %v1254 = vpop.permute.xlu0 %1253
  %1255 = vset.pattern.permute.xlu0 0
  %1256 = vperm.xlu0 %1255, %v1235
  %v1257 = vpop.permute.xlu0 %1256
  %1258 = vset.pattern.permute.xlu0 0
  %1259 = vperm.xlu0 %1258, %v1236
  %v1260 = vpop.permute.xlu0 %1259
  %1261 = vset.pattern.permute.xlu0 0
  %1262 = vperm.xlu0 %1261, %v1237
  %v1263 = vpop.permute.xlu0 %1262
  %1264 = vset.pattern.permute.xlu0 0
  %1265 = vperm.xlu0 %1264, %v1238
  %v1266 = vpop.permute.xlu0 %1265
  %1267 = vset.pattern.permute.xlu0 0
  %1268 = vperm.xlu0 %1267, %v1239
  %v1269 = vpop.permute.xlu0 %1268
  %1270 = vset.pattern.permute.xlu0 0
  %1271 = vperm.xlu0 %1270, %v1240
  %v1272 = vpop.permute.xlu0 %1271
  %1273 = vset.pattern.permute.xlu0 0
  %1274 = vperm.xlu0 %1273, %v1241
  %v1275 = vpop.permute.xlu0 %1274
  %1276 = vset.pattern.permute.xlu0 0
  %1277 = vperm.xlu0 %1276, %v1242
  %v1278 = vpop.permute.xlu0 %1277
  %1279 = vset.pattern.permute.xlu0 0
  %1280 = vperm.xlu0 %1279, %v1243
  %v1281 = vpop.permute.xlu0 %1280
  %1282 = vset.pattern.permute.xlu0 0
  %1283 = vperm.xlu0 %1282, %v1244
  %v1284 = vpop.permute.xlu0 %1283
  %1285 = vset.pattern.permute.xlu0 0
  %1286 = vperm.xlu0 %1285, %v1245
  %v1287 = vpop.permute.xlu0 %1286
  %vm1288 = vcmp.eq.s32.totalorder %v1248, 1
  %vm1289 = vcmp.eq.s32.totalorder %v1251, 1
  %vm1290 = vcmp.eq.s32.totalorder %v1254, 1
  %vm1291 = vcmp.eq.s32.totalorder %v1257, 1
  %vm1292 = vcmp.eq.s32.totalorder %v1260, 1
  %vm1293 = vcmp.eq.s32.totalorder %v1263, 1
  %vm1294 = vcmp.eq.s32.totalorder %v1266, 1
  %vm1295 = vcmp.eq.s32.totalorder %v1269, 1
  %vm1296 = vcmp.eq.s32.totalorder %v1272, 1
  %vm1297 = vcmp.eq.s32.totalorder %v1275, 1
  %vm1298 = vcmp.eq.s32.totalorder %v1278, 1
  %vm1299 = vcmp.eq.s32.totalorder %v1281, 1
  %vm1300 = vcmp.eq.s32.totalorder %v1284, 1
  %vm1301 = vcmp.eq.s32.totalorder %v1287, 1
  %v1302 = vsel %vm1288, %v83, -inf
  %v1303 = vsel %vm1289, %v84, -inf
  %v1304 = vsel %vm1290, %v85, -inf
  %v1305 = vsel %vm1291, %v86, -inf
  %v1306 = vsel %vm1292, %v87, -inf
  %v1307 = vsel %vm1293, %v88, -inf
  %v1308 = vsel %vm1294, %v89, -inf
  %v1309 = vsel %vm1295, %v90, -inf
  %v1310 = vsel %vm1296, %v91, -inf
  %v1311 = vsel %vm1297, %v92, -inf
  %v1312 = vsel %vm1298, %v93, -inf
  %v1313 = vsel %vm1299, %v94, -inf
  %v1314 = vsel %vm1300, %v95, -inf
  %v1315 = vsel %vm1301, %v96, -inf
  %vm1330 = vcmask 1040384
  %v1331 = vrot.slane %v1302, 7
  %v1332 = vrot.slane %v1303, 7
  %v1333 = vsel %vm1330, %v1331, %v1332
  %v1334 = vrot.slane %v1304, 7
  %v1335 = vsel %vm1330, %v1332, %v1334
  %v1336 = vrot.slane %v1305, 7
  %v1337 = vsel %vm1330, %v1334, %v1336
  %v1338 = vrot.slane %v1306, 7
  %v1339 = vsel %vm1330, %v1336, %v1338
  %v1340 = vrot.slane %v1307, 7
  %v1341 = vsel %vm1330, %v1338, %v1340
  %v1342 = vrot.slane %v1308, 7
  %v1343 = vsel %vm1330, %v1340, %v1342
  %v1344 = vrot.slane %v1309, 7
  %v1345 = vsel %vm1330, %v1342, %v1344
  %v1346 = vrot.slane %v1310, 7
  %v1347 = vsel %vm1330, %v1344, %v1346
  %v1348 = vrot.slane %v1311, 7
  %v1349 = vsel %vm1330, %v1346, %v1348
  %v1350 = vrot.slane %v1312, 7
  %v1351 = vsel %vm1330, %v1348, %v1350
  %v1352 = vrot.slane %v1313, 7
  %v1353 = vsel %vm1330, %v1350, %v1352
  %v1354 = vrot.slane %v1314, 7
  %v1355 = vsel %vm1330, %v1352, %v1354
  %v1356 = vrot.slane %v1315, 7
  %v1357 = vsel %vm1330, %v1354, %v1356
  %v1372 = vsel %vm1330, 0.0, %v1331
  %vm1373 = vcmask 1046528
  %v1374 = vrot.slane %v1302, 1
  %v1375 = vrot.slane %v1303, 1
  %v1376 = vsel %vm1373, %v1374, %v1375
  %v1377 = vrot.slane %v1304, 1
  %v1378 = vsel %vm1373, %v1375, %v1377
  %v1379 = vrot.slane %v1305, 1
  %v1380 = vsel %vm1373, %v1377, %v1379
  %v1381 = vrot.slane %v1306, 1
  %v1382 = vsel %vm1373, %v1379, %v1381
  %v1383 = vrot.slane %v1307, 1
  %v1384 = vsel %vm1373, %v1381, %v1383
  %v1385 = vrot.slane %v1308, 1
  %v1386 = vsel %vm1373, %v1383, %v1385
  %v1387 = vrot.slane %v1309, 1
  %v1388 = vsel %vm1373, %v1385, %v1387
  %v1389 = vrot.slane %v1310, 1
  %v1390 = vsel %vm1373, %v1387, %v1389
  %v1391 = vrot.slane %v1311, 1
  %v1392 = vsel %vm1373, %v1389, %v1391
  %v1393 = vrot.slane %v1312, 1
  %v1394 = vsel %vm1373, %v1391, %v1393
  %v1395 = vrot.slane %v1313, 1
  %v1396 = vsel %vm1373, %v1393, %v1395
  %v1397 = vrot.slane %v1314, 1
  %v1398 = vsel %vm1373, %v1395, %v1397
  %v1399 = vrot.slane %v1315, 1
  %v1400 = vsel %vm1373, %v1397, %v1399
  %v1415 = vsel %vm1373, %v1399, 0.0
  %v1416 = vmax.f32 %v1372, %v83
  %v1417 = vmax.f32 %v1333, %v84
  %v1418 = vmax.f32 %v1335, %v85
  %v1419 = vmax.f32 %v1337, %v86
  %v1420 = vmax.f32 %v1339, %v87
  %v1421 = vmax.f32 %v1341, %v88
  %v1422 = vmax.f32 %v1343, %v89
  %v1423 = vmax.f32 %v1345, %v90
  %v1424 = vmax.f32 %v1347, %v91
  %v1425 = vmax.f32 %v1349, %v92
  %v1426 = vmax.f32 %v1351, %v93
  %v1427 = vmax.f32 %v1353, %v94
  %v1428 = vmax.f32 %v1355, %v95
  %v1429 = vmax.f32 %v1357, %v96
  %v1430 = vmax.f32 %v1416, %v1376
  %v1431 = vmax.f32 %v1417, %v1378
  %v1432 = vmax.f32 %v1418, %v1380
  %v1433 = vmax.f32 %v1419, %v1382
  %v1434 = vmax.f32 %v1420, %v1384
  %v1435 = vmax.f32 %v1421, %v1386
  %v1436 = vmax.f32 %v1422, %v1388
  %v1437 = vmax.f32 %v1423, %v1390
  %v1438 = vmax.f32 %v1424, %v1392
  %v1439 = vmax.f32 %v1425, %v1394
  %v1440 = vmax.f32 %v1426, %v1396
  %v1441 = vmax.f32 %v1427, %v1398
  %v1442 = vmax.f32 %v1428, %v1400
  %v1443 = vmax.f32 %v1429, %v1415
  %v1444 = vpack.c.bf16 %v1431, %v1430
  %v1445 = vpack.c.bf16 %v1433, %v1432
  %v1446 = vpack.c.bf16 %v1435, %v1434
  %v1447 = vpack.c.bf16 %v1437, %v1436
  %v1448 = vpack.c.bf16 %v1439, %v1438
  %v1449 = vpack.c.bf16 %v1441, %v1440
  %v1450 = vpack.c.bf16 %v1443, %v1442
  %v1451 = vld [vmem:[%s4] sm:$0x3]
  %v1452 = vld [vmem:[#allocation2] sm:$0xff]
  %v1453 = vld [vmem:[#allocation2 + $0x8] sm:$0xff]
  %v1454 = vld [vmem:[#allocation2 + $0x10] sm:$0xff]
  %v1455 = vld [vmem:[#allocation2 + $0x18] sm:$0xff]
  %v1456 = vld [vmem:[#allocation2 + $0x20] sm:$0xff]
  %v1457 = vld [vmem:[#allocation2 + $0x28] sm:$0xff]
  %v1458 = vld [vmem:[#allocation2 + $0x30] sm:$0xff]
  %v1459 = vld [vmem:[#allocation2 + $0x38] sm:$0xff]
  %v1460 = vld [vmem:[#allocation2 + $0x40] sm:$0xff]
  %v1461 = vld [vmem:[#allocation2 + $0x48] sm:$0xff]
  %v1462 = vld [vmem:[#allocation2 + $0x50] sm:$0xff]
  %v1463 = vld [vmem:[#allocation2 + $0x58] sm:$0xff]
  %v1464 = vld [vmem:[#allocation2 + $0x60] sm:$0xff]
  %v1465 = vld [vmem:[#allocation2 + $0x68] sm:$0xff]
  %v1466 = vld [vmem:[%s3] sm:$0xf]
  %v1467 = vld [vmem:[%s3 + $0x4] sm:$0xf]
  %v1468 = vld [vmem:[%s3 + $0x8] sm:$0xf]
  %v1469 = vld [vmem:[%s3 + $0xc] sm:$0xf]
  %v1470 = vld [vmem:[%s3 + $0x10] sm:$0xf]
  %v1471 = vld [vmem:[%s3 + $0x14] sm:$0xf]
  %v1472 = vld [vmem:[%s3 + $0x18] sm:$0xf]
  %v1473 = vld [vmem:[%s3 + $0x1c] sm:$0xf]
  %v1474 = vld [vmem:[%s3 + $0x20] sm:$0xf]
  %v1475 = vld [vmem:[%s3 + $0x24] sm:$0xf]
  %v1476 = vld [vmem:[%s3 + $0x28] sm:$0xf]
  %v1477 = vld [vmem:[%s3 + $0x2c] sm:$0xf]
  %v1478 = vld [vmem:[%s3 + $0x30] sm:$0xf]
  %v1479 = vld [vmem:[%s3 + $0x34] sm:$0xf]
  %v1480 = vld [vmem:[%s3 + $0x38] sm:$0xf]
  %v1481 = vld [vmem:[%s3 + $0x3c] sm:$0xf]
  %v1482 = vld [vmem:[%s3 + $0x40] sm:$0xf]
  %v1483 = vld [vmem:[%s3 + $0x44] sm:$0xf]
  %v1484 = vld [vmem:[%s3 + $0x48] sm:$0xf]
  %v1485 = vld [vmem:[%s3 + $0x4c] sm:$0xf]
  %v1486 = vld [vmem:[%s3 + $0x50] sm:$0xf]
  %v1487 = vld [vmem:[%s3 + $0x54] sm:$0xf]
  %v1488 = vld [vmem:[%s3 + $0x58] sm:$0xf]
  %v1489 = vld [vmem:[%s3 + $0x5c] sm:$0xf]
  %v1490 = vld [vmem:[%s3 + $0x60] sm:$0xf]
  %v1491 = vld [vmem:[%s3 + $0x64] sm:$0xf]
  %v1492 = vld [vmem:[%s3 + $0x68] sm:$0xf]
  %v1493 = vld [vmem:[%s3 + $0x6c] sm:$0xf]
  %v1494 = vld [vmem:[%s3 + $0x70] sm:$0xf]
  %v1495 = vld [vmem:[%s3 + $0x74] sm:$0xf]
  %v1496 = vld [vmem:[%s3 + $0x78] sm:$0xf]
  %v1497 = vld [vmem:[%s3 + $0x7c] sm:$0xf]
  %v1512 = vunpack.c.l.b16 %v1452
  %v1513 = vunpack.c.h.b16 %v1452
  %v1514 = vunpack.c.l.b16 %v1453
  %v1515 = vunpack.c.h.b16 %v1453
  %v1516 = vunpack.c.l.b16 %v1454
  %v1517 = vunpack.c.h.b16 %v1454
  %v1518 = vunpack.c.l.b16 %v1455
  %v1519 = vunpack.c.h.b16 %v1455
  %v1520 = vunpack.c.l.b16 %v1456
  %v1521 = vunpack.c.h.b16 %v1456
  %v1522 = vunpack.c.l.b16 %v1457
  %v1523 = vunpack.c.h.b16 %v1457
  %v1524 = vunpack.c.l.b16 %v1458
  %v1525 = vunpack.c.h.b16 %v1458
  %v1526 = vunpack.c.l.b16 %v1459
  %v1527 = vunpack.c.h.b16 %v1459
  %v1528 = vunpack.c.l.b16 %v1460
  %v1529 = vunpack.c.h.b16 %v1460
  %v1530 = vunpack.c.l.b16 %v1461
  %v1531 = vunpack.c.h.b16 %v1461
  %v1532 = vunpack.c.l.b16 %v1462
  %v1533 = vunpack.c.h.b16 %v1462
  %v1534 = vunpack.c.l.b16 %v1463
  %v1535 = vunpack.c.h.b16 %v1463
  %v1536 = vunpack.c.l.b16 %v1464
  %v1537 = vunpack.c.h.b16 %v1464
  %v1538 = vunpack.c.l.b16 %v1465
  %v1539 = vunpack.c.h.b16 %v1465
  %v1540 = vpack.c.b16 %v1514, %v1512
  %v1541 = vpack.c.b16 %v1515, %v1513
  %v1542 = vpack.c.b16 %v1518, %v1516
  %v1543 = vpack.c.b16 %v1519, %v1517
  %v1544 = vpack.c.b16 %v1522, %v1520
  %v1545 = vpack.c.b16 %v1523, %v1521
  %v1546 = vpack.c.b16 %v1526, %v1524
  %v1547 = vpack.c.b16 %v1527, %v1525
  %v1548 = vpack.c.b16 %v1530, %v1528
  %v1549 = vpack.c.b16 %v1531, %v1529
  %v1550 = vpack.c.b16 %v1534, %v1532
  %v1551 = vpack.c.b16 %v1535, %v1533
  %v1552 = vpack.c.b16 %v1538, %v1536
  %v1553 = vpack.c.b16 %v1539, %v1537
  %v1600 = vunpack.c.l.b16 %v1466
  %v1601 = vunpack.c.l.b16 %v1467
  %v1602 = vunpack.c.l.b16 %v1468
  %v1603 = vunpack.c.l.b16 %v1469
  %v1604 = vunpack.c.l.b16 %v1470
  %v1605 = vunpack.c.l.b16 %v1471
  %v1606 = vunpack.c.l.b16 %v1472
  %v1607 = vunpack.c.l.b16 %v1473
  %v1608 = vunpack.c.l.b16 %v1474
  %v1609 = vunpack.c.l.b16 %v1475
  %v1610 = vunpack.c.l.b16 %v1476
  %v1611 = vunpack.c.l.b16 %v1477
  %v1612 = vunpack.c.l.b16 %v1478
  %v1613 = vunpack.c.l.b16 %v1479
  %v1614 = vunpack.c.l.b16 %v1480
  %v1615 = vunpack.c.l.b16 %v1481
  %v1616 = vunpack.c.l.b16 %v1482
  %v1617 = vunpack.c.l.b16 %v1483
  %v1618 = vunpack.c.l.b16 %v1484
  %v1619 = vunpack.c.l.b16 %v1485
  %v1620 = vunpack.c.l.b16 %v1486
  %v1621 = vunpack.c.l.b16 %v1487
  %v1622 = vunpack.c.l.b16 %v1488
  %v1623 = vunpack.c.l.b16 %v1489
  %v1624 = vunpack.c.l.b16 %v1490
  %v1625 = vunpack.c.l.b16 %v1491
  %v1626 = vunpack.c.l.b16 %v1492
  %v1627 = vunpack.c.l.b16 %v1493
  %v1628 = vunpack.c.l.b16 %v1494
  %v1629 = vunpack.c.l.b16 %v1495
  %v1630 = vunpack.c.l.b16 %v1496
  %v1631 = vunpack.c.l.b16 %v1497
  %v1632 = vpack.c.b16 %v1601, %v1600
  %v1633 = vpack.c.b16 %v1603, %v1602
  %v1634 = vpack.c.b16 %v1605, %v1604
  %v1635 = vpack.c.b16 %v1607, %v1606
  %v1636 = vpack.c.b16 %v1609, %v1608
  %v1637 = vpack.c.b16 %v1611, %v1610
  %v1638 = vpack.c.b16 %v1613, %v1612
  %v1639 = vpack.c.b16 %v1615, %v1614
  %v1640 = vpack.c.b16 %v1617, %v1616
  %v1641 = vpack.c.b16 %v1619, %v1618
  %v1642 = vpack.c.b16 %v1621, %v1620
  %v1643 = vpack.c.b16 %v1623, %v1622
  %v1644 = vpack.c.b16 %v1625, %v1624
  %v1645 = vpack.c.b16 %v1627, %v1626
  %v1646 = vpack.c.b16 %v1629, %v1628
  %v1647 = vpack.c.b16 %v1631, %v1630
  %1664 = vmatprep.subr.bf16.mxu0 0
  %1665 = vmatpush1.bf16.msra.mxu0 %v1639
  %1666 = vmatprep.subr.bf16.mxu0 0
  %1667 = vmatpush1.bf16.msra.mxu0 %v1638
  %1668 = vmatprep.subr.bf16.mxu0 0
  %1669 = vmatpush1.bf16.msra.mxu0 %v1637
  %1670 = vmatprep.subr.bf16.mxu0 0
  %1671 = vmatpush1.bf16.msra.mxu0 %v1636
  %1672 = vmatprep.subr.bf16.mxu0 0
  %1673 = vmatpush1.bf16.msra.mxu0 %v1635
  %1674 = vmatprep.subr.bf16.mxu0 0
  %1675 = vmatpush1.bf16.msra.mxu0 %v1634
  %1676 = vmatprep.subr.bf16.mxu0 0
  %1677 = vmatpush1.bf16.msra.mxu0 %v1633
  %1678 = vmatprep.subr.bf16.mxu0 0
  %1679 = vmatpush1.bf16.msra.mxu0 %v1632
  %1680 = vmatprep.subr.bf16.mxu0 0
  %1681 = vmatpush2.bf16.msra.mxu0 %v1647
  %1682 = vmatprep.subr.bf16.mxu0 0
  %1683 = vmatpush2.bf16.msra.mxu0 %v1646
  %1684 = vmatprep.subr.bf16.mxu0 0
  %1685 = vmatpush2.bf16.msra.mxu0 %v1645
  %1686 = vmatprep.subr.bf16.mxu0 0
  %1687 = vmatpush2.bf16.msra.mxu0 %v1644
  %1688 = vmatprep.subr.bf16.mxu0 0
  %1689 = vmatpush2.bf16.msra.mxu0 %v1643
  %1690 = vmatprep.subr.bf16.mxu0 0
  %1691 = vmatpush2.bf16.msra.mxu0 %v1642
  %1692 = vmatprep.subr.bf16.mxu0 0
  %1693 = vmatpush2.bf16.msra.mxu0 %v1641
  %1694 = vmatprep.subr.bf16.mxu0 0
  %1695 = vmatpush2.bf16.msra.mxu0 %v1640
  %1696 = vmatprep.mubr.bf16.mxu0 %v1541
  %1697 = vmatmul.mubr.bf16.gmra.mxu0 %v1540
  %v1698 = vpop.f32.mrf.mxu0
  %v1699 = vadd.f32 0.0, %v1698
  %v1700 = vpop.f32.mrf.mxu0
  %v1701 = vpop.f32.mrf.mxu0
  %v1702 = vadd.f32 0.0, %v1701
  %v1703 = vpop.f32.mrf.mxu0
  %1704 = vmatprep.mubr.bf16.mxu0 %v1543
  %1705 = vmatmul.mubr.bf16.gmra.mxu0 %v1542
  %v1706 = vpop.f32.mrf.mxu0
  %v1707 = vadd.f32 0.0, %v1706
  %v1708 = vpop.f32.mrf.mxu0
  %v1709 = vpop.f32.mrf.mxu0
  %v1710 = vadd.f32 0.0, %v1709
  %v1711 = vpop.f32.mrf.mxu0
  %1712 = vmatprep.mubr.bf16.mxu0 %v1545
  %1713 = vmatmul.mubr.bf16.gmra.mxu0 %v1544
  %v1714 = vpop.f32.mrf.mxu0
  %v1715 = vadd.f32 0.0, %v1714
  %v1716 = vpop.f32.mrf.mxu0
  %v1717 = vpop.f32.mrf.mxu0
  %v1718 = vadd.f32 0.0, %v1717
  %v1719 = vpop.f32.mrf.mxu0
  %1720 = vmatprep.mubr.bf16.mxu0 %v1547
  %1721 = vmatmul.mubr.bf16.gmra.mxu0 %v1546
  %v1722 = vpop.f32.mrf.mxu0
  %v1723 = vadd.f32 0.0, %v1722
  %v1724 = vpop.f32.mrf.mxu0
  %v1725 = vpop.f32.mrf.mxu0
  %v1726 = vadd.f32 0.0, %v1725
  %v1727 = vpop.f32.mrf.mxu0
  %1728 = vmatprep.mubr.bf16.mxu0 %v1549
  %1729 = vmatmul.mubr.bf16.gmra.mxu0 %v1548
  %v1730 = vpop.f32.mrf.mxu0
  %v1731 = vadd.f32 0.0, %v1730
  %v1732 = vpop.f32.mrf.mxu0
  %v1733 = vpop.f32.mrf.mxu0
  %v1734 = vadd.f32 0.0, %v1733
  %v1735 = vpop.f32.mrf.mxu0
  %1736 = vmatprep.mubr.bf16.mxu0 %v1551
  %1737 = vmatmul.mubr.bf16.gmra.mxu0 %v1550
  %v1738 = vpop.f32.mrf.mxu0
  %v1739 = vadd.f32 0.0, %v1738
  %v1740 = vpop.f32.mrf.mxu0
  %v1741 = vpop.f32.mrf.mxu0
  %v1742 = vadd.f32 0.0, %v1741
  %v1743 = vpop.f32.mrf.mxu0
  %1744 = vmatprep.mubr.bf16.mxu0 %v1553
  %1745 = vmatmul.mubr.bf16.gmra.mxu0 %v1552
  %v1746 = vpop.f32.mrf.mxu0
  %v1747 = vadd.f32 0.0, %v1746
  %v1748 = vpop.f32.mrf.mxu0
  %v1749 = vpop.f32.mrf.mxu0
  %v1750 = vadd.f32 0.0, %v1749
  %v1751 = vpop.f32.mrf.mxu0
  %1752 = vdwg.mxu0
  %v1754 = vsel %vm123, %v1444, 0
  %v1757 = vsel %vm123, %v1445, 0
  %v1760 = vsel %vm123, %v1446, 0
  %v1763 = vsel %vm123, %v1447, 0
  %v1766 = vsel %vm123, %v1448, 0
  %v1769 = vsel %vm123, %v1449, 0
  %v1772 = vsel %vm123, %v1450, 0
  %v1775 = vsel %vm145, %v1451, 0
  %1777 = vmatprep.subr.bf16.mxu0 0
  %1778 = vmatpush1.bf16.msra.mxu0 0
  %1779 = vmatprep.subr.bf16.mxu0 0
  %1780 = vmatpush1.bf16.msra.mxu0 0
  %1781 = vmatprep.subr.bf16.mxu0 0
  %1782 = vmatpush1.bf16.msra.mxu0 0
  %1783 = vmatprep.subr.bf16.mxu0 0
  %1784 = vmatpush1.bf16.msra.mxu0 0
  %1785 = vmatprep.subr.bf16.mxu0 0
  %1786 = vmatpush1.bf16.msra.mxu0 0
  %1787 = vmatprep.subr.bf16.mxu0 0
  %1788 = vmatpush1.bf16.msra.mxu0 0
  %1789 = vmatprep.subr.bf16.mxu0 0
  %1790 = vmatpush1.bf16.msra.mxu0 0
  %1791 = vmatprep.subr.bf16.mxu0 0
  %1792 = vmatpush1.bf16.msra.mxu0 %v1775
  %1793 = vmatprep.subr.bf16.mxu0 0
  %1794 = vmatpush2.bf16.msra.mxu0 0
  %1795 = vmatprep.subr.bf16.mxu0 0
  %1796 = vmatpush2.bf16.msra.mxu0 0
  %1797 = vmatprep.subr.bf16.mxu0 0
  %1798 = vmatpush2.bf16.msra.mxu0 0
  %1799 = vmatprep.subr.bf16.mxu0 0
  %1800 = vmatpush2.bf16.msra.mxu0 0
  %1801 = vmatprep.subr.bf16.mxu0 0
  %1802 = vmatpush2.bf16.msra.mxu0 0
  %1803 = vmatprep.subr.bf16.mxu0 0
  %1804 = vmatpush2.bf16.msra.mxu0 0
  %1805 = vmatprep.subr.bf16.mxu0 0
  %1806 = vmatpush2.bf16.msra.mxu0 0
  %1807 = vmatprep.subr.bf16.mxu0 0
  %1808 = vmatpush2.bf16.msra.mxu0 0
  %1809 = vmatprep.mubr.bf16.mxu0 0
  %1810 = vmatmul.mubr.bf16.gmra.mxu0 %v1754
  %v1811 = vpop.f32.mrf.mxu0
  %v1812 = vadd.f32 %v1699, %v1811
  %v1813 = vpop.f32.mrf.mxu0
  %v1814 = vpop.f32.mrf.mxu0
  %v1815 = vadd.f32 %v1702, %v1814
  %v1816 = vpop.f32.mrf.mxu0
  %1817 = vmatprep.mubr.bf16.mxu0 0
  %1818 = vmatmul.mubr.bf16.gmra.mxu0 %v1757
  %v1819 = vpop.f32.mrf.mxu0
  %v1820 = vadd.f32 %v1707, %v1819
  %v1821 = vpop.f32.mrf.mxu0
  %v1822 = vpop.f32.mrf.mxu0
  %v1823 = vadd.f32 %v1710, %v1822
  %v1824 = vpop.f32.mrf.mxu0
  %1825 = vmatprep.mubr.bf16.mxu0 0
  %1826 = vmatmul.mubr.bf16.gmra.mxu0 %v1760
  %v1827 = vpop.f32.mrf.mxu0
  %v1828 = vadd.f32 %v1715, %v1827
  %v1829 = vpop.f32.mrf.mxu0
  %v1830 = vpop.f32.mrf.mxu0
  %v1831 = vadd.f32 %v1718, %v1830
  %v1832 = vpop.f32.mrf.mxu0
  %1833 = vmatprep.mubr.bf16.mxu0 0
  %1834 = vmatmul.mubr.bf16.gmra.mxu0 %v1763
  %v1835 = vpop.f32.mrf.mxu0
  %v1836 = vadd.f32 %v1723, %v1835
  %v1837 = vpop.f32.mrf.mxu0
  %v1838 = vpop.f32.mrf.mxu0
  %v1839 = vadd.f32 %v1726, %v1838
  %v1840 = vpop.f32.mrf.mxu0
  %1841 = vmatprep.mubr.bf16.mxu0 0
  %1842 = vmatmul.mubr.bf16.gmra.mxu0 %v1766
  %v1843 = vpop.f32.mrf.mxu0
  %v1844 = vadd.f32 %v1731, %v1843
  %v1845 = vpop.f32.mrf.mxu0
  %v1846 = vpop.f32.mrf.mxu0
  %v1847 = vadd.f32 %v1734, %v1846
  %v1848 = vpop.f32.mrf.mxu0
  %1849 = vmatprep.mubr.bf16.mxu0 0
  %1850 = vmatmul.mubr.bf16.gmra.mxu0 %v1769
  %v1851 = vpop.f32.mrf.mxu0
  %v1852 = vadd.f32 %v1739, %v1851
  %v1853 = vpop.f32.mrf.mxu0
  %v1854 = vpop.f32.mrf.mxu0
  %v1855 = vadd.f32 %v1742, %v1854
  %v1856 = vpop.f32.mrf.mxu0
  %1857 = vmatprep.mubr.bf16.mxu0 0
  %1858 = vmatmul.mubr.bf16.gmra.mxu0 %v1772
  %v1859 = vpop.f32.mrf.mxu0
  %v1860 = vadd.f32 %v1747, %v1859
  %v1861 = vpop.f32.mrf.mxu0
  %v1862 = vpop.f32.mrf.mxu0
  %v1863 = vadd.f32 %v1750, %v1862
  %v1864 = vpop.f32.mrf.mxu0
  %1865 = vdwg.mxu0
  %v1866 = vld [vmem:[#allocation2 + $0x8] sm:$0xff]
  %v1867 = vld [vmem:[#allocation2 + $0x10] sm:$0xff]
  %v1868 = vld [vmem:[#allocation2 + $0x18] sm:$0xff]
  %v1869 = vld [vmem:[#allocation2 + $0x20] sm:$0xff]
  %v1870 = vld [vmem:[#allocation2 + $0x28] sm:$0xff]
  %v1871 = vld [vmem:[#allocation2 + $0x30] sm:$0xff]
  %v1872 = vld [vmem:[#allocation2 + $0x38] sm:$0xff]
  %v1873 = vld [vmem:[#allocation2 + $0x40] sm:$0xff]
  %v1874 = vld [vmem:[#allocation2 + $0x48] sm:$0xff]
  %v1875 = vld [vmem:[#allocation2 + $0x50] sm:$0xff]
  %v1876 = vld [vmem:[#allocation2 + $0x58] sm:$0xff]
  %v1877 = vld [vmem:[#allocation2 + $0x60] sm:$0xff]
  %v1878 = vld [vmem:[#allocation2 + $0x68] sm:$0xff]
  %v1879 = vld [vmem:[#allocation2 + $0x70] sm:$0xff]
  %s1880 = scalar_lea.vmem %s3, 128
  %v1881 = vld [vmem:[%s1880] sm:$0xf]
  %v1882 = vld [vmem:[%s1880 + $0x4] sm:$0xf]
  %v1883 = vld [vmem:[%s1880 + $0x8] sm:$0xf]
  %v1884 = vld [vmem:[%s1880 + $0xc] sm:$0xf]
  %v1885 = vld [vmem:[%s1880 + $0x10] sm:$0xf]
  %v1886 = vld [vmem:[%s1880 + $0x14] sm:$0xf]
  %v1887 = vld [vmem:[%s1880 + $0x18] sm:$0xf]
  %v1888 = vld [vmem:[%s1880 + $0x1c] sm:$0xf]
  %v1889 = vld [vmem:[%s1880 + $0x20] sm:$0xf]
  %v1890 = vld [vmem:[%s1880 + $0x24] sm:$0xf]
  %v1891 = vld [vmem:[%s1880 + $0x28] sm:$0xf]
  %v1892 = vld [vmem:[%s1880 + $0x2c] sm:$0xf]
  %v1893 = vld [vmem:[%s1880 + $0x30] sm:$0xf]
  %v1894 = vld [vmem:[%s1880 + $0x34] sm:$0xf]
  %v1895 = vld [vmem:[%s1880 + $0x38] sm:$0xf]
  %v1896 = vld [vmem:[%s1880 + $0x3c] sm:$0xf]
  %v1897 = vld [vmem:[%s1880 + $0x40] sm:$0xf]
  %v1898 = vld [vmem:[%s1880 + $0x44] sm:$0xf]
  %v1899 = vld [vmem:[%s1880 + $0x48] sm:$0xf]
  %v1900 = vld [vmem:[%s1880 + $0x4c] sm:$0xf]
  %v1901 = vld [vmem:[%s1880 + $0x50] sm:$0xf]
  %v1902 = vld [vmem:[%s1880 + $0x54] sm:$0xf]
  %v1903 = vld [vmem:[%s1880 + $0x58] sm:$0xf]
  %v1904 = vld [vmem:[%s1880 + $0x5c] sm:$0xf]
  %v1905 = vld [vmem:[%s1880 + $0x60] sm:$0xf]
  %v1906 = vld [vmem:[%s1880 + $0x64] sm:$0xf]
  %v1907 = vld [vmem:[%s1880 + $0x68] sm:$0xf]
  %v1908 = vld [vmem:[%s1880 + $0x6c] sm:$0xf]
  %v1909 = vld [vmem:[%s1880 + $0x70] sm:$0xf]
  %v1910 = vld [vmem:[%s1880 + $0x74] sm:$0xf]
  %v1911 = vld [vmem:[%s1880 + $0x78] sm:$0xf]
  %v1912 = vld [vmem:[%s1880 + $0x7c] sm:$0xf]
  %v1927 = vunpack.c.l.b16 %v1866
  %v1928 = vunpack.c.h.b16 %v1866
  %v1929 = vunpack.c.l.b16 %v1867
  %v1930 = vunpack.c.h.b16 %v1867
  %v1931 = vunpack.c.l.b16 %v1868
  %v1932 = vunpack.c.h.b16 %v1868
  %v1933 = vunpack.c.l.b16 %v1869
  %v1934 = vunpack.c.h.b16 %v1869
  %v1935 = vunpack.c.l.b16 %v1870
  %v1936 = vunpack.c.h.b16 %v1870
  %v1937 = vunpack.c.l.b16 %v1871
  %v1938 = vunpack.c.h.b16 %v1871
  %v1939 = vunpack.c.l.b16 %v1872
  %v1940 = vunpack.c.h.b16 %v1872
  %v1941 = vunpack.c.l.b16 %v1873
  %v1942 = vunpack.c.h.b16 %v1873
  %v1943 = vunpack.c.l.b16 %v1874
  %v1944 = vunpack.c.h.b16 %v1874
  %v1945 = vunpack.c.l.b16 %v1875
  %v1946 = vunpack.c.h.b16 %v1875
  %v1947 = vunpack.c.l.b16 %v1876
  %v1948 = vunpack.c.h.b16 %v1876
  %v1949 = vunpack.c.l.b16 %v1877
  %v1950 = vunpack.c.h.b16 %v1877
  %v1951 = vunpack.c.l.b16 %v1878
  %v1952 = vunpack.c.h.b16 %v1878
  %v1953 = vunpack.c.l.b16 %v1879
  %v1954 = vunpack.c.h.b16 %v1879
  %v1955 = vpack.c.b16 %v1929, %v1927
  %v1956 = vpack.c.b16 %v1930, %v1928
  %v1957 = vpack.c.b16 %v1933, %v1931
  %v1958 = vpack.c.b16 %v1934, %v1932
  %v1959 = vpack.c.b16 %v1937, %v1935
  %v1960 = vpack.c.b16 %v1938, %v1936
  %v1961 = vpack.c.b16 %v1941, %v1939
  %v1962 = vpack.c.b16 %v1942, %v1940
  %v1963 = vpack.c.b16 %v1945, %v1943
  %v1964 = vpack.c.b16 %v1946, %v1944
  %v1965 = vpack.c.b16 %v1949, %v1947
  %v1966 = vpack.c.b16 %v1950, %v1948
  %v1967 = vpack.c.b16 %v1953, %v1951
  %v1968 = vpack.c.b16 %v1954, %v1952
  %v2015 = vunpack.c.l.b16 %v1881
  %v2016 = vunpack.c.l.b16 %v1882
  %v2017 = vunpack.c.l.b16 %v1883
  %v2018 = vunpack.c.l.b16 %v1884
  %v2019 = vunpack.c.l.b16 %v1885
  %v2020 = vunpack.c.l.b16 %v1886
  %v2021 = vunpack.c.l.b16 %v1887
  %v2022 = vunpack.c.l.b16 %v1888
  %v2023 = vunpack.c.l.b16 %v1889
  %v2024 = vunpack.c.l.b16 %v1890
  %v2025 = vunpack.c.l.b16 %v1891
  %v2026 = vunpack.c.l.b16 %v1892
  %v2027 = vunpack.c.l.b16 %v1893
  %v2028 = vunpack.c.l.b16 %v1894
  %v2029 = vunpack.c.l.b16 %v1895
  %v2030 = vunpack.c.l.b16 %v1896
  %v2031 = vunpack.c.l.b16 %v1897
  %v2032 = vunpack.c.l.b16 %v1898
  %v2033 = vunpack.c.l.b16 %v1899
  %v2034 = vunpack.c.l.b16 %v1900
  %v2035 = vunpack.c.l.b16 %v1901
  %v2036 = vunpack.c.l.b16 %v1902
  %v2037 = vunpack.c.l.b16 %v1903
  %v2038 = vunpack.c.l.b16 %v1904
  %v2039 = vunpack.c.l.b16 %v1905
  %v2040 = vunpack.c.l.b16 %v1906
  %v2041 = vunpack.c.l.b16 %v1907
  %v2042 = vunpack.c.l.b16 %v1908
  %v2043 = vunpack.c.l.b16 %v1909
  %v2044 = vunpack.c.l.b16 %v1910
  %v2045 = vunpack.c.l.b16 %v1911
  %v2046 = vunpack.c.l.b16 %v1912
  %v2047 = vpack.c.b16 %v2016, %v2015
  %v2048 = vpack.c.b16 %v2018, %v2017
  %v2049 = vpack.c.b16 %v2020, %v2019
  %v2050 = vpack.c.b16 %v2022, %v2021
  %v2051 = vpack.c.b16 %v2024, %v2023
  %v2052 = vpack.c.b16 %v2026, %v2025
  %v2053 = vpack.c.b16 %v2028, %v2027
  %v2054 = vpack.c.b16 %v2030, %v2029
  %v2055 = vpack.c.b16 %v2032, %v2031
  %v2056 = vpack.c.b16 %v2034, %v2033
  %v2057 = vpack.c.b16 %v2036, %v2035
  %v2058 = vpack.c.b16 %v2038, %v2037
  %v2059 = vpack.c.b16 %v2040, %v2039
  %v2060 = vpack.c.b16 %v2042, %v2041
  %v2061 = vpack.c.b16 %v2044, %v2043
  %v2062 = vpack.c.b16 %v2046, %v2045
  %2079 = vmatprep.subr.bf16.mxu0 0
  %2080 = vmatpush1.bf16.msra.mxu0 %v2054
  %2081 = vmatprep.subr.bf16.mxu0 0
  %2082 = vmatpush1.bf16.msra.mxu0 %v2053
  %2083 = vmatprep.subr.bf16.mxu0 0
  %2084 = vmatpush1.bf16.msra.mxu0 %v2052
  %2085 = vmatprep.subr.bf16.mxu0 0
  %2086 = vmatpush1.bf16.msra.mxu0 %v2051
  %2087 = vmatprep.subr.bf16.mxu0 0
  %2088 = vmatpush1.bf16.msra.mxu0 %v2050
  %2089 = vmatprep.subr.bf16.mxu0 0
  %2090 = vmatpush1.bf16.msra.mxu0 %v2049
  %2091 = vmatprep.subr.bf16.mxu0 0
  %2092 = vmatpush1.bf16.msra.mxu0 %v2048
  %2093 = vmatprep.subr.bf16.mxu0 0
  %2094 = vmatpush1.bf16.msra.mxu0 %v2047
  %2095 = vmatprep.subr.bf16.mxu0 0
  %2096 = vmatpush2.bf16.msra.mxu0 %v2062
  %2097 = vmatprep.subr.bf16.mxu0 0
  %2098 = vmatpush2.bf16.msra.mxu0 %v2061
  %2099 = vmatprep.subr.bf16.mxu0 0
  %2100 = vmatpush2.bf16.msra.mxu0 %v2060
  %2101 = vmatprep.subr.bf16.mxu0 0
  %2102 = vmatpush2.bf16.msra.mxu0 %v2059
  %2103 = vmatprep.subr.bf16.mxu0 0
  %2104 = vmatpush2.bf16.msra.mxu0 %v2058
  %2105 = vmatprep.subr.bf16.mxu0 0
  %2106 = vmatpush2.bf16.msra.mxu0 %v2057
  %2107 = vmatprep.subr.bf16.mxu0 0
  %2108 = vmatpush2.bf16.msra.mxu0 %v2056
  %2109 = vmatprep.subr.bf16.mxu0 0
  %2110 = vmatpush2.bf16.msra.mxu0 %v2055
  %2111 = vmatprep.mubr.bf16.mxu0 %v1956
  %2112 = vmatmul.mubr.bf16.gmra.mxu0 %v1955
  %v2113 = vpop.f32.mrf.mxu0
  %v2114 = vadd.f32 0.0, %v2113
  %v2115 = vpop.f32.mrf.mxu0
  %v2116 = vpop.f32.mrf.mxu0
  %v2117 = vadd.f32 0.0, %v2116
  %v2118 = vpop.f32.mrf.mxu0
  %2119 = vmatprep.mubr.bf16.mxu0 %v1958
  %2120 = vmatmul.mubr.bf16.gmra.mxu0 %v1957
  %v2121 = vpop.f32.mrf.mxu0
  %v2122 = vadd.f32 0.0, %v2121
  %v2123 = vpop.f32.mrf.mxu0
  %v2124 = vpop.f32.mrf.mxu0
  %v2125 = vadd.f32 0.0, %v2124
  %v2126 = vpop.f32.mrf.mxu0
  %2127 = vmatprep.mubr.bf16.mxu0 %v1960
  %2128 = vmatmul.mubr.bf16.gmra.mxu0 %v1959
  %v2129 = vpop.f32.mrf.mxu0
  %v2130 = vadd.f32 0.0, %v2129
  %v2131 = vpop.f32.mrf.mxu0
  %v2132 = vpop.f32.mrf.mxu0
  %v2133 = vadd.f32 0.0, %v2132
  %v2134 = vpop.f32.mrf.mxu0
  %2135 = vmatprep.mubr.bf16.mxu0 %v1962
  %2136 = vmatmul.mubr.bf16.gmra.mxu0 %v1961
  %v2137 = vpop.f32.mrf.mxu0
  %v2138 = vadd.f32 0.0, %v2137
  %v2139 = vpop.f32.mrf.mxu0
  %v2140 = vpop.f32.mrf.mxu0
  %v2141 = vadd.f32 0.0, %v2140
  %v2142 = vpop.f32.mrf.mxu0
  %2143 = vmatprep.mubr.bf16.mxu0 %v1964
  %2144 = vmatmul.mubr.bf16.gmra.mxu0 %v1963
  %v2145 = vpop.f32.mrf.mxu0
  %v2146 = vadd.f32 0.0, %v2145
  %v2147 = vpop.f32.mrf.mxu0
  %v2148 = vpop.f32.mrf.mxu0
  %v2149 = vadd.f32 0.0, %v2148
  %v2150 = vpop.f32.mrf.mxu0
  %2151 = vmatprep.mubr.bf16.mxu0 %v1966
  %2152 = vmatmul.mubr.bf16.gmra.mxu0 %v1965
  %v2153 = vpop.f32.mrf.mxu0
  %v2154 = vadd.f32 0.0, %v2153
  %v2155 = vpop.f32.mrf.mxu0
  %v2156 = vpop.f32.mrf.mxu0
  %v2157 = vadd.f32 0.0, %v2156
  %v2158 = vpop.f32.mrf.mxu0
  %2159 = vmatprep.mubr.bf16.mxu0 %v1968
  %2160 = vmatmul.mubr.bf16.gmra.mxu0 %v1967
  %v2161 = vpop.f32.mrf.mxu0
  %v2162 = vadd.f32 0.0, %v2161
  %v2163 = vpop.f32.mrf.mxu0
  %v2164 = vpop.f32.mrf.mxu0
  %v2165 = vadd.f32 0.0, %v2164
  %v2166 = vpop.f32.mrf.mxu0
  %2167 = vdwg.mxu0
  %v2168 = vadd.f32 %v1812, %v2114
  %v2169 = vadd.f32 %v1815, %v2117
  %v2170 = vadd.f32 %v1820, %v2122
  %v2171 = vadd.f32 %v1823, %v2125
  %v2172 = vadd.f32 %v1828, %v2130
  %v2173 = vadd.f32 %v1831, %v2133
  %v2174 = vadd.f32 %v1836, %v2138
  %v2175 = vadd.f32 %v1839, %v2141
  %v2176 = vadd.f32 %v1844, %v2146
  %v2177 = vadd.f32 %v1847, %v2149
  %v2178 = vadd.f32 %v1852, %v2154
  %v2179 = vadd.f32 %v1855, %v2157
  %v2180 = vadd.f32 %v1860, %v2162
  %v2181 = vadd.f32 %v1863, %v2165
  %v2182 = vld [vmem:[#allocation2 + $0x10] sm:$0xff]
  %v2183 = vld [vmem:[#allocation2 + $0x18] sm:$0xff]
  %v2184 = vld [vmem:[#allocation2 + $0x20] sm:$0xff]
  %v2185 = vld [vmem:[#allocation2 + $0x28] sm:$0xff]
  %v2186 = vld [vmem:[#allocation2 + $0x30] sm:$0xff]
  %v2187 = vld [vmem:[#allocation2 + $0x38] sm:$0xff]
  %v2188 = vld [vmem:[#allocation2 + $0x40] sm:$0xff]
  %v2189 = vld [vmem:[#allocation2 + $0x48] sm:$0xff]
  %v2190 = vld [vmem:[#allocation2 + $0x50] sm:$0xff]
  %v2191 = vld [vmem:[#allocation2 + $0x58] sm:$0xff]
  %v2192 = vld [vmem:[#allocation2 + $0x60] sm:$0xff]
  %v2193 = vld [vmem:[#allocation2 + $0x68] sm:$0xff]
  %v2194 = vld [vmem:[#allocation2 + $0x70] sm:$0xff]
  %v2195 = vld [vmem:[#allocation2 + $0x78] sm:$0xff]
  %s2196 = scalar_lea.vmem %s3, 256
  %v2197 = vld [vmem:[%s2196] sm:$0xf]
  %v2198 = vld [vmem:[%s2196 + $0x4] sm:$0xf]
  %v2199 = vld [vmem:[%s2196 + $0x8] sm:$0xf]
  %v2200 = vld [vmem:[%s2196 + $0xc] sm:$0xf]
  %v2201 = vld [vmem:[%s2196 + $0x10] sm:$0xf]
  %v2202 = vld [vmem:[%s2196 + $0x14] sm:$0xf]
  %v2203 = vld [vmem:[%s2196 + $0x18] sm:$0xf]
  %v2204 = vld [vmem:[%s2196 + $0x1c] sm:$0xf]
  %v2205 = vld [vmem:[%s2196 + $0x20] sm:$0xf]
  %v2206 = vld [vmem:[%s2196 + $0x24] sm:$0xf]
  %v2207 = vld [vmem:[%s2196 + $0x28] sm:$0xf]
  %v2208 = vld [vmem:[%s2196 + $0x2c] sm:$0xf]
  %v2209 = vld [vmem:[%s2196 + $0x30] sm:$0xf]
  %v2210 = vld [vmem:[%s2196 + $0x34] sm:$0xf]
  %v2211 = vld [vmem:[%s2196 + $0x38] sm:$0xf]
  %v2212 = vld [vmem:[%s2196 + $0x3c] sm:$0xf]
  %v2213 = vld [vmem:[%s2196 + $0x40] sm:$0xf]
  %v2214 = vld [vmem:[%s2196 + $0x44] sm:$0xf]
  %v2215 = vld [vmem:[%s2196 + $0x48] sm:$0xf]
  %v2216 = vld [vmem:[%s2196 + $0x4c] sm:$0xf]
  %v2217 = vld [vmem:[%s2196 + $0x50] sm:$0xf]
  %v2218 = vld [vmem:[%s2196 + $0x54] sm:$0xf]
  %v2219 = vld [vmem:[%s2196 + $0x58] sm:$0xf]
  %v2220 = vld [vmem:[%s2196 + $0x5c] sm:$0xf]
  %v2221 = vld [vmem:[%s2196 + $0x60] sm:$0xf]
  %v2222 = vld [vmem:[%s2196 + $0x64] sm:$0xf]
  %v2223 = vld [vmem:[%s2196 + $0x68] sm:$0xf]
  %v2224 = vld [vmem:[%s2196 + $0x6c] sm:$0xf]
  %v2225 = vld [vmem:[%s2196 + $0x70] sm:$0xf]
  %v2226 = vld [vmem:[%s2196 + $0x74] sm:$0xf]
  %v2227 = vld [vmem:[%s2196 + $0x78] sm:$0xf]
  %v2228 = vld [vmem:[%s2196 + $0x7c] sm:$0xf]
  %v2243 = vunpack.c.l.b16 %v2182
  %v2244 = vunpack.c.h.b16 %v2182
  %v2245 = vunpack.c.l.b16 %v2183
  %v2246 = vunpack.c.h.b16 %v2183
  %v2247 = vunpack.c.l.b16 %v2184
  %v2248 = vunpack.c.h.b16 %v2184
  %v2249 = vunpack.c.l.b16 %v2185
  %v2250 = vunpack.c.h.b16 %v2185
  %v2251 = vunpack.c.l.b16 %v2186
  %v2252 = vunpack.c.h.b16 %v2186
  %v2253 = vunpack.c.l.b16 %v2187
  %v2254 = vunpack.c.h.b16 %v2187
  %v2255 = vunpack.c.l.b16 %v2188
  %v2256 = vunpack.c.h.b16 %v2188
  %v2257 = vunpack.c.l.b16 %v2189
  %v2258 = vunpack.c.h.b16 %v2189
  %v2259 = vunpack.c.l.b16 %v2190
  %v2260 = vunpack.c.h.b16 %v2190
  %v2261 = vunpack.c.l.b16 %v2191
  %v2262 = vunpack.c.h.b16 %v2191
  %v2263 = vunpack.c.l.b16 %v2192
  %v2264 = vunpack.c.h.b16 %v2192
  %v2265 = vunpack.c.l.b16 %v2193
  %v2266 = vunpack.c.h.b16 %v2193
  %v2267 = vunpack.c.l.b16 %v2194
  %v2268 = vunpack.c.h.b16 %v2194
  %v2269 = vunpack.c.l.b16 %v2195
  %v2270 = vunpack.c.h.b16 %v2195
  %v2271 = vpack.c.b16 %v2245, %v2243
  %v2272 = vpack.c.b16 %v2246, %v2244
  %v2273 = vpack.c.b16 %v2249, %v2247
  %v2274 = vpack.c.b16 %v2250, %v2248
  %v2275 = vpack.c.b16 %v2253, %v2251
  %v2276 = vpack.c.b16 %v2254, %v2252
  %v2277 = vpack.c.b16 %v2257, %v2255
  %v2278 = vpack.c.b16 %v2258, %v2256
  %v2279 = vpack.c.b16 %v2261, %v2259
  %v2280 = vpack.c.b16 %v2262, %v2260
  %v2281 = vpack.c.b16 %v2265, %v2263
  %v2282 = vpack.c.b16 %v2266, %v2264
  %v2283 = vpack.c.b16 %v2269, %v2267
  %v2284 = vpack.c.b16 %v2270, %v2268
  %v2331 = vunpack.c.l.b16 %v2197
  %v2332 = vunpack.c.l.b16 %v2198
  %v2333 = vunpack.c.l.b16 %v2199
  %v2334 = vunpack.c.l.b16 %v2200
  %v2335 = vunpack.c.l.b16 %v2201
  %v2336 = vunpack.c.l.b16 %v2202
  %v2337 = vunpack.c.l.b16 %v2203
  %v2338 = vunpack.c.l.b16 %v2204
  %v2339 = vunpack.c.l.b16 %v2205
  %v2340 = vunpack.c.l.b16 %v2206
  %v2341 = vunpack.c.l.b16 %v2207
  %v2342 = vunpack.c.l.b16 %v2208
  %v2343 = vunpack.c.l.b16 %v2209
  %v2344 = vunpack.c.l.b16 %v2210
  %v2345 = vunpack.c.l.b16 %v2211
  %v2346 = vunpack.c.l.b16 %v2212
  %v2347 = vunpack.c.l.b16 %v2213
  %v2348 = vunpack.c.l.b16 %v2214
  %v2349 = vunpack.c.l.b16 %v2215
  %v2350 = vunpack.c.l.b16 %v2216
  %v2351 = vunpack.c.l.b16 %v2217
  %v2352 = vunpack.c.l.b16 %v2218
  %v2353 = vunpack.c.l.b16 %v2219
  %v2354 = vunpack.c.l.b16 %v2220
  %v2355 = vunpack.c.l.b16 %v2221
  %v2356 = vunpack.c.l.b16 %v2222
  %v2357 = vunpack.c.l.b16 %v2223
  %v2358 = vunpack.c.l.b16 %v2224
  %v2359 = vunpack.c.l.b16 %v2225
  %v2360 = vunpack.c.l.b16 %v2226
  %v2361 = vunpack.c.l.b16 %v2227
  %v2362 = vunpack.c.l.b16 %v2228
  %v2363 = vpack.c.b16 %v2332, %v2331
  %v2364 = vpack.c.b16 %v2334, %v2333
  %v2365 = vpack.c.b16 %v2336, %v2335
  %v2366 = vpack.c.b16 %v2338, %v2337
  %v2367 = vpack.c.b16 %v2340, %v2339
  %v2368 = vpack.c.b16 %v2342, %v2341
  %v2369 = vpack.c.b16 %v2344, %v2343
  %v2370 = vpack.c.b16 %v2346, %v2345
  %v2371 = vpack.c.b16 %v2348, %v2347
  %v2372 = vpack.c.b16 %v2350, %v2349
  %v2373 = vpack.c.b16 %v2352, %v2351
  %v2374 = vpack.c.b16 %v2354, %v2353
  %v2375 = vpack.c.b16 %v2356, %v2355
  %v2376 = vpack.c.b16 %v2358, %v2357
  %v2377 = vpack.c.b16 %v2360, %v2359
  %v2378 = vpack.c.b16 %v2362, %v2361
  %2395 = vmatprep.subr.bf16.mxu0 0
  %2396 = vmatpush1.bf16.msra.mxu0 %v2370
  %2397 = vmatprep.subr.bf16.mxu0 0
  %2398 = vmatpush1.bf16.msra.mxu0 %v2369
  %2399 = vmatprep.subr.bf16.mxu0 0
  %2400 = vmatpush1.bf16.msra.mxu0 %v2368
  %2401 = vmatprep.subr.bf16.mxu0 0
  %2402 = vmatpush1.bf16.msra.mxu0 %v2367
  %2403 = vmatprep.subr.bf16.mxu0 0
  %2404 = vmatpush1.bf16.msra.mxu0 %v2366
  %2405 = vmatprep.subr.bf16.mxu0 0
  %2406 = vmatpush1.bf16.msra.mxu0 %v2365
  %2407 = vmatprep.subr.bf16.mxu0 0
  %2408 = vmatpush1.bf16.msra.mxu0 %v2364
  %2409 = vmatprep.subr.bf16.mxu0 0
  %2410 = vmatpush1.bf16.msra.mxu0 %v2363
  %2411 = vmatprep.subr.bf16.mxu0 0
  %2412 = vmatpush2.bf16.msra.mxu0 %v2378
  %2413 = vmatprep.subr.bf16.mxu0 0
  %2414 = vmatpush2.bf16.msra.mxu0 %v2377
  %2415 = vmatprep.subr.bf16.mxu0 0
  %2416 = vmatpush2.bf16.msra.mxu0 %v2376
  %2417 = vmatprep.subr.bf16.mxu0 0
  %2418 = vmatpush2.bf16.msra.mxu0 %v2375
  %2419 = vmatprep.subr.bf16.mxu0 0
  %2420 = vmatpush2.bf16.msra.mxu0 %v2374
  %2421 = vmatprep.subr.bf16.mxu0 0
  %2422 = vmatpush2.bf16.msra.mxu0 %v2373
  %2423 = vmatprep.subr.bf16.mxu0 0
  %2424 = vmatpush2.bf16.msra.mxu0 %v2372
  %2425 = vmatprep.subr.bf16.mxu0 0
  %2426 = vmatpush2.bf16.msra.mxu0 %v2371
  %2427 = vmatprep.mubr.bf16.mxu0 %v2272
  %2428 = vmatmul.mubr.bf16.gmra.mxu0 %v2271
  %v2429 = vpop.f32.mrf.mxu0
  %v2430 = vadd.f32 0.0, %v2429
  %v2431 = vpop.f32.mrf.mxu0
  %v2432 = vpop.f32.mrf.mxu0
  %v2433 = vadd.f32 0.0, %v2432
  %v2434 = vpop.f32.mrf.mxu0
  %2435 = vmatprep.mubr.bf16.mxu0 %v2274
  %2436 = vmatmul.mubr.bf16.gmra.mxu0 %v2273
  %v2437 = vpop.f32.mrf.mxu0
  %v2438 = vadd.f32 0.0, %v2437
  %v2439 = vpop.f32.mrf.mxu0
  %v2440 = vpop.f32.mrf.mxu0
  %v2441 = vadd.f32 0.0, %v2440
  %v2442 = vpop.f32.mrf.mxu0
  %2443 = vmatprep.mubr.bf16.mxu0 %v2276
  %2444 = vmatmul.mubr.bf16.gmra.mxu0 %v2275
  %v2445 = vpop.f32.mrf.mxu0
  %v2446 = vadd.f32 0.0, %v2445
  %v2447 = vpop.f32.mrf.mxu0
  %v2448 = vpop.f32.mrf.mxu0
  %v2449 = vadd.f32 0.0, %v2448
  %v2450 = vpop.f32.mrf.mxu0
  %2451 = vmatprep.mubr.bf16.mxu0 %v2278
  %2452 = vmatmul.mubr.bf16.gmra.mxu0 %v2277
  %v2453 = vpop.f32.mrf.mxu0
  %v2454 = vadd.f32 0.0, %v2453
  %v2455 = vpop.f32.mrf.mxu0
  %v2456 = vpop.f32.mrf.mxu0
  %v2457 = vadd.f32 0.0, %v2456
  %v2458 = vpop.f32.mrf.mxu0
  %2459 = vmatprep.mubr.bf16.mxu0 %v2280
  %2460 = vmatmul.mubr.bf16.gmra.mxu0 %v2279
  %v2461 = vpop.f32.mrf.mxu0
  %v2462 = vadd.f32 0.0, %v2461
  %v2463 = vpop.f32.mrf.mxu0
  %v2464 = vpop.f32.mrf.mxu0
  %v2465 = vadd.f32 0.0, %v2464
  %v2466 = vpop.f32.mrf.mxu0
  %2467 = vmatprep.mubr.bf16.mxu0 %v2282
  %2468 = vmatmul.mubr.bf16.gmra.mxu0 %v2281
  %v2469 = vpop.f32.mrf.mxu0
  %v2470 = vadd.f32 0.0, %v2469
  %v2471 = vpop.f32.mrf.mxu0
  %v2472 = vpop.f32.mrf.mxu0
  %v2473 = vadd.f32 0.0, %v2472
  %v2474 = vpop.f32.mrf.mxu0
  %2475 = vmatprep.mubr.bf16.mxu0 %v2284
  %2476 = vmatmul.mubr.bf16.gmra.mxu0 %v2283
  %v2477 = vpop.f32.mrf.mxu0
  %v2478 = vadd.f32 0.0, %v2477
  %v2479 = vpop.f32.mrf.mxu0
  %v2480 = vpop.f32.mrf.mxu0
  %v2481 = vadd.f32 0.0, %v2480
  %v2482 = vpop.f32.mrf.mxu0
  %2483 = vdwg.mxu0
  %v2484 = vadd.f32 %v2168, %v2430
  %v2485 = vadd.f32 %v2169, %v2433
  %v2486 = vadd.f32 %v2170, %v2438
  %v2487 = vadd.f32 %v2171, %v2441
  %v2488 = vadd.f32 %v2172, %v2446
  %v2489 = vadd.f32 %v2173, %v2449
  %v2490 = vadd.f32 %v2174, %v2454
  %v2491 = vadd.f32 %v2175, %v2457
  %v2492 = vadd.f32 %v2176, %v2462
  %v2493 = vadd.f32 %v2177, %v2465
  %v2494 = vadd.f32 %v2178, %v2470
  %v2495 = vadd.f32 %v2179, %v2473
  %v2496 = vadd.f32 %v2180, %v2478
  %v2497 = vadd.f32 %v2181, %v2481
  %v2498 = vld [vmem:[#allocation2 + $0x18] sm:$0xff]
  %v2499 = vld [vmem:[#allocation2 + $0x20] sm:$0xff]
  %v2500 = vld [vmem:[#allocation2 + $0x28] sm:$0xff]
  %v2501 = vld [vmem:[#allocation2 + $0x30] sm:$0xff]
  %v2502 = vld [vmem:[#allocation2 + $0x38] sm:$0xff]
  %v2503 = vld [vmem:[#allocation2 + $0x40] sm:$0xff]
  %v2504 = vld [vmem:[#allocation2 + $0x48] sm:$0xff]
  %v2505 = vld [vmem:[#allocation2 + $0x50] sm:$0xff]
  %v2506 = vld [vmem:[#allocation2 + $0x58] sm:$0xff]
  %v2507 = vld [vmem:[#allocation2 + $0x60] sm:$0xff]
  %v2508 = vld [vmem:[#allocation2 + $0x68] sm:$0xff]
  %v2509 = vld [vmem:[#allocation2 + $0x70] sm:$0xff]
  %v2510 = vld [vmem:[#allocation2 + $0x78] sm:$0xff]
  %v2511 = vld [vmem:[#allocation2 + $0x80] sm:$0xff]
  %s2512 = scalar_lea.vmem %s3, 384
  %v2513 = vld [vmem:[%s2512] sm:$0xf]
  %v2514 = vld [vmem:[%s2512 + $0x4] sm:$0xf]
  %v2515 = vld [vmem:[%s2512 + $0x8] sm:$0xf]
  %v2516 = vld [vmem:[%s2512 + $0xc] sm:$0xf]
  %v2517 = vld [vmem:[%s2512 + $0x10] sm:$0xf]
  %v2518 = vld [vmem:[%s2512 + $0x14] sm:$0xf]
  %v2519 = vld [vmem:[%s2512 + $0x18] sm:$0xf]
  %v2520 = vld [vmem:[%s2512 + $0x1c] sm:$0xf]
  %v2521 = vld [vmem:[%s2512 + $0x20] sm:$0xf]
  %v2522 = vld [vmem:[%s2512 + $0x24] sm:$0xf]
  %v2523 = vld [vmem:[%s2512 + $0x28] sm:$0xf]
  %v2524 = vld [vmem:[%s2512 + $0x2c] sm:$0xf]
  %v2525 = vld [vmem:[%s2512 + $0x30] sm:$0xf]
  %v2526 = vld [vmem:[%s2512 + $0x34] sm:$0xf]
  %v2527 = vld [vmem:[%s2512 + $0x38] sm:$0xf]
  %v2528 = vld [vmem:[%s2512 + $0x3c] sm:$0xf]
  %v2529 = vld [vmem:[%s2512 + $0x40] sm:$0xf]
  %v2530 = vld [vmem:[%s2512 + $0x44] sm:$0xf]
  %v2531 = vld [vmem:[%s2512 + $0x48] sm:$0xf]
  %v2532 = vld [vmem:[%s2512 + $0x4c] sm:$0xf]
  %v2533 = vld [vmem:[%s2512 + $0x50] sm:$0xf]
  %v2534 = vld [vmem:[%s2512 + $0x54] sm:$0xf]
  %v2535 = vld [vmem:[%s2512 + $0x58] sm:$0xf]
  %v2536 = vld [vmem:[%s2512 + $0x5c] sm:$0xf]
  %v2537 = vld [vmem:[%s2512 + $0x60] sm:$0xf]
  %v2538 = vld [vmem:[%s2512 + $0x64] sm:$0xf]
  %v2539 = vld [vmem:[%s2512 + $0x68] sm:$0xf]
  %v2540 = vld [vmem:[%s2512 + $0x6c] sm:$0xf]
  %v2541 = vld [vmem:[%s2512 + $0x70] sm:$0xf]
  %v2542 = vld [vmem:[%s2512 + $0x74] sm:$0xf]
  %v2543 = vld [vmem:[%s2512 + $0x78] sm:$0xf]
  %v2544 = vld [vmem:[%s2512 + $0x7c] sm:$0xf]
  %v2559 = vunpack.c.l.b16 %v2498
  %v2560 = vunpack.c.h.b16 %v2498
  %v2561 = vunpack.c.l.b16 %v2499
  %v2562 = vunpack.c.h.b16 %v2499
  %v2563 = vunpack.c.l.b16 %v2500
  %v2564 = vunpack.c.h.b16 %v2500
  %v2565 = vunpack.c.l.b16 %v2501
  %v2566 = vunpack.c.h.b16 %v2501
  %v2567 = vunpack.c.l.b16 %v2502
  %v2568 = vunpack.c.h.b16 %v2502
  %v2569 = vunpack.c.l.b16 %v2503
  %v2570 = vunpack.c.h.b16 %v2503
  %v2571 = vunpack.c.l.b16 %v2504
  %v2572 = vunpack.c.h.b16 %v2504
  %v2573 = vunpack.c.l.b16 %v2505
  %v2574 = vunpack.c.h.b16 %v2505
  %v2575 = vunpack.c.l.b16 %v2506
  %v2576 = vunpack.c.h.b16 %v2506
  %v2577 = vunpack.c.l.b16 %v2507
  %v2578 = vunpack.c.h.b16 %v2507
  %v2579 = vunpack.c.l.b16 %v2508
  %v2580 = vunpack.c.h.b16 %v2508
  %v2581 = vunpack.c.l.b16 %v2509
  %v2582 = vunpack.c.h.b16 %v2509
  %v2583 = vunpack.c.l.b16 %v2510
  %v2584 = vunpack.c.h.b16 %v2510
  %v2585 = vunpack.c.l.b16 %v2511
  %v2586 = vunpack.c.h.b16 %v2511
  %v2587 = vpack.c.b16 %v2561, %v2559
  %v2588 = vpack.c.b16 %v2562, %v2560
  %v2589 = vpack.c.b16 %v2565, %v2563
  %v2590 = vpack.c.b16 %v2566, %v2564
  %v2591 = vpack.c.b16 %v2569, %v2567
  %v2592 = vpack.c.b16 %v2570, %v2568
  %v2593 = vpack.c.b16 %v2573, %v2571
  %v2594 = vpack.c.b16 %v2574, %v2572
  %v2595 = vpack.c.b16 %v2577, %v2575
  %v2596 = vpack.c.b16 %v2578, %v2576
  %v2597 = vpack.c.b16 %v2581, %v2579
  %v2598 = vpack.c.b16 %v2582, %v2580
  %v2599 = vpack.c.b16 %v2585, %v2583
  %v2600 = vpack.c.b16 %v2586, %v2584
  %v2647 = vunpack.c.l.b16 %v2513
  %v2648 = vunpack.c.l.b16 %v2514
  %v2649 = vunpack.c.l.b16 %v2515
  %v2650 = vunpack.c.l.b16 %v2516
  %v2651 = vunpack.c.l.b16 %v2517
  %v2652 = vunpack.c.l.b16 %v2518
  %v2653 = vunpack.c.l.b16 %v2519
  %v2654 = vunpack.c.l.b16 %v2520
  %v2655 = vunpack.c.l.b16 %v2521
  %v2656 = vunpack.c.l.b16 %v2522
  %v2657 = vunpack.c.l.b16 %v2523
  %v2658 = vunpack.c.l.b16 %v2524
  %v2659 = vunpack.c.l.b16 %v2525
  %v2660 = vunpack.c.l.b16 %v2526
  %v2661 = vunpack.c.l.b16 %v2527
  %v2662 = vunpack.c.l.b16 %v2528
  %v2663 = vunpack.c.l.b16 %v2529
  %v2664 = vunpack.c.l.b16 %v2530
  %v2665 = vunpack.c.l.b16 %v2531
  %v2666 = vunpack.c.l.b16 %v2532
  %v2667 = vunpack.c.l.b16 %v2533
  %v2668 = vunpack.c.l.b16 %v2534
  %v2669 = vunpack.c.l.b16 %v2535
  %v2670 = vunpack.c.l.b16 %v2536
  %v2671 = vunpack.c.l.b16 %v2537
  %v2672 = vunpack.c.l.b16 %v2538
  %v2673 = vunpack.c.l.b16 %v2539
  %v2674 = vunpack.c.l.b16 %v2540
  %v2675 = vunpack.c.l.b16 %v2541
  %v2676 = vunpack.c.l.b16 %v2542
  %v2677 = vunpack.c.l.b16 %v2543
  %v2678 = vunpack.c.l.b16 %v2544
  %v2679 = vpack.c.b16 %v2648, %v2647
  %v2680 = vpack.c.b16 %v2650, %v2649
  %v2681 = vpack.c.b16 %v2652, %v2651
  %v2682 = vpack.c.b16 %v2654, %v2653
  %v2683 = vpack.c.b16 %v2656, %v2655
  %v2684 = vpack.c.b16 %v2658, %v2657
  %v2685 = vpack.c.b16 %v2660, %v2659
  %v2686 = vpack.c.b16 %v2662, %v2661
  %v2687 = vpack.c.b16 %v2664, %v2663
  %v2688 = vpack.c.b16 %v2666, %v2665
  %v2689 = vpack.c.b16 %v2668, %v2667
  %v2690 = vpack.c.b16 %v2670, %v2669
  %v2691 = vpack.c.b16 %v2672, %v2671
  %v2692 = vpack.c.b16 %v2674, %v2673
  %v2693 = vpack.c.b16 %v2676, %v2675
  %v2694 = vpack.c.b16 %v2678, %v2677
  %2711 = vmatprep.subr.bf16.mxu0 0
  %2712 = vmatpush1.bf16.msra.mxu0 %v2686
  %2713 = vmatprep.subr.bf16.mxu0 0
  %2714 = vmatpush1.bf16.msra.mxu0 %v2685
  %2715 = vmatprep.subr.bf16.mxu0 0
  %2716 = vmatpush1.bf16.msra.mxu0 %v2684
  %2717 = vmatprep.subr.bf16.mxu0 0
  %2718 = vmatpush1.bf16.msra.mxu0 %v2683
  %2719 = vmatprep.subr.bf16.mxu0 0
  %2720 = vmatpush1.bf16.msra.mxu0 %v2682
  %2721 = vmatprep.subr.bf16.mxu0 0
  %2722 = vmatpush1.bf16.msra.mxu0 %v2681
  %2723 = vmatprep.subr.bf16.mxu0 0
  %2724 = vmatpush1.bf16.msra.mxu0 %v2680
  %2725 = vmatprep.subr.bf16.mxu0 0
  %2726 = vmatpush1.bf16.msra.mxu0 %v2679
  %2727 = vmatprep.subr.bf16.mxu0 0
  %2728 = vmatpush2.bf16.msra.mxu0 %v2694
  %2729 = vmatprep.subr.bf16.mxu0 0
  %2730 = vmatpush2.bf16.msra.mxu0 %v2693
  %2731 = vmatprep.subr.bf16.mxu0 0
  %2732 = vmatpush2.bf16.msra.mxu0 %v2692
  %2733 = vmatprep.subr.bf16.mxu0 0
  %2734 = vmatpush2.bf16.msra.mxu0 %v2691
  %2735 = vmatprep.subr.bf16.mxu0 0
  %2736 = vmatpush2.bf16.msra.mxu0 %v2690
  %2737 = vmatprep.subr.bf16.mxu0 0
  %2738 = vmatpush2.bf16.msra.mxu0 %v2689
  %2739 = vmatprep.subr.bf16.mxu0 0
  %2740 = vmatpush2.bf16.msra.mxu0 %v2688
  %2741 = vmatprep.subr.bf16.mxu0 0
  %2742 = vmatpush2.bf16.msra.mxu0 %v2687
  %2743 = vmatprep.mubr.bf16.mxu0 %v2588
  %2744 = vmatmul.mubr.bf16.gmra.mxu0 %v2587
  %v2745 = vpop.f32.mrf.mxu0
  %v2746 = vadd.f32 0.0, %v2745
  %v2747 = vpop.f32.mrf.mxu0
  %v2748 = vpop.f32.mrf.mxu0
  %v2749 = vadd.f32 0.0, %v2748
  %v2750 = vpop.f32.mrf.mxu0
  %2751 = vmatprep.mubr.bf16.mxu0 %v2590
  %2752 = vmatmul.mubr.bf16.gmra.mxu0 %v2589
  %v2753 = vpop.f32.mrf.mxu0
  %v2754 = vadd.f32 0.0, %v2753
  %v2755 = vpop.f32.mrf.mxu0
  %v2756 = vpop.f32.mrf.mxu0
  %v2757 = vadd.f32 0.0, %v2756
  %v2758 = vpop.f32.mrf.mxu0
  %2759 = vmatprep.mubr.bf16.mxu0 %v2592
  %2760 = vmatmul.mubr.bf16.gmra.mxu0 %v2591
  %v2761 = vpop.f32.mrf.mxu0
  %v2762 = vadd.f32 0.0, %v2761
  %v2763 = vpop.f32.mrf.mxu0
  %v2764 = vpop.f32.mrf.mxu0
  %v2765 = vadd.f32 0.0, %v2764
  %v2766 = vpop.f32.mrf.mxu0
  %2767 = vmatprep.mubr.bf16.mxu0 %v2594
  %2768 = vmatmul.mubr.bf16.gmra.mxu0 %v2593
  %v2769 = vpop.f32.mrf.mxu0
  %v2770 = vadd.f32 0.0, %v2769
  %v2771 = vpop.f32.mrf.mxu0
  %v2772 = vpop.f32.mrf.mxu0
  %v2773 = vadd.f32 0.0, %v2772
  %v2774 = vpop.f32.mrf.mxu0
  %2775 = vmatprep.mubr.bf16.mxu0 %v2596
  %2776 = vmatmul.mubr.bf16.gmra.mxu0 %v2595
  %v2777 = vpop.f32.mrf.mxu0
  %v2778 = vadd.f32 0.0, %v2777
  %v2779 = vpop.f32.mrf.mxu0
  %v2780 = vpop.f32.mrf.mxu0
  %v2781 = vadd.f32 0.0, %v2780
  %v2782 = vpop.f32.mrf.mxu0
  %2783 = vmatprep.mubr.bf16.mxu0 %v2598
  %2784 = vmatmul.mubr.bf16.gmra.mxu0 %v2597
  %v2785 = vpop.f32.mrf.mxu0
  %v2786 = vadd.f32 0.0, %v2785
  %v2787 = vpop.f32.mrf.mxu0
  %v2788 = vpop.f32.mrf.mxu0
  %v2789 = vadd.f32 0.0, %v2788
  %v2790 = vpop.f32.mrf.mxu0
  %2791 = vmatprep.mubr.bf16.mxu0 %v2600
  %2792 = vmatmul.mubr.bf16.gmra.mxu0 %v2599
  %v2793 = vpop.f32.mrf.mxu0
  %v2794 = vadd.f32 0.0, %v2793
  %v2795 = vpop.f32.mrf.mxu0
  %v2796 = vpop.f32.mrf.mxu0
  %v2797 = vadd.f32 0.0, %v2796
  %v2798 = vpop.f32.mrf.mxu0
  %2799 = vdwg.mxu0
  %v2800 = vadd.f32 %v2484, %v2746
  %v2801 = vadd.f32 %v2485, %v2749
  %v2802 = vadd.f32 %v2486, %v2754
  %v2803 = vadd.f32 %v2487, %v2757
  %v2804 = vadd.f32 %v2488, %v2762
  %v2805 = vadd.f32 %v2489, %v2765
  %v2806 = vadd.f32 %v2490, %v2770
  %v2807 = vadd.f32 %v2491, %v2773
  %v2808 = vadd.f32 %v2492, %v2778
  %v2809 = vadd.f32 %v2493, %v2781
  %v2810 = vadd.f32 %v2494, %v2786
  %v2811 = vadd.f32 %v2495, %v2789
  %v2812 = vadd.f32 %v2496, %v2794
  %v2813 = vadd.f32 %v2497, %v2797
  %v2814 = vld [vmem:[#allocation2 + $0x20] sm:$0xff]
  %v2815 = vld [vmem:[#allocation2 + $0x28] sm:$0xff]
  %v2816 = vld [vmem:[#allocation2 + $0x30] sm:$0xff]
  %v2817 = vld [vmem:[#allocation2 + $0x38] sm:$0xff]
  %v2818 = vld [vmem:[#allocation2 + $0x40] sm:$0xff]
  %v2819 = vld [vmem:[#allocation2 + $0x48] sm:$0xff]
  %v2820 = vld [vmem:[#allocation2 + $0x50] sm:$0xff]
  %v2821 = vld [vmem:[#allocation2 + $0x58] sm:$0xff]
  %v2822 = vld [vmem:[#allocation2 + $0x60] sm:$0xff]
  %v2823 = vld [vmem:[#allocation2 + $0x68] sm:$0xff]
  %v2824 = vld [vmem:[#allocation2 + $0x70] sm:$0xff]
  %v2825 = vld [vmem:[#allocation2 + $0x78] sm:$0xff]
  %v2826 = vld [vmem:[#allocation2 + $0x80] sm:$0xff]
  %v2827 = vld [vmem:[#allocation2 + $0x88] sm:$0xff]
  %s2828 = scalar_lea.vmem %s3, 512
  %v2829 = vld [vmem:[%s2828] sm:$0xf]
  %v2830 = vld [vmem:[%s2828 + $0x4] sm:$0xf]
  %v2831 = vld [vmem:[%s2828 + $0x8] sm:$0xf]
  %v2832 = vld [vmem:[%s2828 + $0xc] sm:$0xf]
  %v2833 = vld [vmem:[%s2828 + $0x10] sm:$0xf]
  %v2834 = vld [vmem:[%s2828 + $0x14] sm:$0xf]
  %v2835 = vld [vmem:[%s2828 + $0x18] sm:$0xf]
  %v2836 = vld [vmem:[%s2828 + $0x1c] sm:$0xf]
  %v2837 = vld [vmem:[%s2828 + $0x20] sm:$0xf]
  %v2838 = vld [vmem:[%s2828 + $0x24] sm:$0xf]
  %v2839 = vld [vmem:[%s2828 + $0x28] sm:$0xf]
  %v2840 = vld [vmem:[%s2828 + $0x2c] sm:$0xf]
  %v2841 = vld [vmem:[%s2828 + $0x30] sm:$0xf]
  %v2842 = vld [vmem:[%s2828 + $0x34] sm:$0xf]
  %v2843 = vld [vmem:[%s2828 + $0x38] sm:$0xf]
  %v2844 = vld [vmem:[%s2828 + $0x3c] sm:$0xf]
  %v2845 = vld [vmem:[%s2828 + $0x40] sm:$0xf]
  %v2846 = vld [vmem:[%s2828 + $0x44] sm:$0xf]
  %v2847 = vld [vmem:[%s2828 + $0x48] sm:$0xf]
  %v2848 = vld [vmem:[%s2828 + $0x4c] sm:$0xf]
  %v2849 = vld [vmem:[%s2828 + $0x50] sm:$0xf]
  %v2850 = vld [vmem:[%s2828 + $0x54] sm:$0xf]
  %v2851 = vld [vmem:[%s2828 + $0x58] sm:$0xf]
  %v2852 = vld [vmem:[%s2828 + $0x5c] sm:$0xf]
  %v2853 = vld [vmem:[%s2828 + $0x60] sm:$0xf]
  %v2854 = vld [vmem:[%s2828 + $0x64] sm:$0xf]
  %v2855 = vld [vmem:[%s2828 + $0x68] sm:$0xf]
  %v2856 = vld [vmem:[%s2828 + $0x6c] sm:$0xf]
  %v2857 = vld [vmem:[%s2828 + $0x70] sm:$0xf]
  %v2858 = vld [vmem:[%s2828 + $0x74] sm:$0xf]
  %v2859 = vld [vmem:[%s2828 + $0x78] sm:$0xf]
  %v2860 = vld [vmem:[%s2828 + $0x7c] sm:$0xf]
  %v2875 = vunpack.c.l.b16 %v2814
  %v2876 = vunpack.c.h.b16 %v2814
  %v2877 = vunpack.c.l.b16 %v2815
  %v2878 = vunpack.c.h.b16 %v2815
  %v2879 = vunpack.c.l.b16 %v2816
  %v2880 = vunpack.c.h.b16 %v2816
  %v2881 = vunpack.c.l.b16 %v2817
  %v2882 = vunpack.c.h.b16 %v2817
  %v2883 = vunpack.c.l.b16 %v2818
  %v2884 = vunpack.c.h.b16 %v2818
  %v2885 = vunpack.c.l.b16 %v2819
  %v2886 = vunpack.c.h.b16 %v2819
  %v2887 = vunpack.c.l.b16 %v2820
  %v2888 = vunpack.c.h.b16 %v2820
  %v2889 = vunpack.c.l.b16 %v2821
  %v2890 = vunpack.c.h.b16 %v2821
  %v2891 = vunpack.c.l.b16 %v2822
  %v2892 = vunpack.c.h.b16 %v2822
  %v2893 = vunpack.c.l.b16 %v2823
  %v2894 = vunpack.c.h.b16 %v2823
  %v2895 = vunpack.c.l.b16 %v2824
  %v2896 = vunpack.c.h.b16 %v2824
  %v2897 = vunpack.c.l.b16 %v2825
  %v2898 = vunpack.c.h.b16 %v2825
  %v2899 = vunpack.c.l.b16 %v2826
  %v2900 = vunpack.c.h.b16 %v2826
  %v2901 = vunpack.c.l.b16 %v2827
  %v2902 = vunpack.c.h.b16 %v2827
  %v2903 = vpack.c.b16 %v2877, %v2875
  %v2904 = vpack.c.b16 %v2878, %v2876
  %v2905 = vpack.c.b16 %v2881, %v2879
  %v2906 = vpack.c.b16 %v2882, %v2880
  %v2907 = vpack.c.b16 %v2885, %v2883
  %v2908 = vpack.c.b16 %v2886, %v2884
  %v2909 = vpack.c.b16 %v2889, %v2887
  %v2910 = vpack.c.b16 %v2890, %v2888
  %v2911 = vpack.c.b16 %v2893, %v2891
  %v2912 = vpack.c.b16 %v2894, %v2892
  %v2913 = vpack.c.b16 %v2897, %v2895
  %v2914 = vpack.c.b16 %v2898, %v2896
  %v2915 = vpack.c.b16 %v2901, %v2899
  %v2916 = vpack.c.b16 %v2902, %v2900
  %v2963 = vunpack.c.l.b16 %v2829
  %v2964 = vunpack.c.l.b16 %v2830
  %v2965 = vunpack.c.l.b16 %v2831
  %v2966 = vunpack.c.l.b16 %v2832
  %v2967 = vunpack.c.l.b16 %v2833
  %v2968 = vunpack.c.l.b16 %v2834
  %v2969 = vunpack.c.l.b16 %v2835
  %v2970 = vunpack.c.l.b16 %v2836
  %v2971 = vunpack.c.l.b16 %v2837
  %v2972 = vunpack.c.l.b16 %v2838
  %v2973 = vunpack.c.l.b16 %v2839
  %v2974 = vunpack.c.l.b16 %v2840
  %v2975 = vunpack.c.l.b16 %v2841
  %v2976 = vunpack.c.l.b16 %v2842
  %v2977 = vunpack.c.l.b16 %v2843
  %v2978 = vunpack.c.l.b16 %v2844
  %v2979 = vunpack.c.l.b16 %v2845
  %v2980 = vunpack.c.l.b16 %v2846
  %v2981 = vunpack.c.l.b16 %v2847
  %v2982 = vunpack.c.l.b16 %v2848
  %v2983 = vunpack.c.l.b16 %v2849
  %v2984 = vunpack.c.l.b16 %v2850
  %v2985 = vunpack.c.l.b16 %v2851
  %v2986 = vunpack.c.l.b16 %v2852
  %v2987 = vunpack.c.l.b16 %v2853
  %v2988 = vunpack.c.l.b16 %v2854
  %v2989 = vunpack.c.l.b16 %v2855
  %v2990 = vunpack.c.l.b16 %v2856
  %v2991 = vunpack.c.l.b16 %v2857
  %v2992 = vunpack.c.l.b16 %v2858
  %v2993 = vunpack.c.l.b16 %v2859
  %v2994 = vunpack.c.l.b16 %v2860
  %v2995 = vpack.c.b16 %v2964, %v2963
  %v2996 = vpack.c.b16 %v2966, %v2965
  %v2997 = vpack.c.b16 %v2968, %v2967
  %v2998 = vpack.c.b16 %v2970, %v2969
  %v2999 = vpack.c.b16 %v2972, %v2971
  %v3000 = vpack.c.b16 %v2974, %v2973
  %v3001 = vpack.c.b16 %v2976, %v2975
  %v3002 = vpack.c.b16 %v2978, %v2977
  %v3003 = vpack.c.b16 %v2980, %v2979
  %v3004 = vpack.c.b16 %v2982, %v2981
  %v3005 = vpack.c.b16 %v2984, %v2983
  %v3006 = vpack.c.b16 %v2986, %v2985
  %v3007 = vpack.c.b16 %v2988, %v2987
  %v3008 = vpack.c.b16 %v2990, %v2989
  %v3009 = vpack.c.b16 %v2992, %v2991
  %v3010 = vpack.c.b16 %v2994, %v2993
  %3027 = vmatprep.subr.bf16.mxu0 0
  %3028 = vmatpush1.bf16.msra.mxu0 %v3002
  %3029 = vmatprep.subr.bf16.mxu0 0
  %3030 = vmatpush1.bf16.msra.mxu0 %v3001
  %3031 = vmatprep.subr.bf16.mxu0 0
  %3032 = vmatpush1.bf16.msra.mxu0 %v3000
  %3033 = vmatprep.subr.bf16.mxu0 0
  %3034 = vmatpush1.bf16.msra.mxu0 %v2999
  %3035 = vmatprep.subr.bf16.mxu0 0
  %3036 = vmatpush1.bf16.msra.mxu0 %v2998
  %3037 = vmatprep.subr.bf16.mxu0 0
  %3038 = vmatpush1.bf16.msra.mxu0 %v2997
  %3039 = vmatprep.subr.bf16.mxu0 0
  %3040 = vmatpush1.bf16.msra.mxu0 %v2996
  %3041 = vmatprep.subr.bf16.mxu0 0
  %3042 = vmatpush1.bf16.msra.mxu0 %v2995
  %3043 = vmatprep.subr.bf16.mxu0 0
  %3044 = vmatpush2.bf16.msra.mxu0 %v3010
  %3045 = vmatprep.subr.bf16.mxu0 0
  %3046 = vmatpush2.bf16.msra.mxu0 %v3009
  %3047 = vmatprep.subr.bf16.mxu0 0
  %3048 = vmatpush2.bf16.msra.mxu0 %v3008
  %3049 = vmatprep.subr.bf16.mxu0 0
  %3050 = vmatpush2.bf16.msra.mxu0 %v3007
  %3051 = vmatprep.subr.bf16.mxu0 0
  %3052 = vmatpush2.bf16.msra.mxu0 %v3006
  %3053 = vmatprep.subr.bf16.mxu0 0
  %3054 = vmatpush2.bf16.msra.mxu0 %v3005
  %3055 = vmatprep.subr.bf16.mxu0 0
  %3056 = vmatpush2.bf16.msra.mxu0 %v3004
  %3057 = vmatprep.subr.bf16.mxu0 0
  %3058 = vmatpush2.bf16.msra.mxu0 %v3003
  %3059 = vmatprep.mubr.bf16.mxu0 %v2904
  %3060 = vmatmul.mubr.bf16.gmra.mxu0 %v2903
  %v3061 = vpop.f32.mrf.mxu0
  %v3062 = vadd.f32 0.0, %v3061
  %v3063 = vpop.f32.mrf.mxu0
  %v3064 = vpop.f32.mrf.mxu0
  %v3065 = vadd.f32 0.0, %v3064
  %v3066 = vpop.f32.mrf.mxu0
  %3067 = vmatprep.mubr.bf16.mxu0 %v2906
  %3068 = vmatmul.mubr.bf16.gmra.mxu0 %v2905
  %v3069 = vpop.f32.mrf.mxu0
  %v3070 = vadd.f32 0.0, %v3069
  %v3071 = vpop.f32.mrf.mxu0
  %v3072 = vpop.f32.mrf.mxu0
  %v3073 = vadd.f32 0.0, %v3072
  %v3074 = vpop.f32.mrf.mxu0
  %3075 = vmatprep.mubr.bf16.mxu0 %v2908
  %3076 = vmatmul.mubr.bf16.gmra.mxu0 %v2907
  %v3077 = vpop.f32.mrf.mxu0
  %v3078 = vadd.f32 0.0, %v3077
  %v3079 = vpop.f32.mrf.mxu0
  %v3080 = vpop.f32.mrf.mxu0
  %v3081 = vadd.f32 0.0, %v3080
  %v3082 = vpop.f32.mrf.mxu0
  %3083 = vmatprep.mubr.bf16.mxu0 %v2910
  %3084 = vmatmul.mubr.bf16.gmra.mxu0 %v2909
  %v3085 = vpop.f32.mrf.mxu0
  %v3086 = vadd.f32 0.0, %v3085
  %v3087 = vpop.f32.mrf.mxu0
  %v3088 = vpop.f32.mrf.mxu0
  %v3089 = vadd.f32 0.0, %v3088
  %v3090 = vpop.f32.mrf.mxu0
  %3091 = vmatprep.mubr.bf16.mxu0 %v2912
  %3092 = vmatmul.mubr.bf16.gmra.mxu0 %v2911
  %v3093 = vpop.f32.mrf.mxu0
  %v3094 = vadd.f32 0.0, %v3093
  %v3095 = vpop.f32.mrf.mxu0
  %v3096 = vpop.f32.mrf.mxu0
  %v3097 = vadd.f32 0.0, %v3096
  %v3098 = vpop.f32.mrf.mxu0
  %3099 = vmatprep.mubr.bf16.mxu0 %v2914
  %3100 = vmatmul.mubr.bf16.gmra.mxu0 %v2913
  %v3101 = vpop.f32.mrf.mxu0
  %v3102 = vadd.f32 0.0, %v3101
  %v3103 = vpop.f32.mrf.mxu0
  %v3104 = vpop.f32.mrf.mxu0
  %v3105 = vadd.f32 0.0, %v3104
  %v3106 = vpop.f32.mrf.mxu0
  %3107 = vmatprep.mubr.bf16.mxu0 %v2916
  %3108 = vmatmul.mubr.bf16.gmra.mxu0 %v2915
  %v3109 = vpop.f32.mrf.mxu0
  %v3110 = vadd.f32 0.0, %v3109
  %v3111 = vpop.f32.mrf.mxu0
  %v3112 = vpop.f32.mrf.mxu0
  %v3113 = vadd.f32 0.0, %v3112
  %v3114 = vpop.f32.mrf.mxu0
  %3115 = vdwg.mxu0
  %v3116 = vadd.f32 %v2800, %v3062
  %v3117 = vadd.f32 %v2801, %v3065
  %v3118 = vadd.f32 %v2802, %v3070
  %v3119 = vadd.f32 %v2803, %v3073
  %v3120 = vadd.f32 %v2804, %v3078
  %v3121 = vadd.f32 %v2805, %v3081
  %v3122 = vadd.f32 %v2806, %v3086
  %v3123 = vadd.f32 %v2807, %v3089
  %v3124 = vadd.f32 %v2808, %v3094
  %v3125 = vadd.f32 %v2809, %v3097
  %v3126 = vadd.f32 %v2810, %v3102
  %v3127 = vadd.f32 %v2811, %v3105
  %v3128 = vadd.f32 %v2812, %v3110
  %v3129 = vadd.f32 %v2813, %v3113
  %v3130 = vld [vmem:[%s5] sm:$0x1]
  %v3131 = vld [vmem:[%s6] sm:$0x1]
  %3133 = vset.pattern.permute.xlu0 0
  %3134 = vperm.xlu0 %3133, %v69
  %v3135 = vpop.permute.xlu0 %3134
  %3138 = vset.pattern.permute.xlu0 0
  %3139 = vperm.xlu0 %3138, %v70
  %v3140 = vpop.permute.xlu0 %3139
  %3143 = vset.pattern.permute.xlu0 0
  %3144 = vperm.xlu0 %3143, %v71
  %v3145 = vpop.permute.xlu0 %3144
  %3148 = vset.pattern.permute.xlu0 0
  %3149 = vperm.xlu0 %3148, %v72
  %v3150 = vpop.permute.xlu0 %3149
  %3153 = vset.pattern.permute.xlu0 0
  %3154 = vperm.xlu0 %3153, %v73
  %v3155 = vpop.permute.xlu0 %3154
  %3158 = vset.pattern.permute.xlu0 0
  %3159 = vperm.xlu0 %3158, %v74
  %v3160 = vpop.permute.xlu0 %3159
  %3163 = vset.pattern.permute.xlu0 0
  %3164 = vperm.xlu0 %3163, %v75
  %v3165 = vpop.permute.xlu0 %3164
  %3168 = vset.pattern.permute.xlu0 0
  %3169 = vperm.xlu0 %3168, %v76
  %v3170 = vpop.permute.xlu0 %3169
  %3173 = vset.pattern.permute.xlu0 0
  %3174 = vperm.xlu0 %3173, %v77
  %v3175 = vpop.permute.xlu0 %3174
  %3178 = vset.pattern.permute.xlu0 0
  %3179 = vperm.xlu0 %3178, %v78
  %v3180 = vpop.permute.xlu0 %3179
  %3183 = vset.pattern.permute.xlu0 0
  %3184 = vperm.xlu0 %3183, %v79
  %v3185 = vpop.permute.xlu0 %3184
  %3188 = vset.pattern.permute.xlu0 0
  %3189 = vperm.xlu0 %3188, %v80
  %v3190 = vpop.permute.xlu0 %3189
  %3193 = vset.pattern.permute.xlu0 0
  %3194 = vperm.xlu0 %3193, %v81
  %v3195 = vpop.permute.xlu0 %3194
  %3198 = vset.pattern.permute.xlu0 0
  %3199 = vperm.xlu0 %3198, %v82
  %v3200 = vpop.permute.xlu0 %3199
  %v3202 = vmul.f32 %v3116, %v3135
  %v3203 = vmul.f32 %v3117, %v3140
  %v3204 = vmul.f32 %v3118, %v3145
  %v3205 = vmul.f32 %v3119, %v3150
  %v3206 = vmul.f32 %v3120, %v3155
  %v3207 = vmul.f32 %v3121, %v3160
  %v3208 = vmul.f32 %v3122, %v3165
  %v3209 = vmul.f32 %v3123, %v3170
  %v3210 = vmul.f32 %v3124, %v3175
  %v3211 = vmul.f32 %v3125, %v3180
  %v3212 = vmul.f32 %v3126, %v3185
  %v3213 = vmul.f32 %v3127, %v3190
  %v3214 = vmul.f32 %v3128, %v3195
  %v3215 = vmul.f32 %v3129, %v3200
  %v3216 = vadd.f32 %v3202, %v3203
  %v3217 = vadd.f32 %v3216, %v3204
  %v3218 = vadd.f32 %v3217, %v3205
  %v3219 = vadd.f32 %v3218, %v3206
  %v3220 = vadd.f32 %v3219, %v3207
  %v3221 = vadd.f32 %v3220, %v3208
  %v3222 = vadd.f32 %v3221, %v3209
  %v3223 = vadd.f32 %v3222, %v3210
  %v3224 = vadd.f32 %v3223, %v3211
  %v3225 = vadd.f32 %v3224, %v3212
  %v3226 = vadd.f32 %v3225, %v3213
  %v3227 = vadd.f32 %v3226, %v3214
  %v3228 = vadd.f32 %v3227, %v3215
  %v3229 = vrot.slane %v3228, 4
  %v3230 = vadd.f32 %v3228, %v3229
  %v3231 = vrot.slane %v3230, 2
  %v3232 = vadd.f32 %v3230, %v3231
  %v3233 = vrot.slane %v3232, 1
  %v3234 = vadd.f32 %v3232, %v3233
  %v3235 = vmul.f32 %v3234, 0.03125
  %v3236 = vsub.f32 %v3116, %v3235
  %v3237 = vsub.f32 %v3117, %v3235
  %v3238 = vsub.f32 %v3118, %v3235
  %v3239 = vsub.f32 %v3119, %v3235
  %v3240 = vsub.f32 %v3120, %v3235
  %v3241 = vsub.f32 %v3121, %v3235
  %v3242 = vsub.f32 %v3122, %v3235
  %v3243 = vsub.f32 %v3123, %v3235
  %v3244 = vsub.f32 %v3124, %v3235
  %v3245 = vsub.f32 %v3125, %v3235
  %v3246 = vsub.f32 %v3126, %v3235
  %v3247 = vsub.f32 %v3127, %v3235
  %v3248 = vsub.f32 %v3128, %v3235
  %v3249 = vsub.f32 %v3129, %v3235
  %v3250 = vmul.f32 %v3236, %v3236
  %v3251 = vmul.f32 %v3237, %v3237
  %v3252 = vmul.f32 %v3238, %v3238
  %v3253 = vmul.f32 %v3239, %v3239
  %v3254 = vmul.f32 %v3240, %v3240
  %v3255 = vmul.f32 %v3241, %v3241
  %v3256 = vmul.f32 %v3242, %v3242
  %v3257 = vmul.f32 %v3243, %v3243
  %v3258 = vmul.f32 %v3244, %v3244
  %v3259 = vmul.f32 %v3245, %v3245
  %v3260 = vmul.f32 %v3246, %v3246
  %v3261 = vmul.f32 %v3247, %v3247
  %v3262 = vmul.f32 %v3248, %v3248
  %v3263 = vmul.f32 %v3249, %v3249
  %v3264 = vmul.f32 %v3250, %v3135
  %v3265 = vmul.f32 %v3251, %v3140
  %v3266 = vmul.f32 %v3252, %v3145
  %v3267 = vmul.f32 %v3253, %v3150
  %v3268 = vmul.f32 %v3254, %v3155
  %v3269 = vmul.f32 %v3255, %v3160
  %v3270 = vmul.f32 %v3256, %v3165
  %v3271 = vmul.f32 %v3257, %v3170
  %v3272 = vmul.f32 %v3258, %v3175
  %v3273 = vmul.f32 %v3259, %v3180
  %v3274 = vmul.f32 %v3260, %v3185
  %v3275 = vmul.f32 %v3261, %v3190
  %v3276 = vmul.f32 %v3262, %v3195
  %v3277 = vmul.f32 %v3263, %v3200
  %v3278 = vadd.f32 %v3264, %v3265
  %v3279 = vadd.f32 %v3278, %v3266
  %v3280 = vadd.f32 %v3279, %v3267
  %v3281 = vadd.f32 %v3280, %v3268
  %v3282 = vadd.f32 %v3281, %v3269
  %v3283 = vadd.f32 %v3282, %v3270
  %v3284 = vadd.f32 %v3283, %v3271
  %v3285 = vadd.f32 %v3284, %v3272
  %v3286 = vadd.f32 %v3285, %v3273
  %v3287 = vadd.f32 %v3286, %v3274
  %v3288 = vadd.f32 %v3287, %v3275
  %v3289 = vadd.f32 %v3288, %v3276
  %v3290 = vadd.f32 %v3289, %v3277
  %v3291 = vrot.slane %v3290, 4
  %v3292 = vadd.f32 %v3290, %v3291
  %v3293 = vrot.slane %v3292, 2
  %v3294 = vadd.f32 %v3292, %v3293
  %v3295 = vrot.slane %v3294, 1
  %v3296 = vadd.f32 %v3294, %v3295
  %v3297 = vmul.f32 %v3296, 0.03125
  %v3298 = vadd.f32 %v3297, 1e-05
  %v3299 = vrsqrt.pop %v3298
  %v3300 = vmul.f32 %v3299, %v3130
  %v3301 = vlaneseq
  %v3302 = vshrl.u32 %v3301, 7
  %v3303 = vsub.s32 0, %v3302
  %v3304 = vrot.slane %v3300, %v3303
  %v3305 = vmul.f32 %v3236, %v3304
  %v3306 = vmul.f32 %v3237, %v3304
  %v3307 = vmul.f32 %v3238, %v3304
  %v3308 = vmul.f32 %v3239, %v3304
  %v3309 = vmul.f32 %v3240, %v3304
  %v3310 = vmul.f32 %v3241, %v3304
  %v3311 = vmul.f32 %v3242, %v3304
  %v3312 = vmul.f32 %v3243, %v3304
  %v3313 = vmul.f32 %v3244, %v3304
  %v3314 = vmul.f32 %v3245, %v3304
  %v3315 = vmul.f32 %v3246, %v3304
  %v3316 = vmul.f32 %v3247, %v3304
  %v3317 = vmul.f32 %v3248, %v3304
  %v3318 = vmul.f32 %v3249, %v3304
  %v3320 = vlaneseq
  %v3321 = vshrl.u32 %v3320, 7
  %v3322 = vsub.s32 0, %v3321
  %v3323 = vrot.slane %v3131, %v3322
  %v3325 = vadd.f32 %v3305, %v3323
  %v3326 = vadd.f32 %v3306, %v3323
  %v3327 = vadd.f32 %v3307, %v3323
  %v3328 = vadd.f32 %v3308, %v3323
  %v3329 = vadd.f32 %v3309, %v3323
  %v3330 = vadd.f32 %v3310, %v3323
  %v3331 = vadd.f32 %v3311, %v3323
  %v3332 = vadd.f32 %v3312, %v3323
  %v3333 = vadd.f32 %v3313, %v3323
  %v3334 = vadd.f32 %v3314, %v3323
  %v3335 = vadd.f32 %v3315, %v3323
  %v3336 = vadd.f32 %v3316, %v3323
  %v3337 = vadd.f32 %v3317, %v3323
  %v3338 = vadd.f32 %v3318, %v3323
  %v3339 = vmax.f32 %v3325, 0.0
  %v3340 = vmax.f32 %v3326, 0.0
  %v3341 = vmax.f32 %v3327, 0.0
  %v3342 = vmax.f32 %v3328, 0.0
  %v3343 = vmax.f32 %v3329, 0.0
  %v3344 = vmax.f32 %v3330, 0.0
  %v3345 = vmax.f32 %v3331, 0.0
  %v3346 = vmax.f32 %v3332, 0.0
  %v3347 = vmax.f32 %v3333, 0.0
  %v3348 = vmax.f32 %v3334, 0.0
  %v3349 = vmax.f32 %v3335, 0.0
  %v3350 = vmax.f32 %v3336, 0.0
  %v3351 = vmax.f32 %v3337, 0.0
  %v3352 = vmax.f32 %v3338, 0.0
  %v3353 = vmul.f32 %v3339, %v3135
  %v3354 = vmul.f32 %v3340, %v3140
  %v3355 = vmul.f32 %v3341, %v3145
  %v3356 = vmul.f32 %v3342, %v3150
  %v3357 = vmul.f32 %v3343, %v3155
  %v3358 = vmul.f32 %v3344, %v3160
  %v3359 = vmul.f32 %v3345, %v3165
  %v3360 = vmul.f32 %v3346, %v3170
  %v3361 = vmul.f32 %v3347, %v3175
  %v3362 = vmul.f32 %v3348, %v3180
  %v3363 = vmul.f32 %v3349, %v3185
  %v3364 = vmul.f32 %v3350, %v3190
  %v3365 = vmul.f32 %v3351, %v3195
  %v3366 = vmul.f32 %v3352, %v3200
  %v3367 = vpack.c.bf16 %v3354, %v3353
  %v3368 = vpack.c.bf16 %v3356, %v3355
  %v3369 = vpack.c.bf16 %v3358, %v3357
  %v3370 = vpack.c.bf16 %v3360, %v3359
  %v3371 = vpack.c.bf16 %v3362, %v3361
  %v3372 = vpack.c.bf16 %v3364, %v3363
  %v3373 = vpack.c.bf16 %v3366, %v3365
  %v3374 = vld [vmem:[%s7] sm:$0xf]
  %v3375 = vld [vmem:[%s7 + $0x4] sm:$0xf]
  %v3376 = vld [vmem:[%s7 + $0x8] sm:$0xf]
  %v3377 = vld [vmem:[%s7 + $0xc] sm:$0xf]
  %v3378 = vld [vmem:[%s7 + $0x10] sm:$0xf]
  %v3379 = vld [vmem:[%s7 + $0x14] sm:$0xf]
  %v3380 = vld [vmem:[%s7 + $0x18] sm:$0xf]
  %v3381 = vld [vmem:[%s7 + $0x1c] sm:$0xf]
  %v3382 = vld [vmem:[%s7 + $0x20] sm:$0xf]
  %v3383 = vld [vmem:[%s7 + $0x24] sm:$0xf]
  %v3384 = vld [vmem:[%s7 + $0x28] sm:$0xf]
  %v3385 = vld [vmem:[%s7 + $0x2c] sm:$0xf]
  %v3386 = vld [vmem:[%s7 + $0x30] sm:$0xf]
  %v3387 = vld [vmem:[%s7 + $0x34] sm:$0xf]
  %v3388 = vld [vmem:[%s7 + $0x38] sm:$0xf]
  %v3389 = vld [vmem:[%s7 + $0x3c] sm:$0xf]
  %v3406 = vunpack.c.l.b16 %v3374
  %v3407 = vunpack.c.l.b16 %v3375
  %v3408 = vunpack.c.l.b16 %v3376
  %v3409 = vunpack.c.l.b16 %v3377
  %v3410 = vunpack.c.l.b16 %v3378
  %v3411 = vunpack.c.l.b16 %v3379
  %v3412 = vunpack.c.l.b16 %v3380
  %v3413 = vunpack.c.l.b16 %v3381
  %v3414 = vunpack.c.l.b16 %v3382
  %v3415 = vunpack.c.l.b16 %v3383
  %v3416 = vunpack.c.l.b16 %v3384
  %v3417 = vunpack.c.l.b16 %v3385
  %v3418 = vunpack.c.l.b16 %v3386
  %v3419 = vunpack.c.l.b16 %v3387
  %v3420 = vunpack.c.l.b16 %v3388
  %v3421 = vunpack.c.l.b16 %v3389
  %v3422 = vpack.c.b16 %v3407, %v3406
  %v3423 = vpack.c.b16 %v3409, %v3408
  %v3424 = vpack.c.b16 %v3411, %v3410
  %v3425 = vpack.c.b16 %v3413, %v3412
  %v3426 = vpack.c.b16 %v3415, %v3414
  %v3427 = vpack.c.b16 %v3417, %v3416
  %v3428 = vpack.c.b16 %v3419, %v3418
  %v3429 = vpack.c.b16 %v3421, %v3420
  %3438 = vmatprep.subr.bf16.mxu0 0
  %3439 = vmatpush1.bf16.msra.mxu0 %v3429
  %3440 = vmatprep.subr.bf16.mxu0 0
  %3441 = vmatpush1.bf16.msra.mxu0 %v3428
  %3442 = vmatprep.subr.bf16.mxu0 0
  %3443 = vmatpush1.bf16.msra.mxu0 %v3427
  %3444 = vmatprep.subr.bf16.mxu0 0
  %3445 = vmatpush1.bf16.msra.mxu0 %v3426
  %3446 = vmatprep.subr.bf16.mxu0 0
  %3447 = vmatpush1.bf16.msra.mxu0 %v3425
  %3448 = vmatprep.subr.bf16.mxu0 0
  %3449 = vmatpush1.bf16.msra.mxu0 %v3424
  %3450 = vmatprep.subr.bf16.mxu0 0
  %3451 = vmatpush1.bf16.msra.mxu0 %v3423
  %3452 = vmatprep.subr.bf16.mxu0 0
  %3453 = vmatpush1.bf16.msra.mxu0 %v3422
  %3454 = vmatprep.subr.bf16.mxu0 0
  %3455 = vmatpush2.bf16.msra.mxu0 0
  %3456 = vmatprep.subr.bf16.mxu0 0
  %3457 = vmatpush2.bf16.msra.mxu0 0
  %3458 = vmatprep.subr.bf16.mxu0 0
  %3459 = vmatpush2.bf16.msra.mxu0 0
  %3460 = vmatprep.subr.bf16.mxu0 0
  %3461 = vmatpush2.bf16.msra.mxu0 0
  %3462 = vmatprep.subr.bf16.mxu0 0
  %3463 = vmatpush2.bf16.msra.mxu0 0
  %3464 = vmatprep.subr.bf16.mxu0 0
  %3465 = vmatpush2.bf16.msra.mxu0 0
  %3466 = vmatprep.subr.bf16.mxu0 0
  %3467 = vmatpush2.bf16.msra.mxu0 0
  %3468 = vmatprep.subr.bf16.mxu0 0
  %3469 = vmatpush2.bf16.msra.mxu0 0
  %3470 = vmatprep.mubr.bf16.mxu0 0
  %3471 = vmatmul.mubr.bf16.gmra.mxu0 %v3367
  %v3472 = vpop.f32.mrf.mxu0
  %v3473 = vadd.f32 0.0, %v3472
  %v3474 = vpop.f32.mrf.mxu0
  %v3475 = vpop.f32.mrf.mxu0
  %v3476 = vadd.f32 0.0, %v3475
  %v3477 = vpop.f32.mrf.mxu0
  %3478 = vmatprep.mubr.bf16.mxu0 0
  %3479 = vmatmul.mubr.bf16.gmra.mxu0 %v3368
  %v3480 = vpop.f32.mrf.mxu0
  %v3481 = vadd.f32 0.0, %v3480
  %v3482 = vpop.f32.mrf.mxu0
  %v3483 = vpop.f32.mrf.mxu0
  %v3484 = vadd.f32 0.0, %v3483
  %v3485 = vpop.f32.mrf.mxu0
  %3486 = vmatprep.mubr.bf16.mxu0 0
  %3487 = vmatmul.mubr.bf16.gmra.mxu0 %v3369
  %v3488 = vpop.f32.mrf.mxu0
  %v3489 = vadd.f32 0.0, %v3488
  %v3490 = vpop.f32.mrf.mxu0
  %v3491 = vpop.f32.mrf.mxu0
  %v3492 = vadd.f32 0.0, %v3491
  %v3493 = vpop.f32.mrf.mxu0
  %3494 = vmatprep.mubr.bf16.mxu0 0
  %3495 = vmatmul.mubr.bf16.gmra.mxu0 %v3370
  %v3496 = vpop.f32.mrf.mxu0
  %v3497 = vadd.f32 0.0, %v3496
  %v3498 = vpop.f32.mrf.mxu0
  %v3499 = vpop.f32.mrf.mxu0
  %v3500 = vadd.f32 0.0, %v3499
  %v3501 = vpop.f32.mrf.mxu0
  %3502 = vmatprep.mubr.bf16.mxu0 0
  %3503 = vmatmul.mubr.bf16.gmra.mxu0 %v3371
  %v3504 = vpop.f32.mrf.mxu0
  %v3505 = vadd.f32 0.0, %v3504
  %v3506 = vpop.f32.mrf.mxu0
  %v3507 = vpop.f32.mrf.mxu0
  %v3508 = vadd.f32 0.0, %v3507
  %v3509 = vpop.f32.mrf.mxu0
  %3510 = vmatprep.mubr.bf16.mxu0 0
  %3511 = vmatmul.mubr.bf16.gmra.mxu0 %v3372
  %v3512 = vpop.f32.mrf.mxu0
  %v3513 = vadd.f32 0.0, %v3512
  %v3514 = vpop.f32.mrf.mxu0
  %v3515 = vpop.f32.mrf.mxu0
  %v3516 = vadd.f32 0.0, %v3515
  %v3517 = vpop.f32.mrf.mxu0
  %3518 = vmatprep.mubr.bf16.mxu0 0
  %3519 = vmatmul.mubr.bf16.gmra.mxu0 %v3373
  %v3520 = vpop.f32.mrf.mxu0
  %v3521 = vadd.f32 0.0, %v3520
  %v3522 = vpop.f32.mrf.mxu0
  %v3523 = vpop.f32.mrf.mxu0
  %v3524 = vadd.f32 0.0, %v3523
  %v3525 = vpop.f32.mrf.mxu0
  %3526 = vdwg.mxu0
  %v3527 = vpack.c.bf16 %v3476, %v3473
  %v3528 = vpack.c.bf16 %v3484, %v3481
  %v3529 = vpack.c.bf16 %v3492, %v3489
  %v3530 = vpack.c.bf16 %v3500, %v3497
  %v3531 = vpack.c.bf16 %v3508, %v3505
  %v3532 = vpack.c.bf16 %v3516, %v3513
  %v3533 = vpack.c.bf16 %v3524, %v3521
  %v3541 = vunpack.c.l.b16 %v3527
  %v3542 = vunpack.c.h.b16 %v3527
  %v3543 = vunpack.c.l.b16 %v3528
  %v3544 = vunpack.c.h.b16 %v3528
  %v3545 = vunpack.c.l.b16 %v3529
  %v3546 = vunpack.c.h.b16 %v3529
  %v3547 = vunpack.c.l.b16 %v3530
  %v3548 = vunpack.c.h.b16 %v3530
  %v3549 = vunpack.c.l.b16 %v3531
  %v3550 = vunpack.c.h.b16 %v3531
  %v3551 = vunpack.c.l.b16 %v3532
  %v3552 = vunpack.c.h.b16 %v3532
  %v3553 = vunpack.c.l.b16 %v3533
  %v3554 = vunpack.c.h.b16 %v3533
  %v3555 = vpack.c.b16 %v3541, %v3541
  %v3556 = vpack.c.b16 %v3542, %v3542
  %v3557 = vpack.c.b16 %v3543, %v3543
  %v3558 = vpack.c.b16 %v3544, %v3544
  %v3559 = vpack.c.b16 %v3545, %v3545
  %v3560 = vpack.c.b16 %v3546, %v3546
  %v3561 = vpack.c.b16 %v3547, %v3547
  %v3562 = vpack.c.b16 %v3548, %v3548
  %v3563 = vpack.c.b16 %v3549, %v3549
  %v3564 = vpack.c.b16 %v3550, %v3550
  %v3565 = vpack.c.b16 %v3551, %v3551
  %v3566 = vpack.c.b16 %v3552, %v3552
  %v3567 = vpack.c.b16 %v3553, %v3553
  %v3568 = vpack.c.b16 %v3554, %v3554
  %v3570 = vshrl.u32 %v3555, 16
  %v3572 = vrot.slane %v3570, 6
  %v3573 = vshll.u32 %v3555, 16
  %v3575 = vrot.slane %v3573, 7
  %v3576 = vor.u32 %v3572, %v3575
  %v3577 = vrot.slane %v3576, 4
  %v3579 = vshrl.u32 %v3556, 16
  %v3581 = vrot.slane %v3579, 6
  %v3582 = vshll.u32 %v3556, 16
  %v3584 = vrot.slane %v3582, 7
  %v3585 = vor.u32 %v3581, %v3584
  %v3586 = vsel %vm282, %v3577, %v3585
  %v3587 = vrot.slane %v3585, 4
  %v3589 = vshrl.u32 %v3557, 16
  %v3591 = vrot.slane %v3589, 6
  %v3592 = vshll.u32 %v3557, 16
  %v3594 = vrot.slane %v3592, 7
  %v3595 = vor.u32 %v3591, %v3594
  %v3596 = vsel %vm282, %v3587, %v3595
  %v3597 = vrot.slane %v3595, 4
  %v3599 = vshrl.u32 %v3558, 16
  %v3601 = vrot.slane %v3599, 6
  %v3602 = vshll.u32 %v3558, 16
  %v3604 = vrot.slane %v3602, 7
  %v3605 = vor.u32 %v3601, %v3604
  %v3606 = vsel %vm282, %v3597, %v3605
  %v3607 = vrot.slane %v3605, 4
  %v3609 = vshrl.u32 %v3559, 16
  %v3611 = vrot.slane %v3609, 6
  %v3612 = vshll.u32 %v3559, 16
  %v3614 = vrot.slane %v3612, 7
  %v3615 = vor.u32 %v3611, %v3614
  %v3616 = vsel %vm282, %v3607, %v3615
  %v3617 = vrot.slane %v3615, 4
  %v3619 = vshrl.u32 %v3560, 16
  %v3621 = vrot.slane %v3619, 6
  %v3622 = vshll.u32 %v3560, 16
  %v3624 = vrot.slane %v3622, 7
  %v3625 = vor.u32 %v3621, %v3624
  %v3626 = vsel %vm282, %v3617, %v3625
  %v3627 = vrot.slane %v3625, 4
  %v3629 = vshrl.u32 %v3561, 16
  %v3631 = vrot.slane %v3629, 6
  %v3632 = vshll.u32 %v3561, 16
  %v3634 = vrot.slane %v3632, 7
  %v3635 = vor.u32 %v3631, %v3634
  %v3636 = vsel %vm282, %v3627, %v3635
  %v3637 = vrot.slane %v3635, 4
  %v3639 = vshrl.u32 %v3562, 16
  %v3641 = vrot.slane %v3639, 6
  %v3642 = vshll.u32 %v3562, 16
  %v3644 = vrot.slane %v3642, 7
  %v3645 = vor.u32 %v3641, %v3644
  %v3646 = vsel %vm282, %v3637, %v3645
  %v3647 = vrot.slane %v3645, 4
  %v3649 = vshrl.u32 %v3563, 16
  %v3651 = vrot.slane %v3649, 6
  %v3652 = vshll.u32 %v3563, 16
  %v3654 = vrot.slane %v3652, 7
  %v3655 = vor.u32 %v3651, %v3654
  %v3656 = vsel %vm282, %v3647, %v3655
  %v3657 = vrot.slane %v3655, 4
  %v3659 = vshrl.u32 %v3564, 16
  %v3661 = vrot.slane %v3659, 6
  %v3662 = vshll.u32 %v3564, 16
  %v3664 = vrot.slane %v3662, 7
  %v3665 = vor.u32 %v3661, %v3664
  %v3666 = vsel %vm282, %v3657, %v3665
  %v3667 = vrot.slane %v3665, 4
  %v3669 = vshrl.u32 %v3565, 16
  %v3671 = vrot.slane %v3669, 6
  %v3672 = vshll.u32 %v3565, 16
  %v3674 = vrot.slane %v3672, 7
  %v3675 = vor.u32 %v3671, %v3674
  %v3676 = vsel %vm282, %v3667, %v3675
  %v3677 = vrot.slane %v3675, 4
  %v3679 = vshrl.u32 %v3566, 16
  %v3681 = vrot.slane %v3679, 6
  %v3682 = vshll.u32 %v3566, 16
  %v3684 = vrot.slane %v3682, 7
  %v3685 = vor.u32 %v3681, %v3684
  %v3686 = vsel %vm282, %v3677, %v3685
  %v3687 = vrot.slane %v3685, 4
  %v3689 = vshrl.u32 %v3567, 16
  %v3691 = vrot.slane %v3689, 6
  %v3692 = vshll.u32 %v3567, 16
  %v3694 = vrot.slane %v3692, 7
  %v3695 = vor.u32 %v3691, %v3694
  %v3696 = vsel %vm282, %v3687, %v3695
  %v3697 = vrot.slane %v3695, 4
  %v3699 = vshrl.u32 %v3568, 16
  %v3701 = vrot.slane %v3699, 6
  %v3702 = vshll.u32 %v3568, 16
  %v3704 = vrot.slane %v3702, 7
  %v3705 = vor.u32 %v3701, %v3704
  %v3706 = vsel %vm282, %v3697, %v3705
  %v3707 = vrot.slane %v3705, 4
  %v3723 = vld [vmem:[#allocation2 + $0x10] sm:$0xe]
  %v3724 = vsel %vm439, %v3576, %v3723
  %3725 = vst [vmem:[#allocation2 + $0x10] sm:$0xe] %v3724
  %3726 = vst.msk [vmem:[#allocation2 + $0x18] sm:$0xf] %vm443, %v3586
  %3727 = vst.msk [vmem:[#allocation2 + $0x20] sm:$0xf] %vm443, %v3596
  %3728 = vst.msk [vmem:[#allocation2 + $0x28] sm:$0xf] %vm443, %v3606
  %3729 = vst.msk [vmem:[#allocation2 + $0x30] sm:$0xf] %vm443, %v3616
  %3730 = vst.msk [vmem:[#allocation2 + $0x38] sm:$0xf] %vm443, %v3626
  %3731 = vst.msk [vmem:[#allocation2 + $0x40] sm:$0xf] %vm443, %v3636
  %3732 = vst.msk [vmem:[#allocation2 + $0x48] sm:$0xf] %vm443, %v3646
  %3733 = vst.msk [vmem:[#allocation2 + $0x50] sm:$0xf] %vm443, %v3656
  %3734 = vst.msk [vmem:[#allocation2 + $0x58] sm:$0xf] %vm443, %v3666
  %3735 = vst.msk [vmem:[#allocation2 + $0x60] sm:$0xf] %vm443, %v3676
  %3736 = vst.msk [vmem:[#allocation2 + $0x68] sm:$0xf] %vm443, %v3686
  %3737 = vst.msk [vmem:[#allocation2 + $0x70] sm:$0xf] %vm443, %v3696
  %3738 = vst.msk [vmem:[#allocation2 + $0x78] sm:$0xf] %vm443, %v3706
  %v3739 = vld [vmem:[#allocation2 + $0x80] sm:$0x3]
  %v3740 = vsel %vm458, %v3707, %v3739
  %3741 = vst [vmem:[#allocation2 + $0x80] sm:$0x3] %v3740
  %v3742 = vrot.slane %v3555, 7
  %v3743 = vrot.slane %v3742, 4
  %v3744 = vrot.slane %v3556, 7
  %v3745 = vsel %vm464, %v3743, %v3744
  %v3746 = vrot.slane %v3744, 4
  %v3747 = vrot.slane %v3557, 7
  %v3748 = vsel %vm464, %v3746, %v3747
  %v3749 = vrot.slane %v3747, 4
  %v3750 = vrot.slane %v3558, 7
  %v3751 = vsel %vm464, %v3749, %v3750
  %v3752 = vrot.slane %v3750, 4
  %v3753 = vrot.slane %v3559, 7
  %v3754 = vsel %vm464, %v3752, %v3753
  %v3755 = vrot.slane %v3753, 4
  %v3756 = vrot.slane %v3560, 7
  %v3757 = vsel %vm464, %v3755, %v3756
  %v3758 = vrot.slane %v3756, 4
  %v3759 = vrot.slane %v3561, 7
  %v3760 = vsel %vm464, %v3758, %v3759
  %v3761 = vrot.slane %v3759, 4
  %v3762 = vrot.slane %v3562, 7
  %v3763 = vsel %vm464, %v3761, %v3762
  %v3764 = vrot.slane %v3762, 4
  %v3765 = vrot.slane %v3563, 7
  %v3766 = vsel %vm464, %v3764, %v3765
  %v3767 = vrot.slane %v3765, 4
  %v3768 = vrot.slane %v3564, 7
  %v3769 = vsel %vm464, %v3767, %v3768
  %v3770 = vrot.slane %v3768, 4
  %v3771 = vrot.slane %v3565, 7
  %v3772 = vsel %vm464, %v3770, %v3771
  %v3773 = vrot.slane %v3771, 4
  %v3774 = vrot.slane %v3566, 7
  %v3775 = vsel %vm464, %v3773, %v3774
  %v3776 = vrot.slane %v3774, 4
  %v3777 = vrot.slane %v3567, 7
  %v3778 = vsel %vm464, %v3776, %v3777
  %v3779 = vrot.slane %v3777, 4
  %v3780 = vrot.slane %v3568, 7
  %v3781 = vsel %vm464, %v3779, %v3780
  %v3782 = vrot.slane %v3780, 4
  %3783 = vrot.lane.b32.xlu0 %v3742, 32
  %v3784 = vpop.permute.xlu0 %3783
  %3785 = vrot.lane.b32.xlu0 %v3745, 32
  %v3786 = vpop.permute.xlu0 %3785
  %3787 = vrot.lane.b32.xlu0 %v3748, 32
  %v3788 = vpop.permute.xlu0 %3787
  %3789 = vrot.lane.b32.xlu0 %v3751, 32
  %v3790 = vpop.permute.xlu0 %3789
  %3791 = vrot.lane.b32.xlu0 %v3754, 32
  %v3792 = vpop.permute.xlu0 %3791
  %3793 = vrot.lane.b32.xlu0 %v3757, 32
  %v3794 = vpop.permute.xlu0 %3793
  %3795 = vrot.lane.b32.xlu0 %v3760, 32
  %v3796 = vpop.permute.xlu0 %3795
  %3797 = vrot.lane.b32.xlu0 %v3763, 32
  %v3798 = vpop.permute.xlu0 %3797
  %3799 = vrot.lane.b32.xlu0 %v3766, 32
  %v3800 = vpop.permute.xlu0 %3799
  %3801 = vrot.lane.b32.xlu0 %v3769, 32
  %v3802 = vpop.permute.xlu0 %3801
  %3803 = vrot.lane.b32.xlu0 %v3772, 32
  %v3804 = vpop.permute.xlu0 %3803
  %3805 = vrot.lane.b32.xlu0 %v3775, 32
  %v3806 = vpop.permute.xlu0 %3805
  %3807 = vrot.lane.b32.xlu0 %v3778, 32
  %v3808 = vpop.permute.xlu0 %3807
  %3809 = vrot.lane.b32.xlu0 %v3781, 32
  %v3810 = vpop.permute.xlu0 %3809
  %3811 = vrot.lane.b32.xlu0 %v3782, 32
  %v3812 = vpop.permute.xlu0 %3811
  %3828 = vst.msk [vmem:[#allocation2 + $0x10] sm:$0xe] %vm551, %v3784
  %3829 = vst.msk [vmem:[#allocation2 + $0x18] sm:$0xf] %vm553, %v3786
  %3830 = vst.msk [vmem:[#allocation2 + $0x20] sm:$0xf] %vm553, %v3788
  %3831 = vst.msk [vmem:[#allocation2 + $0x28] sm:$0xf] %vm553, %v3790
  %3832 = vst.msk [vmem:[#allocation2 + $0x30] sm:$0xf] %vm553, %v3792
  %3833 = vst.msk [vmem:[#allocation2 + $0x38] sm:$0xf] %vm553, %v3794
  %3834 = vst.msk [vmem:[#allocation2 + $0x40] sm:$0xf] %vm553, %v3796
  %3835 = vst.msk [vmem:[#allocation2 + $0x48] sm:$0xf] %vm553, %v3798
  %3836 = vst.msk [vmem:[#allocation2 + $0x50] sm:$0xf] %vm553, %v3800
  %3837 = vst.msk [vmem:[#allocation2 + $0x58] sm:$0xf] %vm553, %v3802
  %3838 = vst.msk [vmem:[#allocation2 + $0x60] sm:$0xf] %vm553, %v3804
  %3839 = vst.msk [vmem:[#allocation2 + $0x68] sm:$0xf] %vm553, %v3806
  %3840 = vst.msk [vmem:[#allocation2 + $0x70] sm:$0xf] %vm553, %v3808
  %3841 = vst.msk [vmem:[#allocation2 + $0x78] sm:$0xf] %vm553, %v3810
  %3842 = vst.msk [vmem:[#allocation2 + $0x80] sm:$0x1] %vm567, %v3812
  %v3843 = vrot.slane %v3570, 7
  %v3844 = vor.u32 %v3843, %v3573
  %v3845 = vrot.slane %v3843, 4
  %v3846 = vrot.slane %v3579, 7
  %v3847 = vor.u32 %v3846, %v3582
  %v3848 = vsel %vm571, %v3845, %v3847
  %v3849 = vrot.slane %v3846, 4
  %v3850 = vrot.slane %v3589, 7
  %v3851 = vor.u32 %v3850, %v3592
  %v3852 = vsel %vm571, %v3849, %v3851
  %v3853 = vrot.slane %v3850, 4
  %v3854 = vrot.slane %v3599, 7
  %v3855 = vor.u32 %v3854, %v3602
  %v3856 = vsel %vm571, %v3853, %v3855
  %v3857 = vrot.slane %v3854, 4
  %v3858 = vrot.slane %v3609, 7
  %v3859 = vor.u32 %v3858, %v3612
  %v3860 = vsel %vm571, %v3857, %v3859
  %v3861 = vrot.slane %v3858, 4
  %v3862 = vrot.slane %v3619, 7
  %v3863 = vor.u32 %v3862, %v3622
  %v3864 = vsel %vm571, %v3861, %v3863
  %v3865 = vrot.slane %v3862, 4
  %v3866 = vrot.slane %v3629, 7
  %v3867 = vor.u32 %v3866, %v3632
  %v3868 = vsel %vm571, %v3865, %v3867
  %v3869 = vrot.slane %v3866, 4
  %v3870 = vrot.slane %v3639, 7
  %v3871 = vor.u32 %v3870, %v3642
  %v3872 = vsel %vm571, %v3869, %v3871
  %v3873 = vrot.slane %v3870, 4
  %v3874 = vrot.slane %v3649, 7
  %v3875 = vor.u32 %v3874, %v3652
  %v3876 = vsel %vm571, %v3873, %v3875
  %v3877 = vrot.slane %v3874, 4
  %v3878 = vrot.slane %v3659, 7
  %v3879 = vor.u32 %v3878, %v3662
  %v3880 = vsel %vm571, %v3877, %v3879
  %v3881 = vrot.slane %v3878, 4
  %v3882 = vrot.slane %v3669, 7
  %v3883 = vor.u32 %v3882, %v3672
  %v3884 = vsel %vm571, %v3881, %v3883
  %v3885 = vrot.slane %v3882, 4
  %v3886 = vrot.slane %v3679, 7
  %v3887 = vor.u32 %v3886, %v3682
  %v3888 = vsel %vm571, %v3885, %v3887
  %v3889 = vrot.slane %v3886, 4
  %v3890 = vrot.slane %v3689, 7
  %v3891 = vor.u32 %v3890, %v3692
  %v3892 = vsel %vm571, %v3889, %v3891
  %v3893 = vrot.slane %v3890, 4
  %v3894 = vrot.slane %v3699, 7
  %v3895 = vor.u32 %v3894, %v3702
  %v3896 = vsel %vm571, %v3893, %v3895
  %v3897 = vrot.slane %v3894, 4
  %3898 = vrot.lane.b32.xlu0 %v3844, 64
  %v3899 = vpop.permute.xlu0 %3898
  %3900 = vrot.lane.b32.xlu0 %v3848, 64
  %v3901 = vpop.permute.xlu0 %3900
  %3902 = vrot.lane.b32.xlu0 %v3852, 64
  %v3903 = vpop.permute.xlu0 %3902
  %3904 = vrot.lane.b32.xlu0 %v3856, 64
  %v3905 = vpop.permute.xlu0 %3904
  %3906 = vrot.lane.b32.xlu0 %v3860, 64
  %v3907 = vpop.permute.xlu0 %3906
  %3908 = vrot.lane.b32.xlu0 %v3864, 64
  %v3909 = vpop.permute.xlu0 %3908
  %3910 = vrot.lane.b32.xlu0 %v3868, 64
  %v3911 = vpop.permute.xlu0 %3910
  %3912 = vrot.lane.b32.xlu0 %v3872, 64
  %v3913 = vpop.permute.xlu0 %3912
  %3914 = vrot.lane.b32.xlu0 %v3876, 64
  %v3915 = vpop.permute.xlu0 %3914
  %3916 = vrot.lane.b32.xlu0 %v3880, 64
  %v3917 = vpop.permute.xlu0 %3916
  %3918 = vrot.lane.b32.xlu0 %v3884, 64
  %v3919 = vpop.permute.xlu0 %3918
  %3920 = vrot.lane.b32.xlu0 %v3888, 64
  %v3921 = vpop.permute.xlu0 %3920
  %3922 = vrot.lane.b32.xlu0 %v3892, 64
  %v3923 = vpop.permute.xlu0 %3922
  %3924 = vrot.lane.b32.xlu0 %v3896, 64
  %v3925 = vpop.permute.xlu0 %3924
  %3926 = vrot.lane.b32.xlu0 %v3897, 64
  %v3927 = vpop.permute.xlu0 %3926
  %v3943 = vld [vmem:[#allocation2 + $0x10] sm:$0xf]
  %v3944 = vsel %vm674, %v3899, %v3943
  %3945 = vst [vmem:[#allocation2 + $0x10] sm:$0xf] %v3944
  %3946 = vst.msk [vmem:[#allocation2 + $0x18] sm:$0xf] %vm678, %v3901
  %3947 = vst.msk [vmem:[#allocation2 + $0x20] sm:$0xf] %vm678, %v3903
  %3948 = vst.msk [vmem:[#allocation2 + $0x28] sm:$0xf] %vm678, %v3905
  %3949 = vst.msk [vmem:[#allocation2 + $0x30] sm:$0xf] %vm678, %v3907
  %3950 = vst.msk [vmem:[#allocation2 + $0x38] sm:$0xf] %vm678, %v3909
  %3951 = vst.msk [vmem:[#allocation2 + $0x40] sm:$0xf] %vm678, %v3911
  %3952 = vst.msk [vmem:[#allocation2 + $0x48] sm:$0xf] %vm678, %v3913
  %3953 = vst.msk [vmem:[#allocation2 + $0x50] sm:$0xf] %vm678, %v3915
  %3954 = vst.msk [vmem:[#allocation2 + $0x58] sm:$0xf] %vm678, %v3917
  %3955 = vst.msk [vmem:[#allocation2 + $0x60] sm:$0xf] %vm678, %v3919
  %3956 = vst.msk [vmem:[#allocation2 + $0x68] sm:$0xf] %vm678, %v3921
  %3957 = vst.msk [vmem:[#allocation2 + $0x70] sm:$0xf] %vm678, %v3923
  %3958 = vst.msk [vmem:[#allocation2 + $0x78] sm:$0xf] %vm678, %v3925
  %v3959 = vld [vmem:[#allocation2 + $0x80] sm:$0x1]
  %v3960 = vsel %vm693, %v3927, %v3959
  %3961 = vst [vmem:[#allocation2 + $0x80] sm:$0x1] %v3960
  %3962 = vrot.lane.b32.xlu0 %v3555, 96
  %v3963 = vpop.permute.xlu0 %3962
  %3964 = vrot.lane.b32.xlu0 %v3556, 96
  %v3965 = vpop.permute.xlu0 %3964
  %3966 = vrot.lane.b32.xlu0 %v3557, 96
  %v3967 = vpop.permute.xlu0 %3966
  %3968 = vrot.lane.b32.xlu0 %v3558, 96
  %v3969 = vpop.permute.xlu0 %3968
  %3970 = vrot.lane.b32.xlu0 %v3559, 96
  %v3971 = vpop.permute.xlu0 %3970
  %3972 = vrot.lane.b32.xlu0 %v3560, 96
  %v3973 = vpop.permute.xlu0 %3972
  %3974 = vrot.lane.b32.xlu0 %v3561, 96
  %v3975 = vpop.permute.xlu0 %3974
  %3976 = vrot.lane.b32.xlu0 %v3562, 96
  %v3977 = vpop.permute.xlu0 %3976
  %3978 = vrot.lane.b32.xlu0 %v3563, 96
  %v3979 = vpop.permute.xlu0 %3978
  %3980 = vrot.lane.b32.xlu0 %v3564, 96
  %v3981 = vpop.permute.xlu0 %3980
  %3982 = vrot.lane.b32.xlu0 %v3565, 96
  %v3983 = vpop.permute.xlu0 %3982
  %3984 = vrot.lane.b32.xlu0 %v3566, 96
  %v3985 = vpop.permute.xlu0 %3984
  %3986 = vrot.lane.b32.xlu0 %v3567, 96
  %v3987 = vpop.permute.xlu0 %3986
  %3988 = vrot.lane.b32.xlu0 %v3568, 96
  %v3989 = vpop.permute.xlu0 %3988
  %4004 = vst.msk [vmem:[#allocation2 + $0x10] sm:$0xf] %vm739, %v3963
  %4005 = vst.msk [vmem:[#allocation2 + $0x18] sm:$0xf] %vm739, %v3965
  %4006 = vst.msk [vmem:[#allocation2 + $0x20] sm:$0xf] %vm739, %v3967
  %4007 = vst.msk [vmem:[#allocation2 + $0x28] sm:$0xf] %vm739, %v3969
  %4008 = vst.msk [vmem:[#allocation2 + $0x30] sm:$0xf] %vm739, %v3971
  %4009 = vst.msk [vmem:[#allocation2 + $0x38] sm:$0xf] %vm739, %v3973
  %4010 = vst.msk [vmem:[#allocation2 + $0x40] sm:$0xf] %vm739, %v3975
  %4011 = vst.msk [vmem:[#allocation2 + $0x48] sm:$0xf] %vm739, %v3977
  %4012 = vst.msk [vmem:[#allocation2 + $0x50] sm:$0xf] %vm739, %v3979
  %4013 = vst.msk [vmem:[#allocation2 + $0x58] sm:$0xf] %vm739, %v3981
  %4014 = vst.msk [vmem:[#allocation2 + $0x60] sm:$0xf] %vm739, %v3983
  %4015 = vst.msk [vmem:[#allocation2 + $0x68] sm:$0xf] %vm739, %v3985
  %4016 = vst.msk [vmem:[#allocation2 + $0x70] sm:$0xf] %vm739, %v3987
  %4017 = vst.msk [vmem:[#allocation2 + $0x78] sm:$0xf] %vm739, %v3989
  %v4018 = vrot.slane %v3573, 5
  %v4019 = vrot.slane %v3570, 4
  %v4020 = vor.u32 %v4019, %v4018
  %v4021 = vrot.slane %v4020, 4
  %v4022 = vrot.slane %v3582, 5
  %v4023 = vsel %vm756, %v4021, %v4022
  %v4024 = vrot.slane %v3579, 4
  %v4025 = vor.u32 %v4024, %v4022
  %v4026 = vrot.slane %v4025, 4
  %v4027 = vrot.slane %v3592, 5
  %v4028 = vsel %vm756, %v4026, %v4027
  %v4029 = vrot.slane %v3589, 4
  %v4030 = vor.u32 %v4029, %v4027
  %v4031 = vrot.slane %v4030, 4
  %v4032 = vrot.slane %v3602, 5
  %v4033 = vsel %vm756, %v4031, %v4032
  %v4034 = vrot.slane %v3599, 4
  %v4035 = vor.u32 %v4034, %v4032
  %v4036 = vrot.slane %v4035, 4
  %v4037 = vrot.slane %v3612, 5
  %v4038 = vsel %vm756, %v4036, %v4037
  %v4039 = vrot.slane %v3609, 4
  %v4040 = vor.u32 %v4039, %v4037
  %v4041 = vrot.slane %v4040, 4
  %v4042 = vrot.slane %v3622, 5
  %v4043 = vsel %vm756, %v4041, %v4042
  %v4044 = vrot.slane %v3619, 4
  %v4045 = vor.u32 %v4044, %v4042
  %v4046 = vrot.slane %v4045, 4
  %v4047 = vrot.slane %v3632, 5
  %v4048 = vsel %vm756, %v4046, %v4047
  %v4049 = vrot.slane %v3629, 4
  %v4050 = vor.u32 %v4049, %v4047
  %v4051 = vrot.slane %v4050, 4
  %v4052 = vrot.slane %v3642, 5
  %v4053 = vsel %vm756, %v4051, %v4052
  %v4054 = vrot.slane %v3639, 4
  %v4055 = vor.u32 %v4054, %v4052
  %v4056 = vrot.slane %v4055, 4
  %v4057 = vrot.slane %v3652, 5
  %v4058 = vsel %vm756, %v4056, %v4057
  %v4059 = vrot.slane %v3649, 4
  %v4060 = vor.u32 %v4059, %v4057
  %v4061 = vrot.slane %v4060, 4
  %v4062 = vrot.slane %v3662, 5
  %v4063 = vsel %vm756, %v4061, %v4062
  %v4064 = vrot.slane %v3659, 4
  %v4065 = vor.u32 %v4064, %v4062
  %v4066 = vrot.slane %v4065, 4
  %v4067 = vrot.slane %v3672, 5
  %v4068 = vsel %vm756, %v4066, %v4067
  %v4069 = vrot.slane %v3669, 4
  %v4070 = vor.u32 %v4069, %v4067
  %v4071 = vrot.slane %v4070, 4
  %v4072 = vrot.slane %v3682, 5
  %v4073 = vsel %vm756, %v4071, %v4072
  %v4074 = vrot.slane %v3679, 4
  %v4075 = vor.u32 %v4074, %v4072
  %v4076 = vrot.slane %v4075, 4
  %v4077 = vrot.slane %v3692, 5
  %v4078 = vsel %vm756, %v4076, %v4077
  %v4079 = vrot.slane %v3689, 4
  %v4080 = vor.u32 %v4079, %v4077
  %v4081 = vrot.slane %v4080, 4
  %v4082 = vrot.slane %v3702, 5
  %v4083 = vsel %vm756, %v4081, %v4082
  %v4084 = vrot.slane %v3699, 4
  %v4085 = vor.u32 %v4084, %v4082
  %v4086 = vrot.slane %v4085, 4
  %v4102 = vld [vmem:[#allocation2 + $0xc] sm:$0x8]
  %v4103 = vsel %vm843, %v4018, %v4102
  %4104 = vst [vmem:[#allocation2 + $0xc] sm:$0x8] %v4103
  %4105 = vst.msk [vmem:[#allocation2 + $0x14] sm:$0xf] %vm443, %v4023
  %4106 = vst.msk [vmem:[#allocation2 + $0x1c] sm:$0xf] %vm443, %v4028
  %4107 = vst.msk [vmem:[#allocation2 + $0x24] sm:$0xf] %vm443, %v4033
  %4108 = vst.msk [vmem:[#allocation2 + $0x2c] sm:$0xf] %vm443, %v4038
  %4109 = vst.msk [vmem:[#allocation2 + $0x34] sm:$0xf] %vm443, %v4043
  %4110 = vst.msk [vmem:[#allocation2 + $0x3c] sm:$0xf] %vm443, %v4048
  %4111 = vst.msk [vmem:[#allocation2 + $0x44] sm:$0xf] %vm443, %v4053
  %4112 = vst.msk [vmem:[#allocation2 + $0x4c] sm:$0xf] %vm443, %v4058
  %4113 = vst.msk [vmem:[#allocation2 + $0x54] sm:$0xf] %vm443, %v4063
  %4114 = vst.msk [vmem:[#allocation2 + $0x5c] sm:$0xf] %vm443, %v4068
  %4115 = vst.msk [vmem:[#allocation2 + $0x64] sm:$0xf] %vm443, %v4073
  %4116 = vst.msk [vmem:[#allocation2 + $0x6c] sm:$0xf] %vm443, %v4078
  %4117 = vst.msk [vmem:[#allocation2 + $0x74] sm:$0xf] %vm443, %v4083
  %v4118 = vld [vmem:[#allocation2 + $0x7c] sm:$0xf]
  %v4119 = vsel %vm861, %v4086, %v4118
  %4120 = vst [vmem:[#allocation2 + $0x7c] sm:$0xf] %v4119
  %v4121 = vrot.slane %v3555, 5
  %v4122 = vrot.slane %v4121, 4
  %v4123 = vrot.slane %v3556, 5
  %v4124 = vsel %vm867, %v4122, %v4123
  %v4125 = vrot.slane %v4123, 4
  %v4126 = vrot.slane %v3557, 5
  %v4127 = vsel %vm867, %v4125, %v4126
  %v4128 = vrot.slane %v4126, 4
  %v4129 = vrot.slane %v3558, 5
  %v4130 = vsel %vm867, %v4128, %v4129
  %v4131 = vrot.slane %v4129, 4
  %v4132 = vrot.slane %v3559, 5
  %v4133 = vsel %vm867, %v4131, %v4132
  %v4134 = vrot.slane %v4132, 4
  %v4135 = vrot.slane %v3560, 5
  %v4136 = vsel %vm867, %v4134, %v4135
  %v4137 = vrot.slane %v4135, 4
  %v4138 = vrot.slane %v3561, 5
  %v4139 = vsel %vm867, %v4137, %v4138
  %v4140 = vrot.slane %v4138, 4
  %v4141 = vrot.slane %v3562, 5
  %v4142 = vsel %vm867, %v4140, %v4141
  %v4143 = vrot.slane %v4141, 4
  %v4144 = vrot.slane %v3563, 5
  %v4145 = vsel %vm867, %v4143, %v4144
  %v4146 = vrot.slane %v4144, 4
  %v4147 = vrot.slane %v3564, 5
  %v4148 = vsel %vm867, %v4146, %v4147
  %v4149 = vrot.slane %v4147, 4
  %v4150 = vrot.slane %v3565, 5
  %v4151 = vsel %vm867, %v4149, %v4150
  %v4152 = vrot.slane %v4150, 4
  %v4153 = vrot.slane %v3566, 5
  %v4154 = vsel %vm867, %v4152, %v4153
  %v4155 = vrot.slane %v4153, 4
  %v4156 = vrot.slane %v3567, 5
  %v4157 = vsel %vm867, %v4155, %v4156
  %v4158 = vrot.slane %v4156, 4
  %v4159 = vrot.slane %v3568, 5
  %v4160 = vsel %vm867, %v4158, %v4159
  %v4161 = vrot.slane %v4159, 4
  %4162 = vrot.lane.b32.xlu0 %v4121, 32
  %v4163 = vpop.permute.xlu0 %4162
  %4164 = vrot.lane.b32.xlu0 %v4124, 32
  %v4165 = vpop.permute.xlu0 %4164
  %4166 = vrot.lane.b32.xlu0 %v4127, 32
  %v4167 = vpop.permute.xlu0 %4166
  %4168 = vrot.lane.b32.xlu0 %v4130, 32
  %v4169 = vpop.permute.xlu0 %4168
  %4170 = vrot.lane.b32.xlu0 %v4133, 32
  %v4171 = vpop.permute.xlu0 %4170
  %4172 = vrot.lane.b32.xlu0 %v4136, 32
  %v4173 = vpop.permute.xlu0 %4172
  %4174 = vrot.lane.b32.xlu0 %v4139, 32
  %v4175 = vpop.permute.xlu0 %4174
  %4176 = vrot.lane.b32.xlu0 %v4142, 32
  %v4177 = vpop.permute.xlu0 %4176
  %4178 = vrot.lane.b32.xlu0 %v4145, 32
  %v4179 = vpop.permute.xlu0 %4178
  %4180 = vrot.lane.b32.xlu0 %v4148, 32
  %v4181 = vpop.permute.xlu0 %4180
  %4182 = vrot.lane.b32.xlu0 %v4151, 32
  %v4183 = vpop.permute.xlu0 %4182
  %4184 = vrot.lane.b32.xlu0 %v4154, 32
  %v4185 = vpop.permute.xlu0 %4184
  %4186 = vrot.lane.b32.xlu0 %v4157, 32
  %v4187 = vpop.permute.xlu0 %4186
  %4188 = vrot.lane.b32.xlu0 %v4160, 32
  %v4189 = vpop.permute.xlu0 %4188
  %4190 = vrot.lane.b32.xlu0 %v4161, 32
  %v4191 = vpop.permute.xlu0 %4190
  %4207 = vst.msk [vmem:[#allocation2 + $0xc] sm:$0x8] %vm954, %v4163
  %4208 = vst.msk [vmem:[#allocation2 + $0x14] sm:$0xf] %vm553, %v4165
  %4209 = vst.msk [vmem:[#allocation2 + $0x1c] sm:$0xf] %vm553, %v4167
  %4210 = vst.msk [vmem:[#allocation2 + $0x24] sm:$0xf] %vm553, %v4169
  %4211 = vst.msk [vmem:[#allocation2 + $0x2c] sm:$0xf] %vm553, %v4171
  %4212 = vst.msk [vmem:[#allocation2 + $0x34] sm:$0xf] %vm553, %v4173
  %4213 = vst.msk [vmem:[#allocation2 + $0x3c] sm:$0xf] %vm553, %v4175
  %4214 = vst.msk [vmem:[#allocation2 + $0x44] sm:$0xf] %vm553, %v4177
  %4215 = vst.msk [vmem:[#allocation2 + $0x4c] sm:$0xf] %vm553, %v4179
  %4216 = vst.msk [vmem:[#allocation2 + $0x54] sm:$0xf] %vm553, %v4181
  %4217 = vst.msk [vmem:[#allocation2 + $0x5c] sm:$0xf] %vm553, %v4183
  %4218 = vst.msk [vmem:[#allocation2 + $0x64] sm:$0xf] %vm553, %v4185
  %4219 = vst.msk [vmem:[#allocation2 + $0x6c] sm:$0xf] %vm553, %v4187
  %4220 = vst.msk [vmem:[#allocation2 + $0x74] sm:$0xf] %vm553, %v4189
  %4221 = vst.msk [vmem:[#allocation2 + $0x7c] sm:$0x7] %vm969, %v4191
  %v4222 = vrot.slane %v3570, 5
  %v4223 = vrot.slane %v3573, 6
  %v4224 = vor.u32 %v4222, %v4223
  %v4225 = vrot.slane %v4224, 4
  %v4226 = vrot.slane %v3579, 5
  %v4227 = vrot.slane %v3582, 6
  %v4228 = vor.u32 %v4226, %v4227
  %v4229 = vsel %vm973, %v4225, %v4228
  %v4230 = vrot.slane %v4228, 4
  %v4231 = vrot.slane %v3589, 5
  %v4232 = vrot.slane %v3592, 6
  %v4233 = vor.u32 %v4231, %v4232
  %v4234 = vsel %vm973, %v4230, %v4233
  %v4235 = vrot.slane %v4233, 4
  %v4236 = vrot.slane %v3599, 5
  %v4237 = vrot.slane %v3602, 6
  %v4238 = vor.u32 %v4236, %v4237
  %v4239 = vsel %vm973, %v4235, %v4238
  %v4240 = vrot.slane %v4238, 4
  %v4241 = vrot.slane %v3609, 5
  %v4242 = vrot.slane %v3612, 6
  %v4243 = vor.u32 %v4241, %v4242
  %v4244 = vsel %vm973, %v4240, %v4243
  %v4245 = vrot.slane %v4243, 4
  %v4246 = vrot.slane %v3619, 5
  %v4247 = vrot.slane %v3622, 6
  %v4248 = vor.u32 %v4246, %v4247
  %v4249 = vsel %vm973, %v4245, %v4248
  %v4250 = vrot.slane %v4248, 4
  %v4251 = vrot.slane %v3629, 5
  %v4252 = vrot.slane %v3632, 6
  %v4253 = vor.u32 %v4251, %v4252
  %v4254 = vsel %vm973, %v4250, %v4253
  %v4255 = vrot.slane %v4253, 4
  %v4256 = vrot.slane %v3639, 5
  %v4257 = vrot.slane %v3642, 6
  %v4258 = vor.u32 %v4256, %v4257
  %v4259 = vsel %vm973, %v4255, %v4258
  %v4260 = vrot.slane %v4258, 4
  %v4261 = vrot.slane %v3649, 5
  %v4262 = vrot.slane %v3652, 6
  %v4263 = vor.u32 %v4261, %v4262
  %v4264 = vsel %vm973, %v4260, %v4263
  %v4265 = vrot.slane %v4263, 4
  %v4266 = vrot.slane %v3659, 5
  %v4267 = vrot.slane %v3662, 6
  %v4268 = vor.u32 %v4266, %v4267
  %v4269 = vsel %vm973, %v4265, %v4268
  %v4270 = vrot.slane %v4268, 4
  %v4271 = vrot.slane %v3669, 5
  %v4272 = vrot.slane %v3672, 6
  %v4273 = vor.u32 %v4271, %v4272
  %v4274 = vsel %vm973, %v4270, %v4273
  %v4275 = vrot.slane %v4273, 4
  %v4276 = vrot.slane %v3679, 5
  %v4277 = vrot.slane %v3682, 6
  %v4278 = vor.u32 %v4276, %v4277
  %v4279 = vsel %vm973, %v4275, %v4278
  %v4280 = vrot.slane %v4278, 4
  %v4281 = vrot.slane %v3689, 5
  %v4282 = vrot.slane %v3692, 6
  %v4283 = vor.u32 %v4281, %v4282
  %v4284 = vsel %vm973, %v4280, %v4283
  %v4285 = vrot.slane %v4283, 4
  %v4286 = vrot.slane %v3699, 5
  %v4287 = vrot.slane %v3702, 6
  %v4288 = vor.u32 %v4286, %v4287
  %v4289 = vsel %vm973, %v4285, %v4288
  %v4290 = vrot.slane %v4288, 4
  %4291 = vrot.lane.b32.xlu0 %v4224, 64
  %v4292 = vpop.permute.xlu0 %4291
  %4293 = vrot.lane.b32.xlu0 %v4229, 64
  %v4294 = vpop.permute.xlu0 %4293
  %4295 = vrot.lane.b32.xlu0 %v4234, 64
  %v4296 = vpop.permute.xlu0 %4295
  %4297 = vrot.lane.b32.xlu0 %v4239, 64
  %v4298 = vpop.permute.xlu0 %4297
  %4299 = vrot.lane.b32.xlu0 %v4244, 64
  %v4300 = vpop.permute.xlu0 %4299
  %4301 = vrot.lane.b32.xlu0 %v4249, 64
  %v4302 = vpop.permute.xlu0 %4301
  %4303 = vrot.lane.b32.xlu0 %v4254, 64
  %v4304 = vpop.permute.xlu0 %4303
  %4305 = vrot.lane.b32.xlu0 %v4259, 64
  %v4306 = vpop.permute.xlu0 %4305
  %4307 = vrot.lane.b32.xlu0 %v4264, 64
  %v4308 = vpop.permute.xlu0 %4307
  %4309 = vrot.lane.b32.xlu0 %v4269, 64
  %v4310 = vpop.permute.xlu0 %4309
  %4311 = vrot.lane.b32.xlu0 %v4274, 64
  %v4312 = vpop.permute.xlu0 %4311
  %4313 = vrot.lane.b32.xlu0 %v4279, 64
  %v4314 = vpop.permute.xlu0 %4313
  %4315 = vrot.lane.b32.xlu0 %v4284, 64
  %v4316 = vpop.permute.xlu0 %4315
  %4317 = vrot.lane.b32.xlu0 %v4289, 64
  %v4318 = vpop.permute.xlu0 %4317
  %4319 = vrot.lane.b32.xlu0 %v4290, 64
  %v4320 = vpop.permute.xlu0 %4319
  %v4336 = vld [vmem:[#allocation2 + $0xc] sm:$0xc]
  %v4337 = vsel %vm1090, %v4292, %v4336
  %4338 = vst [vmem:[#allocation2 + $0xc] sm:$0xc] %v4337
  %4339 = vst.msk [vmem:[#allocation2 + $0x14] sm:$0xf] %vm678, %v4294
  %4340 = vst.msk [vmem:[#allocation2 + $0x1c] sm:$0xf] %vm678, %v4296
  %4341 = vst.msk [vmem:[#allocation2 + $0x24] sm:$0xf] %vm678, %v4298
  %4342 = vst.msk [vmem:[#allocation2 + $0x2c] sm:$0xf] %vm678, %v4300
  %4343 = vst.msk [vmem:[#allocation2 + $0x34] sm:$0xf] %vm678, %v4302
  %4344 = vst.msk [vmem:[#allocation2 + $0x3c] sm:$0xf] %vm678, %v4304
  %4345 = vst.msk [vmem:[#allocation2 + $0x44] sm:$0xf] %vm678, %v4306
  %4346 = vst.msk [vmem:[#allocation2 + $0x4c] sm:$0xf] %vm678, %v4308
  %4347 = vst.msk [vmem:[#allocation2 + $0x54] sm:$0xf] %vm678, %v4310
  %4348 = vst.msk [vmem:[#allocation2 + $0x5c] sm:$0xf] %vm678, %v4312
  %4349 = vst.msk [vmem:[#allocation2 + $0x64] sm:$0xf] %vm678, %v4314
  %4350 = vst.msk [vmem:[#allocation2 + $0x6c] sm:$0xf] %vm678, %v4316
  %4351 = vst.msk [vmem:[#allocation2 + $0x74] sm:$0xf] %vm678, %v4318
  %v4352 = vld [vmem:[#allocation2 + $0x7c] sm:$0x7]
  %v4353 = vsel %vm1108, %v4320, %v4352
  %4354 = vst [vmem:[#allocation2 + $0x7c] sm:$0x7] %v4353
  %v4355 = vrot.slane %v3555, 6
  %v4356 = vrot.slane %v4355, 4
  %v4357 = vrot.slane %v3556, 6
  %v4358 = vsel %vm1114, %v4356, %v4357
  %v4359 = vrot.slane %v4357, 4
  %v4360 = vrot.slane %v3557, 6
  %v4361 = vsel %vm1114, %v4359, %v4360
  %v4362 = vrot.slane %v4360, 4
  %v4363 = vrot.slane %v3558, 6
  %v4364 = vsel %vm1114, %v4362, %v4363
  %v4365 = vrot.slane %v4363, 4
  %v4366 = vrot.slane %v3559, 6
  %v4367 = vsel %vm1114, %v4365, %v4366
  %v4368 = vrot.slane %v4366, 4
  %v4369 = vrot.slane %v3560, 6
  %v4370 = vsel %vm1114, %v4368, %v4369
  %v4371 = vrot.slane %v4369, 4
  %v4372 = vrot.slane %v3561, 6
  %v4373 = vsel %vm1114, %v4371, %v4372
  %v4374 = vrot.slane %v4372, 4
  %v4375 = vrot.slane %v3562, 6
  %v4376 = vsel %vm1114, %v4374, %v4375
  %v4377 = vrot.slane %v4375, 4
  %v4378 = vrot.slane %v3563, 6
  %v4379 = vsel %vm1114, %v4377, %v4378
  %v4380 = vrot.slane %v4378, 4
  %v4381 = vrot.slane %v3564, 6
  %v4382 = vsel %vm1114, %v4380, %v4381
  %v4383 = vrot.slane %v4381, 4
  %v4384 = vrot.slane %v3565, 6
  %v4385 = vsel %vm1114, %v4383, %v4384
  %v4386 = vrot.slane %v4384, 4
  %v4387 = vrot.slane %v3566, 6
  %v4388 = vsel %vm1114, %v4386, %v4387
  %v4389 = vrot.slane %v4387, 4
  %v4390 = vrot.slane %v3567, 6
  %v4391 = vsel %vm1114, %v4389, %v4390
  %v4392 = vrot.slane %v4390, 4
  %v4393 = vrot.slane %v3568, 6
  %v4394 = vsel %vm1114, %v4392, %v4393
  %v4395 = vrot.slane %v4393, 4
  %4396 = vrot.lane.b32.xlu0 %v4355, 96
  %v4397 = vpop.permute.xlu0 %4396
  %4398 = vrot.lane.b32.xlu0 %v4358, 96
  %v4399 = vpop.permute.xlu0 %4398
  %4400 = vrot.lane.b32.xlu0 %v4361, 96
  %v4401 = vpop.permute.xlu0 %4400
  %4402 = vrot.lane.b32.xlu0 %v4364, 96
  %v4403 = vpop.permute.xlu0 %4402
  %4404 = vrot.lane.b32.xlu0 %v4367, 96
  %v4405 = vpop.permute.xlu0 %4404
  %4406 = vrot.lane.b32.xlu0 %v4370, 96
  %v4407 = vpop.permute.xlu0 %4406
  %4408 = vrot.lane.b32.xlu0 %v4373, 96
  %v4409 = vpop.permute.xlu0 %4408
  %4410 = vrot.lane.b32.xlu0 %v4376, 96
  %v4411 = vpop.permute.xlu0 %4410
  %4412 = vrot.lane.b32.xlu0 %v4379, 96
  %v4413 = vpop.permute.xlu0 %4412
  %4414 = vrot.lane.b32.xlu0 %v4382, 96
  %v4415 = vpop.permute.xlu0 %4414
  %4416 = vrot.lane.b32.xlu0 %v4385, 96
  %v4417 = vpop.permute.xlu0 %4416
  %4418 = vrot.lane.b32.xlu0 %v4388, 96
  %v4419 = vpop.permute.xlu0 %4418
  %4420 = vrot.lane.b32.xlu0 %v4391, 96
  %v4421 = vpop.permute.xlu0 %4420
  %4422 = vrot.lane.b32.xlu0 %v4394, 96
  %v4423 = vpop.permute.xlu0 %4422
  %4424 = vrot.lane.b32.xlu0 %v4395, 96
  %v4425 = vpop.permute.xlu0 %4424
  %4441 = vst.msk [vmem:[#allocation2 + $0xc] sm:$0xc] %vm1201, %v4397
  %4442 = vst.msk [vmem:[#allocation2 + $0x14] sm:$0xf] %vm739, %v4399
  %4443 = vst.msk [vmem:[#allocation2 + $0x1c] sm:$0xf] %vm739, %v4401
  %4444 = vst.msk [vmem:[#allocation2 + $0x24] sm:$0xf] %vm739, %v4403
  %4445 = vst.msk [vmem:[#allocation2 + $0x2c] sm:$0xf] %vm739, %v4405
  %4446 = vst.msk [vmem:[#allocation2 + $0x34] sm:$0xf] %vm739, %v4407
  %4447 = vst.msk [vmem:[#allocation2 + $0x3c] sm:$0xf] %vm739, %v4409
  %4448 = vst.msk [vmem:[#allocation2 + $0x44] sm:$0xf] %vm739, %v4411
  %4449 = vst.msk [vmem:[#allocation2 + $0x4c] sm:$0xf] %vm739, %v4413
  %4450 = vst.msk [vmem:[#allocation2 + $0x54] sm:$0xf] %vm739, %v4415
  %4451 = vst.msk [vmem:[#allocation2 + $0x5c] sm:$0xf] %vm739, %v4417
  %4452 = vst.msk [vmem:[#allocation2 + $0x64] sm:$0xf] %vm739, %v4419
  %4453 = vst.msk [vmem:[#allocation2 + $0x6c] sm:$0xf] %vm739, %v4421
  %4454 = vst.msk [vmem:[#allocation2 + $0x74] sm:$0xf] %vm739, %v4423
  %4455 = vst.msk [vmem:[#allocation2 + $0x7c] sm:$0x3] %vm1216, %v4425
  %v4470 = vrot.slane %v3353, 7
  %v4471 = vrot.slane %v3354, 7
  %v4472 = vsel %vm1330, %v4470, %v4471
  %v4473 = vrot.slane %v3355, 7
  %v4474 = vsel %vm1330, %v4471, %v4473
  %v4475 = vrot.slane %v3356, 7
  %v4476 = vsel %vm1330, %v4473, %v4475
  %v4477 = vrot.slane %v3357, 7
  %v4478 = vsel %vm1330, %v4475, %v4477
  %v4479 = vrot.slane %v3358, 7
  %v4480 = vsel %vm1330, %v4477, %v4479
  %v4481 = vrot.slane %v3359, 7
  %v4482 = vsel %vm1330, %v4479, %v4481
  %v4483 = vrot.slane %v3360, 7
  %v4484 = vsel %vm1330, %v4481, %v4483
  %v4485 = vrot.slane %v3361, 7
  %v4486 = vsel %vm1330, %v4483, %v4485
  %v4487 = vrot.slane %v3362, 7
  %v4488 = vsel %vm1330, %v4485, %v4487
  %v4489 = vrot.slane %v3363, 7
  %v4490 = vsel %vm1330, %v4487, %v4489
  %v4491 = vrot.slane %v3364, 7
  %v4492 = vsel %vm1330, %v4489, %v4491
  %v4493 = vrot.slane %v3365, 7
  %v4494 = vsel %vm1330, %v4491, %v4493
  %v4495 = vrot.slane %v3366, 7
  %v4496 = vsel %vm1330, %v4493, %v4495
  %v4511 = vsel %vm1330, 0.0, %v4470
  %v4512 = vrot.slane %v3353, 1
  %v4513 = vrot.slane %v3354, 1
  %v4514 = vsel %vm1373, %v4512, %v4513
  %v4515 = vrot.slane %v3355, 1
  %v4516 = vsel %vm1373, %v4513, %v4515
  %v4517 = vrot.slane %v3356, 1
  %v4518 = vsel %vm1373, %v4515, %v4517
  %v4519 = vrot.slane %v3357, 1
  %v4520 = vsel %vm1373, %v4517, %v4519
  %v4521 = vrot.slane %v3358, 1
  %v4522 = vsel %vm1373, %v4519, %v4521
  %v4523 = vrot.slane %v3359, 1
  %v4524 = vsel %vm1373, %v4521, %v4523
  %v4525 = vrot.slane %v3360, 1
  %v4526 = vsel %vm1373, %v4523, %v4525
  %v4527 = vrot.slane %v3361, 1
  %v4528 = vsel %vm1373, %v4525, %v4527
  %v4529 = vrot.slane %v3362, 1
  %v4530 = vsel %vm1373, %v4527, %v4529
  %v4531 = vrot.slane %v3363, 1
  %v4532 = vsel %vm1373, %v4529, %v4531
  %v4533 = vrot.slane %v3364, 1
  %v4534 = vsel %vm1373, %v4531, %v4533
  %v4535 = vrot.slane %v3365, 1
  %v4536 = vsel %vm1373, %v4533, %v4535
  %v4537 = vrot.slane %v3366, 1
  %v4538 = vsel %vm1373, %v4535, %v4537
  %v4553 = vsel %vm1373, %v4537, 0.0
  %v4554 = vmax.f32 %v4511, %v3353
  %v4555 = vmax.f32 %v4472, %v3354
  %v4556 = vmax.f32 %v4474, %v3355
  %v4557 = vmax.f32 %v4476, %v3356
  %v4558 = vmax.f32 %v4478, %v3357
  %v4559 = vmax.f32 %v4480, %v3358
  %v4560 = vmax.f32 %v4482, %v3359
  %v4561 = vmax.f32 %v4484, %v3360
  %v4562 = vmax.f32 %v4486, %v3361
  %v4563 = vmax.f32 %v4488, %v3362
  %v4564 = vmax.f32 %v4490, %v3363
  %v4565 = vmax.f32 %v4492, %v3364
  %v4566 = vmax.f32 %v4494, %v3365
  %v4567 = vmax.f32 %v4496, %v3366
  %v4568 = vmax.f32 %v4554, %v4514
  %v4569 = vmax.f32 %v4555, %v4516
  %v4570 = vmax.f32 %v4556, %v4518
  %v4571 = vmax.f32 %v4557, %v4520
  %v4572 = vmax.f32 %v4558, %v4522
  %v4573 = vmax.f32 %v4559, %v4524
  %v4574 = vmax.f32 %v4560, %v4526
  %v4575 = vmax.f32 %v4561, %v4528
  %v4576 = vmax.f32 %v4562, %v4530
  %v4577 = vmax.f32 %v4563, %v4532
  %v4578 = vmax.f32 %v4564, %v4534
  %v4579 = vmax.f32 %v4565, %v4536
  %v4580 = vmax.f32 %v4566, %v4538
  %v4581 = vmax.f32 %v4567, %v4553
  %v4582 = vpack.c.bf16 %v4569, %v4568
  %v4583 = vpack.c.bf16 %v4571, %v4570
  %v4584 = vpack.c.bf16 %v4573, %v4572
  %v4585 = vpack.c.bf16 %v4575, %v4574
  %v4586 = vpack.c.bf16 %v4577, %v4576
  %v4587 = vpack.c.bf16 %v4579, %v4578
  %v4588 = vpack.c.bf16 %v4581, %v4580
  %v4589 = vld [vmem:[%s9] sm:$0xf]
  %v4590 = vld [vmem:[%s9 + $0x4] sm:$0xf]
  %v4591 = vld [vmem:[%s9 + $0x8] sm:$0xf]
  %v4592 = vld [vmem:[%s9 + $0xc] sm:$0xf]
  %v4593 = vld [vmem:[%s9 + $0x10] sm:$0xf]
  %v4594 = vld [vmem:[%s9 + $0x14] sm:$0xf]
  %v4595 = vld [vmem:[%s9 + $0x18] sm:$0xf]
  %v4596 = vld [vmem:[%s9 + $0x1c] sm:$0xf]
  %v4597 = vld [vmem:[%s9 + $0x20] sm:$0xf]
  %v4598 = vld [vmem:[%s9 + $0x24] sm:$0xf]
  %v4599 = vld [vmem:[%s9 + $0x28] sm:$0xf]
  %v4600 = vld [vmem:[%s9 + $0x2c] sm:$0xf]
  %v4601 = vld [vmem:[%s9 + $0x30] sm:$0xf]
  %v4602 = vld [vmem:[%s9 + $0x34] sm:$0xf]
  %v4603 = vld [vmem:[%s9 + $0x38] sm:$0xf]
  %v4604 = vld [vmem:[%s9 + $0x3c] sm:$0xf]
  %v4605 = vld [vmem:[#allocation2] sm:$0xff]
  %v4606 = vld [vmem:[#allocation2 + $0x8] sm:$0xff]
  %v4607 = vld [vmem:[#allocation2 + $0x10] sm:$0xff]
  %v4608 = vld [vmem:[#allocation2 + $0x18] sm:$0xff]
  %v4609 = vld [vmem:[#allocation2 + $0x20] sm:$0xff]
  %v4610 = vld [vmem:[#allocation2 + $0x28] sm:$0xff]
  %v4611 = vld [vmem:[#allocation2 + $0x30] sm:$0xff]
  %v4612 = vld [vmem:[#allocation2 + $0x38] sm:$0xff]
  %v4613 = vld [vmem:[#allocation2 + $0x40] sm:$0xff]
  %v4614 = vld [vmem:[#allocation2 + $0x48] sm:$0xff]
  %v4615 = vld [vmem:[#allocation2 + $0x50] sm:$0xff]
  %v4616 = vld [vmem:[#allocation2 + $0x58] sm:$0xff]
  %v4617 = vld [vmem:[#allocation2 + $0x60] sm:$0xff]
  %v4618 = vld [vmem:[#allocation2 + $0x68] sm:$0xff]
  %v4619 = vld [vmem:[%s8] sm:$0xf]
  %v4620 = vld [vmem:[%s8 + $0x4] sm:$0xf]
  %v4621 = vld [vmem:[%s8 + $0x8] sm:$0xf]
  %v4622 = vld [vmem:[%s8 + $0xc] sm:$0xf]
  %v4623 = vld [vmem:[%s8 + $0x10] sm:$0xf]
  %v4624 = vld [vmem:[%s8 + $0x14] sm:$0xf]
  %v4625 = vld [vmem:[%s8 + $0x18] sm:$0xf]
  %v4626 = vld [vmem:[%s8 + $0x1c] sm:$0xf]
  %v4627 = vld [vmem:[%s8 + $0x20] sm:$0xf]
  %v4628 = vld [vmem:[%s8 + $0x24] sm:$0xf]
  %v4629 = vld [vmem:[%s8 + $0x28] sm:$0xf]
  %v4630 = vld [vmem:[%s8 + $0x2c] sm:$0xf]
  %v4631 = vld [vmem:[%s8 + $0x30] sm:$0xf]
  %v4632 = vld [vmem:[%s8 + $0x34] sm:$0xf]
  %v4633 = vld [vmem:[%s8 + $0x38] sm:$0xf]
  %v4634 = vld [vmem:[%s8 + $0x3c] sm:$0xf]
  %v4635 = vld [vmem:[%s8 + $0x40] sm:$0xf]
  %v4636 = vld [vmem:[%s8 + $0x44] sm:$0xf]
  %v4637 = vld [vmem:[%s8 + $0x48] sm:$0xf]
  %v4638 = vld [vmem:[%s8 + $0x4c] sm:$0xf]
  %v4639 = vld [vmem:[%s8 + $0x50] sm:$0xf]
  %v4640 = vld [vmem:[%s8 + $0x54] sm:$0xf]
  %v4641 = vld [vmem:[%s8 + $0x58] sm:$0xf]
  %v4642 = vld [vmem:[%s8 + $0x5c] sm:$0xf]
  %v4643 = vld [vmem:[%s8 + $0x60] sm:$0xf]
  %v4644 = vld [vmem:[%s8 + $0x64] sm:$0xf]
  %v4645 = vld [vmem:[%s8 + $0x68] sm:$0xf]
  %v4646 = vld [vmem:[%s8 + $0x6c] sm:$0xf]
  %v4647 = vld [vmem:[%s8 + $0x70] sm:$0xf]
  %v4648 = vld [vmem:[%s8 + $0x74] sm:$0xf]
  %v4649 = vld [vmem:[%s8 + $0x78] sm:$0xf]
  %v4650 = vld [vmem:[%s8 + $0x7c] sm:$0xf]
  %v4665 = vunpack.c.l.b16 %v4605
  %v4666 = vunpack.c.h.b16 %v4605
  %v4667 = vunpack.c.l.b16 %v4606
  %v4668 = vunpack.c.h.b16 %v4606
  %v4669 = vunpack.c.l.b16 %v4607
  %v4670 = vunpack.c.h.b16 %v4607
  %v4671 = vunpack.c.l.b16 %v4608
  %v4672 = vunpack.c.h.b16 %v4608
  %v4673 = vunpack.c.l.b16 %v4609
  %v4674 = vunpack.c.h.b16 %v4609
  %v4675 = vunpack.c.l.b16 %v4610
  %v4676 = vunpack.c.h.b16 %v4610
  %v4677 = vunpack.c.l.b16 %v4611
  %v4678 = vunpack.c.h.b16 %v4611
  %v4679 = vunpack.c.l.b16 %v4612
  %v4680 = vunpack.c.h.b16 %v4612
  %v4681 = vunpack.c.l.b16 %v4613
  %v4682 = vunpack.c.h.b16 %v4613
  %v4683 = vunpack.c.l.b16 %v4614
  %v4684 = vunpack.c.h.b16 %v4614
  %v4685 = vunpack.c.l.b16 %v4615
  %v4686 = vunpack.c.h.b16 %v4615
  %v4687 = vunpack.c.l.b16 %v4616
  %v4688 = vunpack.c.h.b16 %v4616
  %v4689 = vunpack.c.l.b16 %v4617
  %v4690 = vunpack.c.h.b16 %v4617
  %v4691 = vunpack.c.l.b16 %v4618
  %v4692 = vunpack.c.h.b16 %v4618
  %v4693 = vpack.c.b16 %v4667, %v4665
  %v4694 = vpack.c.b16 %v4668, %v4666
  %v4695 = vpack.c.b16 %v4671, %v4669
  %v4696 = vpack.c.b16 %v4672, %v4670
  %v4697 = vpack.c.b16 %v4675, %v4673
  %v4698 = vpack.c.b16 %v4676, %v4674
  %v4699 = vpack.c.b16 %v4679, %v4677
  %v4700 = vpack.c.b16 %v4680, %v4678
  %v4701 = vpack.c.b16 %v4683, %v4681
  %v4702 = vpack.c.b16 %v4684, %v4682
  %v4703 = vpack.c.b16 %v4687, %v4685
  %v4704 = vpack.c.b16 %v4688, %v4686
  %v4705 = vpack.c.b16 %v4691, %v4689
  %v4706 = vpack.c.b16 %v4692, %v4690
  %v4753 = vunpack.c.l.b16 %v4619
  %v4754 = vunpack.c.l.b16 %v4620
  %v4755 = vunpack.c.l.b16 %v4621
  %v4756 = vunpack.c.l.b16 %v4622
  %v4757 = vunpack.c.l.b16 %v4623
  %v4758 = vunpack.c.l.b16 %v4624
  %v4759 = vunpack.c.l.b16 %v4625
  %v4760 = vunpack.c.l.b16 %v4626
  %v4761 = vunpack.c.l.b16 %v4627
  %v4762 = vunpack.c.l.b16 %v4628
  %v4763 = vunpack.c.l.b16 %v4629
  %v4764 = vunpack.c.l.b16 %v4630
  %v4765 = vunpack.c.l.b16 %v4631
  %v4766 = vunpack.c.l.b16 %v4632
  %v4767 = vunpack.c.l.b16 %v4633
  %v4768 = vunpack.c.l.b16 %v4634
  %v4769 = vunpack.c.l.b16 %v4635
  %v4770 = vunpack.c.l.b16 %v4636
  %v4771 = vunpack.c.l.b16 %v4637
  %v4772 = vunpack.c.l.b16 %v4638
  %v4773 = vunpack.c.l.b16 %v4639
  %v4774 = vunpack.c.l.b16 %v4640
  %v4775 = vunpack.c.l.b16 %v4641
  %v4776 = vunpack.c.l.b16 %v4642
  %v4777 = vunpack.c.l.b16 %v4643
  %v4778 = vunpack.c.l.b16 %v4644
  %v4779 = vunpack.c.l.b16 %v4645
  %v4780 = vunpack.c.l.b16 %v4646
  %v4781 = vunpack.c.l.b16 %v4647
  %v4782 = vunpack.c.l.b16 %v4648
  %v4783 = vunpack.c.l.b16 %v4649
  %v4784 = vunpack.c.l.b16 %v4650
  %v4785 = vpack.c.b16 %v4754, %v4753
  %v4786 = vpack.c.b16 %v4756, %v4755
  %v4787 = vpack.c.b16 %v4758, %v4757
  %v4788 = vpack.c.b16 %v4760, %v4759
  %v4789 = vpack.c.b16 %v4762, %v4761
  %v4790 = vpack.c.b16 %v4764, %v4763
  %v4791 = vpack.c.b16 %v4766, %v4765
  %v4792 = vpack.c.b16 %v4768, %v4767
  %v4793 = vpack.c.b16 %v4770, %v4769
  %v4794 = vpack.c.b16 %v4772, %v4771
  %v4795 = vpack.c.b16 %v4774, %v4773
  %v4796 = vpack.c.b16 %v4776, %v4775
  %v4797 = vpack.c.b16 %v4778, %v4777
  %v4798 = vpack.c.b16 %v4780, %v4779
  %v4799 = vpack.c.b16 %v4782, %v4781
  %v4800 = vpack.c.b16 %v4784, %v4783
  %4817 = vmatprep.subr.bf16.mxu0 0
  %4818 = vmatpush1.bf16.msra.mxu0 %v4792
  %4819 = vmatprep.subr.bf16.mxu0 0
  %4820 = vmatpush1.bf16.msra.mxu0 %v4791
  %4821 = vmatprep.subr.bf16.mxu0 0
  %4822 = vmatpush1.bf16.msra.mxu0 %v4790
  %4823 = vmatprep.subr.bf16.mxu0 0
  %4824 = vmatpush1.bf16.msra.mxu0 %v4789
  %4825 = vmatprep.subr.bf16.mxu0 0
  %4826 = vmatpush1.bf16.msra.mxu0 %v4788
  %4827 = vmatprep.subr.bf16.mxu0 0
  %4828 = vmatpush1.bf16.msra.mxu0 %v4787
  %4829 = vmatprep.subr.bf16.mxu0 0
  %4830 = vmatpush1.bf16.msra.mxu0 %v4786
  %4831 = vmatprep.subr.bf16.mxu0 0
  %4832 = vmatpush1.bf16.msra.mxu0 %v4785
  %4833 = vmatprep.subr.bf16.mxu0 0
  %4834 = vmatpush2.bf16.msra.mxu0 %v4800
  %4835 = vmatprep.subr.bf16.mxu0 0
  %4836 = vmatpush2.bf16.msra.mxu0 %v4799
  %4837 = vmatprep.subr.bf16.mxu0 0
  %4838 = vmatpush2.bf16.msra.mxu0 %v4798
  %4839 = vmatprep.subr.bf16.mxu0 0
  %4840 = vmatpush2.bf16.msra.mxu0 %v4797
  %4841 = vmatprep.subr.bf16.mxu0 0
  %4842 = vmatpush2.bf16.msra.mxu0 %v4796
  %4843 = vmatprep.subr.bf16.mxu0 0
  %4844 = vmatpush2.bf16.msra.mxu0 %v4795
  %4845 = vmatprep.subr.bf16.mxu0 0
  %4846 = vmatpush2.bf16.msra.mxu0 %v4794
  %4847 = vmatprep.subr.bf16.mxu0 0
  %4848 = vmatpush2.bf16.msra.mxu0 %v4793
  %4849 = vmatprep.mubr.bf16.mxu0 %v4694
  %4850 = vmatmul.mubr.bf16.gmra.mxu0 %v4693
  %v4851 = vpop.f32.mrf.mxu0
  %v4852 = vadd.f32 0.0, %v4851
  %v4853 = vpop.f32.mrf.mxu0
  %v4854 = vpop.f32.mrf.mxu0
  %v4855 = vadd.f32 0.0, %v4854
  %v4856 = vpop.f32.mrf.mxu0
  %4857 = vmatprep.mubr.bf16.mxu0 %v4696
  %4858 = vmatmul.mubr.bf16.gmra.mxu0 %v4695
  %v4859 = vpop.f32.mrf.mxu0
  %v4860 = vadd.f32 0.0, %v4859
  %v4861 = vpop.f32.mrf.mxu0
  %v4862 = vpop.f32.mrf.mxu0
  %v4863 = vadd.f32 0.0, %v4862
  %v4864 = vpop.f32.mrf.mxu0
  %4865 = vmatprep.mubr.bf16.mxu0 %v4698
  %4866 = vmatmul.mubr.bf16.gmra.mxu0 %v4697
  %v4867 = vpop.f32.mrf.mxu0
  %v4868 = vadd.f32 0.0, %v4867
  %v4869 = vpop.f32.mrf.mxu0
  %v4870 = vpop.f32.mrf.mxu0
  %v4871 = vadd.f32 0.0, %v4870
  %v4872 = vpop.f32.mrf.mxu0
  %4873 = vmatprep.mubr.bf16.mxu0 %v4700
  %4874 = vmatmul.mubr.bf16.gmra.mxu0 %v4699
  %v4875 = vpop.f32.mrf.mxu0
  %v4876 = vadd.f32 0.0, %v4875
  %v4877 = vpop.f32.mrf.mxu0
  %v4878 = vpop.f32.mrf.mxu0
  %v4879 = vadd.f32 0.0, %v4878
  %v4880 = vpop.f32.mrf.mxu0
  %4881 = vmatprep.mubr.bf16.mxu0 %v4702
  %4882 = vmatmul.mubr.bf16.gmra.mxu0 %v4701
  %v4883 = vpop.f32.mrf.mxu0
  %v4884 = vadd.f32 0.0, %v4883
  %v4885 = vpop.f32.mrf.mxu0
  %v4886 = vpop.f32.mrf.mxu0
  %v4887 = vadd.f32 0.0, %v4886
  %v4888 = vpop.f32.mrf.mxu0
  %4889 = vmatprep.mubr.bf16.mxu0 %v4704
  %4890 = vmatmul.mubr.bf16.gmra.mxu0 %v4703
  %v4891 = vpop.f32.mrf.mxu0
  %v4892 = vadd.f32 0.0, %v4891
  %v4893 = vpop.f32.mrf.mxu0
  %v4894 = vpop.f32.mrf.mxu0
  %v4895 = vadd.f32 0.0, %v4894
  %v4896 = vpop.f32.mrf.mxu0
  %4897 = vmatprep.mubr.bf16.mxu0 %v4706
  %4898 = vmatmul.mubr.bf16.gmra.mxu0 %v4705
  %v4899 = vpop.f32.mrf.mxu0
  %v4900 = vadd.f32 0.0, %v4899
  %v4901 = vpop.f32.mrf.mxu0
  %v4902 = vpop.f32.mrf.mxu0
  %v4903 = vadd.f32 0.0, %v4902
  %v4904 = vpop.f32.mrf.mxu0
  %4905 = vdwg.mxu0
  %v4922 = vunpack.c.l.b16 %v4589
  %v4923 = vunpack.c.l.b16 %v4590
  %v4924 = vunpack.c.l.b16 %v4591
  %v4925 = vunpack.c.l.b16 %v4592
  %v4926 = vunpack.c.l.b16 %v4593
  %v4927 = vunpack.c.l.b16 %v4594
  %v4928 = vunpack.c.l.b16 %v4595
  %v4929 = vunpack.c.l.b16 %v4596
  %v4930 = vunpack.c.l.b16 %v4597
  %v4931 = vunpack.c.l.b16 %v4598
  %v4932 = vunpack.c.l.b16 %v4599
  %v4933 = vunpack.c.l.b16 %v4600
  %v4934 = vunpack.c.l.b16 %v4601
  %v4935 = vunpack.c.l.b16 %v4602
  %v4936 = vunpack.c.l.b16 %v4603
  %v4937 = vunpack.c.l.b16 %v4604
  %v4938 = vpack.c.b16 %v4923, %v4922
  %v4939 = vpack.c.b16 %v4925, %v4924
  %v4940 = vpack.c.b16 %v4927, %v4926
  %v4941 = vpack.c.b16 %v4929, %v4928
  %v4942 = vpack.c.b16 %v4931, %v4930
  %v4943 = vpack.c.b16 %v4933, %v4932
  %v4944 = vpack.c.b16 %v4935, %v4934
  %v4945 = vpack.c.b16 %v4937, %v4936
  %4954 = vmatprep.subr.bf16.mxu0 0
  %4955 = vmatpush1.bf16.msra.mxu0 %v4945
  %4956 = vmatprep.subr.bf16.mxu0 0
  %4957 = vmatpush1.bf16.msra.mxu0 %v4944
  %4958 = vmatprep.subr.bf16.mxu0 0
  %4959 = vmatpush1.bf16.msra.mxu0 %v4943
  %4960 = vmatprep.subr.bf16.mxu0 0
  %4961 = vmatpush1.bf16.msra.mxu0 %v4942
  %4962 = vmatprep.subr.bf16.mxu0 0
  %4963 = vmatpush1.bf16.msra.mxu0 %v4941
  %4964 = vmatprep.subr.bf16.mxu0 0
  %4965 = vmatpush1.bf16.msra.mxu0 %v4940
  %4966 = vmatprep.subr.bf16.mxu0 0
  %4967 = vmatpush1.bf16.msra.mxu0 %v4939
  %4968 = vmatprep.subr.bf16.mxu0 0
  %4969 = vmatpush1.bf16.msra.mxu0 %v4938
  %4970 = vmatprep.subr.bf16.mxu0 0
  %4971 = vmatpush2.bf16.msra.mxu0 0
  %4972 = vmatprep.subr.bf16.mxu0 0
  %4973 = vmatpush2.bf16.msra.mxu0 0
  %4974 = vmatprep.subr.bf16.mxu0 0
  %4975 = vmatpush2.bf16.msra.mxu0 0
  %4976 = vmatprep.subr.bf16.mxu0 0
  %4977 = vmatpush2.bf16.msra.mxu0 0
  %4978 = vmatprep.subr.bf16.mxu0 0
  %4979 = vmatpush2.bf16.msra.mxu0 0
  %4980 = vmatprep.subr.bf16.mxu0 0
  %4981 = vmatpush2.bf16.msra.mxu0 0
  %4982 = vmatprep.subr.bf16.mxu0 0
  %4983 = vmatpush2.bf16.msra.mxu0 0
  %4984 = vmatprep.subr.bf16.mxu0 0
  %4985 = vmatpush2.bf16.msra.mxu0 0
  %4986 = vmatprep.mubr.bf16.mxu0 0
  %4987 = vmatmul.mubr.bf16.gmra.mxu0 %v4582
  %v4988 = vpop.f32.mrf.mxu0
  %v4989 = vadd.f32 %v4852, %v4988
  %v4990 = vpop.f32.mrf.mxu0
  %v4991 = vpop.f32.mrf.mxu0
  %v4992 = vadd.f32 %v4855, %v4991
  %v4993 = vpop.f32.mrf.mxu0
  %4994 = vmatprep.mubr.bf16.mxu0 0
  %4995 = vmatmul.mubr.bf16.gmra.mxu0 %v4583
  %v4996 = vpop.f32.mrf.mxu0
  %v4997 = vadd.f32 %v4860, %v4996
  %v4998 = vpop.f32.mrf.mxu0
  %v4999 = vpop.f32.mrf.mxu0
  %v5000 = vadd.f32 %v4863, %v4999
  %v5001 = vpop.f32.mrf.mxu0
  %5002 = vmatprep.mubr.bf16.mxu0 0
  %5003 = vmatmul.mubr.bf16.gmra.mxu0 %v4584
  %v5004 = vpop.f32.mrf.mxu0
  %v5005 = vadd.f32 %v4868, %v5004
  %v5006 = vpop.f32.mrf.mxu0
  %v5007 = vpop.f32.mrf.mxu0
  %v5008 = vadd.f32 %v4871, %v5007
  %v5009 = vpop.f32.mrf.mxu0
  %5010 = vmatprep.mubr.bf16.mxu0 0
  %5011 = vmatmul.mubr.bf16.gmra.mxu0 %v4585
  %v5012 = vpop.f32.mrf.mxu0
  %v5013 = vadd.f32 %v4876, %v5012
  %v5014 = vpop.f32.mrf.mxu0
  %v5015 = vpop.f32.mrf.mxu0
  %v5016 = vadd.f32 %v4879, %v5015
  %v5017 = vpop.f32.mrf.mxu0
  %5018 = vmatprep.mubr.bf16.mxu0 0
  %5019 = vmatmul.mubr.bf16.gmra.mxu0 %v4586
  %v5020 = vpop.f32.mrf.mxu0
  %v5021 = vadd.f32 %v4884, %v5020
  %v5022 = vpop.f32.mrf.mxu0
  %v5023 = vpop.f32.mrf.mxu0
  %v5024 = vadd.f32 %v4887, %v5023
  %v5025 = vpop.f32.mrf.mxu0
  %5026 = vmatprep.mubr.bf16.mxu0 0
  %5027 = vmatmul.mubr.bf16.gmra.mxu0 %v4587
  %v5028 = vpop.f32.mrf.mxu0
  %v5029 = vadd.f32 %v4892, %v5028
  %v5030 = vpop.f32.mrf.mxu0
  %v5031 = vpop.f32.mrf.mxu0
  %v5032 = vadd.f32 %v4895, %v5031
  %v5033 = vpop.f32.mrf.mxu0
  %5034 = vmatprep.mubr.bf16.mxu0 0
  %5035 = vmatmul.mubr.bf16.gmra.mxu0 %v4588
  %v5036 = vpop.f32.mrf.mxu0
  %v5037 = vadd.f32 %v4900, %v5036
  %v5038 = vpop.f32.mrf.mxu0
  %v5039 = vpop.f32.mrf.mxu0
  %v5040 = vadd.f32 %v4903, %v5039
  %v5041 = vpop.f32.mrf.mxu0
  %5042 = vdwg.mxu0
  %v5043 = vld [vmem:[#allocation2 + $0x8] sm:$0xff]
  %v5044 = vld [vmem:[#allocation2 + $0x10] sm:$0xff]
  %v5045 = vld [vmem:[#allocation2 + $0x18] sm:$0xff]
  %v5046 = vld [vmem:[#allocation2 + $0x20] sm:$0xff]
  %v5047 = vld [vmem:[#allocation2 + $0x28] sm:$0xff]
  %v5048 = vld [vmem:[#allocation2 + $0x30] sm:$0xff]
  %v5049 = vld [vmem:[#allocation2 + $0x38] sm:$0xff]
  %v5050 = vld [vmem:[#allocation2 + $0x40] sm:$0xff]
  %v5051 = vld [vmem:[#allocation2 + $0x48] sm:$0xff]
  %v5052 = vld [vmem:[#allocation2 + $0x50] sm:$0xff]
  %v5053 = vld [vmem:[#allocation2 + $0x58] sm:$0xff]
  %v5054 = vld [vmem:[#allocation2 + $0x60] sm:$0xff]
  %v5055 = vld [vmem:[#allocation2 + $0x68] sm:$0xff]
  %v5056 = vld [vmem:[#allocation2 + $0x70] sm:$0xff]
  %s5057 = scalar_lea.vmem %s8, 128
  %v5058 = vld [vmem:[%s5057] sm:$0xf]
  %v5059 = vld [vmem:[%s5057 + $0x4] sm:$0xf]
  %v5060 = vld [vmem:[%s5057 + $0x8] sm:$0xf]
  %v5061 = vld [vmem:[%s5057 + $0xc] sm:$0xf]
  %v5062 = vld [vmem:[%s5057 + $0x10] sm:$0xf]
  %v5063 = vld [vmem:[%s5057 + $0x14] sm:$0xf]
  %v5064 = vld [vmem:[%s5057 + $0x18] sm:$0xf]
  %v5065 = vld [vmem:[%s5057 + $0x1c] sm:$0xf]
  %v5066 = vld [vmem:[%s5057 + $0x20] sm:$0xf]
  %v5067 = vld [vmem:[%s5057 + $0x24] sm:$0xf]
  %v5068 = vld [vmem:[%s5057 + $0x28] sm:$0xf]
  %v5069 = vld [vmem:[%s5057 + $0x2c] sm:$0xf]
  %v5070 = vld [vmem:[%s5057 + $0x30] sm:$0xf]
  %v5071 = vld [vmem:[%s5057 + $0x34] sm:$0xf]
  %v5072 = vld [vmem:[%s5057 + $0x38] sm:$0xf]
  %v5073 = vld [vmem:[%s5057 + $0x3c] sm:$0xf]
  %v5074 = vld [vmem:[%s5057 + $0x40] sm:$0xf]
  %v5075 = vld [vmem:[%s5057 + $0x44] sm:$0xf]
  %v5076 = vld [vmem:[%s5057 + $0x48] sm:$0xf]
  %v5077 = vld [vmem:[%s5057 + $0x4c] sm:$0xf]
  %v5078 = vld [vmem:[%s5057 + $0x50] sm:$0xf]
  %v5079 = vld [vmem:[%s5057 + $0x54] sm:$0xf]
  %v5080 = vld [vmem:[%s5057 + $0x58] sm:$0xf]
  %v5081 = vld [vmem:[%s5057 + $0x5c] sm:$0xf]
  %v5082 = vld [vmem:[%s5057 + $0x60] sm:$0xf]
  %v5083 = vld [vmem:[%s5057 + $0x64] sm:$0xf]
  %v5084 = vld [vmem:[%s5057 + $0x68] sm:$0xf]
  %v5085 = vld [vmem:[%s5057 + $0x6c] sm:$0xf]
  %v5086 = vld [vmem:[%s5057 + $0x70] sm:$0xf]
  %v5087 = vld [vmem:[%s5057 + $0x74] sm:$0xf]
  %v5088 = vld [vmem:[%s5057 + $0x78] sm:$0xf]
  %v5089 = vld [vmem:[%s5057 + $0x7c] sm:$0xf]
  %v5104 = vunpack.c.l.b16 %v5043
  %v5105 = vunpack.c.h.b16 %v5043
  %v5106 = vunpack.c.l.b16 %v5044
  %v5107 = vunpack.c.h.b16 %v5044
  %v5108 = vunpack.c.l.b16 %v5045
  %v5109 = vunpack.c.h.b16 %v5045
  %v5110 = vunpack.c.l.b16 %v5046
  %v5111 = vunpack.c.h.b16 %v5046
  %v5112 = vunpack.c.l.b16 %v5047
  %v5113 = vunpack.c.h.b16 %v5047
  %v5114 = vunpack.c.l.b16 %v5048
  %v5115 = vunpack.c.h.b16 %v5048
  %v5116 = vunpack.c.l.b16 %v5049
  %v5117 = vunpack.c.h.b16 %v5049
  %v5118 = vunpack.c.l.b16 %v5050
  %v5119 = vunpack.c.h.b16 %v5050
  %v5120 = vunpack.c.l.b16 %v5051
  %v5121 = vunpack.c.h.b16 %v5051
  %v5122 = vunpack.c.l.b16 %v5052
  %v5123 = vunpack.c.h.b16 %v5052
  %v5124 = vunpack.c.l.b16 %v5053
  %v5125 = vunpack.c.h.b16 %v5053
  %v5126 = vunpack.c.l.b16 %v5054
  %v5127 = vunpack.c.h.b16 %v5054
  %v5128 = vunpack.c.l.b16 %v5055
  %v5129 = vunpack.c.h.b16 %v5055
  %v5130 = vunpack.c.l.b16 %v5056
  %v5131 = vunpack.c.h.b16 %v5056
  %v5132 = vpack.c.b16 %v5106, %v5104
  %v5133 = vpack.c.b16 %v5107, %v5105
  %v5134 = vpack.c.b16 %v5110, %v5108
  %v5135 = vpack.c.b16 %v5111, %v5109
  %v5136 = vpack.c.b16 %v5114, %v5112
  %v5137 = vpack.c.b16 %v5115, %v5113
  %v5138 = vpack.c.b16 %v5118, %v5116
  %v5139 = vpack.c.b16 %v5119, %v5117
  %v5140 = vpack.c.b16 %v5122, %v5120
  %v5141 = vpack.c.b16 %v5123, %v5121
  %v5142 = vpack.c.b16 %v5126, %v5124
  %v5143 = vpack.c.b16 %v5127, %v5125
  %v5144 = vpack.c.b16 %v5130, %v5128
  %v5145 = vpack.c.b16 %v5131, %v5129
  %v5192 = vunpack.c.l.b16 %v5058
  %v5193 = vunpack.c.l.b16 %v5059
  %v5194 = vunpack.c.l.b16 %v5060
  %v5195 = vunpack.c.l.b16 %v5061
  %v5196 = vunpack.c.l.b16 %v5062
  %v5197 = vunpack.c.l.b16 %v5063
  %v5198 = vunpack.c.l.b16 %v5064
  %v5199 = vunpack.c.l.b16 %v5065
  %v5200 = vunpack.c.l.b16 %v5066
  %v5201 = vunpack.c.l.b16 %v5067
  %v5202 = vunpack.c.l.b16 %v5068
  %v5203 = vunpack.c.l.b16 %v5069
  %v5204 = vunpack.c.l.b16 %v5070
  %v5205 = vunpack.c.l.b16 %v5071
  %v5206 = vunpack.c.l.b16 %v5072
  %v5207 = vunpack.c.l.b16 %v5073
  %v5208 = vunpack.c.l.b16 %v5074
  %v5209 = vunpack.c.l.b16 %v5075
  %v5210 = vunpack.c.l.b16 %v5076
  %v5211 = vunpack.c.l.b16 %v5077
  %v5212 = vunpack.c.l.b16 %v5078
  %v5213 = vunpack.c.l.b16 %v5079
  %v5214 = vunpack.c.l.b16 %v5080
  %v5215 = vunpack.c.l.b16 %v5081
  %v5216 = vunpack.c.l.b16 %v5082
  %v5217 = vunpack.c.l.b16 %v5083
  %v5218 = vunpack.c.l.b16 %v5084
  %v5219 = vunpack.c.l.b16 %v5085
  %v5220 = vunpack.c.l.b16 %v5086
  %v5221 = vunpack.c.l.b16 %v5087
  %v5222 = vunpack.c.l.b16 %v5088
  %v5223 = vunpack.c.l.b16 %v5089
  %v5224 = vpack.c.b16 %v5193, %v5192
  %v5225 = vpack.c.b16 %v5195, %v5194
  %v5226 = vpack.c.b16 %v5197, %v5196
  %v5227 = vpack.c.b16 %v5199, %v5198
  %v5228 = vpack.c.b16 %v5201, %v5200
  %v5229 = vpack.c.b16 %v5203, %v5202
  %v5230 = vpack.c.b16 %v5205, %v5204
  %v5231 = vpack.c.b16 %v5207, %v5206
  %v5232 = vpack.c.b16 %v5209, %v5208
  %v5233 = vpack.c.b16 %v5211, %v5210
  %v5234 = vpack.c.b16 %v5213, %v5212
  %v5235 = vpack.c.b16 %v5215, %v5214
  %v5236 = vpack.c.b16 %v5217, %v5216
  %v5237 = vpack.c.b16 %v5219, %v5218
  %v5238 = vpack.c.b16 %v5221, %v5220
  %v5239 = vpack.c.b16 %v5223, %v5222
  %5256 = vmatprep.subr.bf16.mxu0 0
  %5257 = vmatpush1.bf16.msra.mxu0 %v5231
  %5258 = vmatprep.subr.bf16.mxu0 0
  %5259 = vmatpush1.bf16.msra.mxu0 %v5230
  %5260 = vmatprep.subr.bf16.mxu0 0
  %5261 = vmatpush1.bf16.msra.mxu0 %v5229
  %5262 = vmatprep.subr.bf16.mxu0 0
  %5263 = vmatpush1.bf16.msra.mxu0 %v5228
  %5264 = vmatprep.subr.bf16.mxu0 0
  %5265 = vmatpush1.bf16.msra.mxu0 %v5227
  %5266 = vmatprep.subr.bf16.mxu0 0
  %5267 = vmatpush1.bf16.msra.mxu0 %v5226
  %5268 = vmatprep.subr.bf16.mxu0 0
  %5269 = vmatpush1.bf16.msra.mxu0 %v5225
  %5270 = vmatprep.subr.bf16.mxu0 0
  %5271 = vmatpush1.bf16.msra.mxu0 %v5224
  %5272 = vmatprep.subr.bf16.mxu0 0
  %5273 = vmatpush2.bf16.msra.mxu0 %v5239
  %5274 = vmatprep.subr.bf16.mxu0 0
  %5275 = vmatpush2.bf16.msra.mxu0 %v5238
  %5276 = vmatprep.subr.bf16.mxu0 0
  %5277 = vmatpush2.bf16.msra.mxu0 %v5237
  %5278 = vmatprep.subr.bf16.mxu0 0
  %5279 = vmatpush2.bf16.msra.mxu0 %v5236
  %5280 = vmatprep.subr.bf16.mxu0 0
  %5281 = vmatpush2.bf16.msra.mxu0 %v5235
  %5282 = vmatprep.subr.bf16.mxu0 0
  %5283 = vmatpush2.bf16.msra.mxu0 %v5234
  %5284 = vmatprep.subr.bf16.mxu0 0
  %5285 = vmatpush2.bf16.msra.mxu0 %v5233
  %5286 = vmatprep.subr.bf16.mxu0 0
  %5287 = vmatpush2.bf16.msra.mxu0 %v5232
  %5288 = vmatprep.mubr.bf16.mxu0 %v5133
  %5289 = vmatmul.mubr.bf16.gmra.mxu0 %v5132
  %v5290 = vpop.f32.mrf.mxu0
  %v5291 = vadd.f32 0.0, %v5290
  %v5292 = vpop.f32.mrf.mxu0
  %v5293 = vpop.f32.mrf.mxu0
  %v5294 = vadd.f32 0.0, %v5293
  %v5295 = vpop.f32.mrf.mxu0
  %5296 = vmatprep.mubr.bf16.mxu0 %v5135
  %5297 = vmatmul.mubr.bf16.gmra.mxu0 %v5134
  %v5298 = vpop.f32.mrf.mxu0
  %v5299 = vadd.f32 0.0, %v5298
  %v5300 = vpop.f32.mrf.mxu0
  %v5301 = vpop.f32.mrf.mxu0
  %v5302 = vadd.f32 0.0, %v5301
  %v5303 = vpop.f32.mrf.mxu0
  %5304 = vmatprep.mubr.bf16.mxu0 %v5137
  %5305 = vmatmul.mubr.bf16.gmra.mxu0 %v5136
  %v5306 = vpop.f32.mrf.mxu0
  %v5307 = vadd.f32 0.0, %v5306
  %v5308 = vpop.f32.mrf.mxu0
  %v5309 = vpop.f32.mrf.mxu0
  %v5310 = vadd.f32 0.0, %v5309
  %v5311 = vpop.f32.mrf.mxu0
  %5312 = vmatprep.mubr.bf16.mxu0 %v5139
  %5313 = vmatmul.mubr.bf16.gmra.mxu0 %v5138
  %v5314 = vpop.f32.mrf.mxu0
  %v5315 = vadd.f32 0.0, %v5314
  %v5316 = vpop.f32.mrf.mxu0
  %v5317 = vpop.f32.mrf.mxu0
  %v5318 = vadd.f32 0.0, %v5317
  %v5319 = vpop.f32.mrf.mxu0
  %5320 = vmatprep.mubr.bf16.mxu0 %v5141
  %5321 = vmatmul.mubr.bf16.gmra.mxu0 %v5140
  %v5322 = vpop.f32.mrf.mxu0
  %v5323 = vadd.f32 0.0, %v5322
  %v5324 = vpop.f32.mrf.mxu0
  %v5325 = vpop.f32.mrf.mxu0
  %v5326 = vadd.f32 0.0, %v5325
  %v5327 = vpop.f32.mrf.mxu0
  %5328 = vmatprep.mubr.bf16.mxu0 %v5143
  %5329 = vmatmul.mubr.bf16.gmra.mxu0 %v5142
  %v5330 = vpop.f32.mrf.mxu0
  %v5331 = vadd.f32 0.0, %v5330
  %v5332 = vpop.f32.mrf.mxu0
  %v5333 = vpop.f32.mrf.mxu0
  %v5334 = vadd.f32 0.0, %v5333
  %v5335 = vpop.f32.mrf.mxu0
  %5336 = vmatprep.mubr.bf16.mxu0 %v5145
  %5337 = vmatmul.mubr.bf16.gmra.mxu0 %v5144
  %v5338 = vpop.f32.mrf.mxu0
  %v5339 = vadd.f32 0.0, %v5338
  %v5340 = vpop.f32.mrf.mxu0
  %v5341 = vpop.f32.mrf.mxu0
  %v5342 = vadd.f32 0.0, %v5341
  %v5343 = vpop.f32.mrf.mxu0
  %5344 = vdwg.mxu0
  %v5345 = vadd.f32 %v4989, %v5291
  %v5346 = vadd.f32 %v4992, %v5294
  %v5347 = vadd.f32 %v4997, %v5299
  %v5348 = vadd.f32 %v5000, %v5302
  %v5349 = vadd.f32 %v5005, %v5307
  %v5350 = vadd.f32 %v5008, %v5310
  %v5351 = vadd.f32 %v5013, %v5315
  %v5352 = vadd.f32 %v5016, %v5318
  %v5353 = vadd.f32 %v5021, %v5323
  %v5354 = vadd.f32 %v5024, %v5326
  %v5355 = vadd.f32 %v5029, %v5331
  %v5356 = vadd.f32 %v5032, %v5334
  %v5357 = vadd.f32 %v5037, %v5339
  %v5358 = vadd.f32 %v5040, %v5342
  %v5359 = vld [vmem:[#allocation2 + $0x10] sm:$0xff]
  %v5360 = vld [vmem:[#allocation2 + $0x18] sm:$0xff]
  %v5361 = vld [vmem:[#allocation2 + $0x20] sm:$0xff]
  %v5362 = vld [vmem:[#allocation2 + $0x28] sm:$0xff]
  %v5363 = vld [vmem:[#allocation2 + $0x30] sm:$0xff]
  %v5364 = vld [vmem:[#allocation2 + $0x38] sm:$0xff]
  %v5365 = vld [vmem:[#allocation2 + $0x40] sm:$0xff]
  %v5366 = vld [vmem:[#allocation2 + $0x48] sm:$0xff]
  %v5367 = vld [vmem:[#allocation2 + $0x50] sm:$0xff]
  %v5368 = vld [vmem:[#allocation2 + $0x58] sm:$0xff]
  %v5369 = vld [vmem:[#allocation2 + $0x60] sm:$0xff]
  %v5370 = vld [vmem:[#allocation2 + $0x68] sm:$0xff]
  %v5371 = vld [vmem:[#allocation2 + $0x70] sm:$0xff]
  %v5372 = vld [vmem:[#allocation2 + $0x78] sm:$0xff]
  %s5373 = scalar_lea.vmem %s8, 256
  %v5374 = vld [vmem:[%s5373] sm:$0xf]
  %v5375 = vld [vmem:[%s5373 + $0x4] sm:$0xf]
  %v5376 = vld [vmem:[%s5373 + $0x8] sm:$0xf]
  %v5377 = vld [vmem:[%s5373 + $0xc] sm:$0xf]
  %v5378 = vld [vmem:[%s5373 + $0x10] sm:$0xf]
  %v5379 = vld [vmem:[%s5373 + $0x14] sm:$0xf]
  %v5380 = vld [vmem:[%s5373 + $0x18] sm:$0xf]
  %v5381 = vld [vmem:[%s5373 + $0x1c] sm:$0xf]
  %v5382 = vld [vmem:[%s5373 + $0x20] sm:$0xf]
  %v5383 = vld [vmem:[%s5373 + $0x24] sm:$0xf]
  %v5384 = vld [vmem:[%s5373 + $0x28] sm:$0xf]
  %v5385 = vld [vmem:[%s5373 + $0x2c] sm:$0xf]
  %v5386 = vld [vmem:[%s5373 + $0x30] sm:$0xf]
  %v5387 = vld [vmem:[%s5373 + $0x34] sm:$0xf]
  %v5388 = vld [vmem:[%s5373 + $0x38] sm:$0xf]
  %v5389 = vld [vmem:[%s5373 + $0x3c] sm:$0xf]
  %v5390 = vld [vmem:[%s5373 + $0x40] sm:$0xf]
  %v5391 = vld [vmem:[%s5373 + $0x44] sm:$0xf]
  %v5392 = vld [vmem:[%s5373 + $0x48] sm:$0xf]
  %v5393 = vld [vmem:[%s5373 + $0x4c] sm:$0xf]
  %v5394 = vld [vmem:[%s5373 + $0x50] sm:$0xf]
  %v5395 = vld [vmem:[%s5373 + $0x54] sm:$0xf]
  %v5396 = vld [vmem:[%s5373 + $0x58] sm:$0xf]
  %v5397 = vld [vmem:[%s5373 + $0x5c] sm:$0xf]
  %v5398 = vld [vmem:[%s5373 + $0x60] sm:$0xf]
  %v5399 = vld [vmem:[%s5373 + $0x64] sm:$0xf]
  %v5400 = vld [vmem:[%s5373 + $0x68] sm:$0xf]
  %v5401 = vld [vmem:[%s5373 + $0x6c] sm:$0xf]
  %v5402 = vld [vmem:[%s5373 + $0x70] sm:$0xf]
  %v5403 = vld [vmem:[%s5373 + $0x74] sm:$0xf]
  %v5404 = vld [vmem:[%s5373 + $0x78] sm:$0xf]
  %v5405 = vld [vmem:[%s5373 + $0x7c] sm:$0xf]
  %v5420 = vunpack.c.l.b16 %v5359
  %v5421 = vunpack.c.h.b16 %v5359
  %v5422 = vunpack.c.l.b16 %v5360
  %v5423 = vunpack.c.h.b16 %v5360
  %v5424 = vunpack.c.l.b16 %v5361
  %v5425 = vunpack.c.h.b16 %v5361
  %v5426 = vunpack.c.l.b16 %v5362
  %v5427 = vunpack.c.h.b16 %v5362
  %v5428 = vunpack.c.l.b16 %v5363
  %v5429 = vunpack.c.h.b16 %v5363
  %v5430 = vunpack.c.l.b16 %v5364
  %v5431 = vunpack.c.h.b16 %v5364
  %v5432 = vunpack.c.l.b16 %v5365
  %v5433 = vunpack.c.h.b16 %v5365
  %v5434 = vunpack.c.l.b16 %v5366
  %v5435 = vunpack.c.h.b16 %v5366
  %v5436 = vunpack.c.l.b16 %v5367
  %v5437 = vunpack.c.h.b16 %v5367
  %v5438 = vunpack.c.l.b16 %v5368
  %v5439 = vunpack.c.h.b16 %v5368
  %v5440 = vunpack.c.l.b16 %v5369
  %v5441 = vunpack.c.h.b16 %v5369
  %v5442 = vunpack.c.l.b16 %v5370
  %v5443 = vunpack.c.h.b16 %v5370
  %v5444 = vunpack.c.l.b16 %v5371
  %v5445 = vunpack.c.h.b16 %v5371
  %v5446 = vunpack.c.l.b16 %v5372
  %v5447 = vunpack.c.h.b16 %v5372
  %v5448 = vpack.c.b16 %v5422, %v5420
  %v5449 = vpack.c.b16 %v5423, %v5421
  %v5450 = vpack.c.b16 %v5426, %v5424
  %v5451 = vpack.c.b16 %v5427, %v5425
  %v5452 = vpack.c.b16 %v5430, %v5428
  %v5453 = vpack.c.b16 %v5431, %v5429
  %v5454 = vpack.c.b16 %v5434, %v5432
  %v5455 = vpack.c.b16 %v5435, %v5433
  %v5456 = vpack.c.b16 %v5438, %v5436
  %v5457 = vpack.c.b16 %v5439, %v5437
  %v5458 = vpack.c.b16 %v5442, %v5440
  %v5459 = vpack.c.b16 %v5443, %v5441
  %v5460 = vpack.c.b16 %v5446, %v5444
  %v5461 = vpack.c.b16 %v5447, %v5445
  %v5508 = vunpack.c.l.b16 %v5374
  %v5509 = vunpack.c.l.b16 %v5375
  %v5510 = vunpack.c.l.b16 %v5376
  %v5511 = vunpack.c.l.b16 %v5377
  %v5512 = vunpack.c.l.b16 %v5378
  %v5513 = vunpack.c.l.b16 %v5379
  %v5514 = vunpack.c.l.b16 %v5380
  %v5515 = vunpack.c.l.b16 %v5381
  %v5516 = vunpack.c.l.b16 %v5382
  %v5517 = vunpack.c.l.b16 %v5383
  %v5518 = vunpack.c.l.b16 %v5384
  %v5519 = vunpack.c.l.b16 %v5385
  %v5520 = vunpack.c.l.b16 %v5386
  %v5521 = vunpack.c.l.b16 %v5387
  %v5522 = vunpack.c.l.b16 %v5388
  %v5523 = vunpack.c.l.b16 %v5389
  %v5524 = vunpack.c.l.b16 %v5390
  %v5525 = vunpack.c.l.b16 %v5391
  %v5526 = vunpack.c.l.b16 %v5392
  %v5527 = vunpack.c.l.b16 %v5393
  %v5528 = vunpack.c.l.b16 %v5394
  %v5529 = vunpack.c.l.b16 %v5395
  %v5530 = vunpack.c.l.b16 %v5396
  %v5531 = vunpack.c.l.b16 %v5397
  %v5532 = vunpack.c.l.b16 %v5398
  %v5533 = vunpack.c.l.b16 %v5399
  %v5534 = vunpack.c.l.b16 %v5400
  %v5535 = vunpack.c.l.b16 %v5401
  %v5536 = vunpack.c.l.b16 %v5402
  %v5537 = vunpack.c.l.b16 %v5403
  %v5538 = vunpack.c.l.b16 %v5404
  %v5539 = vunpack.c.l.b16 %v5405
  %v5540 = vpack.c.b16 %v5509, %v5508
  %v5541 = vpack.c.b16 %v5511, %v5510
  %v5542 = vpack.c.b16 %v5513, %v5512
  %v5543 = vpack.c.b16 %v5515, %v5514
  %v5544 = vpack.c.b16 %v5517, %v5516
  %v5545 = vpack.c.b16 %v5519, %v5518
  %v5546 = vpack.c.b16 %v5521, %v5520
  %v5547 = vpack.c.b16 %v5523, %v5522
  %v5548 = vpack.c.b16 %v5525, %v5524
  %v5549 = vpack.c.b16 %v5527, %v5526
  %v5550 = vpack.c.b16 %v5529, %v5528
  %v5551 = vpack.c.b16 %v5531, %v5530
  %v5552 = vpack.c.b16 %v5533, %v5532
  %v5553 = vpack.c.b16 %v5535, %v5534
  %v5554 = vpack.c.b16 %v5537, %v5536
  %v5555 = vpack.c.b16 %v5539, %v5538
  %5572 = vmatprep.subr.bf16.mxu0 0
  %5573 = vmatpush1.bf16.msra.mxu0 %v5547
  %5574 = vmatprep.subr.bf16.mxu0 0
  %5575 = vmatpush1.bf16.msra.mxu0 %v5546
  %5576 = vmatprep.subr.bf16.mxu0 0
  %5577 = vmatpush1.bf16.msra.mxu0 %v5545
  %5578 = vmatprep.subr.bf16.mxu0 0
  %5579 = vmatpush1.bf16.msra.mxu0 %v5544
  %5580 = vmatprep.subr.bf16.mxu0 0
  %5581 = vmatpush1.bf16.msra.mxu0 %v5543
  %5582 = vmatprep.subr.bf16.mxu0 0
  %5583 = vmatpush1.bf16.msra.mxu0 %v5542
  %5584 = vmatprep.subr.bf16.mxu0 0
  %5585 = vmatpush1.bf16.msra.mxu0 %v5541
  %5586 = vmatprep.subr.bf16.mxu0 0
  %5587 = vmatpush1.bf16.msra.mxu0 %v5540
  %5588 = vmatprep.subr.bf16.mxu0 0
  %5589 = vmatpush2.bf16.msra.mxu0 %v5555
  %5590 = vmatprep.subr.bf16.mxu0 0
  %5591 = vmatpush2.bf16.msra.mxu0 %v5554
  %5592 = vmatprep.subr.bf16.mxu0 0
  %5593 = vmatpush2.bf16.msra.mxu0 %v5553
  %5594 = vmatprep.subr.bf16.mxu0 0
  %5595 = vmatpush2.bf16.msra.mxu0 %v5552
  %5596 = vmatprep.subr.bf16.mxu0 0
  %5597 = vmatpush2.bf16.msra.mxu0 %v5551
  %5598 = vmatprep.subr.bf16.mxu0 0
  %5599 = vmatpush2.bf16.msra.mxu0 %v5550
  %5600 = vmatprep.subr.bf16.mxu0 0
  %5601 = vmatpush2.bf16.msra.mxu0 %v5549
  %5602 = vmatprep.subr.bf16.mxu0 0
  %5603 = vmatpush2.bf16.msra.mxu0 %v5548
  %5604 = vmatprep.mubr.bf16.mxu0 %v5449
  %5605 = vmatmul.mubr.bf16.gmra.mxu0 %v5448
  %v5606 = vpop.f32.mrf.mxu0
  %v5607 = vadd.f32 0.0, %v5606
  %v5608 = vpop.f32.mrf.mxu0
  %v5609 = vpop.f32.mrf.mxu0
  %v5610 = vadd.f32 0.0, %v5609
  %v5611 = vpop.f32.mrf.mxu0
  %5612 = vmatprep.mubr.bf16.mxu0 %v5451
  %5613 = vmatmul.mubr.bf16.gmra.mxu0 %v5450
  %v5614 = vpop.f32.mrf.mxu0
  %v5615 = vadd.f32 0.0, %v5614
  %v5616 = vpop.f32.mrf.mxu0
  %v5617 = vpop.f32.mrf.mxu0
  %v5618 = vadd.f32 0.0, %v5617
  %v5619 = vpop.f32.mrf.mxu0
  %5620 = vmatprep.mubr.bf16.mxu0 %v5453
  %5621 = vmatmul.mubr.bf16.gmra.mxu0 %v5452
  %v5622 = vpop.f32.mrf.mxu0
  %v5623 = vadd.f32 0.0, %v5622
  %v5624 = vpop.f32.mrf.mxu0
  %v5625 = vpop.f32.mrf.mxu0
  %v5626 = vadd.f32 0.0, %v5625
  %v5627 = vpop.f32.mrf.mxu0
  %5628 = vmatprep.mubr.bf16.mxu0 %v5455
  %5629 = vmatmul.mubr.bf16.gmra.mxu0 %v5454
  %v5630 = vpop.f32.mrf.mxu0
  %v5631 = vadd.f32 0.0, %v5630
  %v5632 = vpop.f32.mrf.mxu0
  %v5633 = vpop.f32.mrf.mxu0
  %v5634 = vadd.f32 0.0, %v5633
  %v5635 = vpop.f32.mrf.mxu0
  %5636 = vmatprep.mubr.bf16.mxu0 %v5457
  %5637 = vmatmul.mubr.bf16.gmra.mxu0 %v5456
  %v5638 = vpop.f32.mrf.mxu0
  %v5639 = vadd.f32 0.0, %v5638
  %v5640 = vpop.f32.mrf.mxu0
  %v5641 = vpop.f32.mrf.mxu0
  %v5642 = vadd.f32 0.0, %v5641
  %v5643 = vpop.f32.mrf.mxu0
  %5644 = vmatprep.mubr.bf16.mxu0 %v5459
  %5645 = vmatmul.mubr.bf16.gmra.mxu0 %v5458
  %v5646 = vpop.f32.mrf.mxu0
  %v5647 = vadd.f32 0.0, %v5646
  %v5648 = vpop.f32.mrf.mxu0
  %v5649 = vpop.f32.mrf.mxu0
  %v5650 = vadd.f32 0.0, %v5649
  %v5651 = vpop.f32.mrf.mxu0
  %5652 = vmatprep.mubr.bf16.mxu0 %v5461
  %5653 = vmatmul.mubr.bf16.gmra.mxu0 %v5460
  %v5654 = vpop.f32.mrf.mxu0
  %v5655 = vadd.f32 0.0, %v5654
  %v5656 = vpop.f32.mrf.mxu0
  %v5657 = vpop.f32.mrf.mxu0
  %v5658 = vadd.f32 0.0, %v5657
  %v5659 = vpop.f32.mrf.mxu0
  %5660 = vdwg.mxu0
  %v5661 = vadd.f32 %v5345, %v5607
  %v5662 = vadd.f32 %v5346, %v5610
  %v5663 = vadd.f32 %v5347, %v5615
  %v5664 = vadd.f32 %v5348, %v5618
  %v5665 = vadd.f32 %v5349, %v5623
  %v5666 = vadd.f32 %v5350, %v5626
  %v5667 = vadd.f32 %v5351, %v5631
  %v5668 = vadd.f32 %v5352, %v5634
  %v5669 = vadd.f32 %v5353, %v5639
  %v5670 = vadd.f32 %v5354, %v5642
  %v5671 = vadd.f32 %v5355, %v5647
  %v5672 = vadd.f32 %v5356, %v5650
  %v5673 = vadd.f32 %v5357, %v5655
  %v5674 = vadd.f32 %v5358, %v5658
  %v5675 = vld [vmem:[#allocation2 + $0x18] sm:$0xff]
  %v5676 = vld [vmem:[#allocation2 + $0x20] sm:$0xff]
  %v5677 = vld [vmem:[#allocation2 + $0x28] sm:$0xff]
  %v5678 = vld [vmem:[#allocation2 + $0x30] sm:$0xff]
  %v5679 = vld [vmem:[#allocation2 + $0x38] sm:$0xff]
  %v5680 = vld [vmem:[#allocation2 + $0x40] sm:$0xff]
  %v5681 = vld [vmem:[#allocation2 + $0x48] sm:$0xff]
  %v5682 = vld [vmem:[#allocation2 + $0x50] sm:$0xff]
  %v5683 = vld [vmem:[#allocation2 + $0x58] sm:$0xff]
  %v5684 = vld [vmem:[#allocation2 + $0x60] sm:$0xff]
  %v5685 = vld [vmem:[#allocation2 + $0x68] sm:$0xff]
  %v5686 = vld [vmem:[#allocation2 + $0x70] sm:$0xff]
  %v5687 = vld [vmem:[#allocation2 + $0x78] sm:$0xff]
  %v5688 = vld [vmem:[#allocation2 + $0x80] sm:$0xff]
  %s5689 = scalar_lea.vmem %s8, 384
  %v5690 = vld [vmem:[%s5689] sm:$0xf]
  %v5691 = vld [vmem:[%s5689 + $0x4] sm:$0xf]
  %v5692 = vld [vmem:[%s5689 + $0x8] sm:$0xf]
  %v5693 = vld [vmem:[%s5689 + $0xc] sm:$0xf]
  %v5694 = vld [vmem:[%s5689 + $0x10] sm:$0xf]
  %v5695 = vld [vmem:[%s5689 + $0x14] sm:$0xf]
  %v5696 = vld [vmem:[%s5689 + $0x18] sm:$0xf]
  %v5697 = vld [vmem:[%s5689 + $0x1c] sm:$0xf]
  %v5698 = vld [vmem:[%s5689 + $0x20] sm:$0xf]
  %v5699 = vld [vmem:[%s5689 + $0x24] sm:$0xf]
  %v5700 = vld [vmem:[%s5689 + $0x28] sm:$0xf]
  %v5701 = vld [vmem:[%s5689 + $0x2c] sm:$0xf]
  %v5702 = vld [vmem:[%s5689 + $0x30] sm:$0xf]
  %v5703 = vld [vmem:[%s5689 + $0x34] sm:$0xf]
  %v5704 = vld [vmem:[%s5689 + $0x38] sm:$0xf]
  %v5705 = vld [vmem:[%s5689 + $0x3c] sm:$0xf]
  %v5706 = vld [vmem:[%s5689 + $0x40] sm:$0xf]
  %v5707 = vld [vmem:[%s5689 + $0x44] sm:$0xf]
  %v5708 = vld [vmem:[%s5689 + $0x48] sm:$0xf]
  %v5709 = vld [vmem:[%s5689 + $0x4c] sm:$0xf]
  %v5710 = vld [vmem:[%s5689 + $0x50] sm:$0xf]
  %v5711 = vld [vmem:[%s5689 + $0x54] sm:$0xf]
  %v5712 = vld [vmem:[%s5689 + $0x58] sm:$0xf]
  %v5713 = vld [vmem:[%s5689 + $0x5c] sm:$0xf]
  %v5714 = vld [vmem:[%s5689 + $0x60] sm:$0xf]
  %v5715 = vld [vmem:[%s5689 + $0x64] sm:$0xf]
  %v5716 = vld [vmem:[%s5689 + $0x68] sm:$0xf]
  %v5717 = vld [vmem:[%s5689 + $0x6c] sm:$0xf]
  %v5718 = vld [vmem:[%s5689 + $0x70] sm:$0xf]
  %v5719 = vld [vmem:[%s5689 + $0x74] sm:$0xf]
  %v5720 = vld [vmem:[%s5689 + $0x78] sm:$0xf]
  %v5721 = vld [vmem:[%s5689 + $0x7c] sm:$0xf]
  %v5736 = vunpack.c.l.b16 %v5675
  %v5737 = vunpack.c.h.b16 %v5675
  %v5738 = vunpack.c.l.b16 %v5676
  %v5739 = vunpack.c.h.b16 %v5676
  %v5740 = vunpack.c.l.b16 %v5677
  %v5741 = vunpack.c.h.b16 %v5677
  %v5742 = vunpack.c.l.b16 %v5678
  %v5743 = vunpack.c.h.b16 %v5678
  %v5744 = vunpack.c.l.b16 %v5679
  %v5745 = vunpack.c.h.b16 %v5679
  %v5746 = vunpack.c.l.b16 %v5680
  %v5747 = vunpack.c.h.b16 %v5680
  %v5748 = vunpack.c.l.b16 %v5681
  %v5749 = vunpack.c.h.b16 %v5681
  %v5750 = vunpack.c.l.b16 %v5682
  %v5751 = vunpack.c.h.b16 %v5682
  %v5752 = vunpack.c.l.b16 %v5683
  %v5753 = vunpack.c.h.b16 %v5683
  %v5754 = vunpack.c.l.b16 %v5684
  %v5755 = vunpack.c.h.b16 %v5684
  %v5756 = vunpack.c.l.b16 %v5685
  %v5757 = vunpack.c.h.b16 %v5685
  %v5758 = vunpack.c.l.b16 %v5686
  %v5759 = vunpack.c.h.b16 %v5686
  %v5760 = vunpack.c.l.b16 %v5687
  %v5761 = vunpack.c.h.b16 %v5687
  %v5762 = vunpack.c.l.b16 %v5688
  %v5763 = vunpack.c.h.b16 %v5688
  %v5764 = vpack.c.b16 %v5738, %v5736
  %v5765 = vpack.c.b16 %v5739, %v5737
  %v5766 = vpack.c.b16 %v5742, %v5740
  %v5767 = vpack.c.b16 %v5743, %v5741
  %v5768 = vpack.c.b16 %v5746, %v5744
  %v5769 = vpack.c.b16 %v5747, %v5745
  %v5770 = vpack.c.b16 %v5750, %v5748
  %v5771 = vpack.c.b16 %v5751, %v5749
  %v5772 = vpack.c.b16 %v5754, %v5752
  %v5773 = vpack.c.b16 %v5755, %v5753
  %v5774 = vpack.c.b16 %v5758, %v5756
  %v5775 = vpack.c.b16 %v5759, %v5757
  %v5776 = vpack.c.b16 %v5762, %v5760
  %v5777 = vpack.c.b16 %v5763, %v5761
  %v5824 = vunpack.c.l.b16 %v5690
  %v5825 = vunpack.c.l.b16 %v5691
  %v5826 = vunpack.c.l.b16 %v5692
  %v5827 = vunpack.c.l.b16 %v5693
  %v5828 = vunpack.c.l.b16 %v5694
  %v5829 = vunpack.c.l.b16 %v5695
  %v5830 = vunpack.c.l.b16 %v5696
  %v5831 = vunpack.c.l.b16 %v5697
  %v5832 = vunpack.c.l.b16 %v5698
  %v5833 = vunpack.c.l.b16 %v5699
  %v5834 = vunpack.c.l.b16 %v5700
  %v5835 = vunpack.c.l.b16 %v5701
  %v5836 = vunpack.c.l.b16 %v5702
  %v5837 = vunpack.c.l.b16 %v5703
  %v5838 = vunpack.c.l.b16 %v5704
  %v5839 = vunpack.c.l.b16 %v5705
  %v5840 = vunpack.c.l.b16 %v5706
  %v5841 = vunpack.c.l.b16 %v5707
  %v5842 = vunpack.c.l.b16 %v5708
  %v5843 = vunpack.c.l.b16 %v5709
  %v5844 = vunpack.c.l.b16 %v5710
  %v5845 = vunpack.c.l.b16 %v5711
  %v5846 = vunpack.c.l.b16 %v5712
  %v5847 = vunpack.c.l.b16 %v5713
  %v5848 = vunpack.c.l.b16 %v5714
  %v5849 = vunpack.c.l.b16 %v5715
  %v5850 = vunpack.c.l.b16 %v5716
  %v5851 = vunpack.c.l.b16 %v5717
  %v5852 = vunpack.c.l.b16 %v5718
  %v5853 = vunpack.c.l.b16 %v5719
  %v5854 = vunpack.c.l.b16 %v5720
  %v5855 = vunpack.c.l.b16 %v5721
  %v5856 = vpack.c.b16 %v5825, %v5824
  %v5857 = vpack.c.b16 %v5827, %v5826
  %v5858 = vpack.c.b16 %v5829, %v5828
  %v5859 = vpack.c.b16 %v5831, %v5830
  %v5860 = vpack.c.b16 %v5833, %v5832
  %v5861 = vpack.c.b16 %v5835, %v5834
  %v5862 = vpack.c.b16 %v5837, %v5836
  %v5863 = vpack.c.b16 %v5839, %v5838
  %v5864 = vpack.c.b16 %v5841, %v5840
  %v5865 = vpack.c.b16 %v5843, %v5842
  %v5866 = vpack.c.b16 %v5845, %v5844
  %v5867 = vpack.c.b16 %v5847, %v5846
  %v5868 = vpack.c.b16 %v5849, %v5848
  %v5869 = vpack.c.b16 %v5851, %v5850
  %v5870 = vpack.c.b16 %v5853, %v5852
  %v5871 = vpack.c.b16 %v5855, %v5854
  %5888 = vmatprep.subr.bf16.mxu0 0
  %5889 = vmatpush1.bf16.msra.mxu0 %v5863
  %5890 = vmatprep.subr.bf16.mxu0 0
  %5891 = vmatpush1.bf16.msra.mxu0 %v5862
  %5892 = vmatprep.subr.bf16.mxu0 0
  %5893 = vmatpush1.bf16.msra.mxu0 %v5861
  %5894 = vmatprep.subr.bf16.mxu0 0
  %5895 = vmatpush1.bf16.msra.mxu0 %v5860
  %5896 = vmatprep.subr.bf16.mxu0 0
  %5897 = vmatpush1.bf16.msra.mxu0 %v5859
  %5898 = vmatprep.subr.bf16.mxu0 0
  %5899 = vmatpush1.bf16.msra.mxu0 %v5858
  %5900 = vmatprep.subr.bf16.mxu0 0
  %5901 = vmatpush1.bf16.msra.mxu0 %v5857
  %5902 = vmatprep.subr.bf16.mxu0 0
  %5903 = vmatpush1.bf16.msra.mxu0 %v5856
  %5904 = vmatprep.subr.bf16.mxu0 0
  %5905 = vmatpush2.bf16.msra.mxu0 %v5871
  %5906 = vmatprep.subr.bf16.mxu0 0
  %5907 = vmatpush2.bf16.msra.mxu0 %v5870
  %5908 = vmatprep.subr.bf16.mxu0 0
  %5909 = vmatpush2.bf16.msra.mxu0 %v5869
  %5910 = vmatprep.subr.bf16.mxu0 0
  %5911 = vmatpush2.bf16.msra.mxu0 %v5868
  %5912 = vmatprep.subr.bf16.mxu0 0
  %5913 = vmatpush2.bf16.msra.mxu0 %v5867
  %5914 = vmatprep.subr.bf16.mxu0 0
  %5915 = vmatpush2.bf16.msra.mxu0 %v5866
  %5916 = vmatprep.subr.bf16.mxu0 0
  %5917 = vmatpush2.bf16.msra.mxu0 %v5865
  %5918 = vmatprep.subr.bf16.mxu0 0
  %5919 = vmatpush2.bf16.msra.mxu0 %v5864
  %5920 = vmatprep.mubr.bf16.mxu0 %v5765
  %5921 = vmatmul.mubr.bf16.gmra.mxu0 %v5764
  %v5922 = vpop.f32.mrf.mxu0
  %v5923 = vadd.f32 0.0, %v5922
  %v5924 = vpop.f32.mrf.mxu0
  %v5925 = vpop.f32.mrf.mxu0
  %v5926 = vadd.f32 0.0, %v5925
  %v5927 = vpop.f32.mrf.mxu0
  %5928 = vmatprep.mubr.bf16.mxu0 %v5767
  %5929 = vmatmul.mubr.bf16.gmra.mxu0 %v5766
  %v5930 = vpop.f32.mrf.mxu0
  %v5931 = vadd.f32 0.0, %v5930
  %v5932 = vpop.f32.mrf.mxu0
  %v5933 = vpop.f32.mrf.mxu0
  %v5934 = vadd.f32 0.0, %v5933
  %v5935 = vpop.f32.mrf.mxu0
  %5936 = vmatprep.mubr.bf16.mxu0 %v5769
  %5937 = vmatmul.mubr.bf16.gmra.mxu0 %v5768
  %v5938 = vpop.f32.mrf.mxu0
  %v5939 = vadd.f32 0.0, %v5938
  %v5940 = vpop.f32.mrf.mxu0
  %v5941 = vpop.f32.mrf.mxu0
  %v5942 = vadd.f32 0.0, %v5941
  %v5943 = vpop.f32.mrf.mxu0
  %5944 = vmatprep.mubr.bf16.mxu0 %v5771
  %5945 = vmatmul.mubr.bf16.gmra.mxu0 %v5770
  %v5946 = vpop.f32.mrf.mxu0
  %v5947 = vadd.f32 0.0, %v5946
  %v5948 = vpop.f32.mrf.mxu0
  %v5949 = vpop.f32.mrf.mxu0
  %v5950 = vadd.f32 0.0, %v5949
  %v5951 = vpop.f32.mrf.mxu0
  %5952 = vmatprep.mubr.bf16.mxu0 %v5773
  %5953 = vmatmul.mubr.bf16.gmra.mxu0 %v5772
  %v5954 = vpop.f32.mrf.mxu0
  %v5955 = vadd.f32 0.0, %v5954
  %v5956 = vpop.f32.mrf.mxu0
  %v5957 = vpop.f32.mrf.mxu0
  %v5958 = vadd.f32 0.0, %v5957
  %v5959 = vpop.f32.mrf.mxu0
  %5960 = vmatprep.mubr.bf16.mxu0 %v5775
  %5961 = vmatmul.mubr.bf16.gmra.mxu0 %v5774
  %v5962 = vpop.f32.mrf.mxu0
  %v5963 = vadd.f32 0.0, %v5962
  %v5964 = vpop.f32.mrf.mxu0
  %v5965 = vpop.f32.mrf.mxu0
  %v5966 = vadd.f32 0.0, %v5965
  %v5967 = vpop.f32.mrf.mxu0
  %5968 = vmatprep.mubr.bf16.mxu0 %v5777
  %5969 = vmatmul.mubr.bf16.gmra.mxu0 %v5776
  %v5970 = vpop.f32.mrf.mxu0
  %v5971 = vadd.f32 0.0, %v5970
  %v5972 = vpop.f32.mrf.mxu0
  %v5973 = vpop.f32.mrf.mxu0
  %v5974 = vadd.f32 0.0, %v5973
  %v5975 = vpop.f32.mrf.mxu0
  %5976 = vdwg.mxu0
  %v5977 = vadd.f32 %v5661, %v5923
  %v5978 = vadd.f32 %v5662, %v5926
  %v5979 = vadd.f32 %v5663, %v5931
  %v5980 = vadd.f32 %v5664, %v5934
  %v5981 = vadd.f32 %v5665, %v5939
  %v5982 = vadd.f32 %v5666, %v5942
  %v5983 = vadd.f32 %v5667, %v5947
  %v5984 = vadd.f32 %v5668, %v5950
  %v5985 = vadd.f32 %v5669, %v5955
  %v5986 = vadd.f32 %v5670, %v5958
  %v5987 = vadd.f32 %v5671, %v5963
  %v5988 = vadd.f32 %v5672, %v5966
  %v5989 = vadd.f32 %v5673, %v5971
  %v5990 = vadd.f32 %v5674, %v5974
  %v5991 = vld [vmem:[#allocation2 + $0x20] sm:$0xff]
  %v5992 = vld [vmem:[#allocation2 + $0x28] sm:$0xff]
  %v5993 = vld [vmem:[#allocation2 + $0x30] sm:$0xff]
  %v5994 = vld [vmem:[#allocation2 + $0x38] sm:$0xff]
  %v5995 = vld [vmem:[#allocation2 + $0x40] sm:$0xff]
  %v5996 = vld [vmem:[#allocation2 + $0x48] sm:$0xff]
  %v5997 = vld [vmem:[#allocation2 + $0x50] sm:$0xff]
  %v5998 = vld [vmem:[#allocation2 + $0x58] sm:$0xff]
  %v5999 = vld [vmem:[#allocation2 + $0x60] sm:$0xff]
  %v6000 = vld [vmem:[#allocation2 + $0x68] sm:$0xff]
  %v6001 = vld [vmem:[#allocation2 + $0x70] sm:$0xff]
  %v6002 = vld [vmem:[#allocation2 + $0x78] sm:$0xff]
  %v6003 = vld [vmem:[#allocation2 + $0x80] sm:$0xff]
  %v6004 = vld [vmem:[#allocation2 + $0x88] sm:$0xff]
  %s6005 = scalar_lea.vmem %s8, 512
  %v6006 = vld [vmem:[%s6005] sm:$0xf]
  %v6007 = vld [vmem:[%s6005 + $0x4] sm:$0xf]
  %v6008 = vld [vmem:[%s6005 + $0x8] sm:$0xf]
  %v6009 = vld [vmem:[%s6005 + $0xc] sm:$0xf]
  %v6010 = vld [vmem:[%s6005 + $0x10] sm:$0xf]
  %v6011 = vld [vmem:[%s6005 + $0x14] sm:$0xf]
  %v6012 = vld [vmem:[%s6005 + $0x18] sm:$0xf]
  %v6013 = vld [vmem:[%s6005 + $0x1c] sm:$0xf]
  %v6014 = vld [vmem:[%s6005 + $0x20] sm:$0xf]
  %v6015 = vld [vmem:[%s6005 + $0x24] sm:$0xf]
  %v6016 = vld [vmem:[%s6005 + $0x28] sm:$0xf]
  %v6017 = vld [vmem:[%s6005 + $0x2c] sm:$0xf]
  %v6018 = vld [vmem:[%s6005 + $0x30] sm:$0xf]
  %v6019 = vld [vmem:[%s6005 + $0x34] sm:$0xf]
  %v6020 = vld [vmem:[%s6005 + $0x38] sm:$0xf]
  %v6021 = vld [vmem:[%s6005 + $0x3c] sm:$0xf]
  %v6022 = vld [vmem:[%s6005 + $0x40] sm:$0xf]
  %v6023 = vld [vmem:[%s6005 + $0x44] sm:$0xf]
  %v6024 = vld [vmem:[%s6005 + $0x48] sm:$0xf]
  %v6025 = vld [vmem:[%s6005 + $0x4c] sm:$0xf]
  %v6026 = vld [vmem:[%s6005 + $0x50] sm:$0xf]
  %v6027 = vld [vmem:[%s6005 + $0x54] sm:$0xf]
  %v6028 = vld [vmem:[%s6005 + $0x58] sm:$0xf]
  %v6029 = vld [vmem:[%s6005 + $0x5c] sm:$0xf]
  %v6030 = vld [vmem:[%s6005 + $0x60] sm:$0xf]
  %v6031 = vld [vmem:[%s6005 + $0x64] sm:$0xf]
  %v6032 = vld [vmem:[%s6005 + $0x68] sm:$0xf]
  %v6033 = vld [vmem:[%s6005 + $0x6c] sm:$0xf]
  %v6034 = vld [vmem:[%s6005 + $0x70] sm:$0xf]
  %v6035 = vld [vmem:[%s6005 + $0x74] sm:$0xf]
  %v6036 = vld [vmem:[%s6005 + $0x78] sm:$0xf]
  %v6037 = vld [vmem:[%s6005 + $0x7c] sm:$0xf]
  %v6052 = vunpack.c.l.b16 %v5991
  %v6053 = vunpack.c.h.b16 %v5991
  %v6054 = vunpack.c.l.b16 %v5992
  %v6055 = vunpack.c.h.b16 %v5992
  %v6056 = vunpack.c.l.b16 %v5993
  %v6057 = vunpack.c.h.b16 %v5993
  %v6058 = vunpack.c.l.b16 %v5994
  %v6059 = vunpack.c.h.b16 %v5994
  %v6060 = vunpack.c.l.b16 %v5995
  %v6061 = vunpack.c.h.b16 %v5995
  %v6062 = vunpack.c.l.b16 %v5996
  %v6063 = vunpack.c.h.b16 %v5996
  %v6064 = vunpack.c.l.b16 %v5997
  %v6065 = vunpack.c.h.b16 %v5997
  %v6066 = vunpack.c.l.b16 %v5998
  %v6067 = vunpack.c.h.b16 %v5998
  %v6068 = vunpack.c.l.b16 %v5999
  %v6069 = vunpack.c.h.b16 %v5999
  %v6070 = vunpack.c.l.b16 %v6000
  %v6071 = vunpack.c.h.b16 %v6000
  %v6072 = vunpack.c.l.b16 %v6001
  %v6073 = vunpack.c.h.b16 %v6001
  %v6074 = vunpack.c.l.b16 %v6002
  %v6075 = vunpack.c.h.b16 %v6002
  %v6076 = vunpack.c.l.b16 %v6003
  %v6077 = vunpack.c.h.b16 %v6003
  %v6078 = vunpack.c.l.b16 %v6004
  %v6079 = vunpack.c.h.b16 %v6004
  %v6080 = vpack.c.b16 %v6054, %v6052
  %v6081 = vpack.c.b16 %v6055, %v6053
  %v6082 = vpack.c.b16 %v6058, %v6056
  %v6083 = vpack.c.b16 %v6059, %v6057
  %v6084 = vpack.c.b16 %v6062, %v6060
  %v6085 = vpack.c.b16 %v6063, %v6061
  %v6086 = vpack.c.b16 %v6066, %v6064
  %v6087 = vpack.c.b16 %v6067, %v6065
  %v6088 = vpack.c.b16 %v6070, %v6068
  %v6089 = vpack.c.b16 %v6071, %v6069
  %v6090 = vpack.c.b16 %v6074, %v6072
  %v6091 = vpack.c.b16 %v6075, %v6073
  %v6092 = vpack.c.b16 %v6078, %v6076
  %v6093 = vpack.c.b16 %v6079, %v6077
  %v6140 = vunpack.c.l.b16 %v6006
  %v6141 = vunpack.c.l.b16 %v6007
  %v6142 = vunpack.c.l.b16 %v6008
  %v6143 = vunpack.c.l.b16 %v6009
  %v6144 = vunpack.c.l.b16 %v6010
  %v6145 = vunpack.c.l.b16 %v6011
  %v6146 = vunpack.c.l.b16 %v6012
  %v6147 = vunpack.c.l.b16 %v6013
  %v6148 = vunpack.c.l.b16 %v6014
  %v6149 = vunpack.c.l.b16 %v6015
  %v6150 = vunpack.c.l.b16 %v6016
  %v6151 = vunpack.c.l.b16 %v6017
  %v6152 = vunpack.c.l.b16 %v6018
  %v6153 = vunpack.c.l.b16 %v6019
  %v6154 = vunpack.c.l.b16 %v6020
  %v6155 = vunpack.c.l.b16 %v6021
  %v6156 = vunpack.c.l.b16 %v6022
  %v6157 = vunpack.c.l.b16 %v6023
  %v6158 = vunpack.c.l.b16 %v6024
  %v6159 = vunpack.c.l.b16 %v6025
  %v6160 = vunpack.c.l.b16 %v6026
  %v6161 = vunpack.c.l.b16 %v6027
  %v6162 = vunpack.c.l.b16 %v6028
  %v6163 = vunpack.c.l.b16 %v6029
  %v6164 = vunpack.c.l.b16 %v6030
  %v6165 = vunpack.c.l.b16 %v6031
  %v6166 = vunpack.c.l.b16 %v6032
  %v6167 = vunpack.c.l.b16 %v6033
  %v6168 = vunpack.c.l.b16 %v6034
  %v6169 = vunpack.c.l.b16 %v6035
  %v6170 = vunpack.c.l.b16 %v6036
  %v6171 = vunpack.c.l.b16 %v6037
  %v6172 = vpack.c.b16 %v6141, %v6140
  %v6173 = vpack.c.b16 %v6143, %v6142
  %v6174 = vpack.c.b16 %v6145, %v6144
  %v6175 = vpack.c.b16 %v6147, %v6146
  %v6176 = vpack.c.b16 %v6149, %v6148
  %v6177 = vpack.c.b16 %v6151, %v6150
  %v6178 = vpack.c.b16 %v6153, %v6152
  %v6179 = vpack.c.b16 %v6155, %v6154
  %v6180 = vpack.c.b16 %v6157, %v6156
  %v6181 = vpack.c.b16 %v6159, %v6158
  %v6182 = vpack.c.b16 %v6161, %v6160
  %v6183 = vpack.c.b16 %v6163, %v6162
  %v6184 = vpack.c.b16 %v6165, %v6164
  %v6185 = vpack.c.b16 %v6167, %v6166
  %v6186 = vpack.c.b16 %v6169, %v6168
  %v6187 = vpack.c.b16 %v6171, %v6170
  %6204 = vmatprep.subr.bf16.mxu0 0
  %6205 = vmatpush1.bf16.msra.mxu0 %v6179
  %6206 = vmatprep.subr.bf16.mxu0 0
  %6207 = vmatpush1.bf16.msra.mxu0 %v6178
  %6208 = vmatprep.subr.bf16.mxu0 0
  %6209 = vmatpush1.bf16.msra.mxu0 %v6177
  %6210 = vmatprep.subr.bf16.mxu0 0
  %6211 = vmatpush1.bf16.msra.mxu0 %v6176
  %6212 = vmatprep.subr.bf16.mxu0 0
  %6213 = vmatpush1.bf16.msra.mxu0 %v6175
  %6214 = vmatprep.subr.bf16.mxu0 0
  %6215 = vmatpush1.bf16.msra.mxu0 %v6174
  %6216 = vmatprep.subr.bf16.mxu0 0
  %6217 = vmatpush1.bf16.msra.mxu0 %v6173
  %6218 = vmatprep.subr.bf16.mxu0 0
  %6219 = vmatpush1.bf16.msra.mxu0 %v6172
  %6220 = vmatprep.subr.bf16.mxu0 0
  %6221 = vmatpush2.bf16.msra.mxu0 %v6187
  %6222 = vmatprep.subr.bf16.mxu0 0
  %6223 = vmatpush2.bf16.msra.mxu0 %v6186
  %6224 = vmatprep.subr.bf16.mxu0 0
  %6225 = vmatpush2.bf16.msra.mxu0 %v6185
  %6226 = vmatprep.subr.bf16.mxu0 0
  %6227 = vmatpush2.bf16.msra.mxu0 %v6184
  %6228 = vmatprep.subr.bf16.mxu0 0
  %6229 = vmatpush2.bf16.msra.mxu0 %v6183
  %6230 = vmatprep.subr.bf16.mxu0 0
  %6231 = vmatpush2.bf16.msra.mxu0 %v6182
  %6232 = vmatprep.subr.bf16.mxu0 0
  %6233 = vmatpush2.bf16.msra.mxu0 %v6181
  %6234 = vmatprep.subr.bf16.mxu0 0
  %6235 = vmatpush2.bf16.msra.mxu0 %v6180
  %6236 = vmatprep.mubr.bf16.mxu0 %v6081
  %6237 = vmatmul.mubr.bf16.gmra.mxu0 %v6080
  %v6238 = vpop.f32.mrf.mxu0
  %v6239 = vadd.f32 0.0, %v6238
  %v6240 = vpop.f32.mrf.mxu0
  %v6241 = vpop.f32.mrf.mxu0
  %v6242 = vadd.f32 0.0, %v6241
  %v6243 = vpop.f32.mrf.mxu0
  %6244 = vmatprep.mubr.bf16.mxu0 %v6083
  %6245 = vmatmul.mubr.bf16.gmra.mxu0 %v6082
  %v6246 = vpop.f32.mrf.mxu0
  %v6247 = vadd.f32 0.0, %v6246
  %v6248 = vpop.f32.mrf.mxu0
  %v6249 = vpop.f32.mrf.mxu0
  %v6250 = vadd.f32 0.0, %v6249
  %v6251 = vpop.f32.mrf.mxu0
  %6252 = vmatprep.mubr.bf16.mxu0 %v6085
  %6253 = vmatmul.mubr.bf16.gmra.mxu0 %v6084
  %v6254 = vpop.f32.mrf.mxu0
  %v6255 = vadd.f32 0.0, %v6254
  %v6256 = vpop.f32.mrf.mxu0
  %v6257 = vpop.f32.mrf.mxu0
  %v6258 = vadd.f32 0.0, %v6257
  %v6259 = vpop.f32.mrf.mxu0
  %6260 = vmatprep.mubr.bf16.mxu0 %v6087
  %6261 = vmatmul.mubr.bf16.gmra.mxu0 %v6086
  %v6262 = vpop.f32.mrf.mxu0
  %v6263 = vadd.f32 0.0, %v6262
  %v6264 = vpop.f32.mrf.mxu0
  %v6265 = vpop.f32.mrf.mxu0
  %v6266 = vadd.f32 0.0, %v6265
  %v6267 = vpop.f32.mrf.mxu0
  %6268 = vmatprep.mubr.bf16.mxu0 %v6089
  %6269 = vmatmul.mubr.bf16.gmra.mxu0 %v6088
  %v6270 = vpop.f32.mrf.mxu0
  %v6271 = vadd.f32 0.0, %v6270
  %v6272 = vpop.f32.mrf.mxu0
  %v6273 = vpop.f32.mrf.mxu0
  %v6274 = vadd.f32 0.0, %v6273
  %v6275 = vpop.f32.mrf.mxu0
  %6276 = vmatprep.mubr.bf16.mxu0 %v6091
  %6277 = vmatmul.mubr.bf16.gmra.mxu0 %v6090
  %v6278 = vpop.f32.mrf.mxu0
  %v6279 = vadd.f32 0.0, %v6278
  %v6280 = vpop.f32.mrf.mxu0
  %v6281 = vpop.f32.mrf.mxu0
  %v6282 = vadd.f32 0.0, %v6281
  %v6283 = vpop.f32.mrf.mxu0
  %6284 = vmatprep.mubr.bf16.mxu0 %v6093
  %6285 = vmatmul.mubr.bf16.gmra.mxu0 %v6092
  %v6286 = vpop.f32.mrf.mxu0
  %v6287 = vadd.f32 0.0, %v6286
  %v6288 = vpop.f32.mrf.mxu0
  %v6289 = vpop.f32.mrf.mxu0
  %v6290 = vadd.f32 0.0, %v6289
  %v6291 = vpop.f32.mrf.mxu0
  %6292 = vdwg.mxu0
  %v6293 = vadd.f32 %v5977, %v6239
  %v6294 = vadd.f32 %v5978, %v6242
  %v6295 = vadd.f32 %v5979, %v6247
  %v6296 = vadd.f32 %v5980, %v6250
  %v6297 = vadd.f32 %v5981, %v6255
  %v6298 = vadd.f32 %v5982, %v6258
  %v6299 = vadd.f32 %v5983, %v6263
  %v6300 = vadd.f32 %v5984, %v6266
  %v6301 = vadd.f32 %v5985, %v6271
  %v6302 = vadd.f32 %v5986, %v6274
  %v6303 = vadd.f32 %v5987, %v6279
  %v6304 = vadd.f32 %v5988, %v6282
  %v6305 = vadd.f32 %v5989, %v6287
  %v6306 = vadd.f32 %v5990, %v6290
  %v6307 = vld [vmem:[%s10] sm:$0x1]
  %v6308 = vld [vmem:[%s11] sm:$0x1]
  %v6309 = vmul.f32 %v6293, %v3135
  %v6310 = vmul.f32 %v6294, %v3140
  %v6311 = vmul.f32 %v6295, %v3145
  %v6312 = vmul.f32 %v6296, %v3150
  %v6313 = vmul.f32 %v6297, %v3155
  %v6314 = vmul.f32 %v6298, %v3160
  %v6315 = vmul.f32 %v6299, %v3165
  %v6316 = vmul.f32 %v6300, %v3170
  %v6317 = vmul.f32 %v6301, %v3175
  %v6318 = vmul.f32 %v6302, %v3180
  %v6319 = vmul.f32 %v6303, %v3185
  %v6320 = vmul.f32 %v6304, %v3190
  %v6321 = vmul.f32 %v6305, %v3195
  %v6322 = vmul.f32 %v6306, %v3200
  %v6323 = vadd.f32 %v6309, %v6310
  %v6324 = vadd.f32 %v6323, %v6311
  %v6325 = vadd.f32 %v6324, %v6312
  %v6326 = vadd.f32 %v6325, %v6313
  %v6327 = vadd.f32 %v6326, %v6314
  %v6328 = vadd.f32 %v6327, %v6315
  %v6329 = vadd.f32 %v6328, %v6316
  %v6330 = vadd.f32 %v6329, %v6317
  %v6331 = vadd.f32 %v6330, %v6318
  %v6332 = vadd.f32 %v6331, %v6319
  %v6333 = vadd.f32 %v6332, %v6320
  %v6334 = vadd.f32 %v6333, %v6321
  %v6335 = vadd.f32 %v6334, %v6322
  %v6336 = vrot.slane %v6335, 4
  %v6337 = vadd.f32 %v6335, %v6336
  %v6338 = vrot.slane %v6337, 2
  %v6339 = vadd.f32 %v6337, %v6338
  %v6340 = vrot.slane %v6339, 1
  %v6341 = vadd.f32 %v6339, %v6340
  %v6342 = vmul.f32 %v6341, 0.03125
  %v6343 = vsub.f32 %v6293, %v6342
  %v6344 = vsub.f32 %v6294, %v6342
  %v6345 = vsub.f32 %v6295, %v6342
  %v6346 = vsub.f32 %v6296, %v6342
  %v6347 = vsub.f32 %v6297, %v6342
  %v6348 = vsub.f32 %v6298, %v6342
  %v6349 = vsub.f32 %v6299, %v6342
  %v6350 = vsub.f32 %v6300, %v6342
  %v6351 = vsub.f32 %v6301, %v6342
  %v6352 = vsub.f32 %v6302, %v6342
  %v6353 = vsub.f32 %v6303, %v6342
  %v6354 = vsub.f32 %v6304, %v6342
  %v6355 = vsub.f32 %v6305, %v6342
  %v6356 = vsub.f32 %v6306, %v6342
  %v6357 = vmul.f32 %v6343, %v6343
  %v6358 = vmul.f32 %v6344, %v6344
  %v6359 = vmul.f32 %v6345, %v6345
  %v6360 = vmul.f32 %v6346, %v6346
  %v6361 = vmul.f32 %v6347, %v6347
  %v6362 = vmul.f32 %v6348, %v6348
  %v6363 = vmul.f32 %v6349, %v6349
  %v6364 = vmul.f32 %v6350, %v6350
  %v6365 = vmul.f32 %v6351, %v6351
  %v6366 = vmul.f32 %v6352, %v6352
  %v6367 = vmul.f32 %v6353, %v6353
  %v6368 = vmul.f32 %v6354, %v6354
  %v6369 = vmul.f32 %v6355, %v6355
  %v6370 = vmul.f32 %v6356, %v6356
  %v6371 = vmul.f32 %v6357, %v3135
  %v6372 = vmul.f32 %v6358, %v3140
  %v6373 = vmul.f32 %v6359, %v3145
  %v6374 = vmul.f32 %v6360, %v3150
  %v6375 = vmul.f32 %v6361, %v3155
  %v6376 = vmul.f32 %v6362, %v3160
  %v6377 = vmul.f32 %v6363, %v3165
  %v6378 = vmul.f32 %v6364, %v3170
  %v6379 = vmul.f32 %v6365, %v3175
  %v6380 = vmul.f32 %v6366, %v3180
  %v6381 = vmul.f32 %v6367, %v3185
  %v6382 = vmul.f32 %v6368, %v3190
  %v6383 = vmul.f32 %v6369, %v3195
  %v6384 = vmul.f32 %v6370, %v3200
  %v6385 = vadd.f32 %v6371, %v6372
  %v6386 = vadd.f32 %v6385, %v6373
  %v6387 = vadd.f32 %v6386, %v6374
  %v6388 = vadd.f32 %v6387, %v6375
  %v6389 = vadd.f32 %v6388, %v6376
  %v6390 = vadd.f32 %v6389, %v6377
  %v6391 = vadd.f32 %v6390, %v6378
  %v6392 = vadd.f32 %v6391, %v6379
  %v6393 = vadd.f32 %v6392, %v6380
  %v6394 = vadd.f32 %v6393, %v6381
  %v6395 = vadd.f32 %v6394, %v6382
  %v6396 = vadd.f32 %v6395, %v6383
  %v6397 = vadd.f32 %v6396, %v6384
  %v6398 = vrot.slane %v6397, 4
  %v6399 = vadd.f32 %v6397, %v6398
  %v6400 = vrot.slane %v6399, 2
  %v6401 = vadd.f32 %v6399, %v6400
  %v6402 = vrot.slane %v6401, 1
  %v6403 = vadd.f32 %v6401, %v6402
  %v6404 = vmul.f32 %v6403, 0.03125
  %v6405 = vadd.f32 %v6404, 1e-05
  %v6406 = vrsqrt.pop %v6405
  %v6407 = vmul.f32 %v6406, %v6307
  %v6408 = vlaneseq
  %v6409 = vshrl.u32 %v6408, 7
  %v6410 = vsub.s32 0, %v6409
  %v6411 = vrot.slane %v6407, %v6410
  %v6412 = vmul.f32 %v6343, %v6411
  %v6413 = vmul.f32 %v6344, %v6411
  %v6414 = vmul.f32 %v6345, %v6411
  %v6415 = vmul.f32 %v6346, %v6411
  %v6416 = vmul.f32 %v6347, %v6411
  %v6417 = vmul.f32 %v6348, %v6411
  %v6418 = vmul.f32 %v6349, %v6411
  %v6419 = vmul.f32 %v6350, %v6411
  %v6420 = vmul.f32 %v6351, %v6411
  %v6421 = vmul.f32 %v6352, %v6411
  %v6422 = vmul.f32 %v6353, %v6411
  %v6423 = vmul.f32 %v6354, %v6411
  %v6424 = vmul.f32 %v6355, %v6411
  %v6425 = vmul.f32 %v6356, %v6411
  %v6427 = vlaneseq
  %v6428 = vshrl.u32 %v6427, 7
  %v6429 = vsub.s32 0, %v6428
  %v6430 = vrot.slane %v6308, %v6429
  %v6432 = vadd.f32 %v6412, %v6430
  %v6433 = vadd.f32 %v6413, %v6430
  %v6434 = vadd.f32 %v6414, %v6430
  %v6435 = vadd.f32 %v6415, %v6430
  %v6436 = vadd.f32 %v6416, %v6430
  %v6437 = vadd.f32 %v6417, %v6430
  %v6438 = vadd.f32 %v6418, %v6430
  %v6439 = vadd.f32 %v6419, %v6430
  %v6440 = vadd.f32 %v6420, %v6430
  %v6441 = vadd.f32 %v6421, %v6430
  %v6442 = vadd.f32 %v6422, %v6430
  %v6443 = vadd.f32 %v6423, %v6430
  %v6444 = vadd.f32 %v6424, %v6430
  %v6445 = vadd.f32 %v6425, %v6430
  %v6446 = vmax.f32 %v6432, 0.0
  %v6447 = vmax.f32 %v6433, 0.0
  %v6448 = vmax.f32 %v6434, 0.0
  %v6449 = vmax.f32 %v6435, 0.0
  %v6450 = vmax.f32 %v6436, 0.0
  %v6451 = vmax.f32 %v6437, 0.0
  %v6452 = vmax.f32 %v6438, 0.0
  %v6453 = vmax.f32 %v6439, 0.0
  %v6454 = vmax.f32 %v6440, 0.0
  %v6455 = vmax.f32 %v6441, 0.0
  %v6456 = vmax.f32 %v6442, 0.0
  %v6457 = vmax.f32 %v6443, 0.0
  %v6458 = vmax.f32 %v6444, 0.0
  %v6459 = vmax.f32 %v6445, 0.0
  %v6460 = vmul.f32 %v6446, %v3135
  %v6461 = vmul.f32 %v6447, %v3140
  %v6462 = vmul.f32 %v6448, %v3145
  %v6463 = vmul.f32 %v6449, %v3150
  %v6464 = vmul.f32 %v6450, %v3155
  %v6465 = vmul.f32 %v6451, %v3160
  %v6466 = vmul.f32 %v6452, %v3165
  %v6467 = vmul.f32 %v6453, %v3170
  %v6468 = vmul.f32 %v6454, %v3175
  %v6469 = vmul.f32 %v6455, %v3180
  %v6470 = vmul.f32 %v6456, %v3185
  %v6471 = vmul.f32 %v6457, %v3190
  %v6472 = vmul.f32 %v6458, %v3195
  %v6473 = vmul.f32 %v6459, %v3200
  %v6474 = vpack.c.bf16 %v6461, %v6460
  %v6475 = vpack.c.bf16 %v6463, %v6462
  %v6476 = vpack.c.bf16 %v6465, %v6464
  %v6477 = vpack.c.bf16 %v6467, %v6466
  %v6478 = vpack.c.bf16 %v6469, %v6468
  %v6479 = vpack.c.bf16 %v6471, %v6470
  %v6480 = vpack.c.bf16 %v6473, %v6472
  %v6481 = vld [vmem:[%s12] sm:$0xf]
  %v6482 = vld [vmem:[%s12 + $0x4] sm:$0xf]
  %v6483 = vld [vmem:[%s12 + $0x8] sm:$0xf]
  %v6484 = vld [vmem:[%s12 + $0xc] sm:$0xf]
  %v6485 = vld [vmem:[%s12 + $0x10] sm:$0xf]
  %v6486 = vld [vmem:[%s12 + $0x14] sm:$0xf]
  %v6487 = vld [vmem:[%s12 + $0x18] sm:$0xf]
  %v6488 = vld [vmem:[%s12 + $0x1c] sm:$0xf]
  %v6489 = vld [vmem:[%s12 + $0x20] sm:$0xf]
  %v6490 = vld [vmem:[%s12 + $0x24] sm:$0xf]
  %v6491 = vld [vmem:[%s12 + $0x28] sm:$0xf]
  %v6492 = vld [vmem:[%s12 + $0x2c] sm:$0xf]
  %v6493 = vld [vmem:[%s12 + $0x30] sm:$0xf]
  %v6494 = vld [vmem:[%s12 + $0x34] sm:$0xf]
  %v6495 = vld [vmem:[%s12 + $0x38] sm:$0xf]
  %v6496 = vld [vmem:[%s12 + $0x3c] sm:$0xf]
  %v6513 = vunpack.c.l.b16 %v6481
  %v6514 = vunpack.c.l.b16 %v6482
  %v6515 = vunpack.c.l.b16 %v6483
  %v6516 = vunpack.c.l.b16 %v6484
  %v6517 = vunpack.c.l.b16 %v6485
  %v6518 = vunpack.c.l.b16 %v6486
  %v6519 = vunpack.c.l.b16 %v6487
  %v6520 = vunpack.c.l.b16 %v6488
  %v6521 = vunpack.c.l.b16 %v6489
  %v6522 = vunpack.c.l.b16 %v6490
  %v6523 = vunpack.c.l.b16 %v6491
  %v6524 = vunpack.c.l.b16 %v6492
  %v6525 = vunpack.c.l.b16 %v6493
  %v6526 = vunpack.c.l.b16 %v6494
  %v6527 = vunpack.c.l.b16 %v6495
  %v6528 = vunpack.c.l.b16 %v6496
  %v6529 = vpack.c.b16 %v6514, %v6513
  %v6530 = vpack.c.b16 %v6516, %v6515
  %v6531 = vpack.c.b16 %v6518, %v6517
  %v6532 = vpack.c.b16 %v6520, %v6519
  %v6533 = vpack.c.b16 %v6522, %v6521
  %v6534 = vpack.c.b16 %v6524, %v6523
  %v6535 = vpack.c.b16 %v6526, %v6525
  %v6536 = vpack.c.b16 %v6528, %v6527
  %6545 = vmatprep.subr.bf16.mxu0 0
  %6546 = vmatpush1.bf16.msra.mxu0 %v6536
  %6547 = vmatprep.subr.bf16.mxu0 0
  %6548 = vmatpush1.bf16.msra.mxu0 %v6535
  %6549 = vmatprep.subr.bf16.mxu0 0
  %6550 = vmatpush1.bf16.msra.mxu0 %v6534
  %6551 = vmatprep.subr.bf16.mxu0 0
  %6552 = vmatpush1.bf16.msra.mxu0 %v6533
  %6553 = vmatprep.subr.bf16.mxu0 0
  %6554 = vmatpush1.bf16.msra.mxu0 %v6532
  %6555 = vmatprep.subr.bf16.mxu0 0
  %6556 = vmatpush1.bf16.msra.mxu0 %v6531
  %6557 = vmatprep.subr.bf16.mxu0 0
  %6558 = vmatpush1.bf16.msra.mxu0 %v6530
  %6559 = vmatprep.subr.bf16.mxu0 0
  %6560 = vmatpush1.bf16.msra.mxu0 %v6529
  %6561 = vmatprep.subr.bf16.mxu0 0
  %6562 = vmatpush2.bf16.msra.mxu0 0
  %6563 = vmatprep.subr.bf16.mxu0 0
  %6564 = vmatpush2.bf16.msra.mxu0 0
  %6565 = vmatprep.subr.bf16.mxu0 0
  %6566 = vmatpush2.bf16.msra.mxu0 0
  %6567 = vmatprep.subr.bf16.mxu0 0
  %6568 = vmatpush2.bf16.msra.mxu0 0
  %6569 = vmatprep.subr.bf16.mxu0 0
  %6570 = vmatpush2.bf16.msra.mxu0 0
  %6571 = vmatprep.subr.bf16.mxu0 0
  %6572 = vmatpush2.bf16.msra.mxu0 0
  %6573 = vmatprep.subr.bf16.mxu0 0
  %6574 = vmatpush2.bf16.msra.mxu0 0
  %6575 = vmatprep.subr.bf16.mxu0 0
  %6576 = vmatpush2.bf16.msra.mxu0 0
  %6577 = vmatprep.mubr.bf16.mxu0 0
  %6578 = vmatmul.mubr.bf16.gmra.mxu0 %v6474
  %v6579 = vpop.f32.mrf.mxu0
  %v6580 = vadd.f32 0.0, %v6579
  %v6581 = vpop.f32.mrf.mxu0
  %v6582 = vpop.f32.mrf.mxu0
  %v6583 = vadd.f32 0.0, %v6582
  %v6584 = vpop.f32.mrf.mxu0
  %6585 = vmatprep.mubr.bf16.mxu0 0
  %6586 = vmatmul.mubr.bf16.gmra.mxu0 %v6475
  %v6587 = vpop.f32.mrf.mxu0
  %v6588 = vadd.f32 0.0, %v6587
  %v6589 = vpop.f32.mrf.mxu0
  %v6590 = vpop.f32.mrf.mxu0
  %v6591 = vadd.f32 0.0, %v6590
  %v6592 = vpop.f32.mrf.mxu0
  %6593 = vmatprep.mubr.bf16.mxu0 0
  %6594 = vmatmul.mubr.bf16.gmra.mxu0 %v6476
  %v6595 = vpop.f32.mrf.mxu0
  %v6596 = vadd.f32 0.0, %v6595
  %v6597 = vpop.f32.mrf.mxu0
  %v6598 = vpop.f32.mrf.mxu0
  %v6599 = vadd.f32 0.0, %v6598
  %v6600 = vpop.f32.mrf.mxu0
  %6601 = vmatprep.mubr.bf16.mxu0 0
  %6602 = vmatmul.mubr.bf16.gmra.mxu0 %v6477
  %v6603 = vpop.f32.mrf.mxu0
  %v6604 = vadd.f32 0.0, %v6603
  %v6605 = vpop.f32.mrf.mxu0
  %v6606 = vpop.f32.mrf.mxu0
  %v6607 = vadd.f32 0.0, %v6606
  %v6608 = vpop.f32.mrf.mxu0
  %6609 = vmatprep.mubr.bf16.mxu0 0
  %6610 = vmatmul.mubr.bf16.gmra.mxu0 %v6478
  %v6611 = vpop.f32.mrf.mxu0
  %v6612 = vadd.f32 0.0, %v6611
  %v6613 = vpop.f32.mrf.mxu0
  %v6614 = vpop.f32.mrf.mxu0
  %v6615 = vadd.f32 0.0, %v6614
  %v6616 = vpop.f32.mrf.mxu0
  %6617 = vmatprep.mubr.bf16.mxu0 0
  %6618 = vmatmul.mubr.bf16.gmra.mxu0 %v6479
  %v6619 = vpop.f32.mrf.mxu0
  %v6620 = vadd.f32 0.0, %v6619
  %v6621 = vpop.f32.mrf.mxu0
  %v6622 = vpop.f32.mrf.mxu0
  %v6623 = vadd.f32 0.0, %v6622
  %v6624 = vpop.f32.mrf.mxu0
  %6625 = vmatprep.mubr.bf16.mxu0 0
  %6626 = vmatmul.mubr.bf16.gmra.mxu0 %v6480
  %v6627 = vpop.f32.mrf.mxu0
  %v6628 = vadd.f32 0.0, %v6627
  %v6629 = vpop.f32.mrf.mxu0
  %v6630 = vpop.f32.mrf.mxu0
  %v6631 = vadd.f32 0.0, %v6630
  %v6632 = vpop.f32.mrf.mxu0
  %6633 = vdwg.mxu0
  %v6634 = vpack.c.bf16 %v6583, %v6580
  %v6635 = vpack.c.bf16 %v6591, %v6588
  %v6636 = vpack.c.bf16 %v6599, %v6596
  %v6637 = vpack.c.bf16 %v6607, %v6604
  %v6638 = vpack.c.bf16 %v6615, %v6612
  %v6639 = vpack.c.bf16 %v6623, %v6620
  %v6640 = vpack.c.bf16 %v6631, %v6628
  %v6648 = vunpack.c.l.b16 %v6634
  %v6649 = vunpack.c.h.b16 %v6634
  %v6650 = vunpack.c.l.b16 %v6635
  %v6651 = vunpack.c.h.b16 %v6635
  %v6652 = vunpack.c.l.b16 %v6636
  %v6653 = vunpack.c.h.b16 %v6636
  %v6654 = vunpack.c.l.b16 %v6637
  %v6655 = vunpack.c.h.b16 %v6637
  %v6656 = vunpack.c.l.b16 %v6638
  %v6657 = vunpack.c.h.b16 %v6638
  %v6658 = vunpack.c.l.b16 %v6639
  %v6659 = vunpack.c.h.b16 %v6639
  %v6660 = vunpack.c.l.b16 %v6640
  %v6661 = vunpack.c.h.b16 %v6640
  %v6662 = vpack.c.b16 %v6648, %v6648
  %v6663 = vpack.c.b16 %v6649, %v6649
  %v6664 = vpack.c.b16 %v6650, %v6650
  %v6665 = vpack.c.b16 %v6651, %v6651
  %v6666 = vpack.c.b16 %v6652, %v6652
  %v6667 = vpack.c.b16 %v6653, %v6653
  %v6668 = vpack.c.b16 %v6654, %v6654
  %v6669 = vpack.c.b16 %v6655, %v6655
  %v6670 = vpack.c.b16 %v6656, %v6656
  %v6671 = vpack.c.b16 %v6657, %v6657
  %v6672 = vpack.c.b16 %v6658, %v6658
  %v6673 = vpack.c.b16 %v6659, %v6659
  %v6674 = vpack.c.b16 %v6660, %v6660
  %v6675 = vpack.c.b16 %v6661, %v6661
  %v6677 = vshrl.u32 %v6662, 16
  %v6679 = vrot.slane %v6677, 6
  %v6680 = vshll.u32 %v6662, 16
  %v6682 = vrot.slane %v6680, 7
  %v6683 = vor.u32 %v6679, %v6682
  %v6684 = vrot.slane %v6683, 4
  %v6686 = vshrl.u32 %v6663, 16
  %v6688 = vrot.slane %v6686, 6
  %v6689 = vshll.u32 %v6663, 16
  %v6691 = vrot.slane %v6689, 7
  %v6692 = vor.u32 %v6688, %v6691
  %v6693 = vsel %vm282, %v6684, %v6692
  %v6694 = vrot.slane %v6692, 4
  %v6696 = vshrl.u32 %v6664, 16
  %v6698 = vrot.slane %v6696, 6
  %v6699 = vshll.u32 %v6664, 16
  %v6701 = vrot.slane %v6699, 7
  %v6702 = vor.u32 %v6698, %v6701
  %v6703 = vsel %vm282, %v6694, %v6702
  %v6704 = vrot.slane %v6702, 4
  %v6706 = vshrl.u32 %v6665, 16
  %v6708 = vrot.slane %v6706, 6
  %v6709 = vshll.u32 %v6665, 16
  %v6711 = vrot.slane %v6709, 7
  %v6712 = vor.u32 %v6708, %v6711
  %v6713 = vsel %vm282, %v6704, %v6712
  %v6714 = vrot.slane %v6712, 4
  %v6716 = vshrl.u32 %v6666, 16
  %v6718 = vrot.slane %v6716, 6
  %v6719 = vshll.u32 %v6666, 16
  %v6721 = vrot.slane %v6719, 7
  %v6722 = vor.u32 %v6718, %v6721
  %v6723 = vsel %vm282, %v6714, %v6722
  %v6724 = vrot.slane %v6722, 4
  %v6726 = vshrl.u32 %v6667, 16
  %v6728 = vrot.slane %v6726, 6
  %v6729 = vshll.u32 %v6667, 16
  %v6731 = vrot.slane %v6729, 7
  %v6732 = vor.u32 %v6728, %v6731
  %v6733 = vsel %vm282, %v6724, %v6732
  %v6734 = vrot.slane %v6732, 4
  %v6736 = vshrl.u32 %v6668, 16
  %v6738 = vrot.slane %v6736, 6
  %v6739 = vshll.u32 %v6668, 16
  %v6741 = vrot.slane %v6739, 7
  %v6742 = vor.u32 %v6738, %v6741
  %v6743 = vsel %vm282, %v6734, %v6742
  %v6744 = vrot.slane %v6742, 4
  %v6746 = vshrl.u32 %v6669, 16
  %v6748 = vrot.slane %v6746, 6
  %v6749 = vshll.u32 %v6669, 16
  %v6751 = vrot.slane %v6749, 7
  %v6752 = vor.u32 %v6748, %v6751
  %v6753 = vsel %vm282, %v6744, %v6752
  %v6754 = vrot.slane %v6752, 4
  %v6756 = vshrl.u32 %v6670, 16
  %v6758 = vrot.slane %v6756, 6
  %v6759 = vshll.u32 %v6670, 16
  %v6761 = vrot.slane %v6759, 7
  %v6762 = vor.u32 %v6758, %v6761
  %v6763 = vsel %vm282, %v6754, %v6762
  %v6764 = vrot.slane %v6762, 4
  %v6766 = vshrl.u32 %v6671, 16
  %v6768 = vrot.slane %v6766, 6
  %v6769 = vshll.u32 %v6671, 16
  %v6771 = vrot.slane %v6769, 7
  %v6772 = vor.u32 %v6768, %v6771
  %v6773 = vsel %vm282, %v6764, %v6772
  %v6774 = vrot.slane %v6772, 4
  %v6776 = vshrl.u32 %v6672, 16
  %v6778 = vrot.slane %v6776, 6
  %v6779 = vshll.u32 %v6672, 16
  %v6781 = vrot.slane %v6779, 7
  %v6782 = vor.u32 %v6778, %v6781
  %v6783 = vsel %vm282, %v6774, %v6782
  %v6784 = vrot.slane %v6782, 4
  %v6786 = vshrl.u32 %v6673, 16
  %v6788 = vrot.slane %v6786, 6
  %v6789 = vshll.u32 %v6673, 16
  %v6791 = vrot.slane %v6789, 7
  %v6792 = vor.u32 %v6788, %v6791
  %v6793 = vsel %vm282, %v6784, %v6792
  %v6794 = vrot.slane %v6792, 4
  %v6796 = vshrl.u32 %v6674, 16
  %v6798 = vrot.slane %v6796, 6
  %v6799 = vshll.u32 %v6674, 16
  %v6801 = vrot.slane %v6799, 7
  %v6802 = vor.u32 %v6798, %v6801
  %v6803 = vsel %vm282, %v6794, %v6802
  %v6804 = vrot.slane %v6802, 4
  %v6806 = vshrl.u32 %v6675, 16
  %v6808 = vrot.slane %v6806, 6
  %v6809 = vshll.u32 %v6675, 16
  %v6811 = vrot.slane %v6809, 7
  %v6812 = vor.u32 %v6808, %v6811
  %v6813 = vsel %vm282, %v6804, %v6812
  %v6814 = vrot.slane %v6812, 4
  %v6830 = vld [vmem:[#allocation2 + $0x10] sm:$0xe]
  %v6831 = vsel %vm439, %v6683, %v6830
  %6832 = vst [vmem:[#allocation2 + $0x10] sm:$0xe] %v6831
  %6833 = vst.msk [vmem:[#allocation2 + $0x18] sm:$0xf] %vm443, %v6693
  %6834 = vst.msk [vmem:[#allocation2 + $0x20] sm:$0xf] %vm443, %v6703
  %6835 = vst.msk [vmem:[#allocation2 + $0x28] sm:$0xf] %vm443, %v6713
  %6836 = vst.msk [vmem:[#allocation2 + $0x30] sm:$0xf] %vm443, %v6723
  %6837 = vst.msk [vmem:[#allocation2 + $0x38] sm:$0xf] %vm443, %v6733
  %6838 = vst.msk [vmem:[#allocation2 + $0x40] sm:$0xf] %vm443, %v6743
  %6839 = vst.msk [vmem:[#allocation2 + $0x48] sm:$0xf] %vm443, %v6753
  %6840 = vst.msk [vmem:[#allocation2 + $0x50] sm:$0xf] %vm443, %v6763
  %6841 = vst.msk [vmem:[#allocation2 + $0x58] sm:$0xf] %vm443, %v6773
  %6842 = vst.msk [vmem:[#allocation2 + $0x60] sm:$0xf] %vm443, %v6783
  %6843 = vst.msk [vmem:[#allocation2 + $0x68] sm:$0xf] %vm443, %v6793
  %6844 = vst.msk [vmem:[#allocation2 + $0x70] sm:$0xf] %vm443, %v6803
  %6845 = vst.msk [vmem:[#allocation2 + $0x78] sm:$0xf] %vm443, %v6813
  %v6846 = vld [vmem:[#allocation2 + $0x80] sm:$0x3]
  %v6847 = vsel %vm458, %v6814, %v6846
  %6848 = vst [vmem:[#allocation2 + $0x80] sm:$0x3] %v6847
  %v6849 = vrot.slane %v6662, 7
  %v6850 = vrot.slane %v6849, 4
  %v6851 = vrot.slane %v6663, 7
  %v6852 = vsel %vm464, %v6850, %v6851
  %v6853 = vrot.slane %v6851, 4
  %v6854 = vrot.slane %v6664, 7
  %v6855 = vsel %vm464, %v6853, %v6854
  %v6856 = vrot.slane %v6854, 4
  %v6857 = vrot.slane %v6665, 7
  %v6858 = vsel %vm464, %v6856, %v6857
  %v6859 = vrot.slane %v6857, 4
  %v6860 = vrot.slane %v6666, 7
  %v6861 = vsel %vm464, %v6859, %v6860
  %v6862 = vrot.slane %v6860, 4
  %v6863 = vrot.slane %v6667, 7
  %v6864 = vsel %vm464, %v6862, %v6863
  %v6865 = vrot.slane %v6863, 4
  %v6866 = vrot.slane %v6668, 7
  %v6867 = vsel %vm464, %v6865, %v6866
  %v6868 = vrot.slane %v6866, 4
  %v6869 = vrot.slane %v6669, 7
  %v6870 = vsel %vm464, %v6868, %v6869
  %v6871 = vrot.slane %v6869, 4
  %v6872 = vrot.slane %v6670, 7
  %v6873 = vsel %vm464, %v6871, %v6872
  %v6874 = vrot.slane %v6872, 4
  %v6875 = vrot.slane %v6671, 7
  %v6876 = vsel %vm464, %v6874, %v6875
  %v6877 = vrot.slane %v6875, 4
  %v6878 = vrot.slane %v6672, 7
  %v6879 = vsel %vm464, %v6877, %v6878
  %v6880 = vrot.slane %v6878, 4
  %v6881 = vrot.slane %v6673, 7
  %v6882 = vsel %vm464, %v6880, %v6881
  %v6883 = vrot.slane %v6881, 4
  %v6884 = vrot.slane %v6674, 7
  %v6885 = vsel %vm464, %v6883, %v6884
  %v6886 = vrot.slane %v6884, 4
  %v6887 = vrot.slane %v6675, 7
  %v6888 = vsel %vm464, %v6886, %v6887
  %v6889 = vrot.slane %v6887, 4
  %6890 = vrot.lane.b32.xlu0 %v6849, 32
  %v6891 = vpop.permute.xlu0 %6890
  %6892 = vrot.lane.b32.xlu0 %v6852, 32
  %v6893 = vpop.permute.xlu0 %6892
  %6894 = vrot.lane.b32.xlu0 %v6855, 32
  %v6895 = vpop.permute.xlu0 %6894
  %6896 = vrot.lane.b32.xlu0 %v6858, 32
  %v6897 = vpop.permute.xlu0 %6896
  %6898 = vrot.lane.b32.xlu0 %v6861, 32
  %v6899 = vpop.permute.xlu0 %6898
  %6900 = vrot.lane.b32.xlu0 %v6864, 32
  %v6901 = vpop.permute.xlu0 %6900
  %6902 = vrot.lane.b32.xlu0 %v6867, 32
  %v6903 = vpop.permute.xlu0 %6902
  %6904 = vrot.lane.b32.xlu0 %v6870, 32
  %v6905 = vpop.permute.xlu0 %6904
  %6906 = vrot.lane.b32.xlu0 %v6873, 32
  %v6907 = vpop.permute.xlu0 %6906
  %6908 = vrot.lane.b32.xlu0 %v6876, 32
  %v6909 = vpop.permute.xlu0 %6908
  %6910 = vrot.lane.b32.xlu0 %v6879, 32
  %v6911 = vpop.permute.xlu0 %6910
  %6912 = vrot.lane.b32.xlu0 %v6882, 32
  %v6913 = vpop.permute.xlu0 %6912
  %6914 = vrot.lane.b32.xlu0 %v6885, 32
  %v6915 = vpop.permute.xlu0 %6914
  %6916 = vrot.lane.b32.xlu0 %v6888, 32
  %v6917 = vpop.permute.xlu0 %6916
  %6918 = vrot.lane.b32.xlu0 %v6889, 32
  %v6919 = vpop.permute.xlu0 %6918
  %6935 = vst.msk [vmem:[#allocation2 + $0x10] sm:$0xe] %vm551, %v6891
  %6936 = vst.msk [vmem:[#allocation2 + $0x18] sm:$0xf] %vm553, %v6893
  %6937 = vst.msk [vmem:[#allocation2 + $0x20] sm:$0xf] %vm553, %v6895
  %6938 = vst.msk [vmem:[#allocation2 + $0x28] sm:$0xf] %vm553, %v6897
  %6939 = vst.msk [vmem:[#allocation2 + $0x30] sm:$0xf] %vm553, %v6899
  %6940 = vst.msk [vmem:[#allocation2 + $0x38] sm:$0xf] %vm553, %v6901
  %6941 = vst.msk [vmem:[#allocation2 + $0x40] sm:$0xf] %vm553, %v6903
  %6942 = vst.msk [vmem:[#allocation2 + $0x48] sm:$0xf] %vm553, %v6905
  %6943 = vst.msk [vmem:[#allocation2 + $0x50] sm:$0xf] %vm553, %v6907
  %6944 = vst.msk [vmem:[#allocation2 + $0x58] sm:$0xf] %vm553, %v6909
  %6945 = vst.msk [vmem:[#allocation2 + $0x60] sm:$0xf] %vm553, %v6911
  %6946 = vst.msk [vmem:[#allocation2 + $0x68] sm:$0xf] %vm553, %v6913
  %6947 = vst.msk [vmem:[#allocation2 + $0x70] sm:$0xf] %vm553, %v6915
  %6948 = vst.msk [vmem:[#allocation2 + $0x78] sm:$0xf] %vm553, %v6917
  %6949 = vst.msk [vmem:[#allocation2 + $0x80] sm:$0x1] %vm567, %v6919
  %v6950 = vrot.slane %v6677, 7
  %v6951 = vor.u32 %v6950, %v6680
  %v6952 = vrot.slane %v6950, 4
  %v6953 = vrot.slane %v6686, 7
  %v6954 = vor.u32 %v6953, %v6689
  %v6955 = vsel %vm571, %v6952, %v6954
  %v6956 = vrot.slane %v6953, 4
  %v6957 = vrot.slane %v6696, 7
  %v6958 = vor.u32 %v6957, %v6699
  %v6959 = vsel %vm571, %v6956, %v6958
  %v6960 = vrot.slane %v6957, 4
  %v6961 = vrot.slane %v6706, 7
  %v6962 = vor.u32 %v6961, %v6709
  %v6963 = vsel %vm571, %v6960, %v6962
  %v6964 = vrot.slane %v6961, 4
  %v6965 = vrot.slane %v6716, 7
  %v6966 = vor.u32 %v6965, %v6719
  %v6967 = vsel %vm571, %v6964, %v6966
  %v6968 = vrot.slane %v6965, 4
  %v6969 = vrot.slane %v6726, 7
  %v6970 = vor.u32 %v6969, %v6729
  %v6971 = vsel %vm571, %v6968, %v6970
  %v6972 = vrot.slane %v6969, 4
  %v6973 = vrot.slane %v6736, 7
  %v6974 = vor.u32 %v6973, %v6739
  %v6975 = vsel %vm571, %v6972, %v6974
  %v6976 = vrot.slane %v6973, 4
  %v6977 = vrot.slane %v6746, 7
  %v6978 = vor.u32 %v6977, %v6749
  %v6979 = vsel %vm571, %v6976, %v6978
  %v6980 = vrot.slane %v6977, 4
  %v6981 = vrot.slane %v6756, 7
  %v6982 = vor.u32 %v6981, %v6759
  %v6983 = vsel %vm571, %v6980, %v6982
  %v6984 = vrot.slane %v6981, 4
  %v6985 = vrot.slane %v6766, 7
  %v6986 = vor.u32 %v6985, %v6769
  %v6987 = vsel %vm571, %v6984, %v6986
  %v6988 = vrot.slane %v6985, 4
  %v6989 = vrot.slane %v6776, 7
  %v6990 = vor.u32 %v6989, %v6779
  %v6991 = vsel %vm571, %v6988, %v6990
  %v6992 = vrot.slane %v6989, 4
  %v6993 = vrot.slane %v6786, 7
  %v6994 = vor.u32 %v6993, %v6789
  %v6995 = vsel %vm571, %v6992, %v6994
  %v6996 = vrot.slane %v6993, 4
  %v6997 = vrot.slane %v6796, 7
  %v6998 = vor.u32 %v6997, %v6799
  %v6999 = vsel %vm571, %v6996, %v6998
  %v7000 = vrot.slane %v6997, 4
  %v7001 = vrot.slane %v6806, 7
  %v7002 = vor.u32 %v7001, %v6809
  %v7003 = vsel %vm571, %v7000, %v7002
  %v7004 = vrot.slane %v7001, 4
  %7005 = vrot.lane.b32.xlu0 %v6951, 64
  %v7006 = vpop.permute.xlu0 %7005
  %7007 = vrot.lane.b32.xlu0 %v6955, 64
  %v7008 = vpop.permute.xlu0 %7007
  %7009 = vrot.lane.b32.xlu0 %v6959, 64
  %v7010 = vpop.permute.xlu0 %7009
  %7011 = vrot.lane.b32.xlu0 %v6963, 64
  %v7012 = vpop.permute.xlu0 %7011
  %7013 = vrot.lane.b32.xlu0 %v6967, 64
  %v7014 = vpop.permute.xlu0 %7013
  %7015 = vrot.lane.b32.xlu0 %v6971, 64
  %v7016 = vpop.permute.xlu0 %7015
  %7017 = vrot.lane.b32.xlu0 %v6975, 64
  %v7018 = vpop.permute.xlu0 %7017
  %7019 = vrot.lane.b32.xlu0 %v6979, 64
  %v7020 = vpop.permute.xlu0 %7019
  %7021 = vrot.lane.b32.xlu0 %v6983, 64
  %v7022 = vpop.permute.xlu0 %7021
  %7023 = vrot.lane.b32.xlu0 %v6987, 64
  %v7024 = vpop.permute.xlu0 %7023
  %7025 = vrot.lane.b32.xlu0 %v6991, 64
  %v7026 = vpop.permute.xlu0 %7025
  %7027 = vrot.lane.b32.xlu0 %v6995, 64
  %v7028 = vpop.permute.xlu0 %7027
  %7029 = vrot.lane.b32.xlu0 %v6999, 64
  %v7030 = vpop.permute.xlu0 %7029
  %7031 = vrot.lane.b32.xlu0 %v7003, 64
  %v7032 = vpop.permute.xlu0 %7031
  %7033 = vrot.lane.b32.xlu0 %v7004, 64
  %v7034 = vpop.permute.xlu0 %7033
  %v7050 = vld [vmem:[#allocation2 + $0x10] sm:$0xf]
  %v7051 = vsel %vm674, %v7006, %v7050
  %7052 = vst [vmem:[#allocation2 + $0x10] sm:$0xf] %v7051
  %7053 = vst.msk [vmem:[#allocation2 + $0x18] sm:$0xf] %vm678, %v7008
  %7054 = vst.msk [vmem:[#allocation2 + $0x20] sm:$0xf] %vm678, %v7010
  %7055 = vst.msk [vmem:[#allocation2 + $0x28] sm:$0xf] %vm678, %v7012
  %7056 = vst.msk [vmem:[#allocation2 + $0x30] sm:$0xf] %vm678, %v7014
  %7057 = vst.msk [vmem:[#allocation2 + $0x38] sm:$0xf] %vm678, %v7016
  %7058 = vst.msk [vmem:[#allocation2 + $0x40] sm:$0xf] %vm678, %v7018
  %7059 = vst.msk [vmem:[#allocation2 + $0x48] sm:$0xf] %vm678, %v7020
  %7060 = vst.msk [vmem:[#allocation2 + $0x50] sm:$0xf] %vm678, %v7022
  %7061 = vst.msk [vmem:[#allocation2 + $0x58] sm:$0xf] %vm678, %v7024
  %7062 = vst.msk [vmem:[#allocation2 + $0x60] sm:$0xf] %vm678, %v7026
  %7063 = vst.msk [vmem:[#allocation2 + $0x68] sm:$0xf] %vm678, %v7028
  %7064 = vst.msk [vmem:[#allocation2 + $0x70] sm:$0xf] %vm678, %v7030
  %7065 = vst.msk [vmem:[#allocation2 + $0x78] sm:$0xf] %vm678, %v7032
  %v7066 = vld [vmem:[#allocation2 + $0x80] sm:$0x1]
  %v7067 = vsel %vm693, %v7034, %v7066
  %7068 = vst [vmem:[#allocation2 + $0x80] sm:$0x1] %v7067
  %7069 = vrot.lane.b32.xlu0 %v6662, 96
  %v7070 = vpop.permute.xlu0 %7069
  %7071 = vrot.lane.b32.xlu0 %v6663, 96
  %v7072 = vpop.permute.xlu0 %7071
  %7073 = vrot.lane.b32.xlu0 %v6664, 96
  %v7074 = vpop.permute.xlu0 %7073
  %7075 = vrot.lane.b32.xlu0 %v6665, 96
  %v7076 = vpop.permute.xlu0 %7075
  %7077 = vrot.lane.b32.xlu0 %v6666, 96
  %v7078 = vpop.permute.xlu0 %7077
  %7079 = vrot.lane.b32.xlu0 %v6667, 96
  %v7080 = vpop.permute.xlu0 %7079
  %7081 = vrot.lane.b32.xlu0 %v6668, 96
  %v7082 = vpop.permute.xlu0 %7081
  %7083 = vrot.lane.b32.xlu0 %v6669, 96
  %v7084 = vpop.permute.xlu0 %7083
  %7085 = vrot.lane.b32.xlu0 %v6670, 96
  %v7086 = vpop.permute.xlu0 %7085
  %7087 = vrot.lane.b32.xlu0 %v6671, 96
  %v7088 = vpop.permute.xlu0 %7087
  %7089 = vrot.lane.b32.xlu0 %v6672, 96
  %v7090 = vpop.permute.xlu0 %7089
  %7091 = vrot.lane.b32.xlu0 %v6673, 96
  %v7092 = vpop.permute.xlu0 %7091
  %7093 = vrot.lane.b32.xlu0 %v6674, 96
  %v7094 = vpop.permute.xlu0 %7093
  %7095 = vrot.lane.b32.xlu0 %v6675, 96
  %v7096 = vpop.permute.xlu0 %7095
  %7111 = vst.msk [vmem:[#allocation2 + $0x10] sm:$0xf] %vm739, %v7070
  %7112 = vst.msk [vmem:[#allocation2 + $0x18] sm:$0xf] %vm739, %v7072
  %7113 = vst.msk [vmem:[#allocation2 + $0x20] sm:$0xf] %vm739, %v7074
  %7114 = vst.msk [vmem:[#allocation2 + $0x28] sm:$0xf] %vm739, %v7076
  %7115 = vst.msk [vmem:[#allocation2 + $0x30] sm:$0xf] %vm739, %v7078
  %7116 = vst.msk [vmem:[#allocation2 + $0x38] sm:$0xf] %vm739, %v7080
  %7117 = vst.msk [vmem:[#allocation2 + $0x40] sm:$0xf] %vm739, %v7082
  %7118 = vst.msk [vmem:[#allocation2 + $0x48] sm:$0xf] %vm739, %v7084
  %7119 = vst.msk [vmem:[#allocation2 + $0x50] sm:$0xf] %vm739, %v7086
  %7120 = vst.msk [vmem:[#allocation2 + $0x58] sm:$0xf] %vm739, %v7088
  %7121 = vst.msk [vmem:[#allocation2 + $0x60] sm:$0xf] %vm739, %v7090
  %7122 = vst.msk [vmem:[#allocation2 + $0x68] sm:$0xf] %vm739, %v7092
  %7123 = vst.msk [vmem:[#allocation2 + $0x70] sm:$0xf] %vm739, %v7094
  %7124 = vst.msk [vmem:[#allocation2 + $0x78] sm:$0xf] %vm739, %v7096
  %v7125 = vrot.slane %v6680, 5
  %v7126 = vrot.slane %v6677, 4
  %v7127 = vor.u32 %v7126, %v7125
  %v7128 = vrot.slane %v7127, 4
  %v7129 = vrot.slane %v6689, 5
  %v7130 = vsel %vm756, %v7128, %v7129
  %v7131 = vrot.slane %v6686, 4
  %v7132 = vor.u32 %v7131, %v7129
  %v7133 = vrot.slane %v7132, 4
  %v7134 = vrot.slane %v6699, 5
  %v7135 = vsel %vm756, %v7133, %v7134
  %v7136 = vrot.slane %v6696, 4
  %v7137 = vor.u32 %v7136, %v7134
  %v7138 = vrot.slane %v7137, 4
  %v7139 = vrot.slane %v6709, 5
  %v7140 = vsel %vm756, %v7138, %v7139
  %v7141 = vrot.slane %v6706, 4
  %v7142 = vor.u32 %v7141, %v7139
  %v7143 = vrot.slane %v7142, 4
  %v7144 = vrot.slane %v6719, 5
  %v7145 = vsel %vm756, %v7143, %v7144
  %v7146 = vrot.slane %v6716, 4
  %v7147 = vor.u32 %v7146, %v7144
  %v7148 = vrot.slane %v7147, 4
  %v7149 = vrot.slane %v6729, 5
  %v7150 = vsel %vm756, %v7148, %v7149
  %v7151 = vrot.slane %v6726, 4
  %v7152 = vor.u32 %v7151, %v7149
  %v7153 = vrot.slane %v7152, 4
  %v7154 = vrot.slane %v6739, 5
  %v7155 = vsel %vm756, %v7153, %v7154
  %v7156 = vrot.slane %v6736, 4
  %v7157 = vor.u32 %v7156, %v7154
  %v7158 = vrot.slane %v7157, 4
  %v7159 = vrot.slane %v6749, 5
  %v7160 = vsel %vm756, %v7158, %v7159
  %v7161 = vrot.slane %v6746, 4
  %v7162 = vor.u32 %v7161, %v7159
  %v7163 = vrot.slane %v7162, 4
  %v7164 = vrot.slane %v6759, 5
  %v7165 = vsel %vm756, %v7163, %v7164
  %v7166 = vrot.slane %v6756, 4
  %v7167 = vor.u32 %v7166, %v7164
  %v7168 = vrot.slane %v7167, 4
  %v7169 = vrot.slane %v6769, 5
  %v7170 = vsel %vm756, %v7168, %v7169
  %v7171 = vrot.slane %v6766, 4
  %v7172 = vor.u32 %v7171, %v7169
  %v7173 = vrot.slane %v7172, 4
  %v7174 = vrot.slane %v6779, 5
  %v7175 = vsel %vm756, %v7173, %v7174
  %v7176 = vrot.slane %v6776, 4
  %v7177 = vor.u32 %v7176, %v7174
  %v7178 = vrot.slane %v7177, 4
  %v7179 = vrot.slane %v6789, 5
  %v7180 = vsel %vm756, %v7178, %v7179
  %v7181 = vrot.slane %v6786, 4
  %v7182 = vor.u32 %v7181, %v7179
  %v7183 = vrot.slane %v7182, 4
  %v7184 = vrot.slane %v6799, 5
  %v7185 = vsel %vm756, %v7183, %v7184
  %v7186 = vrot.slane %v6796, 4
  %v7187 = vor.u32 %v7186, %v7184
  %v7188 = vrot.slane %v7187, 4
  %v7189 = vrot.slane %v6809, 5
  %v7190 = vsel %vm756, %v7188, %v7189
  %v7191 = vrot.slane %v6806, 4
  %v7192 = vor.u32 %v7191, %v7189
  %v7193 = vrot.slane %v7192, 4
  %v7209 = vld [vmem:[#allocation2 + $0xc] sm:$0x8]
  %v7210 = vsel %vm843, %v7125, %v7209
  %7211 = vst [vmem:[#allocation2 + $0xc] sm:$0x8] %v7210
  %7212 = vst.msk [vmem:[#allocation2 + $0x14] sm:$0xf] %vm443, %v7130
  %7213 = vst.msk [vmem:[#allocation2 + $0x1c] sm:$0xf] %vm443, %v7135
  %7214 = vst.msk [vmem:[#allocation2 + $0x24] sm:$0xf] %vm443, %v7140
  %7215 = vst.msk [vmem:[#allocation2 + $0x2c] sm:$0xf] %vm443, %v7145
  %7216 = vst.msk [vmem:[#allocation2 + $0x34] sm:$0xf] %vm443, %v7150
  %7217 = vst.msk [vmem:[#allocation2 + $0x3c] sm:$0xf] %vm443, %v7155
  %7218 = vst.msk [vmem:[#allocation2 + $0x44] sm:$0xf] %vm443, %v7160
  %7219 = vst.msk [vmem:[#allocation2 + $0x4c] sm:$0xf] %vm443, %v7165
  %7220 = vst.msk [vmem:[#allocation2 + $0x54] sm:$0xf] %vm443, %v7170
  %7221 = vst.msk [vmem:[#allocation2 + $0x5c] sm:$0xf] %vm443, %v7175
  %7222 = vst.msk [vmem:[#allocation2 + $0x64] sm:$0xf] %vm443, %v7180
  %7223 = vst.msk [vmem:[#allocation2 + $0x6c] sm:$0xf] %vm443, %v7185
  %7224 = vst.msk [vmem:[#allocation2 + $0x74] sm:$0xf] %vm443, %v7190
  %v7225 = vld [vmem:[#allocation2 + $0x7c] sm:$0xf]
  %v7226 = vsel %vm861, %v7193, %v7225
  %7227 = vst [vmem:[#allocation2 + $0x7c] sm:$0xf] %v7226
  %v7228 = vrot.slane %v6662, 5
  %v7229 = vrot.slane %v7228, 4
  %v7230 = vrot.slane %v6663, 5
  %v7231 = vsel %vm867, %v7229, %v7230
  %v7232 = vrot.slane %v7230, 4
  %v7233 = vrot.slane %v6664, 5
  %v7234 = vsel %vm867, %v7232, %v7233
  %v7235 = vrot.slane %v7233, 4
  %v7236 = vrot.slane %v6665, 5
  %v7237 = vsel %vm867, %v7235, %v7236
  %v7238 = vrot.slane %v7236, 4
  %v7239 = vrot.slane %v6666, 5
  %v7240 = vsel %vm867, %v7238, %v7239
  %v7241 = vrot.slane %v7239, 4
  %v7242 = vrot.slane %v6667, 5
  %v7243 = vsel %vm867, %v7241, %v7242
  %v7244 = vrot.slane %v7242, 4
  %v7245 = vrot.slane %v6668, 5
  %v7246 = vsel %vm867, %v7244, %v7245
  %v7247 = vrot.slane %v7245, 4
  %v7248 = vrot.slane %v6669, 5
  %v7249 = vsel %vm867, %v7247, %v7248
  %v7250 = vrot.slane %v7248, 4
  %v7251 = vrot.slane %v6670, 5
  %v7252 = vsel %vm867, %v7250, %v7251
  %v7253 = vrot.slane %v7251, 4
  %v7254 = vrot.slane %v6671, 5
  %v7255 = vsel %vm867, %v7253, %v7254
  %v7256 = vrot.slane %v7254, 4
  %v7257 = vrot.slane %v6672, 5
  %v7258 = vsel %vm867, %v7256, %v7257
  %v7259 = vrot.slane %v7257, 4
  %v7260 = vrot.slane %v6673, 5
  %v7261 = vsel %vm867, %v7259, %v7260
  %v7262 = vrot.slane %v7260, 4
  %v7263 = vrot.slane %v6674, 5
  %v7264 = vsel %vm867, %v7262, %v7263
  %v7265 = vrot.slane %v7263, 4
  %v7266 = vrot.slane %v6675, 5
  %v7267 = vsel %vm867, %v7265, %v7266
  %v7268 = vrot.slane %v7266, 4
  %7269 = vrot.lane.b32.xlu0 %v7228, 32
  %v7270 = vpop.permute.xlu0 %7269
  %7271 = vrot.lane.b32.xlu0 %v7231, 32
  %v7272 = vpop.permute.xlu0 %7271
  %7273 = vrot.lane.b32.xlu0 %v7234, 32
  %v7274 = vpop.permute.xlu0 %7273
  %7275 = vrot.lane.b32.xlu0 %v7237, 32
  %v7276 = vpop.permute.xlu0 %7275
  %7277 = vrot.lane.b32.xlu0 %v7240, 32
  %v7278 = vpop.permute.xlu0 %7277
  %7279 = vrot.lane.b32.xlu0 %v7243, 32
  %v7280 = vpop.permute.xlu0 %7279
  %7281 = vrot.lane.b32.xlu0 %v7246, 32
  %v7282 = vpop.permute.xlu0 %7281
  %7283 = vrot.lane.b32.xlu0 %v7249, 32
  %v7284 = vpop.permute.xlu0 %7283
  %7285 = vrot.lane.b32.xlu0 %v7252, 32
  %v7286 = vpop.permute.xlu0 %7285
  %7287 = vrot.lane.b32.xlu0 %v7255, 32
  %v7288 = vpop.permute.xlu0 %7287
  %7289 = vrot.lane.b32.xlu0 %v7258, 32
  %v7290 = vpop.permute.xlu0 %7289
  %7291 = vrot.lane.b32.xlu0 %v7261, 32
  %v7292 = vpop.permute.xlu0 %7291
  %7293 = vrot.lane.b32.xlu0 %v7264, 32
  %v7294 = vpop.permute.xlu0 %7293
  %7295 = vrot.lane.b32.xlu0 %v7267, 32
  %v7296 = vpop.permute.xlu0 %7295
  %7297 = vrot.lane.b32.xlu0 %v7268, 32
  %v7298 = vpop.permute.xlu0 %7297
  %7314 = vst.msk [vmem:[#allocation2 + $0xc] sm:$0x8] %vm954, %v7270
  %7315 = vst.msk [vmem:[#allocation2 + $0x14] sm:$0xf] %vm553, %v7272
  %7316 = vst.msk [vmem:[#allocation2 + $0x1c] sm:$0xf] %vm553, %v7274
  %7317 = vst.msk [vmem:[#allocation2 + $0x24] sm:$0xf] %vm553, %v7276
  %7318 = vst.msk [vmem:[#allocation2 + $0x2c] sm:$0xf] %vm553, %v7278
  %7319 = vst.msk [vmem:[#allocation2 + $0x34] sm:$0xf] %vm553, %v7280
  %7320 = vst.msk [vmem:[#allocation2 + $0x3c] sm:$0xf] %vm553, %v7282
  %7321 = vst.msk [vmem:[#allocation2 + $0x44] sm:$0xf] %vm553, %v7284
  %7322 = vst.msk [vmem:[#allocation2 + $0x4c] sm:$0xf] %vm553, %v7286
  %7323 = vst.msk [vmem:[#allocation2 + $0x54] sm:$0xf] %vm553, %v7288
  %7324 = vst.msk [vmem:[#allocation2 + $0x5c] sm:$0xf] %vm553, %v7290
  %7325 = vst.msk [vmem:[#allocation2 + $0x64] sm:$0xf] %vm553, %v7292
  %7326 = vst.msk [vmem:[#allocation2 + $0x6c] sm:$0xf] %vm553, %v7294
  %7327 = vst.msk [vmem:[#allocation2 + $0x74] sm:$0xf] %vm553, %v7296
  %7328 = vst.msk [vmem:[#allocation2 + $0x7c] sm:$0x7] %vm969, %v7298
  %v7329 = vrot.slane %v6677, 5
  %v7330 = vrot.slane %v6680, 6
  %v7331 = vor.u32 %v7329, %v7330
  %v7332 = vrot.slane %v7331, 4
  %v7333 = vrot.slane %v6686, 5
  %v7334 = vrot.slane %v6689, 6
  %v7335 = vor.u32 %v7333, %v7334
  %v7336 = vsel %vm973, %v7332, %v7335
  %v7337 = vrot.slane %v7335, 4
  %v7338 = vrot.slane %v6696, 5
  %v7339 = vrot.slane %v6699, 6
  %v7340 = vor.u32 %v7338, %v7339
  %v7341 = vsel %vm973, %v7337, %v7340
  %v7342 = vrot.slane %v7340, 4
  %v7343 = vrot.slane %v6706, 5
  %v7344 = vrot.slane %v6709, 6
  %v7345 = vor.u32 %v7343, %v7344
  %v7346 = vsel %vm973, %v7342, %v7345
  %v7347 = vrot.slane %v7345, 4
  %v7348 = vrot.slane %v6716, 5
  %v7349 = vrot.slane %v6719, 6
  %v7350 = vor.u32 %v7348, %v7349
  %v7351 = vsel %vm973, %v7347, %v7350
  %v7352 = vrot.slane %v7350, 4
  %v7353 = vrot.slane %v6726, 5
  %v7354 = vrot.slane %v6729, 6
  %v7355 = vor.u32 %v7353, %v7354
  %v7356 = vsel %vm973, %v7352, %v7355
  %v7357 = vrot.slane %v7355, 4
  %v7358 = vrot.slane %v6736, 5
  %v7359 = vrot.slane %v6739, 6
  %v7360 = vor.u32 %v7358, %v7359
  %v7361 = vsel %vm973, %v7357, %v7360
  %v7362 = vrot.slane %v7360, 4
  %v7363 = vrot.slane %v6746, 5
  %v7364 = vrot.slane %v6749, 6
  %v7365 = vor.u32 %v7363, %v7364
  %v7366 = vsel %vm973, %v7362, %v7365
  %v7367 = vrot.slane %v7365, 4
  %v7368 = vrot.slane %v6756, 5
  %v7369 = vrot.slane %v6759, 6
  %v7370 = vor.u32 %v7368, %v7369
  %v7371 = vsel %vm973, %v7367, %v7370
  %v7372 = vrot.slane %v7370, 4
  %v7373 = vrot.slane %v6766, 5
  %v7374 = vrot.slane %v6769, 6
  %v7375 = vor.u32 %v7373, %v7374
  %v7376 = vsel %vm973, %v7372, %v7375
  %v7377 = vrot.slane %v7375, 4
  %v7378 = vrot.slane %v6776, 5
  %v7379 = vrot.slane %v6779, 6
  %v7380 = vor.u32 %v7378, %v7379
  %v7381 = vsel %vm973, %v7377, %v7380
  %v7382 = vrot.slane %v7380, 4
  %v7383 = vrot.slane %v6786, 5
  %v7384 = vrot.slane %v6789, 6
  %v7385 = vor.u32 %v7383, %v7384
  %v7386 = vsel %vm973, %v7382, %v7385
  %v7387 = vrot.slane %v7385, 4
  %v7388 = vrot.slane %v6796, 5
  %v7389 = vrot.slane %v6799, 6
  %v7390 = vor.u32 %v7388, %v7389
  %v7391 = vsel %vm973, %v7387, %v7390
  %v7392 = vrot.slane %v7390, 4
  %v7393 = vrot.slane %v6806, 5
  %v7394 = vrot.slane %v6809, 6
  %v7395 = vor.u32 %v7393, %v7394
  %v7396 = vsel %vm973, %v7392, %v7395
  %v7397 = vrot.slane %v7395, 4
  %7398 = vrot.lane.b32.xlu0 %v7331, 64
  %v7399 = vpop.permute.xlu0 %7398
  %7400 = vrot.lane.b32.xlu0 %v7336, 64
  %v7401 = vpop.permute.xlu0 %7400
  %7402 = vrot.lane.b32.xlu0 %v7341, 64
  %v7403 = vpop.permute.xlu0 %7402
  %7404 = vrot.lane.b32.xlu0 %v7346, 64
  %v7405 = vpop.permute.xlu0 %7404
  %7406 = vrot.lane.b32.xlu0 %v7351, 64
  %v7407 = vpop.permute.xlu0 %7406
  %7408 = vrot.lane.b32.xlu0 %v7356, 64
  %v7409 = vpop.permute.xlu0 %7408
  %7410 = vrot.lane.b32.xlu0 %v7361, 64
  %v7411 = vpop.permute.xlu0 %7410
  %7412 = vrot.lane.b32.xlu0 %v7366, 64
  %v7413 = vpop.permute.xlu0 %7412
  %7414 = vrot.lane.b32.xlu0 %v7371, 64
  %v7415 = vpop.permute.xlu0 %7414
  %7416 = vrot.lane.b32.xlu0 %v7376, 64
  %v7417 = vpop.permute.xlu0 %7416
  %7418 = vrot.lane.b32.xlu0 %v7381, 64
  %v7419 = vpop.permute.xlu0 %7418
  %7420 = vrot.lane.b32.xlu0 %v7386, 64
  %v7421 = vpop.permute.xlu0 %7420
  %7422 = vrot.lane.b32.xlu0 %v7391, 64
  %v7423 = vpop.permute.xlu0 %7422
  %7424 = vrot.lane.b32.xlu0 %v7396, 64
  %v7425 = vpop.permute.xlu0 %7424
  %7426 = vrot.lane.b32.xlu0 %v7397, 64
  %v7427 = vpop.permute.xlu0 %7426
  %v7443 = vld [vmem:[#allocation2 + $0xc] sm:$0xc]
  %v7444 = vsel %vm1090, %v7399, %v7443
  %7445 = vst [vmem:[#allocation2 + $0xc] sm:$0xc] %v7444
  %7446 = vst.msk [vmem:[#allocation2 + $0x14] sm:$0xf] %vm678, %v7401
  %7447 = vst.msk [vmem:[#allocation2 + $0x1c] sm:$0xf] %vm678, %v7403
  %7448 = vst.msk [vmem:[#allocation2 + $0x24] sm:$0xf] %vm678, %v7405
  %7449 = vst.msk [vmem:[#allocation2 + $0x2c] sm:$0xf] %vm678, %v7407
  %7450 = vst.msk [vmem:[#allocation2 + $0x34] sm:$0xf] %vm678, %v7409
  %7451 = vst.msk [vmem:[#allocation2 + $0x3c] sm:$0xf] %vm678, %v7411
  %7452 = vst.msk [vmem:[#allocation2 + $0x44] sm:$0xf] %vm678, %v7413
  %7453 = vst.msk [vmem:[#allocation2 + $0x4c] sm:$0xf] %vm678, %v7415
  %7454 = vst.msk [vmem:[#allocation2 + $0x54] sm:$0xf] %vm678, %v7417
  %7455 = vst.msk [vmem:[#allocation2 + $0x5c] sm:$0xf] %vm678, %v7419
  %7456 = vst.msk [vmem:[#allocation2 + $0x64] sm:$0xf] %vm678, %v7421
  %7457 = vst.msk [vmem:[#allocation2 + $0x6c] sm:$0xf] %vm678, %v7423
  %7458 = vst.msk [vmem:[#allocation2 + $0x74] sm:$0xf] %vm678, %v7425
  %v7459 = vld [vmem:[#allocation2 + $0x7c] sm:$0x7]
  %v7460 = vsel %vm1108, %v7427, %v7459
  %7461 = vst [vmem:[#allocation2 + $0x7c] sm:$0x7] %v7460
  %v7462 = vrot.slane %v6662, 6
  %v7463 = vrot.slane %v7462, 4
  %v7464 = vrot.slane %v6663, 6
  %v7465 = vsel %vm1114, %v7463, %v7464
  %v7466 = vrot.slane %v7464, 4
  %v7467 = vrot.slane %v6664, 6
  %v7468 = vsel %vm1114, %v7466, %v7467
  %v7469 = vrot.slane %v7467, 4
  %v7470 = vrot.slane %v6665, 6
  %v7471 = vsel %vm1114, %v7469, %v7470
  %v7472 = vrot.slane %v7470, 4
  %v7473 = vrot.slane %v6666, 6
  %v7474 = vsel %vm1114, %v7472, %v7473
  %v7475 = vrot.slane %v7473, 4
  %v7476 = vrot.slane %v6667, 6
  %v7477 = vsel %vm1114, %v7475, %v7476
  %v7478 = vrot.slane %v7476, 4
  %v7479 = vrot.slane %v6668, 6
  %v7480 = vsel %vm1114, %v7478, %v7479
  %v7481 = vrot.slane %v7479, 4
  %v7482 = vrot.slane %v6669, 6
  %v7483 = vsel %vm1114, %v7481, %v7482
  %v7484 = vrot.slane %v7482, 4
  %v7485 = vrot.slane %v6670, 6
  %v7486 = vsel %vm1114, %v7484, %v7485
  %v7487 = vrot.slane %v7485, 4
  %v7488 = vrot.slane %v6671, 6
  %v7489 = vsel %vm1114, %v7487, %v7488
  %v7490 = vrot.slane %v7488, 4
  %v7491 = vrot.slane %v6672, 6
  %v7492 = vsel %vm1114, %v7490, %v7491
  %v7493 = vrot.slane %v7491, 4
  %v7494 = vrot.slane %v6673, 6
  %v7495 = vsel %vm1114, %v7493, %v7494
  %v7496 = vrot.slane %v7494, 4
  %v7497 = vrot.slane %v6674, 6
  %v7498 = vsel %vm1114, %v7496, %v7497
  %v7499 = vrot.slane %v7497, 4
  %v7500 = vrot.slane %v6675, 6
  %v7501 = vsel %vm1114, %v7499, %v7500
  %v7502 = vrot.slane %v7500, 4
  %7503 = vrot.lane.b32.xlu0 %v7462, 96
  %v7504 = vpop.permute.xlu0 %7503
  %7505 = vrot.lane.b32.xlu0 %v7465, 96
  %v7506 = vpop.permute.xlu0 %7505
  %7507 = vrot.lane.b32.xlu0 %v7468, 96
  %v7508 = vpop.permute.xlu0 %7507
  %7509 = vrot.lane.b32.xlu0 %v7471, 96
  %v7510 = vpop.permute.xlu0 %7509
  %7511 = vrot.lane.b32.xlu0 %v7474, 96
  %v7512 = vpop.permute.xlu0 %7511
  %7513 = vrot.lane.b32.xlu0 %v7477, 96
  %v7514 = vpop.permute.xlu0 %7513
  %7515 = vrot.lane.b32.xlu0 %v7480, 96
  %v7516 = vpop.permute.xlu0 %7515
  %7517 = vrot.lane.b32.xlu0 %v7483, 96
  %v7518 = vpop.permute.xlu0 %7517
  %7519 = vrot.lane.b32.xlu0 %v7486, 96
  %v7520 = vpop.permute.xlu0 %7519
  %7521 = vrot.lane.b32.xlu0 %v7489, 96
  %v7522 = vpop.permute.xlu0 %7521
  %7523 = vrot.lane.b32.xlu0 %v7492, 96
  %v7524 = vpop.permute.xlu0 %7523
  %7525 = vrot.lane.b32.xlu0 %v7495, 96
  %v7526 = vpop.permute.xlu0 %7525
  %7527 = vrot.lane.b32.xlu0 %v7498, 96
  %v7528 = vpop.permute.xlu0 %7527
  %7529 = vrot.lane.b32.xlu0 %v7501, 96
  %v7530 = vpop.permute.xlu0 %7529
  %7531 = vrot.lane.b32.xlu0 %v7502, 96
  %v7532 = vpop.permute.xlu0 %7531
  %7548 = vst.msk [vmem:[#allocation2 + $0xc] sm:$0xc] %vm1201, %v7504
  %7549 = vst.msk [vmem:[#allocation2 + $0x14] sm:$0xf] %vm739, %v7506
  %7550 = vst.msk [vmem:[#allocation2 + $0x1c] sm:$0xf] %vm739, %v7508
  %7551 = vst.msk [vmem:[#allocation2 + $0x24] sm:$0xf] %vm739, %v7510
  %7552 = vst.msk [vmem:[#allocation2 + $0x2c] sm:$0xf] %vm739, %v7512
  %7553 = vst.msk [vmem:[#allocation2 + $0x34] sm:$0xf] %vm739, %v7514
  %7554 = vst.msk [vmem:[#allocation2 + $0x3c] sm:$0xf] %vm739, %v7516
  %7555 = vst.msk [vmem:[#allocation2 + $0x44] sm:$0xf] %vm739, %v7518
  %7556 = vst.msk [vmem:[#allocation2 + $0x4c] sm:$0xf] %vm739, %v7520
  %7557 = vst.msk [vmem:[#allocation2 + $0x54] sm:$0xf] %vm739, %v7522
  %7558 = vst.msk [vmem:[#allocation2 + $0x5c] sm:$0xf] %vm739, %v7524
  %7559 = vst.msk [vmem:[#allocation2 + $0x64] sm:$0xf] %vm739, %v7526
  %7560 = vst.msk [vmem:[#allocation2 + $0x6c] sm:$0xf] %vm739, %v7528
  %7561 = vst.msk [vmem:[#allocation2 + $0x74] sm:$0xf] %vm739, %v7530
  %7562 = vst.msk [vmem:[#allocation2 + $0x7c] sm:$0x3] %vm1216, %v7532
  %v7577 = vrot.slane %v6460, 7
  %v7578 = vrot.slane %v6461, 7
  %v7579 = vsel %vm1330, %v7577, %v7578
  %v7580 = vrot.slane %v6462, 7
  %v7581 = vsel %vm1330, %v7578, %v7580
  %v7582 = vrot.slane %v6463, 7
  %v7583 = vsel %vm1330, %v7580, %v7582
  %v7584 = vrot.slane %v6464, 7
  %v7585 = vsel %vm1330, %v7582, %v7584
  %v7586 = vrot.slane %v6465, 7
  %v7587 = vsel %vm1330, %v7584, %v7586
  %v7588 = vrot.slane %v6466, 7
  %v7589 = vsel %vm1330, %v7586, %v7588
  %v7590 = vrot.slane %v6467, 7
  %v7591 = vsel %vm1330, %v7588, %v7590
  %v7592 = vrot.slane %v6468, 7
  %v7593 = vsel %vm1330, %v7590, %v7592
  %v7594 = vrot.slane %v6469, 7
  %v7595 = vsel %vm1330, %v7592, %v7594
  %v7596 = vrot.slane %v6470, 7
  %v7597 = vsel %vm1330, %v7594, %v7596
  %v7598 = vrot.slane %v6471, 7
  %v7599 = vsel %vm1330, %v7596, %v7598
  %v7600 = vrot.slane %v6472, 7
  %v7601 = vsel %vm1330, %v7598, %v7600
  %v7602 = vrot.slane %v6473, 7
  %v7603 = vsel %vm1330, %v7600, %v7602
  %v7618 = vsel %vm1330, 0.0, %v7577
  %v7619 = vrot.slane %v6460, 1
  %v7620 = vrot.slane %v6461, 1
  %v7621 = vsel %vm1373, %v7619, %v7620
  %v7622 = vrot.slane %v6462, 1
  %v7623 = vsel %vm1373, %v7620, %v7622
  %v7624 = vrot.slane %v6463, 1
  %v7625 = vsel %vm1373, %v7622, %v7624
  %v7626 = vrot.slane %v6464, 1
  %v7627 = vsel %vm1373, %v7624, %v7626
  %v7628 = vrot.slane %v6465, 1
  %v7629 = vsel %vm1373, %v7626, %v7628
  %v7630 = vrot.slane %v6466, 1
  %v7631 = vsel %vm1373, %v7628, %v7630
  %v7632 = vrot.slane %v6467, 1
  %v7633 = vsel %vm1373, %v7630, %v7632
  %v7634 = vrot.slane %v6468, 1
  %v7635 = vsel %vm1373, %v7632, %v7634
  %v7636 = vrot.slane %v6469, 1
  %v7637 = vsel %vm1373, %v7634, %v7636
  %v7638 = vrot.slane %v6470, 1
  %v7639 = vsel %vm1373, %v7636, %v7638
  %v7640 = vrot.slane %v6471, 1
  %v7641 = vsel %vm1373, %v7638, %v7640
  %v7642 = vrot.slane %v6472, 1
  %v7643 = vsel %vm1373, %v7640, %v7642
  %v7644 = vrot.slane %v6473, 1
  %v7645 = vsel %vm1373, %v7642, %v7644
  %v7660 = vsel %vm1373, %v7644, 0.0
  %v7661 = vmax.f32 %v7618, %v6460
  %v7662 = vmax.f32 %v7579, %v6461
  %v7663 = vmax.f32 %v7581, %v6462
  %v7664 = vmax.f32 %v7583, %v6463
  %v7665 = vmax.f32 %v7585, %v6464
  %v7666 = vmax.f32 %v7587, %v6465
  %v7667 = vmax.f32 %v7589, %v6466
  %v7668 = vmax.f32 %v7591, %v6467
  %v7669 = vmax.f32 %v7593, %v6468
  %v7670 = vmax.f32 %v7595, %v6469
  %v7671 = vmax.f32 %v7597, %v6470
  %v7672 = vmax.f32 %v7599, %v6471
  %v7673 = vmax.f32 %v7601, %v6472
  %v7674 = vmax.f32 %v7603, %v6473
  %v7675 = vmax.f32 %v7661, %v7621
  %v7676 = vmax.f32 %v7662, %v7623
  %v7677 = vmax.f32 %v7663, %v7625
  %v7678 = vmax.f32 %v7664, %v7627
  %v7679 = vmax.f32 %v7665, %v7629
  %v7680 = vmax.f32 %v7666, %v7631
  %v7681 = vmax.f32 %v7667, %v7633
  %v7682 = vmax.f32 %v7668, %v7635
  %v7683 = vmax.f32 %v7669, %v7637
  %v7684 = vmax.f32 %v7670, %v7639
  %v7685 = vmax.f32 %v7671, %v7641
  %v7686 = vmax.f32 %v7672, %v7643
  %v7687 = vmax.f32 %v7673, %v7645
  %v7688 = vmax.f32 %v7674, %v7660
  %v7689 = vpack.c.bf16 %v7676, %v7675
  %v7690 = vpack.c.bf16 %v7678, %v7677
  %v7691 = vpack.c.bf16 %v7680, %v7679
  %v7692 = vpack.c.bf16 %v7682, %v7681
  %v7693 = vpack.c.bf16 %v7684, %v7683
  %v7694 = vpack.c.bf16 %v7686, %v7685
  %v7695 = vpack.c.bf16 %v7688, %v7687
  %v7696 = vld [vmem:[%s14] sm:$0xf]
  %v7697 = vld [vmem:[%s14 + $0x4] sm:$0xf]
  %v7698 = vld [vmem:[%s14 + $0x8] sm:$0xf]
  %v7699 = vld [vmem:[%s14 + $0xc] sm:$0xf]
  %v7700 = vld [vmem:[%s14 + $0x10] sm:$0xf]
  %v7701 = vld [vmem:[%s14 + $0x14] sm:$0xf]
  %v7702 = vld [vmem:[%s14 + $0x18] sm:$0xf]
  %v7703 = vld [vmem:[%s14 + $0x1c] sm:$0xf]
  %v7704 = vld [vmem:[%s14 + $0x20] sm:$0xf]
  %v7705 = vld [vmem:[%s14 + $0x24] sm:$0xf]
  %v7706 = vld [vmem:[%s14 + $0x28] sm:$0xf]
  %v7707 = vld [vmem:[%s14 + $0x2c] sm:$0xf]
  %v7708 = vld [vmem:[%s14 + $0x30] sm:$0xf]
  %v7709 = vld [vmem:[%s14 + $0x34] sm:$0xf]
  %v7710 = vld [vmem:[%s14 + $0x38] sm:$0xf]
  %v7711 = vld [vmem:[%s14 + $0x3c] sm:$0xf]
  %v7712 = vld [vmem:[#allocation2] sm:$0xff]
  %v7713 = vld [vmem:[#allocation2 + $0x8] sm:$0xff]
  %v7714 = vld [vmem:[#allocation2 + $0x10] sm:$0xff]
  %v7715 = vld [vmem:[#allocation2 + $0x18] sm:$0xff]
  %v7716 = vld [vmem:[#allocation2 + $0x20] sm:$0xff]
  %v7717 = vld [vmem:[#allocation2 + $0x28] sm:$0xff]
  %v7718 = vld [vmem:[#allocation2 + $0x30] sm:$0xff]
  %v7719 = vld [vmem:[#allocation2 + $0x38] sm:$0xff]
  %v7720 = vld [vmem:[#allocation2 + $0x40] sm:$0xff]
  %v7721 = vld [vmem:[#allocation2 + $0x48] sm:$0xff]
  %v7722 = vld [vmem:[#allocation2 + $0x50] sm:$0xff]
  %v7723 = vld [vmem:[#allocation2 + $0x58] sm:$0xff]
  %v7724 = vld [vmem:[#allocation2 + $0x60] sm:$0xff]
  %v7725 = vld [vmem:[#allocation2 + $0x68] sm:$0xff]
  %v7726 = vld [vmem:[%s13] sm:$0xf]
  %v7727 = vld [vmem:[%s13 + $0x4] sm:$0xf]
  %v7728 = vld [vmem:[%s13 + $0x8] sm:$0xf]
  %v7729 = vld [vmem:[%s13 + $0xc] sm:$0xf]
  %v7730 = vld [vmem:[%s13 + $0x10] sm:$0xf]
  %v7731 = vld [vmem:[%s13 + $0x14] sm:$0xf]
  %v7732 = vld [vmem:[%s13 + $0x18] sm:$0xf]
  %v7733 = vld [vmem:[%s13 + $0x1c] sm:$0xf]
  %v7734 = vld [vmem:[%s13 + $0x20] sm:$0xf]
  %v7735 = vld [vmem:[%s13 + $0x24] sm:$0xf]
  %v7736 = vld [vmem:[%s13 + $0x28] sm:$0xf]
  %v7737 = vld [vmem:[%s13 + $0x2c] sm:$0xf]
  %v7738 = vld [vmem:[%s13 + $0x30] sm:$0xf]
  %v7739 = vld [vmem:[%s13 + $0x34] sm:$0xf]
  %v7740 = vld [vmem:[%s13 + $0x38] sm:$0xf]
  %v7741 = vld [vmem:[%s13 + $0x3c] sm:$0xf]
  %v7742 = vld [vmem:[%s13 + $0x40] sm:$0xf]
  %v7743 = vld [vmem:[%s13 + $0x44] sm:$0xf]
  %v7744 = vld [vmem:[%s13 + $0x48] sm:$0xf]
  %v7745 = vld [vmem:[%s13 + $0x4c] sm:$0xf]
  %v7746 = vld [vmem:[%s13 + $0x50] sm:$0xf]
  %v7747 = vld [vmem:[%s13 + $0x54] sm:$0xf]
  %v7748 = vld [vmem:[%s13 + $0x58] sm:$0xf]
  %v7749 = vld [vmem:[%s13 + $0x5c] sm:$0xf]
  %v7750 = vld [vmem:[%s13 + $0x60] sm:$0xf]
  %v7751 = vld [vmem:[%s13 + $0x64] sm:$0xf]
  %v7752 = vld [vmem:[%s13 + $0x68] sm:$0xf]
  %v7753 = vld [vmem:[%s13 + $0x6c] sm:$0xf]
  %v7754 = vld [vmem:[%s13 + $0x70] sm:$0xf]
  %v7755 = vld [vmem:[%s13 + $0x74] sm:$0xf]
  %v7756 = vld [vmem:[%s13 + $0x78] sm:$0xf]
  %v7757 = vld [vmem:[%s13 + $0x7c] sm:$0xf]
  %v7772 = vunpack.c.l.b16 %v7712
  %v7773 = vunpack.c.h.b16 %v7712
  %v7774 = vunpack.c.l.b16 %v7713
  %v7775 = vunpack.c.h.b16 %v7713
  %v7776 = vunpack.c.l.b16 %v7714
  %v7777 = vunpack.c.h.b16 %v7714
  %v7778 = vunpack.c.l.b16 %v7715
  %v7779 = vunpack.c.h.b16 %v7715
  %v7780 = vunpack.c.l.b16 %v7716
  %v7781 = vunpack.c.h.b16 %v7716
  %v7782 = vunpack.c.l.b16 %v7717
  %v7783 = vunpack.c.h.b16 %v7717
  %v7784 = vunpack.c.l.b16 %v7718
  %v7785 = vunpack.c.h.b16 %v7718
  %v7786 = vunpack.c.l.b16 %v7719
  %v7787 = vunpack.c.h.b16 %v7719
  %v7788 = vunpack.c.l.b16 %v7720
  %v7789 = vunpack.c.h.b16 %v7720
  %v7790 = vunpack.c.l.b16 %v7721
  %v7791 = vunpack.c.h.b16 %v7721
  %v7792 = vunpack.c.l.b16 %v7722
  %v7793 = vunpack.c.h.b16 %v7722
  %v7794 = vunpack.c.l.b16 %v7723
  %v7795 = vunpack.c.h.b16 %v7723
  %v7796 = vunpack.c.l.b16 %v7724
  %v7797 = vunpack.c.h.b16 %v7724
  %v7798 = vunpack.c.l.b16 %v7725
  %v7799 = vunpack.c.h.b16 %v7725
  %v7800 = vpack.c.b16 %v7774, %v7772
  %v7801 = vpack.c.b16 %v7775, %v7773
  %v7802 = vpack.c.b16 %v7778, %v7776
  %v7803 = vpack.c.b16 %v7779, %v7777
  %v7804 = vpack.c.b16 %v7782, %v7780
  %v7805 = vpack.c.b16 %v7783, %v7781
  %v7806 = vpack.c.b16 %v7786, %v7784
  %v7807 = vpack.c.b16 %v7787, %v7785
  %v7808 = vpack.c.b16 %v7790, %v7788
  %v7809 = vpack.c.b16 %v7791, %v7789
  %v7810 = vpack.c.b16 %v7794, %v7792
  %v7811 = vpack.c.b16 %v7795, %v7793
  %v7812 = vpack.c.b16 %v7798, %v7796
  %v7813 = vpack.c.b16 %v7799, %v7797
  %v7860 = vunpack.c.l.b16 %v7726
  %v7861 = vunpack.c.l.b16 %v7727
  %v7862 = vunpack.c.l.b16 %v7728
  %v7863 = vunpack.c.l.b16 %v7729
  %v7864 = vunpack.c.l.b16 %v7730
  %v7865 = vunpack.c.l.b16 %v7731
  %v7866 = vunpack.c.l.b16 %v7732
  %v7867 = vunpack.c.l.b16 %v7733
  %v7868 = vunpack.c.l.b16 %v7734
  %v7869 = vunpack.c.l.b16 %v7735
  %v7870 = vunpack.c.l.b16 %v7736
  %v7871 = vunpack.c.l.b16 %v7737
  %v7872 = vunpack.c.l.b16 %v7738
  %v7873 = vunpack.c.l.b16 %v7739
  %v7874 = vunpack.c.l.b16 %v7740
  %v7875 = vunpack.c.l.b16 %v7741
  %v7876 = vunpack.c.l.b16 %v7742
  %v7877 = vunpack.c.l.b16 %v7743
  %v7878 = vunpack.c.l.b16 %v7744
  %v7879 = vunpack.c.l.b16 %v7745
  %v7880 = vunpack.c.l.b16 %v7746
  %v7881 = vunpack.c.l.b16 %v7747
  %v7882 = vunpack.c.l.b16 %v7748
  %v7883 = vunpack.c.l.b16 %v7749
  %v7884 = vunpack.c.l.b16 %v7750
  %v7885 = vunpack.c.l.b16 %v7751
  %v7886 = vunpack.c.l.b16 %v7752
  %v7887 = vunpack.c.l.b16 %v7753
  %v7888 = vunpack.c.l.b16 %v7754
  %v7889 = vunpack.c.l.b16 %v7755
  %v7890 = vunpack.c.l.b16 %v7756
  %v7891 = vunpack.c.l.b16 %v7757
  %v7892 = vpack.c.b16 %v7861, %v7860
  %v7893 = vpack.c.b16 %v7863, %v7862
  %v7894 = vpack.c.b16 %v7865, %v7864
  %v7895 = vpack.c.b16 %v7867, %v7866
  %v7896 = vpack.c.b16 %v7869, %v7868
  %v7897 = vpack.c.b16 %v7871, %v7870
  %v7898 = vpack.c.b16 %v7873, %v7872
  %v7899 = vpack.c.b16 %v7875, %v7874
  %v7900 = vpack.c.b16 %v7877, %v7876
  %v7901 = vpack.c.b16 %v7879, %v7878
  %v7902 = vpack.c.b16 %v7881, %v7880
  %v7903 = vpack.c.b16 %v7883, %v7882
  %v7904 = vpack.c.b16 %v7885, %v7884
  %v7905 = vpack.c.b16 %v7887, %v7886
  %v7906 = vpack.c.b16 %v7889, %v7888
  %v7907 = vpack.c.b16 %v7891, %v7890
  %7924 = vmatprep.subr.bf16.mxu0 0
  %7925 = vmatpush1.bf16.msra.mxu0 %v7899
  %7926 = vmatprep.subr.bf16.mxu0 0
  %7927 = vmatpush1.bf16.msra.mxu0 %v7898
  %7928 = vmatprep.subr.bf16.mxu0 0
  %7929 = vmatpush1.bf16.msra.mxu0 %v7897
  %7930 = vmatprep.subr.bf16.mxu0 0
  %7931 = vmatpush1.bf16.msra.mxu0 %v7896
  %7932 = vmatprep.subr.bf16.mxu0 0
  %7933 = vmatpush1.bf16.msra.mxu0 %v7895
  %7934 = vmatprep.subr.bf16.mxu0 0
  %7935 = vmatpush1.bf16.msra.mxu0 %v7894
  %7936 = vmatprep.subr.bf16.mxu0 0
  %7937 = vmatpush1.bf16.msra.mxu0 %v7893
  %7938 = vmatprep.subr.bf16.mxu0 0
  %7939 = vmatpush1.bf16.msra.mxu0 %v7892
  %7940 = vmatprep.subr.bf16.mxu0 0
  %7941 = vmatpush2.bf16.msra.mxu0 %v7907
  %7942 = vmatprep.subr.bf16.mxu0 0
  %7943 = vmatpush2.bf16.msra.mxu0 %v7906
  %7944 = vmatprep.subr.bf16.mxu0 0
  %7945 = vmatpush2.bf16.msra.mxu0 %v7905
  %7946 = vmatprep.subr.bf16.mxu0 0
  %7947 = vmatpush2.bf16.msra.mxu0 %v7904
  %7948 = vmatprep.subr.bf16.mxu0 0
  %7949 = vmatpush2.bf16.msra.mxu0 %v7903
  %7950 = vmatprep.subr.bf16.mxu0 0
  %7951 = vmatpush2.bf16.msra.mxu0 %v7902
  %7952 = vmatprep.subr.bf16.mxu0 0
  %7953 = vmatpush2.bf16.msra.mxu0 %v7901
  %7954 = vmatprep.subr.bf16.mxu0 0
  %7955 = vmatpush2.bf16.msra.mxu0 %v7900
  %7956 = vmatprep.mubr.bf16.mxu0 %v7801
  %7957 = vmatmul.mubr.bf16.gmra.mxu0 %v7800
  %v7958 = vpop.f32.mrf.mxu0
  %v7959 = vadd.f32 0.0, %v7958
  %v7960 = vpop.f32.mrf.mxu0
  %v7961 = vpop.f32.mrf.mxu0
  %v7962 = vadd.f32 0.0, %v7961
  %v7963 = vpop.f32.mrf.mxu0
  %7964 = vmatprep.mubr.bf16.mxu0 %v7803
  %7965 = vmatmul.mubr.bf16.gmra.mxu0 %v7802
  %v7966 = vpop.f32.mrf.mxu0
  %v7967 = vadd.f32 0.0, %v7966
  %v7968 = vpop.f32.mrf.mxu0
  %v7969 = vpop.f32.mrf.mxu0
  %v7970 = vadd.f32 0.0, %v7969
  %v7971 = vpop.f32.mrf.mxu0
  %7972 = vmatprep.mubr.bf16.mxu0 %v7805
  %7973 = vmatmul.mubr.bf16.gmra.mxu0 %v7804
  %v7974 = vpop.f32.mrf.mxu0
  %v7975 = vadd.f32 0.0, %v7974
  %v7976 = vpop.f32.mrf.mxu0
  %v7977 = vpop.f32.mrf.mxu0
  %v7978 = vadd.f32 0.0, %v7977
  %v7979 = vpop.f32.mrf.mxu0
  %7980 = vmatprep.mubr.bf16.mxu0 %v7807
  %7981 = vmatmul.mubr.bf16.gmra.mxu0 %v7806
  %v7982 = vpop.f32.mrf.mxu0
  %v7983 = vadd.f32 0.0, %v7982
  %v7984 = vpop.f32.mrf.mxu0
  %v7985 = vpop.f32.mrf.mxu0
  %v7986 = vadd.f32 0.0, %v7985
  %v7987 = vpop.f32.mrf.mxu0
  %7988 = vmatprep.mubr.bf16.mxu0 %v7809
  %7989 = vmatmul.mubr.bf16.gmra.mxu0 %v7808
  %v7990 = vpop.f32.mrf.mxu0
  %v7991 = vadd.f32 0.0, %v7990
  %v7992 = vpop.f32.mrf.mxu0
  %v7993 = vpop.f32.mrf.mxu0
  %v7994 = vadd.f32 0.0, %v7993
  %v7995 = vpop.f32.mrf.mxu0
  %7996 = vmatprep.mubr.bf16.mxu0 %v7811
  %7997 = vmatmul.mubr.bf16.gmra.mxu0 %v7810
  %v7998 = vpop.f32.mrf.mxu0
  %v7999 = vadd.f32 0.0, %v7998
  %v8000 = vpop.f32.mrf.mxu0
  %v8001 = vpop.f32.mrf.mxu0
  %v8002 = vadd.f32 0.0, %v8001
  %v8003 = vpop.f32.mrf.mxu0
  %8004 = vmatprep.mubr.bf16.mxu0 %v7813
  %8005 = vmatmul.mubr.bf16.gmra.mxu0 %v7812
  %v8006 = vpop.f32.mrf.mxu0
  %v8007 = vadd.f32 0.0, %v8006
  %v8008 = vpop.f32.mrf.mxu0
  %v8009 = vpop.f32.mrf.mxu0
  %v8010 = vadd.f32 0.0, %v8009
  %v8011 = vpop.f32.mrf.mxu0
  %8012 = vdwg.mxu0
  %v8029 = vunpack.c.l.b16 %v7696
  %v8030 = vunpack.c.l.b16 %v7697
  %v8031 = vunpack.c.l.b16 %v7698
  %v8032 = vunpack.c.l.b16 %v7699
  %v8033 = vunpack.c.l.b16 %v7700
  %v8034 = vunpack.c.l.b16 %v7701
  %v8035 = vunpack.c.l.b16 %v7702
  %v8036 = vunpack.c.l.b16 %v7703
  %v8037 = vunpack.c.l.b16 %v7704
  %v8038 = vunpack.c.l.b16 %v7705
  %v8039 = vunpack.c.l.b16 %v7706
  %v8040 = vunpack.c.l.b16 %v7707
  %v8041 = vunpack.c.l.b16 %v7708
  %v8042 = vunpack.c.l.b16 %v7709
  %v8043 = vunpack.c.l.b16 %v7710
  %v8044 = vunpack.c.l.b16 %v7711
  %v8045 = vpack.c.b16 %v8030, %v8029
  %v8046 = vpack.c.b16 %v8032, %v8031
  %v8047 = vpack.c.b16 %v8034, %v8033
  %v8048 = vpack.c.b16 %v8036, %v8035
  %v8049 = vpack.c.b16 %v8038, %v8037
  %v8050 = vpack.c.b16 %v8040, %v8039
  %v8051 = vpack.c.b16 %v8042, %v8041
  %v8052 = vpack.c.b16 %v8044, %v8043
  %8061 = vmatprep.subr.bf16.mxu0 0
  %8062 = vmatpush1.bf16.msra.mxu0 %v8052
  %8063 = vmatprep.subr.bf16.mxu0 0
  %8064 = vmatpush1.bf16.msra.mxu0 %v8051
  %8065 = vmatprep.subr.bf16.mxu0 0
  %8066 = vmatpush1.bf16.msra.mxu0 %v8050
  %8067 = vmatprep.subr.bf16.mxu0 0
  %8068 = vmatpush1.bf16.msra.mxu0 %v8049
  %8069 = vmatprep.subr.bf16.mxu0 0
  %8070 = vmatpush1.bf16.msra.mxu0 %v8048
  %8071 = vmatprep.subr.bf16.mxu0 0
  %8072 = vmatpush1.bf16.msra.mxu0 %v8047
  %8073 = vmatprep.subr.bf16.mxu0 0
  %8074 = vmatpush1.bf16.msra.mxu0 %v8046
  %8075 = vmatprep.subr.bf16.mxu0 0
  %8076 = vmatpush1.bf16.msra.mxu0 %v8045
  %8077 = vmatprep.subr.bf16.mxu0 0
  %8078 = vmatpush2.bf16.msra.mxu0 0
  %8079 = vmatprep.subr.bf16.mxu0 0
  %8080 = vmatpush2.bf16.msra.mxu0 0
  %8081 = vmatprep.subr.bf16.mxu0 0
  %8082 = vmatpush2.bf16.msra.mxu0 0
  %8083 = vmatprep.subr.bf16.mxu0 0
  %8084 = vmatpush2.bf16.msra.mxu0 0
  %8085 = vmatprep.subr.bf16.mxu0 0
  %8086 = vmatpush2.bf16.msra.mxu0 0
  %8087 = vmatprep.subr.bf16.mxu0 0
  %8088 = vmatpush2.bf16.msra.mxu0 0
  %8089 = vmatprep.subr.bf16.mxu0 0
  %8090 = vmatpush2.bf16.msra.mxu0 0
  %8091 = vmatprep.subr.bf16.mxu0 0
  %8092 = vmatpush2.bf16.msra.mxu0 0
  %8093 = vmatprep.mubr.bf16.mxu0 0
  %8094 = vmatmul.mubr.bf16.gmra.mxu0 %v7689
  %v8095 = vpop.f32.mrf.mxu0
  %v8096 = vadd.f32 %v7959, %v8095
  %v8097 = vpop.f32.mrf.mxu0
  %v8098 = vpop.f32.mrf.mxu0
  %v8099 = vadd.f32 %v7962, %v8098
  %v8100 = vpop.f32.mrf.mxu0
  %8101 = vmatprep.mubr.bf16.mxu0 0
  %8102 = vmatmul.mubr.bf16.gmra.mxu0 %v7690
  %v8103 = vpop.f32.mrf.mxu0
  %v8104 = vadd.f32 %v7967, %v8103
  %v8105 = vpop.f32.mrf.mxu0
  %v8106 = vpop.f32.mrf.mxu0
  %v8107 = vadd.f32 %v7970, %v8106
  %v8108 = vpop.f32.mrf.mxu0
  %8109 = vmatprep.mubr.bf16.mxu0 0
  %8110 = vmatmul.mubr.bf16.gmra.mxu0 %v7691
  %v8111 = vpop.f32.mrf.mxu0
  %v8112 = vadd.f32 %v7975, %v8111
  %v8113 = vpop.f32.mrf.mxu0
  %v8114 = vpop.f32.mrf.mxu0
  %v8115 = vadd.f32 %v7978, %v8114
  %v8116 = vpop.f32.mrf.mxu0
  %8117 = vmatprep.mubr.bf16.mxu0 0
  %8118 = vmatmul.mubr.bf16.gmra.mxu0 %v7692
  %v8119 = vpop.f32.mrf.mxu0
  %v8120 = vadd.f32 %v7983, %v8119
  %v8121 = vpop.f32.mrf.mxu0
  %v8122 = vpop.f32.mrf.mxu0
  %v8123 = vadd.f32 %v7986, %v8122
  %v8124 = vpop.f32.mrf.mxu0
  %8125 = vmatprep.mubr.bf16.mxu0 0
  %8126 = vmatmul.mubr.bf16.gmra.mxu0 %v7693
  %v8127 = vpop.f32.mrf.mxu0
  %v8128 = vadd.f32 %v7991, %v8127
  %v8129 = vpop.f32.mrf.mxu0
  %v8130 = vpop.f32.mrf.mxu0
  %v8131 = vadd.f32 %v7994, %v8130
  %v8132 = vpop.f32.mrf.mxu0
  %8133 = vmatprep.mubr.bf16.mxu0 0
  %8134 = vmatmul.mubr.bf16.gmra.mxu0 %v7694
  %v8135 = vpop.f32.mrf.mxu0
  %v8136 = vadd.f32 %v7999, %v8135
  %v8137 = vpop.f32.mrf.mxu0
  %v8138 = vpop.f32.mrf.mxu0
  %v8139 = vadd.f32 %v8002, %v8138
  %v8140 = vpop.f32.mrf.mxu0
  %8141 = vmatprep.mubr.bf16.mxu0 0
  %8142 = vmatmul.mubr.bf16.gmra.mxu0 %v7695
  %v8143 = vpop.f32.mrf.mxu0
  %v8144 = vadd.f32 %v8007, %v8143
  %v8145 = vpop.f32.mrf.mxu0
  %v8146 = vpop.f32.mrf.mxu0
  %v8147 = vadd.f32 %v8010, %v8146
  %v8148 = vpop.f32.mrf.mxu0
  %8149 = vdwg.mxu0
  %v8150 = vld [vmem:[#allocation2 + $0x8] sm:$0xff]
  %v8151 = vld [vmem:[#allocation2 + $0x10] sm:$0xff]
  %v8152 = vld [vmem:[#allocation2 + $0x18] sm:$0xff]
  %v8153 = vld [vmem:[#allocation2 + $0x20] sm:$0xff]
  %v8154 = vld [vmem:[#allocation2 + $0x28] sm:$0xff]
  %v8155 = vld [vmem:[#allocation2 + $0x30] sm:$0xff]
  %v8156 = vld [vmem:[#allocation2 + $0x38] sm:$0xff]
  %v8157 = vld [vmem:[#allocation2 + $0x40] sm:$0xff]
  %v8158 = vld [vmem:[#allocation2 + $0x48] sm:$0xff]
  %v8159 = vld [vmem:[#allocation2 + $0x50] sm:$0xff]
  %v8160 = vld [vmem:[#allocation2 + $0x58] sm:$0xff]
  %v8161 = vld [vmem:[#allocation2 + $0x60] sm:$0xff]
  %v8162 = vld [vmem:[#allocation2 + $0x68] sm:$0xff]
  %v8163 = vld [vmem:[#allocation2 + $0x70] sm:$0xff]
  %s8164 = scalar_lea.vmem %s13, 128
  %v8165 = vld [vmem:[%s8164] sm:$0xf]
  %v8166 = vld [vmem:[%s8164 + $0x4] sm:$0xf]
  %v8167 = vld [vmem:[%s8164 + $0x8] sm:$0xf]
  %v8168 = vld [vmem:[%s8164 + $0xc] sm:$0xf]
  %v8169 = vld [vmem:[%s8164 + $0x10] sm:$0xf]
  %v8170 = vld [vmem:[%s8164 + $0x14] sm:$0xf]
  %v8171 = vld [vmem:[%s8164 + $0x18] sm:$0xf]
  %v8172 = vld [vmem:[%s8164 + $0x1c] sm:$0xf]
  %v8173 = vld [vmem:[%s8164 + $0x20] sm:$0xf]
  %v8174 = vld [vmem:[%s8164 + $0x24] sm:$0xf]
  %v8175 = vld [vmem:[%s8164 + $0x28] sm:$0xf]
  %v8176 = vld [vmem:[%s8164 + $0x2c] sm:$0xf]
  %v8177 = vld [vmem:[%s8164 + $0x30] sm:$0xf]
  %v8178 = vld [vmem:[%s8164 + $0x34] sm:$0xf]
  %v8179 = vld [vmem:[%s8164 + $0x38] sm:$0xf]
  %v8180 = vld [vmem:[%s8164 + $0x3c] sm:$0xf]
  %v8181 = vld [vmem:[%s8164 + $0x40] sm:$0xf]
  %v8182 = vld [vmem:[%s8164 + $0x44] sm:$0xf]
  %v8183 = vld [vmem:[%s8164 + $0x48] sm:$0xf]
  %v8184 = vld [vmem:[%s8164 + $0x4c] sm:$0xf]
  %v8185 = vld [vmem:[%s8164 + $0x50] sm:$0xf]
  %v8186 = vld [vmem:[%s8164 + $0x54] sm:$0xf]
  %v8187 = vld [vmem:[%s8164 + $0x58] sm:$0xf]
  %v8188 = vld [vmem:[%s8164 + $0x5c] sm:$0xf]
  %v8189 = vld [vmem:[%s8164 + $0x60] sm:$0xf]
  %v8190 = vld [vmem:[%s8164 + $0x64] sm:$0xf]
  %v8191 = vld [vmem:[%s8164 + $0x68] sm:$0xf]
  %v8192 = vld [vmem:[%s8164 + $0x6c] sm:$0xf]
  %v8193 = vld [vmem:[%s8164 + $0x70] sm:$0xf]
  %v8194 = vld [vmem:[%s8164 + $0x74] sm:$0xf]
  %v8195 = vld [vmem:[%s8164 + $0x78] sm:$0xf]
  %v8196 = vld [vmem:[%s8164 + $0x7c] sm:$0xf]
  %v8211 = vunpack.c.l.b16 %v8150
  %v8212 = vunpack.c.h.b16 %v8150
  %v8213 = vunpack.c.l.b16 %v8151
  %v8214 = vunpack.c.h.b16 %v8151
  %v8215 = vunpack.c.l.b16 %v8152
  %v8216 = vunpack.c.h.b16 %v8152
  %v8217 = vunpack.c.l.b16 %v8153
  %v8218 = vunpack.c.h.b16 %v8153
  %v8219 = vunpack.c.l.b16 %v8154
  %v8220 = vunpack.c.h.b16 %v8154
  %v8221 = vunpack.c.l.b16 %v8155
  %v8222 = vunpack.c.h.b16 %v8155
  %v8223 = vunpack.c.l.b16 %v8156
  %v8224 = vunpack.c.h.b16 %v8156
  %v8225 = vunpack.c.l.b16 %v8157
  %v8226 = vunpack.c.h.b16 %v8157
  %v8227 = vunpack.c.l.b16 %v8158
  %v8228 = vunpack.c.h.b16 %v8158
  %v8229 = vunpack.c.l.b16 %v8159
  %v8230 = vunpack.c.h.b16 %v8159
  %v8231 = vunpack.c.l.b16 %v8160
  %v8232 = vunpack.c.h.b16 %v8160
  %v8233 = vunpack.c.l.b16 %v8161
  %v8234 = vunpack.c.h.b16 %v8161
  %v8235 = vunpack.c.l.b16 %v8162
  %v8236 = vunpack.c.h.b16 %v8162
  %v8237 = vunpack.c.l.b16 %v8163
  %v8238 = vunpack.c.h.b16 %v8163
  %v8239 = vpack.c.b16 %v8213, %v8211
  %v8240 = vpack.c.b16 %v8214, %v8212
  %v8241 = vpack.c.b16 %v8217, %v8215
  %v8242 = vpack.c.b16 %v8218, %v8216
  %v8243 = vpack.c.b16 %v8221, %v8219
  %v8244 = vpack.c.b16 %v8222, %v8220
  %v8245 = vpack.c.b16 %v8225, %v8223
  %v8246 = vpack.c.b16 %v8226, %v8224
  %v8247 = vpack.c.b16 %v8229, %v8227
  %v8248 = vpack.c.b16 %v8230, %v8228
  %v8249 = vpack.c.b16 %v8233, %v8231
  %v8250 = vpack.c.b16 %v8234, %v8232
  %v8251 = vpack.c.b16 %v8237, %v8235
  %v8252 = vpack.c.b16 %v8238, %v8236
  %v8299 = vunpack.c.l.b16 %v8165
  %v8300 = vunpack.c.l.b16 %v8166
  %v8301 = vunpack.c.l.b16 %v8167
  %v8302 = vunpack.c.l.b16 %v8168
  %v8303 = vunpack.c.l.b16 %v8169
  %v8304 = vunpack.c.l.b16 %v8170
  %v8305 = vunpack.c.l.b16 %v8171
  %v8306 = vunpack.c.l.b16 %v8172
  %v8307 = vunpack.c.l.b16 %v8173
  %v8308 = vunpack.c.l.b16 %v8174
  %v8309 = vunpack.c.l.b16 %v8175
  %v8310 = vunpack.c.l.b16 %v8176
  %v8311 = vunpack.c.l.b16 %v8177
  %v8312 = vunpack.c.l.b16 %v8178
  %v8313 = vunpack.c.l.b16 %v8179
  %v8314 = vunpack.c.l.b16 %v8180
  %v8315 = vunpack.c.l.b16 %v8181
  %v8316 = vunpack.c.l.b16 %v8182
  %v8317 = vunpack.c.l.b16 %v8183
  %v8318 = vunpack.c.l.b16 %v8184
  %v8319 = vunpack.c.l.b16 %v8185
  %v8320 = vunpack.c.l.b16 %v8186
  %v8321 = vunpack.c.l.b16 %v8187
  %v8322 = vunpack.c.l.b16 %v8188
  %v8323 = vunpack.c.l.b16 %v8189
  %v8324 = vunpack.c.l.b16 %v8190
  %v8325 = vunpack.c.l.b16 %v8191
  %v8326 = vunpack.c.l.b16 %v8192
  %v8327 = vunpack.c.l.b16 %v8193
  %v8328 = vunpack.c.l.b16 %v8194
  %v8329 = vunpack.c.l.b16 %v8195
  %v8330 = vunpack.c.l.b16 %v8196
  %v8331 = vpack.c.b16 %v8300, %v8299
  %v8332 = vpack.c.b16 %v8302, %v8301
  %v8333 = vpack.c.b16 %v8304, %v8303
  %v8334 = vpack.c.b16 %v8306, %v8305
  %v8335 = vpack.c.b16 %v8308, %v8307
  %v8336 = vpack.c.b16 %v8310, %v8309
  %v8337 = vpack.c.b16 %v8312, %v8311
  %v8338 = vpack.c.b16 %v8314, %v8313
  %v8339 = vpack.c.b16 %v8316, %v8315
  %v8340 = vpack.c.b16 %v8318, %v8317
  %v8341 = vpack.c.b16 %v8320, %v8319
  %v8342 = vpack.c.b16 %v8322, %v8321
  %v8343 = vpack.c.b16 %v8324, %v8323
  %v8344 = vpack.c.b16 %v8326, %v8325
  %v8345 = vpack.c.b16 %v8328, %v8327
  %v8346 = vpack.c.b16 %v8330, %v8329
  %8363 = vmatprep.subr.bf16.mxu0 0
  %8364 = vmatpush1.bf16.msra.mxu0 %v8338
  %8365 = vmatprep.subr.bf16.mxu0 0
  %8366 = vmatpush1.bf16.msra.mxu0 %v8337
  %8367 = vmatprep.subr.bf16.mxu0 0
  %8368 = vmatpush1.bf16.msra.mxu0 %v8336
  %8369 = vmatprep.subr.bf16.mxu0 0
  %8370 = vmatpush1.bf16.msra.mxu0 %v8335
  %8371 = vmatprep.subr.bf16.mxu0 0
  %8372 = vmatpush1.bf16.msra.mxu0 %v8334
  %8373 = vmatprep.subr.bf16.mxu0 0
  %8374 = vmatpush1.bf16.msra.mxu0 %v8333
  %8375 = vmatprep.subr.bf16.mxu0 0
  %8376 = vmatpush1.bf16.msra.mxu0 %v8332
  %8377 = vmatprep.subr.bf16.mxu0 0
  %8378 = vmatpush1.bf16.msra.mxu0 %v8331
  %8379 = vmatprep.subr.bf16.mxu0 0
  %8380 = vmatpush2.bf16.msra.mxu0 %v8346
  %8381 = vmatprep.subr.bf16.mxu0 0
  %8382 = vmatpush2.bf16.msra.mxu0 %v8345
  %8383 = vmatprep.subr.bf16.mxu0 0
  %8384 = vmatpush2.bf16.msra.mxu0 %v8344
  %8385 = vmatprep.subr.bf16.mxu0 0
  %8386 = vmatpush2.bf16.msra.mxu0 %v8343
  %8387 = vmatprep.subr.bf16.mxu0 0
  %8388 = vmatpush2.bf16.msra.mxu0 %v8342
  %8389 = vmatprep.subr.bf16.mxu0 0
  %8390 = vmatpush2.bf16.msra.mxu0 %v8341
  %8391 = vmatprep.subr.bf16.mxu0 0
  %8392 = vmatpush2.bf16.msra.mxu0 %v8340
  %8393 = vmatprep.subr.bf16.mxu0 0
  %8394 = vmatpush2.bf16.msra.mxu0 %v8339
  %8395 = vmatprep.mubr.bf16.mxu0 %v8240
  %8396 = vmatmul.mubr.bf16.gmra.mxu0 %v8239
  %v8397 = vpop.f32.mrf.mxu0
  %v8398 = vadd.f32 0.0, %v8397
  %v8399 = vpop.f32.mrf.mxu0
  %v8400 = vpop.f32.mrf.mxu0
  %v8401 = vadd.f32 0.0, %v8400
  %v8402 = vpop.f32.mrf.mxu0
  %8403 = vmatprep.mubr.bf16.mxu0 %v8242
  %8404 = vmatmul.mubr.bf16.gmra.mxu0 %v8241
  %v8405 = vpop.f32.mrf.mxu0
  %v8406 = vadd.f32 0.0, %v8405
  %v8407 = vpop.f32.mrf.mxu0
  %v8408 = vpop.f32.mrf.mxu0
  %v8409 = vadd.f32 0.0, %v8408
  %v8410 = vpop.f32.mrf.mxu0
  %8411 = vmatprep.mubr.bf16.mxu0 %v8244
  %8412 = vmatmul.mubr.bf16.gmra.mxu0 %v8243
  %v8413 = vpop.f32.mrf.mxu0
  %v8414 = vadd.f32 0.0, %v8413
  %v8415 = vpop.f32.mrf.mxu0
  %v8416 = vpop.f32.mrf.mxu0
  %v8417 = vadd.f32 0.0, %v8416
  %v8418 = vpop.f32.mrf.mxu0
  %8419 = vmatprep.mubr.bf16.mxu0 %v8246
  %8420 = vmatmul.mubr.bf16.gmra.mxu0 %v8245
  %v8421 = vpop.f32.mrf.mxu0
  %v8422 = vadd.f32 0.0, %v8421
  %v8423 = vpop.f32.mrf.mxu0
  %v8424 = vpop.f32.mrf.mxu0
  %v8425 = vadd.f32 0.0, %v8424
  %v8426 = vpop.f32.mrf.mxu0
  %8427 = vmatprep.mubr.bf16.mxu0 %v8248
  %8428 = vmatmul.mubr.bf16.gmra.mxu0 %v8247
  %v8429 = vpop.f32.mrf.mxu0
  %v8430 = vadd.f32 0.0, %v8429
  %v8431 = vpop.f32.mrf.mxu0
  %v8432 = vpop.f32.mrf.mxu0
  %v8433 = vadd.f32 0.0, %v8432
  %v8434 = vpop.f32.mrf.mxu0
  %8435 = vmatprep.mubr.bf16.mxu0 %v8250
  %8436 = vmatmul.mubr.bf16.gmra.mxu0 %v8249
  %v8437 = vpop.f32.mrf.mxu0
  %v8438 = vadd.f32 0.0, %v8437
  %v8439 = vpop.f32.mrf.mxu0
  %v8440 = vpop.f32.mrf.mxu0
  %v8441 = vadd.f32 0.0, %v8440
  %v8442 = vpop.f32.mrf.mxu0
  %8443 = vmatprep.mubr.bf16.mxu0 %v8252
  %8444 = vmatmul.mubr.bf16.gmra.mxu0 %v8251
  %v8445 = vpop.f32.mrf.mxu0
  %v8446 = vadd.f32 0.0, %v8445
  %v8447 = vpop.f32.mrf.mxu0
  %v8448 = vpop.f32.mrf.mxu0
  %v8449 = vadd.f32 0.0, %v8448
  %v8450 = vpop.f32.mrf.mxu0
  %8451 = vdwg.mxu0
  %v8452 = vadd.f32 %v8096, %v8398
  %v8453 = vadd.f32 %v8099, %v8401
  %v8454 = vadd.f32 %v8104, %v8406
  %v8455 = vadd.f32 %v8107, %v8409
  %v8456 = vadd.f32 %v8112, %v8414
  %v8457 = vadd.f32 %v8115, %v8417
  %v8458 = vadd.f32 %v8120, %v8422
  %v8459 = vadd.f32 %v8123, %v8425
  %v8460 = vadd.f32 %v8128, %v8430
  %v8461 = vadd.f32 %v8131, %v8433
  %v8462 = vadd.f32 %v8136, %v8438
  %v8463 = vadd.f32 %v8139, %v8441
  %v8464 = vadd.f32 %v8144, %v8446
  %v8465 = vadd.f32 %v8147, %v8449
  %v8466 = vld [vmem:[#allocation2 + $0x10] sm:$0xff]
  %v8467 = vld [vmem:[#allocation2 + $0x18] sm:$0xff]
  %v8468 = vld [vmem:[#allocation2 + $0x20] sm:$0xff]
  %v8469 = vld [vmem:[#allocation2 + $0x28] sm:$0xff]
  %v8470 = vld [vmem:[#allocation2 + $0x30] sm:$0xff]
  %v8471 = vld [vmem:[#allocation2 + $0x38] sm:$0xff]
  %v8472 = vld [vmem:[#allocation2 + $0x40] sm:$0xff]
  %v8473 = vld [vmem:[#allocation2 + $0x48] sm:$0xff]
  %v8474 = vld [vmem:[#allocation2 + $0x50] sm:$0xff]
  %v8475 = vld [vmem:[#allocation2 + $0x58] sm:$0xff]
  %v8476 = vld [vmem:[#allocation2 + $0x60] sm:$0xff]
  %v8477 = vld [vmem:[#allocation2 + $0x68] sm:$0xff]
  %v8478 = vld [vmem:[#allocation2 + $0x70] sm:$0xff]
  %v8479 = vld [vmem:[#allocation2 + $0x78] sm:$0xff]
  %s8480 = scalar_lea.vmem %s13, 256
  %v8481 = vld [vmem:[%s8480] sm:$0xf]
  %v8482 = vld [vmem:[%s8480 + $0x4] sm:$0xf]
  %v8483 = vld [vmem:[%s8480 + $0x8] sm:$0xf]
  %v8484 = vld [vmem:[%s8480 + $0xc] sm:$0xf]
  %v8485 = vld [vmem:[%s8480 + $0x10] sm:$0xf]
  %v8486 = vld [vmem:[%s8480 + $0x14] sm:$0xf]
  %v8487 = vld [vmem:[%s8480 + $0x18] sm:$0xf]
  %v8488 = vld [vmem:[%s8480 + $0x1c] sm:$0xf]
  %v8489 = vld [vmem:[%s8480 + $0x20] sm:$0xf]
  %v8490 = vld [vmem:[%s8480 + $0x24] sm:$0xf]
  %v8491 = vld [vmem:[%s8480 + $0x28] sm:$0xf]
  %v8492 = vld [vmem:[%s8480 + $0x2c] sm:$0xf]
  %v8493 = vld [vmem:[%s8480 + $0x30] sm:$0xf]
  %v8494 = vld [vmem:[%s8480 + $0x34] sm:$0xf]
  %v8495 = vld [vmem:[%s8480 + $0x38] sm:$0xf]
  %v8496 = vld [vmem:[%s8480 + $0x3c] sm:$0xf]
  %v8497 = vld [vmem:[%s8480 + $0x40] sm:$0xf]
  %v8498 = vld [vmem:[%s8480 + $0x44] sm:$0xf]
  %v8499 = vld [vmem:[%s8480 + $0x48] sm:$0xf]
  %v8500 = vld [vmem:[%s8480 + $0x4c] sm:$0xf]
  %v8501 = vld [vmem:[%s8480 + $0x50] sm:$0xf]
  %v8502 = vld [vmem:[%s8480 + $0x54] sm:$0xf]
  %v8503 = vld [vmem:[%s8480 + $0x58] sm:$0xf]
  %v8504 = vld [vmem:[%s8480 + $0x5c] sm:$0xf]
  %v8505 = vld [vmem:[%s8480 + $0x60] sm:$0xf]
  %v8506 = vld [vmem:[%s8480 + $0x64] sm:$0xf]
  %v8507 = vld [vmem:[%s8480 + $0x68] sm:$0xf]
  %v8508 = vld [vmem:[%s8480 + $0x6c] sm:$0xf]
  %v8509 = vld [vmem:[%s8480 + $0x70] sm:$0xf]
  %v8510 = vld [vmem:[%s8480 + $0x74] sm:$0xf]
  %v8511 = vld [vmem:[%s8480 + $0x78] sm:$0xf]
  %v8512 = vld [vmem:[%s8480 + $0x7c] sm:$0xf]
  %v8527 = vunpack.c.l.b16 %v8466
  %v8528 = vunpack.c.h.b16 %v8466
  %v8529 = vunpack.c.l.b16 %v8467
  %v8530 = vunpack.c.h.b16 %v8467
  %v8531 = vunpack.c.l.b16 %v8468
  %v8532 = vunpack.c.h.b16 %v8468
  %v8533 = vunpack.c.l.b16 %v8469
  %v8534 = vunpack.c.h.b16 %v8469
  %v8535 = vunpack.c.l.b16 %v8470
  %v8536 = vunpack.c.h.b16 %v8470
  %v8537 = vunpack.c.l.b16 %v8471
  %v8538 = vunpack.c.h.b16 %v8471
  %v8539 = vunpack.c.l.b16 %v8472
  %v8540 = vunpack.c.h.b16 %v8472
  %v8541 = vunpack.c.l.b16 %v8473
  %v8542 = vunpack.c.h.b16 %v8473
  %v8543 = vunpack.c.l.b16 %v8474
  %v8544 = vunpack.c.h.b16 %v8474
  %v8545 = vunpack.c.l.b16 %v8475
  %v8546 = vunpack.c.h.b16 %v8475
  %v8547 = vunpack.c.l.b16 %v8476
  %v8548 = vunpack.c.h.b16 %v8476
  %v8549 = vunpack.c.l.b16 %v8477
  %v8550 = vunpack.c.h.b16 %v8477
  %v8551 = vunpack.c.l.b16 %v8478
  %v8552 = vunpack.c.h.b16 %v8478
  %v8553 = vunpack.c.l.b16 %v8479
  %v8554 = vunpack.c.h.b16 %v8479
  %v8555 = vpack.c.b16 %v8529, %v8527
  %v8556 = vpack.c.b16 %v8530, %v8528
  %v8557 = vpack.c.b16 %v8533, %v8531
  %v8558 = vpack.c.b16 %v8534, %v8532
  %v8559 = vpack.c.b16 %v8537, %v8535
  %v8560 = vpack.c.b16 %v8538, %v8536
  %v8561 = vpack.c.b16 %v8541, %v8539
  %v8562 = vpack.c.b16 %v8542, %v8540
  %v8563 = vpack.c.b16 %v8545, %v8543
  %v8564 = vpack.c.b16 %v8546, %v8544
  %v8565 = vpack.c.b16 %v8549, %v8547
  %v8566 = vpack.c.b16 %v8550, %v8548
  %v8567 = vpack.c.b16 %v8553, %v8551
  %v8568 = vpack.c.b16 %v8554, %v8552
  %v8615 = vunpack.c.l.b16 %v8481
  %v8616 = vunpack.c.l.b16 %v8482
  %v8617 = vunpack.c.l.b16 %v8483
  %v8618 = vunpack.c.l.b16 %v8484
  %v8619 = vunpack.c.l.b16 %v8485
  %v8620 = vunpack.c.l.b16 %v8486
  %v8621 = vunpack.c.l.b16 %v8487
  %v8622 = vunpack.c.l.b16 %v8488
  %v8623 = vunpack.c.l.b16 %v8489
  %v8624 = vunpack.c.l.b16 %v8490
  %v8625 = vunpack.c.l.b16 %v8491
  %v8626 = vunpack.c.l.b16 %v8492
  %v8627 = vunpack.c.l.b16 %v8493
  %v8628 = vunpack.c.l.b16 %v8494
  %v8629 = vunpack.c.l.b16 %v8495
  %v8630 = vunpack.c.l.b16 %v8496
  %v8631 = vunpack.c.l.b16 %v8497
  %v8632 = vunpack.c.l.b16 %v8498
  %v8633 = vunpack.c.l.b16 %v8499
  %v8634 = vunpack.c.l.b16 %v8500
  %v8635 = vunpack.c.l.b16 %v8501
  %v8636 = vunpack.c.l.b16 %v8502
  %v8637 = vunpack.c.l.b16 %v8503
  %v8638 = vunpack.c.l.b16 %v8504
  %v8639 = vunpack.c.l.b16 %v8505
  %v8640 = vunpack.c.l.b16 %v8506
  %v8641 = vunpack.c.l.b16 %v8507
  %v8642 = vunpack.c.l.b16 %v8508
  %v8643 = vunpack.c.l.b16 %v8509
  %v8644 = vunpack.c.l.b16 %v8510
  %v8645 = vunpack.c.l.b16 %v8511
  %v8646 = vunpack.c.l.b16 %v8512
  %v8647 = vpack.c.b16 %v8616, %v8615
  %v8648 = vpack.c.b16 %v8618, %v8617
  %v8649 = vpack.c.b16 %v8620, %v8619
  %v8650 = vpack.c.b16 %v8622, %v8621
  %v8651 = vpack.c.b16 %v8624, %v8623
  %v8652 = vpack.c.b16 %v8626, %v8625
  %v8653 = vpack.c.b16 %v8628, %v8627
  %v8654 = vpack.c.b16 %v8630, %v8629
  %v8655 = vpack.c.b16 %v8632, %v8631
  %v8656 = vpack.c.b16 %v8634, %v8633
  %v8657 = vpack.c.b16 %v8636, %v8635
  %v8658 = vpack.c.b16 %v8638, %v8637
  %v8659 = vpack.c.b16 %v8640, %v8639
  %v8660 = vpack.c.b16 %v8642, %v8641
  %v8661 = vpack.c.b16 %v8644, %v8643
  %v8662 = vpack.c.b16 %v8646, %v8645
  %8679 = vmatprep.subr.bf16.mxu0 0
  %8680 = vmatpush1.bf16.msra.mxu0 %v8654
  %8681 = vmatprep.subr.bf16.mxu0 0
  %8682 = vmatpush1.bf16.msra.mxu0 %v8653
  %8683 = vmatprep.subr.bf16.mxu0 0
  %8684 = vmatpush1.bf16.msra.mxu0 %v8652
  %8685 = vmatprep.subr.bf16.mxu0 0
  %8686 = vmatpush1.bf16.msra.mxu0 %v8651
  %8687 = vmatprep.subr.bf16.mxu0 0
  %8688 = vmatpush1.bf16.msra.mxu0 %v8650
  %8689 = vmatprep.subr.bf16.mxu0 0
  %8690 = vmatpush1.bf16.msra.mxu0 %v8649
  %8691 = vmatprep.subr.bf16.mxu0 0
  %8692 = vmatpush1.bf16.msra.mxu0 %v8648
  %8693 = vmatprep.subr.bf16.mxu0 0
  %8694 = vmatpush1.bf16.msra.mxu0 %v8647
  %8695 = vmatprep.subr.bf16.mxu0 0
  %8696 = vmatpush2.bf16.msra.mxu0 %v8662
  %8697 = vmatprep.subr.bf16.mxu0 0
  %8698 = vmatpush2.bf16.msra.mxu0 %v8661
  %8699 = vmatprep.subr.bf16.mxu0 0
  %8700 = vmatpush2.bf16.msra.mxu0 %v8660
  %8701 = vmatprep.subr.bf16.mxu0 0
  %8702 = vmatpush2.bf16.msra.mxu0 %v8659
  %8703 = vmatprep.subr.bf16.mxu0 0
  %8704 = vmatpush2.bf16.msra.mxu0 %v8658
  %8705 = vmatprep.subr.bf16.mxu0 0
  %8706 = vmatpush2.bf16.msra.mxu0 %v8657
  %8707 = vmatprep.subr.bf16.mxu0 0
  %8708 = vmatpush2.bf16.msra.mxu0 %v8656
  %8709 = vmatprep.subr.bf16.mxu0 0
  %8710 = vmatpush2.bf16.msra.mxu0 %v8655
  %8711 = vmatprep.mubr.bf16.mxu0 %v8556
  %8712 = vmatmul.mubr.bf16.gmra.mxu0 %v8555
  %v8713 = vpop.f32.mrf.mxu0
  %v8714 = vadd.f32 0.0, %v8713
  %v8715 = vpop.f32.mrf.mxu0
  %v8716 = vpop.f32.mrf.mxu0
  %v8717 = vadd.f32 0.0, %v8716
  %v8718 = vpop.f32.mrf.mxu0
  %8719 = vmatprep.mubr.bf16.mxu0 %v8558
  %8720 = vmatmul.mubr.bf16.gmra.mxu0 %v8557
  %v8721 = vpop.f32.mrf.mxu0
  %v8722 = vadd.f32 0.0, %v8721
  %v8723 = vpop.f32.mrf.mxu0
  %v8724 = vpop.f32.mrf.mxu0
  %v8725 = vadd.f32 0.0, %v8724
  %v8726 = vpop.f32.mrf.mxu0
  %8727 = vmatprep.mubr.bf16.mxu0 %v8560
  %8728 = vmatmul.mubr.bf16.gmra.mxu0 %v8559
  %v8729 = vpop.f32.mrf.mxu0
  %v8730 = vadd.f32 0.0, %v8729
  %v8731 = vpop.f32.mrf.mxu0
  %v8732 = vpop.f32.mrf.mxu0
  %v8733 = vadd.f32 0.0, %v8732
  %v8734 = vpop.f32.mrf.mxu0
  %8735 = vmatprep.mubr.bf16.mxu0 %v8562
  %8736 = vmatmul.mubr.bf16.gmra.mxu0 %v8561
  %v8737 = vpop.f32.mrf.mxu0
  %v8738 = vadd.f32 0.0, %v8737
  %v8739 = vpop.f32.mrf.mxu0
  %v8740 = vpop.f32.mrf.mxu0
  %v8741 = vadd.f32 0.0, %v8740
  %v8742 = vpop.f32.mrf.mxu0
  %8743 = vmatprep.mubr.bf16.mxu0 %v8564
  %8744 = vmatmul.mubr.bf16.gmra.mxu0 %v8563
  %v8745 = vpop.f32.mrf.mxu0
  %v8746 = vadd.f32 0.0, %v8745
  %v8747 = vpop.f32.mrf.mxu0
  %v8748 = vpop.f32.mrf.mxu0
  %v8749 = vadd.f32 0.0, %v8748
  %v8750 = vpop.f32.mrf.mxu0
  %8751 = vmatprep.mubr.bf16.mxu0 %v8566
  %8752 = vmatmul.mubr.bf16.gmra.mxu0 %v8565
  %v8753 = vpop.f32.mrf.mxu0
  %v8754 = vadd.f32 0.0, %v8753
  %v8755 = vpop.f32.mrf.mxu0
  %v8756 = vpop.f32.mrf.mxu0
  %v8757 = vadd.f32 0.0, %v8756
  %v8758 = vpop.f32.mrf.mxu0
  %8759 = vmatprep.mubr.bf16.mxu0 %v8568
  %8760 = vmatmul.mubr.bf16.gmra.mxu0 %v8567
  %v8761 = vpop.f32.mrf.mxu0
  %v8762 = vadd.f32 0.0, %v8761
  %v8763 = vpop.f32.mrf.mxu0
  %v8764 = vpop.f32.mrf.mxu0
  %v8765 = vadd.f32 0.0, %v8764
  %v8766 = vpop.f32.mrf.mxu0
  %8767 = vdwg.mxu0
  %v8768 = vadd.f32 %v8452, %v8714
  %v8769 = vadd.f32 %v8453, %v8717
  %v8770 = vadd.f32 %v8454, %v8722
  %v8771 = vadd.f32 %v8455, %v8725
  %v8772 = vadd.f32 %v8456, %v8730
  %v8773 = vadd.f32 %v8457, %v8733
  %v8774 = vadd.f32 %v8458, %v8738
  %v8775 = vadd.f32 %v8459, %v8741
  %v8776 = vadd.f32 %v8460, %v8746
  %v8777 = vadd.f32 %v8461, %v8749
  %v8778 = vadd.f32 %v8462, %v8754
  %v8779 = vadd.f32 %v8463, %v8757
  %v8780 = vadd.f32 %v8464, %v8762
  %v8781 = vadd.f32 %v8465, %v8765
  %v8782 = vld [vmem:[#allocation2 + $0x18] sm:$0xff]
  %v8783 = vld [vmem:[#allocation2 + $0x20] sm:$0xff]
  %v8784 = vld [vmem:[#allocation2 + $0x28] sm:$0xff]
  %v8785 = vld [vmem:[#allocation2 + $0x30] sm:$0xff]
  %v8786 = vld [vmem:[#allocation2 + $0x38] sm:$0xff]
  %v8787 = vld [vmem:[#allocation2 + $0x40] sm:$0xff]
  %v8788 = vld [vmem:[#allocation2 + $0x48] sm:$0xff]
  %v8789 = vld [vmem:[#allocation2 + $0x50] sm:$0xff]
  %v8790 = vld [vmem:[#allocation2 + $0x58] sm:$0xff]
  %v8791 = vld [vmem:[#allocation2 + $0x60] sm:$0xff]
  %v8792 = vld [vmem:[#allocation2 + $0x68] sm:$0xff]
  %v8793 = vld [vmem:[#allocation2 + $0x70] sm:$0xff]
  %v8794 = vld [vmem:[#allocation2 + $0x78] sm:$0xff]
  %v8795 = vld [vmem:[#allocation2 + $0x80] sm:$0xff]
  %s8796 = scalar_lea.vmem %s13, 384
  %v8797 = vld [vmem:[%s8796] sm:$0xf]
  %v8798 = vld [vmem:[%s8796 + $0x4] sm:$0xf]
  %v8799 = vld [vmem:[%s8796 + $0x8] sm:$0xf]
  %v8800 = vld [vmem:[%s8796 + $0xc] sm:$0xf]
  %v8801 = vld [vmem:[%s8796 + $0x10] sm:$0xf]
  %v8802 = vld [vmem:[%s8796 + $0x14] sm:$0xf]
  %v8803 = vld [vmem:[%s8796 + $0x18] sm:$0xf]
  %v8804 = vld [vmem:[%s8796 + $0x1c] sm:$0xf]
  %v8805 = vld [vmem:[%s8796 + $0x20] sm:$0xf]
  %v8806 = vld [vmem:[%s8796 + $0x24] sm:$0xf]
  %v8807 = vld [vmem:[%s8796 + $0x28] sm:$0xf]
  %v8808 = vld [vmem:[%s8796 + $0x2c] sm:$0xf]
  %v8809 = vld [vmem:[%s8796 + $0x30] sm:$0xf]
  %v8810 = vld [vmem:[%s8796 + $0x34] sm:$0xf]
  %v8811 = vld [vmem:[%s8796 + $0x38] sm:$0xf]
  %v8812 = vld [vmem:[%s8796 + $0x3c] sm:$0xf]
  %v8813 = vld [vmem:[%s8796 + $0x40] sm:$0xf]
  %v8814 = vld [vmem:[%s8796 + $0x44] sm:$0xf]
  %v8815 = vld [vmem:[%s8796 + $0x48] sm:$0xf]
  %v8816 = vld [vmem:[%s8796 + $0x4c] sm:$0xf]
  %v8817 = vld [vmem:[%s8796 + $0x50] sm:$0xf]
  %v8818 = vld [vmem:[%s8796 + $0x54] sm:$0xf]
  %v8819 = vld [vmem:[%s8796 + $0x58] sm:$0xf]
  %v8820 = vld [vmem:[%s8796 + $0x5c] sm:$0xf]
  %v8821 = vld [vmem:[%s8796 + $0x60] sm:$0xf]
  %v8822 = vld [vmem:[%s8796 + $0x64] sm:$0xf]
  %v8823 = vld [vmem:[%s8796 + $0x68] sm:$0xf]
  %v8824 = vld [vmem:[%s8796 + $0x6c] sm:$0xf]
  %v8825 = vld [vmem:[%s8796 + $0x70] sm:$0xf]
  %v8826 = vld [vmem:[%s8796 + $0x74] sm:$0xf]
  %v8827 = vld [vmem:[%s8796 + $0x78] sm:$0xf]
  %v8828 = vld [vmem:[%s8796 + $0x7c] sm:$0xf]
  %v8843 = vunpack.c.l.b16 %v8782
  %v8844 = vunpack.c.h.b16 %v8782
  %v8845 = vunpack.c.l.b16 %v8783
  %v8846 = vunpack.c.h.b16 %v8783
  %v8847 = vunpack.c.l.b16 %v8784
  %v8848 = vunpack.c.h.b16 %v8784
  %v8849 = vunpack.c.l.b16 %v8785
  %v8850 = vunpack.c.h.b16 %v8785
  %v8851 = vunpack.c.l.b16 %v8786
  %v8852 = vunpack.c.h.b16 %v8786
  %v8853 = vunpack.c.l.b16 %v8787
  %v8854 = vunpack.c.h.b16 %v8787
  %v8855 = vunpack.c.l.b16 %v8788
  %v8856 = vunpack.c.h.b16 %v8788
  %v8857 = vunpack.c.l.b16 %v8789
  %v8858 = vunpack.c.h.b16 %v8789
  %v8859 = vunpack.c.l.b16 %v8790
  %v8860 = vunpack.c.h.b16 %v8790
  %v8861 = vunpack.c.l.b16 %v8791
  %v8862 = vunpack.c.h.b16 %v8791
  %v8863 = vunpack.c.l.b16 %v8792
  %v8864 = vunpack.c.h.b16 %v8792
  %v8865 = vunpack.c.l.b16 %v8793
  %v8866 = vunpack.c.h.b16 %v8793
  %v8867 = vunpack.c.l.b16 %v8794
  %v8868 = vunpack.c.h.b16 %v8794
  %v8869 = vunpack.c.l.b16 %v8795
  %v8870 = vunpack.c.h.b16 %v8795
  %v8871 = vpack.c.b16 %v8845, %v8843
  %v8872 = vpack.c.b16 %v8846, %v8844
  %v8873 = vpack.c.b16 %v8849, %v8847
  %v8874 = vpack.c.b16 %v8850, %v8848
  %v8875 = vpack.c.b16 %v8853, %v8851
  %v8876 = vpack.c.b16 %v8854, %v8852
  %v8877 = vpack.c.b16 %v8857, %v8855
  %v8878 = vpack.c.b16 %v8858, %v8856
  %v8879 = vpack.c.b16 %v8861, %v8859
  %v8880 = vpack.c.b16 %v8862, %v8860
  %v8881 = vpack.c.b16 %v8865, %v8863
  %v8882 = vpack.c.b16 %v8866, %v8864
  %v8883 = vpack.c.b16 %v8869, %v8867
  %v8884 = vpack.c.b16 %v8870, %v8868
  %v8931 = vunpack.c.l.b16 %v8797
  %v8932 = vunpack.c.l.b16 %v8798
  %v8933 = vunpack.c.l.b16 %v8799
  %v8934 = vunpack.c.l.b16 %v8800
  %v8935 = vunpack.c.l.b16 %v8801
  %v8936 = vunpack.c.l.b16 %v8802
  %v8937 = vunpack.c.l.b16 %v8803
  %v8938 = vunpack.c.l.b16 %v8804
  %v8939 = vunpack.c.l.b16 %v8805
  %v8940 = vunpack.c.l.b16 %v8806
  %v8941 = vunpack.c.l.b16 %v8807
  %v8942 = vunpack.c.l.b16 %v8808
  %v8943 = vunpack.c.l.b16 %v8809
  %v8944 = vunpack.c.l.b16 %v8810
  %v8945 = vunpack.c.l.b16 %v8811
  %v8946 = vunpack.c.l.b16 %v8812
  %v8947 = vunpack.c.l.b16 %v8813
  %v8948 = vunpack.c.l.b16 %v8814
  %v8949 = vunpack.c.l.b16 %v8815
  %v8950 = vunpack.c.l.b16 %v8816
  %v8951 = vunpack.c.l.b16 %v8817
  %v8952 = vunpack.c.l.b16 %v8818
  %v8953 = vunpack.c.l.b16 %v8819
  %v8954 = vunpack.c.l.b16 %v8820
  %v8955 = vunpack.c.l.b16 %v8821
  %v8956 = vunpack.c.l.b16 %v8822
  %v8957 = vunpack.c.l.b16 %v8823
  %v8958 = vunpack.c.l.b16 %v8824
  %v8959 = vunpack.c.l.b16 %v8825
  %v8960 = vunpack.c.l.b16 %v8826
  %v8961 = vunpack.c.l.b16 %v8827
  %v8962 = vunpack.c.l.b16 %v8828
  %v8963 = vpack.c.b16 %v8932, %v8931
  %v8964 = vpack.c.b16 %v8934, %v8933
  %v8965 = vpack.c.b16 %v8936, %v8935
  %v8966 = vpack.c.b16 %v8938, %v8937
  %v8967 = vpack.c.b16 %v8940, %v8939
  %v8968 = vpack.c.b16 %v8942, %v8941
  %v8969 = vpack.c.b16 %v8944, %v8943
  %v8970 = vpack.c.b16 %v8946, %v8945
  %v8971 = vpack.c.b16 %v8948, %v8947
  %v8972 = vpack.c.b16 %v8950, %v8949
  %v8973 = vpack.c.b16 %v8952, %v8951
  %v8974 = vpack.c.b16 %v8954, %v8953
  %v8975 = vpack.c.b16 %v8956, %v8955
  %v8976 = vpack.c.b16 %v8958, %v8957
  %v8977 = vpack.c.b16 %v8960, %v8959
  %v8978 = vpack.c.b16 %v8962, %v8961
  %8995 = vmatprep.subr.bf16.mxu0 0
  %8996 = vmatpush1.bf16.msra.mxu0 %v8970
  %8997 = vmatprep.subr.bf16.mxu0 0
  %8998 = vmatpush1.bf16.msra.mxu0 %v8969
  %8999 = vmatprep.subr.bf16.mxu0 0
  %9000 = vmatpush1.bf16.msra.mxu0 %v8968
  %9001 = vmatprep.subr.bf16.mxu0 0
  %9002 = vmatpush1.bf16.msra.mxu0 %v8967
  %9003 = vmatprep.subr.bf16.mxu0 0
  %9004 = vmatpush1.bf16.msra.mxu0 %v8966
  %9005 = vmatprep.subr.bf16.mxu0 0
  %9006 = vmatpush1.bf16.msra.mxu0 %v8965
  %9007 = vmatprep.subr.bf16.mxu0 0
  %9008 = vmatpush1.bf16.msra.mxu0 %v8964
  %9009 = vmatprep.subr.bf16.mxu0 0
  %9010 = vmatpush1.bf16.msra.mxu0 %v8963
  %9011 = vmatprep.subr.bf16.mxu0 0
  %9012 = vmatpush2.bf16.msra.mxu0 %v8978
  %9013 = vmatprep.subr.bf16.mxu0 0
  %9014 = vmatpush2.bf16.msra.mxu0 %v8977
  %9015 = vmatprep.subr.bf16.mxu0 0
  %9016 = vmatpush2.bf16.msra.mxu0 %v8976
  %9017 = vmatprep.subr.bf16.mxu0 0
  %9018 = vmatpush2.bf16.msra.mxu0 %v8975
  %9019 = vmatprep.subr.bf16.mxu0 0
  %9020 = vmatpush2.bf16.msra.mxu0 %v8974
  %9021 = vmatprep.subr.bf16.mxu0 0
  %9022 = vmatpush2.bf16.msra.mxu0 %v8973
  %9023 = vmatprep.subr.bf16.mxu0 0
  %9024 = vmatpush2.bf16.msra.mxu0 %v8972
  %9025 = vmatprep.subr.bf16.mxu0 0
  %9026 = vmatpush2.bf16.msra.mxu0 %v8971
  %9027 = vmatprep.mubr.bf16.mxu0 %v8872
  %9028 = vmatmul.mubr.bf16.gmra.mxu0 %v8871
  %v9029 = vpop.f32.mrf.mxu0
  %v9030 = vadd.f32 0.0, %v9029
  %v9031 = vpop.f32.mrf.mxu0
  %v9032 = vpop.f32.mrf.mxu0
  %v9033 = vadd.f32 0.0, %v9032
  %v9034 = vpop.f32.mrf.mxu0
  %9035 = vmatprep.mubr.bf16.mxu0 %v8874
  %9036 = vmatmul.mubr.bf16.gmra.mxu0 %v8873
  %v9037 = vpop.f32.mrf.mxu0
  %v9038 = vadd.f32 0.0, %v9037
  %v9039 = vpop.f32.mrf.mxu0
  %v9040 = vpop.f32.mrf.mxu0
  %v9041 = vadd.f32 0.0, %v9040
  %v9042 = vpop.f32.mrf.mxu0
  %9043 = vmatprep.mubr.bf16.mxu0 %v8876
  %9044 = vmatmul.mubr.bf16.gmra.mxu0 %v8875
  %v9045 = vpop.f32.mrf.mxu0
  %v9046 = vadd.f32 0.0, %v9045
  %v9047 = vpop.f32.mrf.mxu0
  %v9048 = vpop.f32.mrf.mxu0
  %v9049 = vadd.f32 0.0, %v9048
  %v9050 = vpop.f32.mrf.mxu0
  %9051 = vmatprep.mubr.bf16.mxu0 %v8878
  %9052 = vmatmul.mubr.bf16.gmra.mxu0 %v8877
  %v9053 = vpop.f32.mrf.mxu0
  %v9054 = vadd.f32 0.0, %v9053
  %v9055 = vpop.f32.mrf.mxu0
  %v9056 = vpop.f32.mrf.mxu0
  %v9057 = vadd.f32 0.0, %v9056
  %v9058 = vpop.f32.mrf.mxu0
  %9059 = vmatprep.mubr.bf16.mxu0 %v8880
  %9060 = vmatmul.mubr.bf16.gmra.mxu0 %v8879
  %v9061 = vpop.f32.mrf.mxu0
  %v9062 = vadd.f32 0.0, %v9061
  %v9063 = vpop.f32.mrf.mxu0
  %v9064 = vpop.f32.mrf.mxu0
  %v9065 = vadd.f32 0.0, %v9064
  %v9066 = vpop.f32.mrf.mxu0
  %9067 = vmatprep.mubr.bf16.mxu0 %v8882
  %9068 = vmatmul.mubr.bf16.gmra.mxu0 %v8881
  %v9069 = vpop.f32.mrf.mxu0
  %v9070 = vadd.f32 0.0, %v9069
  %v9071 = vpop.f32.mrf.mxu0
  %v9072 = vpop.f32.mrf.mxu0
  %v9073 = vadd.f32 0.0, %v9072
  %v9074 = vpop.f32.mrf.mxu0
  %9075 = vmatprep.mubr.bf16.mxu0 %v8884
  %9076 = vmatmul.mubr.bf16.gmra.mxu0 %v8883
  %v9077 = vpop.f32.mrf.mxu0
  %v9078 = vadd.f32 0.0, %v9077
  %v9079 = vpop.f32.mrf.mxu0
  %v9080 = vpop.f32.mrf.mxu0
  %v9081 = vadd.f32 0.0, %v9080
  %v9082 = vpop.f32.mrf.mxu0
  %9083 = vdwg.mxu0
  %v9084 = vadd.f32 %v8768, %v9030
  %v9085 = vadd.f32 %v8769, %v9033
  %v9086 = vadd.f32 %v8770, %v9038
  %v9087 = vadd.f32 %v8771, %v9041
  %v9088 = vadd.f32 %v8772, %v9046
  %v9089 = vadd.f32 %v8773, %v9049
  %v9090 = vadd.f32 %v8774, %v9054
  %v9091 = vadd.f32 %v8775, %v9057
  %v9092 = vadd.f32 %v8776, %v9062
  %v9093 = vadd.f32 %v8777, %v9065
  %v9094 = vadd.f32 %v8778, %v9070
  %v9095 = vadd.f32 %v8779, %v9073
  %v9096 = vadd.f32 %v8780, %v9078
  %v9097 = vadd.f32 %v8781, %v9081
  %v9098 = vld [vmem:[#allocation2 + $0x20] sm:$0xff]
  %v9099 = vld [vmem:[#allocation2 + $0x28] sm:$0xff]
  %v9100 = vld [vmem:[#allocation2 + $0x30] sm:$0xff]
  %v9101 = vld [vmem:[#allocation2 + $0x38] sm:$0xff]
  %v9102 = vld [vmem:[#allocation2 + $0x40] sm:$0xff]
  %v9103 = vld [vmem:[#allocation2 + $0x48] sm:$0xff]
  %v9104 = vld [vmem:[#allocation2 + $0x50] sm:$0xff]
  %v9105 = vld [vmem:[#allocation2 + $0x58] sm:$0xff]
  %v9106 = vld [vmem:[#allocation2 + $0x60] sm:$0xff]
  %v9107 = vld [vmem:[#allocation2 + $0x68] sm:$0xff]
  %v9108 = vld [vmem:[#allocation2 + $0x70] sm:$0xff]
  %v9109 = vld [vmem:[#allocation2 + $0x78] sm:$0xff]
  %v9110 = vld [vmem:[#allocation2 + $0x80] sm:$0xff]
  %v9111 = vld [vmem:[#allocation2 + $0x88] sm:$0xff]
  %s9112 = scalar_lea.vmem %s13, 512
  %v9113 = vld [vmem:[%s9112] sm:$0xf]
  %v9114 = vld [vmem:[%s9112 + $0x4] sm:$0xf]
  %v9115 = vld [vmem:[%s9112 + $0x8] sm:$0xf]
  %v9116 = vld [vmem:[%s9112 + $0xc] sm:$0xf]
  %v9117 = vld [vmem:[%s9112 + $0x10] sm:$0xf]
  %v9118 = vld [vmem:[%s9112 + $0x14] sm:$0xf]
  %v9119 = vld [vmem:[%s9112 + $0x18] sm:$0xf]
  %v9120 = vld [vmem:[%s9112 + $0x1c] sm:$0xf]
  %v9121 = vld [vmem:[%s9112 + $0x20] sm:$0xf]
  %v9122 = vld [vmem:[%s9112 + $0x24] sm:$0xf]
  %v9123 = vld [vmem:[%s9112 + $0x28] sm:$0xf]
  %v9124 = vld [vmem:[%s9112 + $0x2c] sm:$0xf]
  %v9125 = vld [vmem:[%s9112 + $0x30] sm:$0xf]
  %v9126 = vld [vmem:[%s9112 + $0x34] sm:$0xf]
  %v9127 = vld [vmem:[%s9112 + $0x38] sm:$0xf]
  %v9128 = vld [vmem:[%s9112 + $0x3c] sm:$0xf]
  %v9129 = vld [vmem:[%s9112 + $0x40] sm:$0xf]
  %v9130 = vld [vmem:[%s9112 + $0x44] sm:$0xf]
  %v9131 = vld [vmem:[%s9112 + $0x48] sm:$0xf]
  %v9132 = vld [vmem:[%s9112 + $0x4c] sm:$0xf]
  %v9133 = vld [vmem:[%s9112 + $0x50] sm:$0xf]
  %v9134 = vld [vmem:[%s9112 + $0x54] sm:$0xf]
  %v9135 = vld [vmem:[%s9112 + $0x58] sm:$0xf]
  %v9136 = vld [vmem:[%s9112 + $0x5c] sm:$0xf]
  %v9137 = vld [vmem:[%s9112 + $0x60] sm:$0xf]
  %v9138 = vld [vmem:[%s9112 + $0x64] sm:$0xf]
  %v9139 = vld [vmem:[%s9112 + $0x68] sm:$0xf]
  %v9140 = vld [vmem:[%s9112 + $0x6c] sm:$0xf]
  %v9141 = vld [vmem:[%s9112 + $0x70] sm:$0xf]
  %v9142 = vld [vmem:[%s9112 + $0x74] sm:$0xf]
  %v9143 = vld [vmem:[%s9112 + $0x78] sm:$0xf]
  %v9144 = vld [vmem:[%s9112 + $0x7c] sm:$0xf]
  %v9159 = vunpack.c.l.b16 %v9098
  %v9160 = vunpack.c.h.b16 %v9098
  %v9161 = vunpack.c.l.b16 %v9099
  %v9162 = vunpack.c.h.b16 %v9099
  %v9163 = vunpack.c.l.b16 %v9100
  %v9164 = vunpack.c.h.b16 %v9100
  %v9165 = vunpack.c.l.b16 %v9101
  %v9166 = vunpack.c.h.b16 %v9101
  %v9167 = vunpack.c.l.b16 %v9102
  %v9168 = vunpack.c.h.b16 %v9102
  %v9169 = vunpack.c.l.b16 %v9103
  %v9170 = vunpack.c.h.b16 %v9103
  %v9171 = vunpack.c.l.b16 %v9104
  %v9172 = vunpack.c.h.b16 %v9104
  %v9173 = vunpack.c.l.b16 %v9105
  %v9174 = vunpack.c.h.b16 %v9105
  %v9175 = vunpack.c.l.b16 %v9106
  %v9176 = vunpack.c.h.b16 %v9106
  %v9177 = vunpack.c.l.b16 %v9107
  %v9178 = vunpack.c.h.b16 %v9107
  %v9179 = vunpack.c.l.b16 %v9108
  %v9180 = vunpack.c.h.b16 %v9108
  %v9181 = vunpack.c.l.b16 %v9109
  %v9182 = vunpack.c.h.b16 %v9109
  %v9183 = vunpack.c.l.b16 %v9110
  %v9184 = vunpack.c.h.b16 %v9110
  %v9185 = vunpack.c.l.b16 %v9111
  %v9186 = vunpack.c.h.b16 %v9111
  %v9187 = vpack.c.b16 %v9161, %v9159
  %v9188 = vpack.c.b16 %v9162, %v9160
  %v9189 = vpack.c.b16 %v9165, %v9163
  %v9190 = vpack.c.b16 %v9166, %v9164
  %v9191 = vpack.c.b16 %v9169, %v9167
  %v9192 = vpack.c.b16 %v9170, %v9168
  %v9193 = vpack.c.b16 %v9173, %v9171
  %v9194 = vpack.c.b16 %v9174, %v9172
  %v9195 = vpack.c.b16 %v9177, %v9175
  %v9196 = vpack.c.b16 %v9178, %v9176
  %v9197 = vpack.c.b16 %v9181, %v9179
  %v9198 = vpack.c.b16 %v9182, %v9180
  %v9199 = vpack.c.b16 %v9185, %v9183
  %v9200 = vpack.c.b16 %v9186, %v9184
  %v9247 = vunpack.c.l.b16 %v9113
  %v9248 = vunpack.c.l.b16 %v9114
  %v9249 = vunpack.c.l.b16 %v9115
  %v9250 = vunpack.c.l.b16 %v9116
  %v9251 = vunpack.c.l.b16 %v9117
  %v9252 = vunpack.c.l.b16 %v9118
  %v9253 = vunpack.c.l.b16 %v9119
  %v9254 = vunpack.c.l.b16 %v9120
  %v9255 = vunpack.c.l.b16 %v9121
  %v9256 = vunpack.c.l.b16 %v9122
  %v9257 = vunpack.c.l.b16 %v9123
  %v9258 = vunpack.c.l.b16 %v9124
  %v9259 = vunpack.c.l.b16 %v9125
  %v9260 = vunpack.c.l.b16 %v9126
  %v9261 = vunpack.c.l.b16 %v9127
  %v9262 = vunpack.c.l.b16 %v9128
  %v9263 = vunpack.c.l.b16 %v9129
  %v9264 = vunpack.c.l.b16 %v9130
  %v9265 = vunpack.c.l.b16 %v9131
  %v9266 = vunpack.c.l.b16 %v9132
  %v9267 = vunpack.c.l.b16 %v9133
  %v9268 = vunpack.c.l.b16 %v9134
  %v9269 = vunpack.c.l.b16 %v9135
  %v9270 = vunpack.c.l.b16 %v9136
  %v9271 = vunpack.c.l.b16 %v9137
  %v9272 = vunpack.c.l.b16 %v9138
  %v9273 = vunpack.c.l.b16 %v9139
  %v9274 = vunpack.c.l.b16 %v9140
  %v9275 = vunpack.c.l.b16 %v9141
  %v9276 = vunpack.c.l.b16 %v9142
  %v9277 = vunpack.c.l.b16 %v9143
  %v9278 = vunpack.c.l.b16 %v9144
  %v9279 = vpack.c.b16 %v9248, %v9247
  %v9280 = vpack.c.b16 %v9250, %v9249
  %v9281 = vpack.c.b16 %v9252, %v9251
  %v9282 = vpack.c.b16 %v9254, %v9253
  %v9283 = vpack.c.b16 %v9256, %v9255
  %v9284 = vpack.c.b16 %v9258, %v9257
  %v9285 = vpack.c.b16 %v9260, %v9259
  %v9286 = vpack.c.b16 %v9262, %v9261
  %v9287 = vpack.c.b16 %v9264, %v9263
  %v9288 = vpack.c.b16 %v9266, %v9265
  %v9289 = vpack.c.b16 %v9268, %v9267
  %v9290 = vpack.c.b16 %v9270, %v9269
  %v9291 = vpack.c.b16 %v9272, %v9271
  %v9292 = vpack.c.b16 %v9274, %v9273
  %v9293 = vpack.c.b16 %v9276, %v9275
  %v9294 = vpack.c.b16 %v9278, %v9277
  %9311 = vmatprep.subr.bf16.mxu0 0
  %9312 = vmatpush1.bf16.msra.mxu0 %v9286
  %9313 = vmatprep.subr.bf16.mxu0 0
  %9314 = vmatpush1.bf16.msra.mxu0 %v9285
  %9315 = vmatprep.subr.bf16.mxu0 0
  %9316 = vmatpush1.bf16.msra.mxu0 %v9284
  %9317 = vmatprep.subr.bf16.mxu0 0
  %9318 = vmatpush1.bf16.msra.mxu0 %v9283
  %9319 = vmatprep.subr.bf16.mxu0 0
  %9320 = vmatpush1.bf16.msra.mxu0 %v9282
  %9321 = vmatprep.subr.bf16.mxu0 0
  %9322 = vmatpush1.bf16.msra.mxu0 %v9281
  %9323 = vmatprep.subr.bf16.mxu0 0
  %9324 = vmatpush1.bf16.msra.mxu0 %v9280
  %9325 = vmatprep.subr.bf16.mxu0 0
  %9326 = vmatpush1.bf16.msra.mxu0 %v9279
  %9327 = vmatprep.subr.bf16.mxu0 0
  %9328 = vmatpush2.bf16.msra.mxu0 %v9294
  %9329 = vmatprep.subr.bf16.mxu0 0
  %9330 = vmatpush2.bf16.msra.mxu0 %v9293
  %9331 = vmatprep.subr.bf16.mxu0 0
  %9332 = vmatpush2.bf16.msra.mxu0 %v9292
  %9333 = vmatprep.subr.bf16.mxu0 0
  %9334 = vmatpush2.bf16.msra.mxu0 %v9291
  %9335 = vmatprep.subr.bf16.mxu0 0
  %9336 = vmatpush2.bf16.msra.mxu0 %v9290
  %9337 = vmatprep.subr.bf16.mxu0 0
  %9338 = vmatpush2.bf16.msra.mxu0 %v9289
  %9339 = vmatprep.subr.bf16.mxu0 0
  %9340 = vmatpush2.bf16.msra.mxu0 %v9288
  %9341 = vmatprep.subr.bf16.mxu0 0
  %9342 = vmatpush2.bf16.msra.mxu0 %v9287
  %9343 = vmatprep.mubr.bf16.mxu0 %v9188
  %9344 = vmatmul.mubr.bf16.gmra.mxu0 %v9187
  %v9345 = vpop.f32.mrf.mxu0
  %v9346 = vadd.f32 0.0, %v9345
  %v9347 = vpop.f32.mrf.mxu0
  %v9348 = vpop.f32.mrf.mxu0
  %v9349 = vadd.f32 0.0, %v9348
  %v9350 = vpop.f32.mrf.mxu0
  %9351 = vmatprep.mubr.bf16.mxu0 %v9190
  %9352 = vmatmul.mubr.bf16.gmra.mxu0 %v9189
  %v9353 = vpop.f32.mrf.mxu0
  %v9354 = vadd.f32 0.0, %v9353
  %v9355 = vpop.f32.mrf.mxu0
  %v9356 = vpop.f32.mrf.mxu0
  %v9357 = vadd.f32 0.0, %v9356
  %v9358 = vpop.f32.mrf.mxu0
  %9359 = vmatprep.mubr.bf16.mxu0 %v9192
  %9360 = vmatmul.mubr.bf16.gmra.mxu0 %v9191
  %v9361 = vpop.f32.mrf.mxu0
  %v9362 = vadd.f32 0.0, %v9361
  %v9363 = vpop.f32.mrf.mxu0
  %v9364 = vpop.f32.mrf.mxu0
  %v9365 = vadd.f32 0.0, %v9364
  %v9366 = vpop.f32.mrf.mxu0
  %9367 = vmatprep.mubr.bf16.mxu0 %v9194
  %9368 = vmatmul.mubr.bf16.gmra.mxu0 %v9193
  %v9369 = vpop.f32.mrf.mxu0
  %v9370 = vadd.f32 0.0, %v9369
  %v9371 = vpop.f32.mrf.mxu0
  %v9372 = vpop.f32.mrf.mxu0
  %v9373 = vadd.f32 0.0, %v9372
  %v9374 = vpop.f32.mrf.mxu0
  %9375 = vmatprep.mubr.bf16.mxu0 %v9196
  %9376 = vmatmul.mubr.bf16.gmra.mxu0 %v9195
  %v9377 = vpop.f32.mrf.mxu0
  %v9378 = vadd.f32 0.0, %v9377
  %v9379 = vpop.f32.mrf.mxu0
  %v9380 = vpop.f32.mrf.mxu0
  %v9381 = vadd.f32 0.0, %v9380
  %v9382 = vpop.f32.mrf.mxu0
  %9383 = vmatprep.mubr.bf16.mxu0 %v9198
  %9384 = vmatmul.mubr.bf16.gmra.mxu0 %v9197
  %v9385 = vpop.f32.mrf.mxu0
  %v9386 = vadd.f32 0.0, %v9385
  %v9387 = vpop.f32.mrf.mxu0
  %v9388 = vpop.f32.mrf.mxu0
  %v9389 = vadd.f32 0.0, %v9388
  %v9390 = vpop.f32.mrf.mxu0
  %9391 = vmatprep.mubr.bf16.mxu0 %v9200
  %9392 = vmatmul.mubr.bf16.gmra.mxu0 %v9199
  %v9393 = vpop.f32.mrf.mxu0
  %v9394 = vadd.f32 0.0, %v9393
  %v9395 = vpop.f32.mrf.mxu0
  %v9396 = vpop.f32.mrf.mxu0
  %v9397 = vadd.f32 0.0, %v9396
  %v9398 = vpop.f32.mrf.mxu0
  %9399 = vdwg.mxu0
  %v9400 = vadd.f32 %v9084, %v9346
  %v9401 = vadd.f32 %v9085, %v9349
  %v9402 = vadd.f32 %v9086, %v9354
  %v9403 = vadd.f32 %v9087, %v9357
  %v9404 = vadd.f32 %v9088, %v9362
  %v9405 = vadd.f32 %v9089, %v9365
  %v9406 = vadd.f32 %v9090, %v9370
  %v9407 = vadd.f32 %v9091, %v9373
  %v9408 = vadd.f32 %v9092, %v9378
  %v9409 = vadd.f32 %v9093, %v9381
  %v9410 = vadd.f32 %v9094, %v9386
  %v9411 = vadd.f32 %v9095, %v9389
  %v9412 = vadd.f32 %v9096, %v9394
  %v9413 = vadd.f32 %v9097, %v9397
  %v9414 = vld [vmem:[%s15] sm:$0x1]
  %v9415 = vld [vmem:[%s16] sm:$0x1]
  %v9416 = vmul.f32 %v9400, %v3135
  %v9417 = vmul.f32 %v9401, %v3140
  %v9418 = vmul.f32 %v9402, %v3145
  %v9419 = vmul.f32 %v9403, %v3150
  %v9420 = vmul.f32 %v9404, %v3155
  %v9421 = vmul.f32 %v9405, %v3160
  %v9422 = vmul.f32 %v9406, %v3165
  %v9423 = vmul.f32 %v9407, %v3170
  %v9424 = vmul.f32 %v9408, %v3175
  %v9425 = vmul.f32 %v9409, %v3180
  %v9426 = vmul.f32 %v9410, %v3185
  %v9427 = vmul.f32 %v9411, %v3190
  %v9428 = vmul.f32 %v9412, %v3195
  %v9429 = vmul.f32 %v9413, %v3200
  %v9430 = vadd.f32 %v9416, %v9417
  %v9431 = vadd.f32 %v9430, %v9418
  %v9432 = vadd.f32 %v9431, %v9419
  %v9433 = vadd.f32 %v9432, %v9420
  %v9434 = vadd.f32 %v9433, %v9421
  %v9435 = vadd.f32 %v9434, %v9422
  %v9436 = vadd.f32 %v9435, %v9423
  %v9437 = vadd.f32 %v9436, %v9424
  %v9438 = vadd.f32 %v9437, %v9425
  %v9439 = vadd.f32 %v9438, %v9426
  %v9440 = vadd.f32 %v9439, %v9427
  %v9441 = vadd.f32 %v9440, %v9428
  %v9442 = vadd.f32 %v9441, %v9429
  %v9443 = vrot.slane %v9442, 4
  %v9444 = vadd.f32 %v9442, %v9443
  %v9445 = vrot.slane %v9444, 2
  %v9446 = vadd.f32 %v9444, %v9445
  %v9447 = vrot.slane %v9446, 1
  %v9448 = vadd.f32 %v9446, %v9447
  %v9449 = vmul.f32 %v9448, 0.03125
  %v9450 = vsub.f32 %v9400, %v9449
  %v9451 = vsub.f32 %v9401, %v9449
  %v9452 = vsub.f32 %v9402, %v9449
  %v9453 = vsub.f32 %v9403, %v9449
  %v9454 = vsub.f32 %v9404, %v9449
  %v9455 = vsub.f32 %v9405, %v9449
  %v9456 = vsub.f32 %v9406, %v9449
  %v9457 = vsub.f32 %v9407, %v9449
  %v9458 = vsub.f32 %v9408, %v9449
  %v9459 = vsub.f32 %v9409, %v9449
  %v9460 = vsub.f32 %v9410, %v9449
  %v9461 = vsub.f32 %v9411, %v9449
  %v9462 = vsub.f32 %v9412, %v9449
  %v9463 = vsub.f32 %v9413, %v9449
  %v9464 = vmul.f32 %v9450, %v9450
  %v9465 = vmul.f32 %v9451, %v9451
  %v9466 = vmul.f32 %v9452, %v9452
  %v9467 = vmul.f32 %v9453, %v9453
  %v9468 = vmul.f32 %v9454, %v9454
  %v9469 = vmul.f32 %v9455, %v9455
  %v9470 = vmul.f32 %v9456, %v9456
  %v9471 = vmul.f32 %v9457, %v9457
  %v9472 = vmul.f32 %v9458, %v9458
  %v9473 = vmul.f32 %v9459, %v9459
  %v9474 = vmul.f32 %v9460, %v9460
  %v9475 = vmul.f32 %v9461, %v9461
  %v9476 = vmul.f32 %v9462, %v9462
  %v9477 = vmul.f32 %v9463, %v9463
  %v9478 = vmul.f32 %v9464, %v3135
  %v9479 = vmul.f32 %v9465, %v3140
  %v9480 = vmul.f32 %v9466, %v3145
  %v9481 = vmul.f32 %v9467, %v3150
  %v9482 = vmul.f32 %v9468, %v3155
  %v9483 = vmul.f32 %v9469, %v3160
  %v9484 = vmul.f32 %v9470, %v3165
  %v9485 = vmul.f32 %v9471, %v3170
  %v9486 = vmul.f32 %v9472, %v3175
  %v9487 = vmul.f32 %v9473, %v3180
  %v9488 = vmul.f32 %v9474, %v3185
  %v9489 = vmul.f32 %v9475, %v3190
  %v9490 = vmul.f32 %v9476, %v3195
  %v9491 = vmul.f32 %v9477, %v3200
  %v9492 = vadd.f32 %v9478, %v9479
  %v9493 = vadd.f32 %v9492, %v9480
  %v9494 = vadd.f32 %v9493, %v9481
  %v9495 = vadd.f32 %v9494, %v9482
  %v9496 = vadd.f32 %v9495, %v9483
  %v9497 = vadd.f32 %v9496, %v9484
  %v9498 = vadd.f32 %v9497, %v9485
  %v9499 = vadd.f32 %v9498, %v9486
  %v9500 = vadd.f32 %v9499, %v9487
  %v9501 = vadd.f32 %v9500, %v9488
  %v9502 = vadd.f32 %v9501, %v9489
  %v9503 = vadd.f32 %v9502, %v9490
  %v9504 = vadd.f32 %v9503, %v9491
  %v9505 = vrot.slane %v9504, 4
  %v9506 = vadd.f32 %v9504, %v9505
  %v9507 = vrot.slane %v9506, 2
  %v9508 = vadd.f32 %v9506, %v9507
  %v9509 = vrot.slane %v9508, 1
  %v9510 = vadd.f32 %v9508, %v9509
  %v9511 = vmul.f32 %v9510, 0.03125
  %v9512 = vadd.f32 %v9511, 1e-05
  %v9513 = vrsqrt.pop %v9512
  %v9514 = vmul.f32 %v9513, %v9414
  %v9515 = vlaneseq
  %v9516 = vshrl.u32 %v9515, 7
  %v9517 = vsub.s32 0, %v9516
  %v9518 = vrot.slane %v9514, %v9517
  %v9519 = vmul.f32 %v9450, %v9518
  %v9520 = vmul.f32 %v9451, %v9518
  %v9521 = vmul.f32 %v9452, %v9518
  %v9522 = vmul.f32 %v9453, %v9518
  %v9523 = vmul.f32 %v9454, %v9518
  %v9524 = vmul.f32 %v9455, %v9518
  %v9525 = vmul.f32 %v9456, %v9518
  %v9526 = vmul.f32 %v9457, %v9518
  %v9527 = vmul.f32 %v9458, %v9518
  %v9528 = vmul.f32 %v9459, %v9518
  %v9529 = vmul.f32 %v9460, %v9518
  %v9530 = vmul.f32 %v9461, %v9518
  %v9531 = vmul.f32 %v9462, %v9518
  %v9532 = vmul.f32 %v9463, %v9518
  %v9534 = vlaneseq
  %v9535 = vshrl.u32 %v9534, 7
  %v9536 = vsub.s32 0, %v9535
  %v9537 = vrot.slane %v9415, %v9536
  %v9539 = vadd.f32 %v9519, %v9537
  %v9540 = vadd.f32 %v9520, %v9537
  %v9541 = vadd.f32 %v9521, %v9537
  %v9542 = vadd.f32 %v9522, %v9537
  %v9543 = vadd.f32 %v9523, %v9537
  %v9544 = vadd.f32 %v9524, %v9537
  %v9545 = vadd.f32 %v9525, %v9537
  %v9546 = vadd.f32 %v9526, %v9537
  %v9547 = vadd.f32 %v9527, %v9537
  %v9548 = vadd.f32 %v9528, %v9537
  %v9549 = vadd.f32 %v9529, %v9537
  %v9550 = vadd.f32 %v9530, %v9537
  %v9551 = vadd.f32 %v9531, %v9537
  %v9552 = vadd.f32 %v9532, %v9537
  %v9553 = vmax.f32 %v9539, 0.0
  %v9554 = vmax.f32 %v9540, 0.0
  %v9555 = vmax.f32 %v9541, 0.0
  %v9556 = vmax.f32 %v9542, 0.0
  %v9557 = vmax.f32 %v9543, 0.0
  %v9558 = vmax.f32 %v9544, 0.0
  %v9559 = vmax.f32 %v9545, 0.0
  %v9560 = vmax.f32 %v9546, 0.0
  %v9561 = vmax.f32 %v9547, 0.0
  %v9562 = vmax.f32 %v9548, 0.0
  %v9563 = vmax.f32 %v9549, 0.0
  %v9564 = vmax.f32 %v9550, 0.0
  %v9565 = vmax.f32 %v9551, 0.0
  %v9566 = vmax.f32 %v9552, 0.0
  %v9567 = vld [vmem:[%s17] sm:$0x3]
  %v9568 = vld [vmem:[%s18] sm:$0x1]
  %v9570 = vlaneseq
  %v9571 = vshrl.u32 %v9570, 7
  %v9572 = vsub.s32 0, %v9571
  %v9573 = vrot.slane %v9568, %v9572
  %v9576 = vsel %vm145, %v9567, 0
  %9578 = vmatprep.subr.bf16.mxu0 0
  %9579 = vmatpush1.bf16.msra.mxu0 0
  %9580 = vmatprep.subr.bf16.mxu0 0
  %9581 = vmatpush1.bf16.msra.mxu0 0
  %9582 = vmatprep.subr.bf16.mxu0 0
  %9583 = vmatpush1.bf16.msra.mxu0 0
  %9584 = vmatprep.subr.bf16.mxu0 0
  %9585 = vmatpush1.bf16.msra.mxu0 0
  %9586 = vmatprep.subr.bf16.mxu0 0
  %9587 = vmatpush1.bf16.msra.mxu0 0
  %9588 = vmatprep.subr.bf16.mxu0 0
  %9589 = vmatpush1.bf16.msra.mxu0 0
  %9590 = vmatprep.subr.bf16.mxu0 0
  %9591 = vmatpush1.bf16.msra.mxu0 0
  %9592 = vmatprep.subr.bf16.mxu0 0
  %9593 = vmatpush1.bf16.msra.mxu0 %v9576
  %9594 = vmatprep.subr.bf16.mxu0 0
  %9595 = vmatpush2.bf16.msra.mxu0 0
  %9596 = vmatprep.subr.bf16.mxu0 0
  %9597 = vmatpush2.bf16.msra.mxu0 0
  %9598 = vmatprep.subr.bf16.mxu0 0
  %9599 = vmatpush2.bf16.msra.mxu0 0
  %9600 = vmatprep.subr.bf16.mxu0 0
  %9601 = vmatpush2.bf16.msra.mxu0 0
  %9602 = vmatprep.subr.bf16.mxu0 0
  %9603 = vmatpush2.bf16.msra.mxu0 0
  %9604 = vmatprep.subr.bf16.mxu0 0
  %9605 = vmatpush2.bf16.msra.mxu0 0
  %9606 = vmatprep.subr.bf16.mxu0 0
  %9607 = vmatpush2.bf16.msra.mxu0 0
  %9608 = vmatprep.subr.bf16.mxu0 0
  %9609 = vmatpush2.bf16.msra.mxu0 0
  %9610 = vmatprep.mubr.bf16.mxu0 0
  %9611 = vmatmul.mubr.bf16.gmra.mxu0 %v125
  %v9612 = vpop.f32.mrf.mxu0
  %v9613 = vadd.f32 %v9573, %v9612
  %v9614 = vpop.f32.mrf.mxu0
  %v9615 = vpop.f32.mrf.mxu0
  %v9616 = vadd.f32 %v9573, %v9615
  %v9617 = vpop.f32.mrf.mxu0
  %9618 = vmatprep.mubr.bf16.mxu0 0
  %9619 = vmatmul.mubr.bf16.gmra.mxu0 %v128
  %v9620 = vpop.f32.mrf.mxu0
  %v9621 = vadd.f32 %v9573, %v9620
  %v9622 = vpop.f32.mrf.mxu0
  %v9623 = vpop.f32.mrf.mxu0
  %v9624 = vadd.f32 %v9573, %v9623
  %v9625 = vpop.f32.mrf.mxu0
  %9626 = vmatprep.mubr.bf16.mxu0 0
  %9627 = vmatmul.mubr.bf16.gmra.mxu0 %v131
  %v9628 = vpop.f32.mrf.mxu0
  %v9629 = vadd.f32 %v9573, %v9628
  %v9630 = vpop.f32.mrf.mxu0
  %v9631 = vpop.f32.mrf.mxu0
  %v9632 = vadd.f32 %v9573, %v9631
  %v9633 = vpop.f32.mrf.mxu0
  %9634 = vmatprep.mubr.bf16.mxu0 0
  %9635 = vmatmul.mubr.bf16.gmra.mxu0 %v134
  %v9636 = vpop.f32.mrf.mxu0
  %v9637 = vadd.f32 %v9573, %v9636
  %v9638 = vpop.f32.mrf.mxu0
  %v9639 = vpop.f32.mrf.mxu0
  %v9640 = vadd.f32 %v9573, %v9639
  %v9641 = vpop.f32.mrf.mxu0
  %9642 = vmatprep.mubr.bf16.mxu0 0
  %9643 = vmatmul.mubr.bf16.gmra.mxu0 %v137
  %v9644 = vpop.f32.mrf.mxu0
  %v9645 = vadd.f32 %v9573, %v9644
  %v9646 = vpop.f32.mrf.mxu0
  %v9647 = vpop.f32.mrf.mxu0
  %v9648 = vadd.f32 %v9573, %v9647
  %v9649 = vpop.f32.mrf.mxu0
  %9650 = vmatprep.mubr.bf16.mxu0 0
  %9651 = vmatmul.mubr.bf16.gmra.mxu0 %v140
  %v9652 = vpop.f32.mrf.mxu0
  %v9653 = vadd.f32 %v9573, %v9652
  %v9654 = vpop.f32.mrf.mxu0
  %v9655 = vpop.f32.mrf.mxu0
  %v9656 = vadd.f32 %v9573, %v9655
  %v9657 = vpop.f32.mrf.mxu0
  %9658 = vmatprep.mubr.bf16.mxu0 0
  %9659 = vmatmul.mubr.bf16.gmra.mxu0 %v143
  %v9660 = vpop.f32.mrf.mxu0
  %v9661 = vadd.f32 %v9573, %v9660
  %v9662 = vpop.f32.mrf.mxu0
  %v9663 = vpop.f32.mrf.mxu0
  %v9664 = vadd.f32 %v9573, %v9663
  %v9665 = vpop.f32.mrf.mxu0
  %9666 = vdwg.mxu0
  %v9667 = vld [vmem:[%s19] sm:$0x1]
  %v9668 = vld [vmem:[%s20] sm:$0x1]
  %v9669 = vmul.f32 %v9613, %v3135
  %v9670 = vmul.f32 %v9616, %v3140
  %v9671 = vmul.f32 %v9621, %v3145
  %v9672 = vmul.f32 %v9624, %v3150
  %v9673 = vmul.f32 %v9629, %v3155
  %v9674 = vmul.f32 %v9632, %v3160
  %v9675 = vmul.f32 %v9637, %v3165
  %v9676 = vmul.f32 %v9640, %v3170
  %v9677 = vmul.f32 %v9645, %v3175
  %v9678 = vmul.f32 %v9648, %v3180
  %v9679 = vmul.f32 %v9653, %v3185
  %v9680 = vmul.f32 %v9656, %v3190
  %v9681 = vmul.f32 %v9661, %v3195
  %v9682 = vmul.f32 %v9664, %v3200
  %v9683 = vadd.f32 %v9669, %v9670
  %v9684 = vadd.f32 %v9683, %v9671
  %v9685 = vadd.f32 %v9684, %v9672
  %v9686 = vadd.f32 %v9685, %v9673
  %v9687 = vadd.f32 %v9686, %v9674
  %v9688 = vadd.f32 %v9687, %v9675
  %v9689 = vadd.f32 %v9688, %v9676
  %v9690 = vadd.f32 %v9689, %v9677
  %v9691 = vadd.f32 %v9690, %v9678
  %v9692 = vadd.f32 %v9691, %v9679
  %v9693 = vadd.f32 %v9692, %v9680
  %v9694 = vadd.f32 %v9693, %v9681
  %v9695 = vadd.f32 %v9694, %v9682
  %v9696 = vrot.slane %v9695, 4
  %v9697 = vadd.f32 %v9695, %v9696
  %v9698 = vrot.slane %v9697, 2
  %v9699 = vadd.f32 %v9697, %v9698
  %v9700 = vrot.slane %v9699, 1
  %v9701 = vadd.f32 %v9699, %v9700
  %v9702 = vmul.f32 %v9701, 0.03125
  %v9703 = vsub.f32 %v9613, %v9702
  %v9704 = vsub.f32 %v9616, %v9702
  %v9705 = vsub.f32 %v9621, %v9702
  %v9706 = vsub.f32 %v9624, %v9702
  %v9707 = vsub.f32 %v9629, %v9702
  %v9708 = vsub.f32 %v9632, %v9702
  %v9709 = vsub.f32 %v9637, %v9702
  %v9710 = vsub.f32 %v9640, %v9702
  %v9711 = vsub.f32 %v9645, %v9702
  %v9712 = vsub.f32 %v9648, %v9702
  %v9713 = vsub.f32 %v9653, %v9702
  %v9714 = vsub.f32 %v9656, %v9702
  %v9715 = vsub.f32 %v9661, %v9702
  %v9716 = vsub.f32 %v9664, %v9702
  %v9717 = vmul.f32 %v9703, %v9703
  %v9718 = vmul.f32 %v9704, %v9704
  %v9719 = vmul.f32 %v9705, %v9705
  %v9720 = vmul.f32 %v9706, %v9706
  %v9721 = vmul.f32 %v9707, %v9707
  %v9722 = vmul.f32 %v9708, %v9708
  %v9723 = vmul.f32 %v9709, %v9709
  %v9724 = vmul.f32 %v9710, %v9710
  %v9725 = vmul.f32 %v9711, %v9711
  %v9726 = vmul.f32 %v9712, %v9712
  %v9727 = vmul.f32 %v9713, %v9713
  %v9728 = vmul.f32 %v9714, %v9714
  %v9729 = vmul.f32 %v9715, %v9715
  %v9730 = vmul.f32 %v9716, %v9716
  %v9731 = vmul.f32 %v9717, %v3135
  %v9732 = vmul.f32 %v9718, %v3140
  %v9733 = vmul.f32 %v9719, %v3145
  %v9734 = vmul.f32 %v9720, %v3150
  %v9735 = vmul.f32 %v9721, %v3155
  %v9736 = vmul.f32 %v9722, %v3160
  %v9737 = vmul.f32 %v9723, %v3165
  %v9738 = vmul.f32 %v9724, %v3170
  %v9739 = vmul.f32 %v9725, %v3175
  %v9740 = vmul.f32 %v9726, %v3180
  %v9741 = vmul.f32 %v9727, %v3185
  %v9742 = vmul.f32 %v9728, %v3190
  %v9743 = vmul.f32 %v9729, %v3195
  %v9744 = vmul.f32 %v9730, %v3200
  %v9745 = vadd.f32 %v9731, %v9732
  %v9746 = vadd.f32 %v9745, %v9733
  %v9747 = vadd.f32 %v9746, %v9734
  %v9748 = vadd.f32 %v9747, %v9735
  %v9749 = vadd.f32 %v9748, %v9736
  %v9750 = vadd.f32 %v9749, %v9737
  %v9751 = vadd.f32 %v9750, %v9738
  %v9752 = vadd.f32 %v9751, %v9739
  %v9753 = vadd.f32 %v9752, %v9740
  %v9754 = vadd.f32 %v9753, %v9741
  %v9755 = vadd.f32 %v9754, %v9742
  %v9756 = vadd.f32 %v9755, %v9743
  %v9757 = vadd.f32 %v9756, %v9744
  %v9758 = vrot.slane %v9757, 4
  %v9759 = vadd.f32 %v9757, %v9758
  %v9760 = vrot.slane %v9759, 2
  %v9761 = vadd.f32 %v9759, %v9760
  %v9762 = vrot.slane %v9761, 1
  %v9763 = vadd.f32 %v9761, %v9762
  %v9764 = vmul.f32 %v9763, 0.03125
  %v9765 = vadd.f32 %v9764, 1e-05
  %v9766 = vrsqrt.pop %v9765
  %v9767 = vmul.f32 %v9766, %v9667
  %v9768 = vlaneseq
  %v9769 = vshrl.u32 %v9768, 7
  %v9770 = vsub.s32 0, %v9769
  %v9771 = vrot.slane %v9767, %v9770
  %v9772 = vmul.f32 %v9703, %v9771
  %v9773 = vmul.f32 %v9704, %v9771
  %v9774 = vmul.f32 %v9705, %v9771
  %v9775 = vmul.f32 %v9706, %v9771
  %v9776 = vmul.f32 %v9707, %v9771
  %v9777 = vmul.f32 %v9708, %v9771
  %v9778 = vmul.f32 %v9709, %v9771
  %v9779 = vmul.f32 %v9710, %v9771
  %v9780 = vmul.f32 %v9711, %v9771
  %v9781 = vmul.f32 %v9712, %v9771
  %v9782 = vmul.f32 %v9713, %v9771
  %v9783 = vmul.f32 %v9714, %v9771
  %v9784 = vmul.f32 %v9715, %v9771
  %v9785 = vmul.f32 %v9716, %v9771
  %v9787 = vlaneseq
  %v9788 = vshrl.u32 %v9787, 7
  %v9789 = vsub.s32 0, %v9788
  %v9790 = vrot.slane %v9668, %v9789
  %v9792 = vadd.f32 %v9772, %v9790
  %v9793 = vadd.f32 %v9773, %v9790
  %v9794 = vadd.f32 %v9774, %v9790
  %v9795 = vadd.f32 %v9775, %v9790
  %v9796 = vadd.f32 %v9776, %v9790
  %v9797 = vadd.f32 %v9777, %v9790
  %v9798 = vadd.f32 %v9778, %v9790
  %v9799 = vadd.f32 %v9779, %v9790
  %v9800 = vadd.f32 %v9780, %v9790
  %v9801 = vadd.f32 %v9781, %v9790
  %v9802 = vadd.f32 %v9782, %v9790
  %v9803 = vadd.f32 %v9783, %v9790
  %v9804 = vadd.f32 %v9784, %v9790
  %v9805 = vadd.f32 %v9785, %v9790
  %v9806 = vadd.f32 %v9553, %v9792
  %v9807 = vadd.f32 %v9554, %v9793
  %v9808 = vadd.f32 %v9555, %v9794
  %v9809 = vadd.f32 %v9556, %v9795
  %v9810 = vadd.f32 %v9557, %v9796
  %v9811 = vadd.f32 %v9558, %v9797
  %v9812 = vadd.f32 %v9559, %v9798
  %v9813 = vadd.f32 %v9560, %v9799
  %v9814 = vadd.f32 %v9561, %v9800
  %v9815 = vadd.f32 %v9562, %v9801
  %v9816 = vadd.f32 %v9563, %v9802
  %v9817 = vadd.f32 %v9564, %v9803
  %v9818 = vadd.f32 %v9565, %v9804
  %v9819 = vadd.f32 %v9566, %v9805
  %v9820 = vmax.f32 %v9806, 0.0
  %v9821 = vmax.f32 %v9807, 0.0
  %v9822 = vmax.f32 %v9808, 0.0
  %v9823 = vmax.f32 %v9809, 0.0
  %v9824 = vmax.f32 %v9810, 0.0
  %v9825 = vmax.f32 %v9811, 0.0
  %v9826 = vmax.f32 %v9812, 0.0
  %v9827 = vmax.f32 %v9813, 0.0
  %v9828 = vmax.f32 %v9814, 0.0
  %v9829 = vmax.f32 %v9815, 0.0
  %v9830 = vmax.f32 %v9816, 0.0
  %v9831 = vmax.f32 %v9817, 0.0
  %v9832 = vmax.f32 %v9818, 0.0
  %v9833 = vmax.f32 %v9819, 0.0
  %9834 = vst [vmem:[%s21] sm:$0xff] %v9820
  %9835 = vst [vmem:[%s21 + $0x8] sm:$0xff] %v9821
  %9836 = vst [vmem:[%s21 + $0x10] sm:$0xff] %v9822
  %9837 = vst [vmem:[%s21 + $0x18] sm:$0xff] %v9823
  %9838 = vst [vmem:[%s21 + $0x20] sm:$0xff] %v9824
  %9839 = vst [vmem:[%s21 + $0x28] sm:$0xff] %v9825
  %9840 = vst [vmem:[%s21 + $0x30] sm:$0xff] %v9826
  %9841 = vst [vmem:[%s21 + $0x38] sm:$0xff] %v9827
  %9842 = vst [vmem:[%s21 + $0x40] sm:$0xff] %v9828
  %9843 = vst [vmem:[%s21 + $0x48] sm:$0xff] %v9829
  %9844 = vst [vmem:[%s21 + $0x50] sm:$0xff] %v9830
  %9845 = vst [vmem:[%s21 + $0x58] sm:$0xff] %v9831
  %9846 = vst [vmem:[%s21 + $0x60] sm:$0xff] %v9832
  %9847 = vst [vmem:[%s21 + $0x68] sm:$0xff] %v9833
  // Predicated region
  $region86: #{inception_block_forward.1} parent=0 // pred_check
    _
  $region87: #{inception_block_forward.1} parent=0 // pred_check_branch
    %9849 = sbr.rel (0) target = $region89
  $region88: #{inception_block_forward.1} parent=0 // pred_region
    _
  $region89: #{inception_block_forward.1} parent=0 // pred_fallthru
    _
  // Predicated region
  $region90: #{inception_block_forward.1} parent=0 // pred_check
    _
  $region91: #{inception_block_forward.1} parent=0 // pred_check_branch
    %9851 = sbr.rel (0) target = $region93
  $region92: #{inception_block_forward.1} parent=0 // pred_region
    _
  $region93: #{inception_block_forward.1} parent=0 // pred_fallthru
    _

</llo_original>
